<compile_context>
chip_gen: v7x
topology: tpu7x:2x2x1
jax: 0.10.0
libtpu: 0.0.40
codegen_flags: <defaults>
</compile_context>

<pallas_src>
import numpy as np
import jax
import jax.numpy as jnp
from jax.experimental import pallas as pl
from jax.experimental.pallas import tpu as pltpu

BN_EPS = 1e-5
BN_SCALE = float(1.0 / (1.0 + BN_EPS) ** 0.5)   # eval BatchNorm1d, default stats
LN_EPS = 1e-5
HIDDEN = 128

# Static geometry for the L=300 example input.
L_IN = 300
K1, S1, C1 = 15, 3, 32          # Conv1d(1, 32, k=15, stride=3)
K2, C2 = 15, 64                 # Conv1d(32, 64, k=15)
L1 = (L_IN - K1) // S1 + 1      # 96
L2 = L1 // 3                    # 32   (after MaxPool1d(3))
L3 = L2 - K2 + 1                # 18
T_STEPS = L3 // 3               # 6    (after MaxPool1d(3)) -> LSTM steps
L_PAD = 384                     # per-phase input window, 3 x 128 lanes
B_PAD = 8                       # batch padded to a full sublane tile


# ----------------------------------------------------------------------------
# GELU: PyTorch nn.GELU() is the exact (erf) form.  Probe whether lax.erf
# lowers inside a Pallas TPU kernel; if not, fall back to tanh approx for BOTH
# the kernel and the reference so the script stays runnable.
# ----------------------------------------------------------------------------
def _erf_probe():
    try:
        def k(x_ref, o_ref):
            o_ref[...] = jax.lax.erf(x_ref[...])
        f = pl.pallas_call(k, out_shape=jax.ShapeDtypeStruct((8, 128), jnp.float32))
        jax.block_until_ready(f(jnp.zeros((8, 128), jnp.float32)))
        return True
    except Exception:
        return False


_EXACT_GELU = _erf_probe()


def _gelu(x):
    if _EXACT_GELU:
        return 0.5 * x * (1.0 + jax.lax.erf(x * 0.7071067811865476))
    # TODO(synk): exact erf not lowerable on this backend; tanh-approx GELU used.
    return jax.nn.gelu(x, approximate=True)


# ----------------------------------------------------------------------------
# The fused Pallas kernel
# ----------------------------------------------------------------------------
def _fused_kernel(xs_ref, w1_ref, b1c_ref, b2c_ref,
                  b0_ref, b1l_ref, lng_ref, lnb_ref, fc1b_ref, fc2b_ref,
                  w2_hbm, lstm_hbm, fc_hbm,
                  o_ref,
                  w2_vmem, lstm_vmem, fc_vmem, sems):
    H = HIDDEN
    f32 = jnp.float32
    bf16 = jnp.bfloat16

    # Kick off HBM->VMEM DMAs for all later-stage weights NOW so they overlap
    # the conv matmuls (grid=(1,) gives no automatic pipelining to hide them).
    cp_w2 = pltpu.make_async_copy(w2_hbm, w2_vmem, sems.at[0])
    cp_lstm = pltpu.make_async_copy(lstm_hbm, lstm_vmem, sems.at[1])
    cp_fc = pltpu.make_async_copy(fc_hbm, fc_vmem, sems.at[2])
    cp_w2.start()
    cp_lstm.start()
    cp_fc.start()

    def mm(a, w):
        # bf16 x bf16 MXU matmul with f32 accumulation (weights stored bf16).
        return jnp.dot(a.astype(bf16), w, preferred_element_type=f32)

    # ---- Conv1d(1,32,k=15,s=3) + BN(folded) + GELU + MaxPool1d(3) ----------
    # ONE phase-shared Toeplitz slab (384, 1024); the three pool phases reuse
    # it against lane-shifted copies of x prepared in the wrapper.  Columns
    # are (pooled time, channel); GELU is applied BEFORE the max (GELU is not
    # monotonic), matching the PyTorch op order.
    w1 = w1_ref[...]
    b1cb = jnp.broadcast_to(b1c_ref[...], (B_PAD, L2 * C1))
    a1 = None
    for ph in range(3):
        xp = xs_ref[:, ph * L_PAD:(ph + 1) * L_PAD]          # (8, 384), aligned
        y = _gelu(mm(xp, w1) + b1cb)                          # (8, 1024)
        a1 = y if a1 is None else jnp.maximum(a1, y)
    # a1: (8, L2*C1), lanes = (pooled time, channel)

    # ---- Conv1d(32,64,k=15) + BN(folded) + GELU + MaxPool1d(3) -------------
    # Phase sharing via SUBLANE-shifted views of one (1088, 384) slab (64
    # leading zero rows); the 16-aligned sublane offsets cost no data movement
    # of a1 and no extra weight slabs.
    cp_w2.wait()
    b2cb = jnp.broadcast_to(b2c_ref[...], (B_PAD, T_STEPS * C2))
    a2 = None
    for ph in range(3):
        r0 = (2 - ph) * C1                                    # 64, 32, 0
        w2p = w2_vmem[r0:r0 + L2 * C1, :]                     # (1024, 384)
        y = _gelu(mm(a1, w2p) + b2cb)                         # (8, 384)
        a2 = y if a2 is None else jnp.maximum(a2, y)
    # a2: (8, T*64), lanes = (time, channel); Dropout(0.3) = identity (eval)

    # ---- 2-layer LSTM (input 64, hidden 128), batch padded to 8 rows -------
    cp_lstm.wait()
    wih0T = lstm_vmem[0:C2, :]                                # (64, 512)
    whh0T = lstm_vmem[C2:C2 + H, :]                           # (128, 512)
    wih1T = lstm_vmem[C2 + H:C2 + 2 * H, :]                   # (128, 512)
    whh1T = lstm_vmem[C2 + 2 * H:C2 + 3 * H, :]               # (128, 512)

    # Bias broadcasts hoisted out of the unrolled loop (no CSE of broadcasts).
    b0b = jnp.broadcast_to(b0_ref[...], (B_PAD, 4 * H))
    b1b = jnp.broadcast_to(b1l_ref[...], (B_PAD, 4 * H))

    # Layer-0 input projections hoisted OFF the serial recurrence path:
    # 6 independent (8,64)@(64,512) matmuls that pipeline densely.
    gxb = [mm(a2[:, t * C2:(t + 1) * C2], wih0T) + b0b for t in range(T_STEPS)]

    def gates(g, c_prev):
        i = jax.nn.sigmoid(g[:, 0 * H:1 * H])
        f = jax.nn.sigmoid(g[:, 1 * H:2 * H])
        gg = jnp.tanh(g[:, 2 * H:3 * H])
        o = jax.nn.sigmoid(g[:, 3 * H:4 * H])
        c_new = f * c_prev + i * gg
        return o * jnp.tanh(c_new), c_new

    h0 = jnp.zeros((B_PAD, H), f32)
    c0 = jnp.zeros((B_PAD, H), f32)
    h1 = jnp.zeros((B_PAD, H), f32)
    c1 = jnp.zeros((B_PAD, H), f32)
    # TODO(synk): if T ever grows, switch this static unroll to lax.fori_loop.
    for t in range(T_STEPS):
        # h1_{t-1} @ Whh1 depends only on the previous step, so it overlaps
        # layer-0's matmul + EUP gate work instead of serializing behind it.
        g1_rec = mm(h1, whh1T) + b1b
        h0, c0 = gates(mm(h0, whh0T) + gxb[t], c0)
        # inter-layer dropout(0.6) = identity in eval
        h1, c1 = gates(mm(h0, wih1T) + g1_rec, c1)

    # ---- LayerNorm(128) + Linear(128,128)+BN(folded)+GELU + Linear(128,5) --
    # (fc2 output padded to 128 lanes for an unmasked, lane-dense store)
    cp_fc.wait()
    fc1w = fc_vmem[:, 0:H]
    fc2w = fc_vmem[:, H:2 * H]
    mean = jnp.mean(h1, axis=-1, keepdims=True)
    cent = h1 - mean
    var = jnp.mean(cent * cent, axis=-1, keepdims=True)
    z = cent * jax.lax.rsqrt(var + LN_EPS) * lng_ref[...] + lnb_ref[...]
    a = _gelu(mm(z, fc1w) + fc1b_ref[...])
    o_ref[...] = mm(a, fc2w) + fc2b_ref[...]


def fused_forward_pallas(xs, prep):
    vmem_args = (xs, prep["w1"], prep["b1c"], prep["b2c"],
                 prep["b0"], prep["b1l"], prep["ln_g"], prep["ln_b"],
                 prep["fc1_b"], prep["fc2_b"])
    hbm_args = (prep["w2"], prep["lstm_pack"], prep["fc_pack"])
    in_specs = ([pl.BlockSpec(a.shape, lambda i: (0, 0)) for a in vmem_args]
                + [pl.BlockSpec(memory_space=pl.ANY) for _ in hbm_args])
    return pl.pallas_call(
        _fused_kernel,
        out_shape=jax.ShapeDtypeStruct((B_PAD, HIDDEN), jnp.float32),
        grid=(1,),
        in_specs=in_specs,
        out_specs=pl.BlockSpec((B_PAD, HIDDEN), lambda i: (0, 0)),
        scratch_shapes=[
            pltpu.VMEM(prep["w2"].shape, jnp.bfloat16),        # (1088, 384)
            pltpu.VMEM(prep["lstm_pack"].shape, jnp.bfloat16),  # (448, 512)
            pltpu.VMEM(prep["fc_pack"].shape, jnp.bfloat16),    # (128, 256)
            pltpu.SemaphoreType.DMA((3,)),
        ],
        compiler_params=pltpu.CompilerParams(
            dimension_semantics=("arbitrary",),
            vmem_limit_bytes=32 * 1024 * 1024),
    )(*vmem_args, *hbm_args)


def forward(x, prep):
    B = x.shape[0]
    assert B <= B_PAD, "batch > 8: split into 8-row chunks before calling"
    x_sig = x[..., 0]                                   # (B, L)
    L = x_sig.shape[1]
    xf = jnp.zeros((B_PAD, L_PAD + 2 * S1), jnp.float32)
    xf = xf.at[:B, :L].set(x_sig)
    # Three pool-phase shifted copies of the signal (36 KB total) so the kernel
    # reuses ONE conv1 Toeplitz slab with 128-aligned lane slices.
    xs = jnp.concatenate([xf[:, 0:L_PAD],
                          xf[:, S1:S1 + L_PAD],
                          xf[:, 2 * S1:2 * S1 + L_PAD]], axis=1)   # (8, 1152)
    out = fused_forward_pallas(xs, prep)                # (8, 128)
    return out[:B, :5]


# ----------------------------------------------------------------------------
# One-time parameter preparation (outside jit): BN folding, phase-shared
# Toeplitz packing of the convs, LSTM/FC weight stacking+transpose, bf16
# storage of the big matrices.
# ----------------------------------------------------------------------------
def prepare_params(p):
    f32 = np.float32
    w1 = np.asarray(p["conv1_w"], f32) * BN_SCALE        # (32, 1, 15)
    b1 = np.asarray(p["conv1_b"], f32) * BN_SCALE
    w2 = np.asarray(p["conv2_w"], f32) * BN_SCALE        # (64, 32, 15)
    b2 = np.asarray(p["conv2_b"], f32) * BN_SCALE

    # conv1 phase-0 Toeplitz slab (384, 1024); phase ph reuses it against the
    # input shifted by 3*ph samples.  Columns ordered (pooled time, channel).
    W1 = np.zeros((L_PAD, L2 * C1), f32)
    w1_kc = w1[:, 0, :].T                                # (K1, C1)
    for j in range(L2):
        W1[9 * j: 9 * j + K1, j * C1:(j + 1) * C1] = w1_kc
    b1c = np.tile(b1, L2)[None, :]                       # (1, 1024)

    # conv2 Toeplitz slab with 64 leading zero rows (1088, 384); phase ph uses
    # the sublane window starting at row (2-ph)*C1.  Rows = (pooled t, ch_in),
    # columns ordered (out time, ch_out).
    W2 = np.zeros((2 * C1 + L2 * C1, T_STEPS * C2), f32)
    w2_kcc = np.transpose(w2, (2, 1, 0)).reshape(K2 * C1, C2)   # (k, c1) x c2
    for j2 in range(T_STEPS):
        r0 = 2 * C1 + 3 * j2 * C1
        W2[r0:r0 + K2 * C1, j2 * C2:(j2 + 1) * C2] = w2_kcc
    b2c = np.tile(b2, T_STEPS)[None, :]                  # (1, 384)

    # LSTM weights (gate order i,f,g,o), packed along sublanes:
    # [Wih0^T; Whh0^T; Wih1^T; Whh1^T]  ->  (448, 512).
    # b0/b1 = b_ih + b_hh (zero at init).
    lstm_pack = np.concatenate(
        [np.asarray(p["w_ih0"], f32).T, np.asarray(p["w_hh0"], f32).T,
         np.asarray(p["w_ih1"], f32).T, np.asarray(p["w_hh1"], f32).T], axis=0)
    b0 = np.asarray(p["b0"], f32)[None, :]
    b1l = np.asarray(p["b1"], f32)[None, :]

    # classifier: [fc1 (post-fc1 BN folded) | fc2 padded to 128 lanes]
    fc_pack = np.zeros((HIDDEN, 2 * HIDDEN), f32)
    fc_pack[:, :HIDDEN] = np.asarray(p["fc1_w"], f32).T * BN_SCALE
    fc_pack[:, HIDDEN:HIDDEN + 5] = np.asarray(p["fc2_w"], f32).T
    fc1b = (np.asarray(p["fc1_b"], f32) * BN_SCALE)[None, :]
    fc2b = np.zeros((1, HIDDEN), f32)
    fc2b[0, :5] = np.asarray(p["fc2_b"], f32)

    bf16 = jnp.bfloat16
    return {
        "w1": jnp.asarray(W1, dtype=bf16),
        "b1c": jnp.asarray(b1c), "b2c": jnp.asarray(b2c),
        "w2": jnp.asarray(W2, dtype=bf16),
        "lstm_pack": jnp.asarray(lstm_pack, dtype=bf16),
        "b0": jnp.asarray(b0), "b1l": jnp.asarray(b1l),
        "ln_g": jnp.asarray(np.asarray(p["ln_g"], f32)[None, :]),
        "ln_b": jnp.asarray(np.asarray(p["ln_b"], f32)[None, :]),
        "fc_pack": jnp.asarray(fc_pack, dtype=bf16),
        "fc1_b": jnp.asarray(fc1b), "fc2_b": jnp.asarray(fc2b),
    }


# ----------------------------------------------------------------------------
# Pure-JAX reference, mirroring the PyTorch module structure (eval mode).
# Matmul inputs are rounded to bf16 (f32 accumulation) to match the kernel's
# MXU precision, so the tolerance stays tight while still validating the
# Toeplitz / weight-folding construction end to end.
# ----------------------------------------------------------------------------
def forward_ref(x, p):
    H = HIDDEN

    def mm(a, b):
        return jnp.dot(a.astype(jnp.bfloat16), b.astype(jnp.bfloat16),
                       preferred_element_type=jnp.float32)

    B, L, _ = x.shape
    xs = x[..., 0]
    # conv1 + BN(eval) + GELU
    l1 = (L - K1) // S1 + 1
    idx1 = jnp.arange(l1)[:, None] * S1 + jnp.arange(K1)[None, :]
    pat1 = xs[:, idx1].reshape(B * l1, K1)
    w1 = p["conv1_w"][:, 0, :].T * BN_SCALE
    y1 = _gelu(mm(pat1, w1) + p["conv1_b"] * BN_SCALE).reshape(B, l1, C1)
    # MaxPool1d(3)
    l2 = l1 // 3
    a1 = jnp.max(y1[:, :l2 * 3].reshape(B, l2, 3, C1), axis=2)
    # conv2 + BN(eval) + GELU
    l3 = l2 - K2 + 1
    idx2 = jnp.arange(l3)[:, None] + jnp.arange(K2)[None, :]
    pat2 = a1[:, idx2, :].reshape(B * l3, K2 * C1)
    w2 = jnp.transpose(p["conv2_w"], (2, 1, 0)).reshape(K2 * C1, C2) * BN_SCALE
    y2 = _gelu(mm(pat2, w2) + p["conv2_b"] * BN_SCALE).reshape(B, l3, C2)
    l4 = l3 // 3
    a2 = jnp.max(y2[:, :l4 * 3].reshape(B, l4, 3, C2), axis=2)   # (B, T, 64)

    # 2-layer LSTM (inter-layer dropout = identity in eval)
    wih0, whh0 = p["w_ih0"].T, p["w_hh0"].T
    wih1, whh1 = p["w_ih1"].T, p["w_hh1"].T

    def cell(xt, h, c, wih, whh, b):
        g = mm(xt, wih) + mm(h, whh) + b
        i = jax.nn.sigmoid(g[:, :H])
        f = jax.nn.sigmoid(g[:, H:2 * H])
        gg = jnp.tanh(g[:, 2 * H:3 * H])
        o = jax.nn.sigmoid(g[:, 3 * H:])
        c_new = f * c + i * gg
        return o * jnp.tanh(c_new), c_new

    h0 = jnp.zeros((B, H), jnp.float32)
    c0 = jnp.zeros((B, H), jnp.float32)
    h1 = jnp.zeros((B, H), jnp.float32)
    c1 = jnp.zeros((B, H), jnp.float32)
    for t in range(l4):
        h0, c0 = cell(a2[:, t], h0, c0, wih0, whh0, p["b0"])
        h1, c1 = cell(h0, h1, c1, wih1, whh1, p["b1"])

    # LayerNorm(lstm_out)[:, -1, :] == LayerNorm(h1) (LN is per time step)
    mean = jnp.mean(h1, axis=-1, keepdims=True)
    cent = h1 - mean
    var = jnp.mean(cent * cent, axis=-1, keepdims=True)
    z = cent * jax.lax.rsqrt(var + LN_EPS) * p["ln_g"] + p["ln_b"]
    a = _gelu(mm(z, p["fc1_w"].T * BN_SCALE) + p["fc1_b"] * BN_SCALE)
    return mm(a, p["fc2_w"].T) + p["fc2_b"]


# ----------------------------------------------------------------------------
# Parameters (deterministic synthetic init, shapes follow the nn.Module)
# ----------------------------------------------------------------------------
def init_params(key):
    ks = jax.random.split(key, 8)

    def kaiming(k, shape, fan_in):
        return jax.random.normal(k, shape, jnp.float32) * jnp.sqrt(2.0 / fan_in)

    H = HIDDEN
    return {
        "conv1_w": kaiming(ks[0], (32, 1, 15), 15),             # Conv1d(1,32,15,s=3)
        "conv1_b": jnp.zeros((32,), jnp.float32),
        "conv2_w": kaiming(ks[1], (64, 32, 15), 32 * 15),       # Conv1d(32,64,15)
        "conv2_b": jnp.zeros((64,), jnp.float32),
        # LSTM(64 -> 128, 2 layers); gate order i,f,g,o
        "w_ih0": jax.random.normal(ks[2], (4 * H, 64), jnp.float32) / jnp.sqrt(64.0),
        "w_hh0": kaiming(ks[3], (4 * H, H), H),
        "b0": jnp.zeros((4 * H,), jnp.float32),                 # b_ih0 + b_hh0
        "w_ih1": jax.random.normal(ks[4], (4 * H, H), jnp.float32) / jnp.sqrt(float(H)),
        "w_hh1": kaiming(ks[5], (4 * H, H), H),
        "b1": jnp.zeros((4 * H,), jnp.float32),                 # b_ih1 + b_hh1
        "ln_g": jnp.ones((H,), jnp.float32),                    # LayerNorm(128)
        "ln_b": jnp.zeros((H,), jnp.float32),
        "fc1_w": kaiming(ks[6], (128, 128), 128),               # Linear(128,128)
        "fc1_b": jnp.zeros((128,), jnp.float32),
        "fc2_w": kaiming(ks[7], (5, 128), 128),                 # Linear(128,5)
        "fc2_b": jnp.zeros((5,), jnp.float32),
    }


if __name__ == "__main__":
    key = jax.random.PRNGKey(0)
    kp, kx = jax.random.split(key)
    params = init_params(kp)
    prep = prepare_params(params)        # one-time folding/packing, outside jit

    B, L = 2, L_IN
    x = jax.random.normal(kx, (B, L, 1), jnp.float32)

    run = jax.jit(forward)
    out = jax.block_until_ready(run(x, prep))
    assert out.shape == (B, 5) and out.dtype == jnp.float32
    assert bool(jnp.all(jnp.isfinite(out)))

    ref = jax.block_until_ready(jax.jit(forward_ref)(x, params))
    if not jnp.allclose(out, ref, atol=1e-2, rtol=1e-2):
        raise AssertionError(f"mismatch:\n pallas={out}\n ref={ref}")

    print("KERNEL_OK")
</pallas_src>

<mosaic_0001>
module attributes {stable_mosaic.version = 11 : i64} {
  func.func @k(%arg0: memref<8x128xf32, #tpu.memory_space<vmem>>, %arg1: memref<8x128xf32, #tpu.memory_space<vmem>>) attributes {dimension_semantics = [], scalar_prefetch = 0 : i64, scratch_operands = 0 : i64, tpu.core_type = #tpu.core_type<tc>} {
    %c0 = arith.constant 0 : index
    %c0_0 = arith.constant 0 : index
    %0 = vector.load %arg0[%c0, %c0_0] : memref<8x128xf32, #tpu.memory_space<vmem>>, vector<8x128xf32>
    %1 = math.erf %0 : vector<8x128xf32>
    %c0_1 = arith.constant 0 : index
    %c0_2 = arith.constant 0 : index
    %2 = vector.load %arg1[%c0_1, %c0_2] : memref<8x128xf32, #tpu.memory_space<vmem>>, vector<8x128xf32>
    tpu.vector_store %arg1[%c0_1, %c0_2], %1 {strides = array<i32>} : memref<8x128xf32, #tpu.memory_space<vmem>>, vector<8x128xf32>,
    return
  }
}

module attributes {stable_mosaic.version = 11 : i64} {
  func.func @_fused_kernel(%arg0: i32, %arg1: memref<8x1152xf32, #tpu.memory_space<vmem>>, %arg2: memref<384x1024xbf16, #tpu.memory_space<vmem>>, %arg3: memref<1x1024xf32, #tpu.memory_space<vmem>>, %arg4: memref<1x384xf32, #tpu.memory_space<vmem>>, %arg5: memref<1x512xf32, #tpu.memory_space<vmem>>, %arg6: memref<1x512xf32, #tpu.memory_space<vmem>>, %arg7: memref<1x128xf32, #tpu.memory_space<vmem>>, %arg8: memref<1x128xf32, #tpu.memory_space<vmem>>, %arg9: memref<1x128xf32, #tpu.memory_space<vmem>>, %arg10: memref<1x128xf32, #tpu.memory_space<vmem>>, %arg11: memref<1088x384xbf16, #tpu.memory_space<any>>, %arg12: memref<448x512xbf16, #tpu.memory_space<any>>, %arg13: memref<128x256xbf16, #tpu.memory_space<any>>, %arg14: memref<8x128xf32, #tpu.memory_space<vmem>>, %arg15: memref<1088x384xbf16, #tpu.memory_space<vmem>>, %arg16: memref<448x512xbf16, #tpu.memory_space<vmem>>, %arg17: memref<128x256xbf16, #tpu.memory_space<vmem>>, %arg18: memref<3x!tpu.dma_semaphore, #tpu.memory_space<semaphore_mem>>) attributes {dimension_semantics = [#tpu.dimension_semantics<arbitrary>], iteration_bounds = array<i64: 1>, scalar_prefetch = 0 : i64, scratch_operands = 4 : i64, tpu.core_type = #tpu.core_type<tc>, window_params = [{pipeline_mode = #tpu.pipeline_mode<synchronous>, transform_indices = @transform_0, window_bounds = array<i64: 8, 1152>}, {pipeline_mode = #tpu.pipeline_mode<synchronous>, transform_indices = @transform_1, window_bounds = array<i64: 384, 1024>}, {pipeline_mode = #tpu.pipeline_mode<synchronous>, transform_indices = @transform_2, window_bounds = array<i64: 1, 1024>}, {pipeline_mode = #tpu.pipeline_mode<synchronous>, transform_indices = @transform_3, window_bounds = array<i64: 1, 384>}, {pipeline_mode = #tpu.pipeline_mode<synchronous>, transform_indices = @transform_4, window_bounds = array<i64: 1, 512>}, {pipeline_mode = #tpu.pipeline_mode<synchronous>, transform_indices = @transform_5, window_bounds = array<i64: 1, 512>}, {pipeline_mode = #tpu.pipeline_mode<synchronous>, transform_indices = @transform_6, window_bounds = array<i64: 1, 128>}, {pipeline_mode = #tpu.pipeline_mode<synchronous>, transform_indices = @transform_7, window_bounds = array<i64: 1, 128>}, {pipeline_mode = #tpu.pipeline_mode<synchronous>, transform_indices = @transform_8, window_bounds = array<i64: 1, 128>}, {pipeline_mode = #tpu.pipeline_mode<synchronous>, transform_indices = @transform_9, window_bounds = array<i64: 1, 128>}, {}, {}, {}, {pipeline_mode = #tpu.pipeline_mode<synchronous>, transform_indices = @transform_13, window_bounds = array<i64: 8, 128>}]} {
    %c0_i32 = arith.constant 0 : i32
    %0 = tpu.memref_slice %arg18[%c0_i32] : memref<3x!tpu.dma_semaphore, #tpu.memory_space<semaphore_mem>> -> memref<1x!tpu.dma_semaphore, #tpu.memory_space<semaphore_mem>>
    %1 = tpu.memref_squeeze %0 : memref<1x!tpu.dma_semaphore, #tpu.memory_space<semaphore_mem>> -> memref<!tpu.dma_semaphore, #tpu.memory_space<semaphore_mem>>
    tpu.enqueue_dma source(%arg11 : memref<1088x384xbf16, #tpu.memory_space<any>>) target(%arg15 : memref<1088x384xbf16, #tpu.memory_space<vmem>>) target_semaphore(%1 : memref<!tpu.dma_semaphore, #tpu.memory_space<semaphore_mem>>)
    %c1_i32 = arith.constant 1 : i32
    %2 = tpu.memref_slice %arg18[%c1_i32] : memref<3x!tpu.dma_semaphore, #tpu.memory_space<semaphore_mem>> -> memref<1x!tpu.dma_semaphore, #tpu.memory_space<semaphore_mem>>
    %3 = tpu.memref_squeeze %2 : memref<1x!tpu.dma_semaphore, #tpu.memory_space<semaphore_mem>> -> memref<!tpu.dma_semaphore, #tpu.memory_space<semaphore_mem>>
    tpu.enqueue_dma source(%arg12 : memref<448x512xbf16, #tpu.memory_space<any>>) target(%arg16 : memref<448x512xbf16, #tpu.memory_space<vmem>>) target_semaphore(%3 : memref<!tpu.dma_semaphore, #tpu.memory_space<semaphore_mem>>)
    %c2_i32 = arith.constant 2 : i32
    %4 = tpu.memref_slice %arg18[%c2_i32] : memref<3x!tpu.dma_semaphore, #tpu.memory_space<semaphore_mem>> -> memref<1x!tpu.dma_semaphore, #tpu.memory_space<semaphore_mem>>
    %5 = tpu.memref_squeeze %4 : memref<1x!tpu.dma_semaphore, #tpu.memory_space<semaphore_mem>> -> memref<!tpu.dma_semaphore, #tpu.memory_space<semaphore_mem>>
    tpu.enqueue_dma source(%arg13 : memref<128x256xbf16, #tpu.memory_space<any>>) target(%arg17 : memref<128x256xbf16, #tpu.memory_space<vmem>>) target_semaphore(%5 : memref<!tpu.dma_semaphore, #tpu.memory_space<semaphore_mem>>)
    %c0 = arith.constant 0 : index
    %c0_0 = arith.constant 0 : index
    %6 = vector.load %arg2[%c0, %c0_0] : memref<384x1024xbf16, #tpu.memory_space<vmem>>, vector<384x1024xbf16>
    %c0_1 = arith.constant 0 : index
    %c0_2 = arith.constant 0 : index
    %7 = vector.load %arg3[%c0_1, %c0_2] : memref<1x1024xf32, #tpu.memory_space<vmem>>, vector<1x1024xf32>
    %8 = vector.shape_cast %7 : vector<1x1024xf32> to vector<1x1024xf32>
    %9 = vector.broadcast %8 : vector<1x1024xf32> to vector<8x1024xf32>
    %c0_3 = arith.constant 0 : index
    %c0_4 = arith.constant 0 : index
    %10 = vector.load %arg1[%c0_3, %c0_4] : memref<8x1152xf32, #tpu.memory_space<vmem>>, vector<8x384xf32>
    %11 = arith.truncf %10 : vector<8x384xf32> to vector<8x384xbf16>
    %cst = arith.constant dense<0.000000e+00> : vector<8x1024xf32>
    %12 = tpu.matmul %11, %6, %cst {dimension_numbers = #tpu.dot_dimension_numbers<[1], [0], [0], [1], [0, 0, 1, 1], [], []>} : vector<8x384xbf16>, vector<384x1024xbf16>, vector<8x1024xf32> -> vector<8x1024xf32>
    %13 = arith.addf %12, %9 : vector<8x1024xf32>
    %14 = arith.mulf %13, %13 : vector<8x1024xf32>
    %15 = arith.mulf %13, %14 : vector<8x1024xf32>
    %cst_5 = arith.constant 4.471500e-02 : f32
    %16 = vector.broadcast %cst_5 : f32 to vector<8x1024xf32>
    %17 = arith.mulf %16, %15 : vector<8x1024xf32>
    %18 = arith.addf %13, %17 : vector<8x1024xf32>
    %cst_6 = arith.constant 0.797884583 : f32
    %19 = vector.broadcast %cst_6 : f32 to vector<8x1024xf32>
    %20 = arith.mulf %19, %18 : vector<8x1024xf32>
    %21 = math.tanh %20 : vector<8x1024xf32>
    %cst_7 = arith.constant 1.000000e+00 : f32
    %22 = vector.broadcast %cst_7 : f32 to vector<8x1024xf32>
    %23 = arith.addf %22, %21 : vector<8x1024xf32>
    %cst_8 = arith.constant 5.000000e-01 : f32
    %24 = vector.broadcast %cst_8 : f32 to vector<8x1024xf32>
    %25 = arith.mulf %24, %23 : vector<8x1024xf32>
    %26 = arith.mulf %13, %25 : vector<8x1024xf32>
    %c0_9 = arith.constant 0 : index
    %c384 = arith.constant 384 : index
    %27 = vector.load %arg1[%c0_9, %c384] : memref<8x1152xf32, #tpu.memory_space<vmem>>, vector<8x384xf32>
    %28 = arith.truncf %27 : vector<8x384xf32> to vector<8x384xbf16>
    %cst_10 = arith.constant dense<0.000000e+00> : vector<8x1024xf32>
    %29 = tpu.matmul %28, %6, %cst_10 {dimension_numbers = #tpu.dot_dimension_numbers<[1], [0], [0], [1], [0, 0, 1, 1], [], []>} : vector<8x384xbf16>, vector<384x1024xbf16>, vector<8x1024xf32> -> vector<8x1024xf32>
    %30 = arith.addf %29, %9 : vector<8x1024xf32>
    %31 = arith.mulf %30, %30 : vector<8x1024xf32>
    %32 = arith.mulf %30, %31 : vector<8x1024xf32>
    %cst_11 = arith.constant 4.471500e-02 : f32
    %33 = vector.broadcast %cst_11 : f32 to vector<8x1024xf32>
    %34 = arith.mulf %33, %32 : vector<8x1024xf32>
    %35 = arith.addf %30, %34 : vector<8x1024xf32>
    %cst_12 = arith.constant 0.797884583 : f32
    %36 = vector.broadcast %cst_12 : f32 to vector<8x1024xf32>
    %37 = arith.mulf %36, %35 : vector<8x1024xf32>
    %38 = math.tanh %37 : vector<8x1024xf32>
    %cst_13 = arith.constant 1.000000e+00 : f32
    %39 = vector.broadcast %cst_13 : f32 to vector<8x1024xf32>
    %40 = arith.addf %39, %38 : vector<8x1024xf32>
    %cst_14 = arith.constant 5.000000e-01 : f32
    %41 = vector.broadcast %cst_14 : f32 to vector<8x1024xf32>
    %42 = arith.mulf %41, %40 : vector<8x1024xf32>
    %43 = arith.mulf %30, %42 : vector<8x1024xf32>
    %44 = arith.maximumf %26, %43 : vector<8x1024xf32>
    %c0_15 = arith.constant 0 : index
    %c768 = arith.constant 768 : index
    %45 = vector.load %arg1[%c0_15, %c768] : memref<8x1152xf32, #tpu.memory_space<vmem>>, vector<8x384xf32>
    %46 = arith.truncf %45 : vector<8x384xf32> to vector<8x384xbf16>
    %cst_16 = arith.constant dense<0.000000e+00> : vector<8x1024xf32>
    %47 = tpu.matmul %46, %6, %cst_16 {dimension_numbers = #tpu.dot_dimension_numbers<[1], [0], [0], [1], [0, 0, 1, 1], [], []>} : vector<8x384xbf16>, vector<384x1024xbf16>, vector<8x1024xf32> -> vector<8x1024xf32>
    %48 = arith.addf %47, %9 : vector<8x1024xf32>
    %49 = arith.mulf %48, %48 : vector<8x1024xf32>
    %50 = arith.mulf %48, %49 : vector<8x1024xf32>
    %cst_17 = arith.constant 4.471500e-02 : f32
    %51 = vector.broadcast %cst_17 : f32 to vector<8x1024xf32>
    %52 = arith.mulf %51, %50 : vector<8x1024xf32>
    %53 = arith.addf %48, %52 : vector<8x1024xf32>
    %cst_18 = arith.constant 0.797884583 : f32
    %54 = vector.broadcast %cst_18 : f32 to vector<8x1024xf32>
    %55 = arith.mulf %54, %53 : vector<8x1024xf32>
    %56 = math.tanh %55 : vector<8x1024xf32>
    %cst_19 = arith.constant 1.000000e+00 : f32
    %57 = vector.broadcast %cst_19 : f32 to vector<8x1024xf32>
    %58 = arith.addf %57, %56 : vector<8x1024xf32>
    %cst_20 = arith.constant 5.000000e-01 : f32
    %59 = vector.broadcast %cst_20 : f32 to vector<8x1024xf32>
    %60 = arith.mulf %59, %58 : vector<8x1024xf32>
    %61 = arith.mulf %48, %60 : vector<8x1024xf32>
    %62 = arith.maximumf %44, %61 : vector<8x1024xf32>
    %c0_i32_21 = arith.constant 0 : i32
    %63 = tpu.memref_slice %arg18[%c0_i32_21] : memref<3x!tpu.dma_semaphore, #tpu.memory_space<semaphore_mem>> -> memref<1x!tpu.dma_semaphore, #tpu.memory_space<semaphore_mem>>
    %64 = tpu.memref_squeeze %63 : memref<1x!tpu.dma_semaphore, #tpu.memory_space<semaphore_mem>> -> memref<!tpu.dma_semaphore, #tpu.memory_space<semaphore_mem>>
    tpu.wait_dma2 semaphore(%64 : memref<!tpu.dma_semaphore, #tpu.memory_space<semaphore_mem>>) src(%arg11 : memref<1088x384xbf16, #tpu.memory_space<any>>) dst(%arg15 : memref<1088x384xbf16, #tpu.memory_space<vmem>>)
    %c0_22 = arith.constant 0 : index
    %c0_23 = arith.constant 0 : index
    %65 = vector.load %arg4[%c0_22, %c0_23] : memref<1x384xf32, #tpu.memory_space<vmem>>, vector<1x384xf32>
    %66 = vector.shape_cast %65 : vector<1x384xf32> to vector<1x384xf32>
    %67 = vector.broadcast %66 : vector<1x384xf32> to vector<8x384xf32>
    %c64 = arith.constant 64 : index
    %c0_24 = arith.constant 0 : index
    %68 = vector.load %arg15[%c64, %c0_24] : memref<1088x384xbf16, #tpu.memory_space<vmem>>, vector<1024x384xbf16>
    %69 = arith.truncf %62 : vector<8x1024xf32> to vector<8x1024xbf16>
    %cst_25 = arith.constant dense<0.000000e+00> : vector<8x384xf32>
    %70 = tpu.matmul %69, %68, %cst_25 {dimension_numbers = #tpu.dot_dimension_numbers<[1], [0], [0], [1], [0, 0, 1, 1], [], []>} : vector<8x1024xbf16>, vector<1024x384xbf16>, vector<8x384xf32> -> vector<8x384xf32>
    %71 = arith.addf %70, %67 : vector<8x384xf32>
    %72 = arith.mulf %71, %71 : vector<8x384xf32>
    %73 = arith.mulf %71, %72 : vector<8x384xf32>
    %cst_26 = arith.constant 4.471500e-02 : f32
    %74 = vector.broadcast %cst_26 : f32 to vector<8x384xf32>
    %75 = arith.mulf %74, %73 : vector<8x384xf32>
    %76 = arith.addf %71, %75 : vector<8x384xf32>
    %cst_27 = arith.constant 0.797884583 : f32
    %77 = vector.broadcast %cst_27 : f32 to vector<8x384xf32>
    %78 = arith.mulf %77, %76 : vector<8x384xf32>
    %79 = math.tanh %78 : vector<8x384xf32>
    %cst_28 = arith.constant 1.000000e+00 : f32
    %80 = vector.broadcast %cst_28 : f32 to vector<8x384xf32>
    %81 = arith.addf %80, %79 : vector<8x384xf32>
    %cst_29 = arith.constant 5.000000e-01 : f32
    %82 = vector.broadcast %cst_29 : f32 to vector<8x384xf32>
    %83 = arith.mulf %82, %81 : vector<8x384xf32>
    %84 = arith.mulf %71, %83 : vector<8x384xf32>
    %c32 = arith.constant 32 : index
    %c0_30 = arith.constant 0 : index
    %85 = vector.load %arg15[%c32, %c0_30] : memref<1088x384xbf16, #tpu.memory_space<vmem>>, vector<1024x384xbf16>
    %86 = arith.truncf %62 : vector<8x1024xf32> to vector<8x1024xbf16>
    %cst_31 = arith.constant dense<0.000000e+00> : vector<8x384xf32>
    %87 = tpu.matmul %86, %85, %cst_31 {dimension_numbers = #tpu.dot_dimension_numbers<[1], [0], [0], [1], [0, 0, 1, 1], [], []>} : vector<8x1024xbf16>, vector<1024x384xbf16>, vector<8x384xf32> -> vector<8x384xf32>
    %88 = arith.addf %87, %67 : vector<8x384xf32>
    %89 = arith.mulf %88, %88 : vector<8x384xf32>
    %90 = arith.mulf %88, %89 : vector<8x384xf32>
    %cst_32 = arith.constant 4.471500e-02 : f32
    %91 = vector.broadcast %cst_32 : f32 to vector<8x384xf32>
    %92 = arith.mulf %91, %90 : vector<8x384xf32>
    %93 = arith.addf %88, %92 : vector<8x384xf32>
    %cst_33 = arith.constant 0.797884583 : f32
    %94 = vector.broadcast %cst_33 : f32 to vector<8x384xf32>
    %95 = arith.mulf %94, %93 : vector<8x384xf32>
    %96 = math.tanh %95 : vector<8x384xf32>
    %cst_34 = arith.constant 1.000000e+00 : f32
    %97 = vector.broadcast %cst_34 : f32 to vector<8x384xf32>
    %98 = arith.addf %97, %96 : vector<8x384xf32>
    %cst_35 = arith.constant 5.000000e-01 : f32
    %99 = vector.broadcast %cst_35 : f32 to vector<8x384xf32>
    %100 = arith.mulf %99, %98 : vector<8x384xf32>
    %101 = arith.mulf %88, %100 : vector<8x384xf32>
    %102 = arith.maximumf %84, %101 : vector<8x384xf32>
    %c0_36 = arith.constant 0 : index
    %c0_37 = arith.constant 0 : index
    %103 = vector.load %arg15[%c0_36, %c0_37] : memref<1088x384xbf16, #tpu.memory_space<vmem>>, vector<1024x384xbf16>
    %104 = arith.truncf %62 : vector<8x1024xf32> to vector<8x1024xbf16>
    %cst_38 = arith.constant dense<0.000000e+00> : vector<8x384xf32>
    %105 = tpu.matmul %104, %103, %cst_38 {dimension_numbers = #tpu.dot_dimension_numbers<[1], [0], [0], [1], [0, 0, 1, 1], [], []>} : vector<8x1024xbf16>, vector<1024x384xbf16>, vector<8x384xf32> -> vector<8x384xf32>
    %106 = arith.addf %105, %67 : vector<8x384xf32>
    %107 = arith.mulf %106, %106 : vector<8x384xf32>
    %108 = arith.mulf %106, %107 : vector<8x384xf32>
    %cst_39 = arith.constant 4.471500e-02 : f32
    %109 = vector.broadcast %cst_39 : f32 to vector<8x384xf32>
    %110 = arith.mulf %109, %108 : vector<8x384xf32>
    %111 = arith.addf %106, %110 : vector<8x384xf32>
    %cst_40 = arith.constant 0.797884583 : f32
    %112 = vector.broadcast %cst_40 : f32 to vector<8x384xf32>
    %113 = arith.mulf %112, %111 : vector<8x384xf32>
    %114 = math.tanh %113 : vector<8x384xf32>
    %cst_41 = arith.constant 1.000000e+00 : f32
    %115 = vector.broadcast %cst_41 : f32 to vector<8x384xf32>
    %116 = arith.addf %115, %114 : vector<8x384xf32>
    %cst_42 = arith.constant 5.000000e-01 : f32
    %117 = vector.broadcast %cst_42 : f32 to vector<8x384xf32>
    %118 = arith.mulf %117, %116 : vector<8x384xf32>
    %119 = arith.mulf %106, %118 : vector<8x384xf32>
    %120 = arith.maximumf %102, %119 : vector<8x384xf32>
    %c1_i32_43 = arith.constant 1 : i32
    %121 = tpu.memref_slice %arg18[%c1_i32_43] : memref<3x!tpu.dma_semaphore, #tpu.memory_space<semaphore_mem>> -> memref<1x!tpu.dma_semaphore, #tpu.memory_space<semaphore_mem>>
    %122 = tpu.memref_squeeze %121 : memref<1x!tpu.dma_semaphore, #tpu.memory_space<semaphore_mem>> -> memref<!tpu.dma_semaphore, #tpu.memory_space<semaphore_mem>>
    tpu.wait_dma2 semaphore(%122 : memref<!tpu.dma_semaphore, #tpu.memory_space<semaphore_mem>>) src(%arg12 : memref<448x512xbf16, #tpu.memory_space<any>>) dst(%arg16 : memref<448x512xbf16, #tpu.memory_space<vmem>>)
    %c0_44 = arith.constant 0 : index
    %c0_45 = arith.constant 0 : index
    %123 = vector.load %arg16[%c0_44, %c0_45] : memref<448x512xbf16, #tpu.memory_space<vmem>>, vector<64x512xbf16>
    %c64_46 = arith.constant 64 : index
    %c0_47 = arith.constant 0 : index
    %124 = vector.load %arg16[%c64_46, %c0_47] : memref<448x512xbf16, #tpu.memory_space<vmem>>, vector<128x512xbf16>
    %c192 = arith.constant 192 : index
    %c0_48 = arith.constant 0 : index
    %125 = vector.load %arg16[%c192, %c0_48] : memref<448x512xbf16, #tpu.memory_space<vmem>>, vector<128x512xbf16>
    %c320 = arith.constant 320 : index
    %c0_49 = arith.constant 0 : index
    %126 = vector.load %arg16[%c320, %c0_49] : memref<448x512xbf16, #tpu.memory_space<vmem>>, vector<128x512xbf16>
    %c0_50 = arith.constant 0 : index
    %c0_51 = arith.constant 0 : index
    %127 = vector.load %arg5[%c0_50, %c0_51] : memref<1x512xf32, #tpu.memory_space<vmem>>, vector<1x512xf32>
    %128 = vector.shape_cast %127 : vector<1x512xf32> to vector<1x512xf32>
    %129 = vector.broadcast %128 : vector<1x512xf32> to vector<8x512xf32>
    %c0_52 = arith.constant 0 : index
    %c0_53 = arith.constant 0 : index
    %130 = vector.load %arg6[%c0_52, %c0_53] : memref<1x512xf32, #tpu.memory_space<vmem>>, vector<1x512xf32>
    %131 = vector.shape_cast %130 : vector<1x512xf32> to vector<1x512xf32>
    %132 = vector.broadcast %131 : vector<1x512xf32> to vector<8x512xf32>
    %133 = vector.extract_strided_slice %120 {offsets = [0, 0], sizes = [8, 64], strides = [1, 1]} : vector<8x384xf32> to vector<8x64xf32>
    %134 = arith.truncf %133 : vector<8x64xf32> to vector<8x64xbf16>
    %cst_54 = arith.constant dense<0.000000e+00> : vector<8x512xf32>
    %135 = tpu.matmul %134, %123, %cst_54 {dimension_numbers = #tpu.dot_dimension_numbers<[1], [0], [0], [1], [0, 0, 1, 1], [], []>} : vector<8x64xbf16>, vector<64x512xbf16>, vector<8x512xf32> -> vector<8x512xf32>
    %136 = arith.addf %135, %129 : vector<8x512xf32>
    %137 = vector.extract_strided_slice %120 {offsets = [0, 64], sizes = [8, 64], strides = [1, 1]} : vector<8x384xf32> to vector<8x64xf32>
    %138 = arith.truncf %137 : vector<8x64xf32> to vector<8x64xbf16>
    %cst_55 = arith.constant dense<0.000000e+00> : vector<8x512xf32>
    %139 = tpu.matmul %138, %123, %cst_55 {dimension_numbers = #tpu.dot_dimension_numbers<[1], [0], [0], [1], [0, 0, 1, 1], [], []>} : vector<8x64xbf16>, vector<64x512xbf16>, vector<8x512xf32> -> vector<8x512xf32>
    %140 = arith.addf %139, %129 : vector<8x512xf32>
    %141 = vector.extract_strided_slice %120 {offsets = [0, 128], sizes = [8, 64], strides = [1, 1]} : vector<8x384xf32> to vector<8x64xf32>
    %142 = arith.truncf %141 : vector<8x64xf32> to vector<8x64xbf16>
    %cst_56 = arith.constant dense<0.000000e+00> : vector<8x512xf32>
    %143 = tpu.matmul %142, %123, %cst_56 {dimension_numbers = #tpu.dot_dimension_numbers<[1], [0], [0], [1], [0, 0, 1, 1], [], []>} : vector<8x64xbf16>, vector<64x512xbf16>, vector<8x512xf32> -> vector<8x512xf32>
    %144 = arith.addf %143, %129 : vector<8x512xf32>
    %145 = vector.extract_strided_slice %120 {offsets = [0, 192], sizes = [8, 64], strides = [1, 1]} : vector<8x384xf32> to vector<8x64xf32>
    %146 = arith.truncf %145 : vector<8x64xf32> to vector<8x64xbf16>
    %cst_57 = arith.constant dense<0.000000e+00> : vector<8x512xf32>
    %147 = tpu.matmul %146, %123, %cst_57 {dimension_numbers = #tpu.dot_dimension_numbers<[1], [0], [0], [1], [0, 0, 1, 1], [], []>} : vector<8x64xbf16>, vector<64x512xbf16>, vector<8x512xf32> -> vector<8x512xf32>
    %148 = arith.addf %147, %129 : vector<8x512xf32>
    %149 = vector.extract_strided_slice %120 {offsets = [0, 256], sizes = [8, 64], strides = [1, 1]} : vector<8x384xf32> to vector<8x64xf32>
    %150 = arith.truncf %149 : vector<8x64xf32> to vector<8x64xbf16>
    %cst_58 = arith.constant dense<0.000000e+00> : vector<8x512xf32>
    %151 = tpu.matmul %150, %123, %cst_58 {dimension_numbers = #tpu.dot_dimension_numbers<[1], [0], [0], [1], [0, 0, 1, 1], [], []>} : vector<8x64xbf16>, vector<64x512xbf16>, vector<8x512xf32> -> vector<8x512xf32>
    %152 = arith.addf %151, %129 : vector<8x512xf32>
    %153 = vector.extract_strided_slice %120 {offsets = [0, 320], sizes = [8, 64], strides = [1, 1]} : vector<8x384xf32> to vector<8x64xf32>
    %154 = arith.truncf %153 : vector<8x64xf32> to vector<8x64xbf16>
    %cst_59 = arith.constant dense<0.000000e+00> : vector<8x512xf32>
    %155 = tpu.matmul %154, %123, %cst_59 {dimension_numbers = #tpu.dot_dimension_numbers<[1], [0], [0], [1], [0, 0, 1, 1], [], []>} : vector<8x64xbf16>, vector<64x512xbf16>, vector<8x512xf32> -> vector<8x512xf32>
    %156 = arith.addf %155, %129 : vector<8x512xf32>
    %cst_60 = arith.constant 0.000000e+00 : f32
    %157 = vector.broadcast %cst_60 : f32 to vector<8x128xf32>
    %cst_61 = arith.constant 0.000000e+00 : f32
    %158 = vector.broadcast %cst_61 : f32 to vector<8x128xf32>
    %cst_62 = arith.constant 0.000000e+00 : f32
    %159 = vector.broadcast %cst_62 : f32 to vector<8x128xf32>
    %cst_63 = arith.constant 0.000000e+00 : f32
    %160 = vector.broadcast %cst_63 : f32 to vector<8x128xf32>
    %161 = arith.truncf %159 : vector<8x128xf32> to vector<8x128xbf16>
    %cst_64 = arith.constant dense<0.000000e+00> : vector<8x512xf32>
    %162 = tpu.matmul %161, %126, %cst_64 {dimension_numbers = #tpu.dot_dimension_numbers<[1], [0], [0], [1], [0, 0, 1, 1], [], []>} : vector<8x128xbf16>, vector<128x512xbf16>, vector<8x512xf32> -> vector<8x512xf32>
    %163 = arith.addf %162, %132 : vector<8x512xf32>
    %164 = arith.truncf %157 : vector<8x128xf32> to vector<8x128xbf16>
    %cst_65 = arith.constant dense<0.000000e+00> : vector<8x512xf32>
    %165 = tpu.matmul %164, %124, %cst_65 {dimension_numbers = #tpu.dot_dimension_numbers<[1], [0], [0], [1], [0, 0, 1, 1], [], []>} : vector<8x128xbf16>, vector<128x512xbf16>, vector<8x512xf32> -> vector<8x512xf32>
    %166 = arith.addf %165, %136 : vector<8x512xf32>
    %167 = vector.extract_strided_slice %166 {offsets = [0, 0], sizes = [8, 128], strides = [1, 1]} : vector<8x512xf32> to vector<8x128xf32>
    %168 = arith.negf %167 : vector<8x128xf32>
    %169 = math.exp %168 : vector<8x128xf32>
    %cst_66 = arith.constant 1.000000e+00 : f32
    %170 = vector.broadcast %cst_66 : f32 to vector<8x128xf32>
    %171 = arith.addf %170, %169 : vector<8x128xf32>
    %172 = arith.divf %170, %171 : vector<8x128xf32>
    %173 = vector.extract_strided_slice %166 {offsets = [0, 128], sizes = [8, 128], strides = [1, 1]} : vector<8x512xf32> to vector<8x128xf32>
    %174 = arith.negf %173 : vector<8x128xf32>
    %175 = math.exp %174 : vector<8x128xf32>
    %cst_67 = arith.constant 1.000000e+00 : f32
    %176 = vector.broadcast %cst_67 : f32 to vector<8x128xf32>
    %177 = arith.addf %176, %175 : vector<8x128xf32>
    %178 = arith.divf %176, %177 : vector<8x128xf32>
    %179 = vector.extract_strided_slice %166 {offsets = [0, 256], sizes = [8, 128], strides = [1, 1]} : vector<8x512xf32> to vector<8x128xf32>
    %180 = math.tanh %179 : vector<8x128xf32>
    %181 = vector.extract_strided_slice %166 {offsets = [0, 384], sizes = [8, 128], strides = [1, 1]} : vector<8x512xf32> to vector<8x128xf32>
    %182 = arith.negf %181 : vector<8x128xf32>
    %183 = math.exp %182 : vector<8x128xf32>
    %cst_68 = arith.constant 1.000000e+00 : f32
    %184 = vector.broadcast %cst_68 : f32 to vector<8x128xf32>
    %185 = arith.addf %184, %183 : vector<8x128xf32>
    %186 = arith.divf %184, %185 : vector<8x128xf32>
    %187 = arith.mulf %178, %158 : vector<8x128xf32>
    %188 = arith.mulf %172, %180 : vector<8x128xf32>
    %189 = arith.addf %187, %188 : vector<8x128xf32>
    %190 = math.tanh %189 : vector<8x128xf32>
    %191 = arith.mulf %186, %190 : vector<8x128xf32>
    %192 = arith.truncf %191 : vector<8x128xf32> to vector<8x128xbf16>
    %cst_69 = arith.constant dense<0.000000e+00> : vector<8x512xf32>
    %193 = tpu.matmul %192, %125, %cst_69 {dimension_numbers = #tpu.dot_dimension_numbers<[1], [0], [0], [1], [0, 0, 1, 1], [], []>} : vector<8x128xbf16>, vector<128x512xbf16>, vector<8x512xf32> -> vector<8x512xf32>
    %194 = arith.addf %193, %163 : vector<8x512xf32>
    %195 = vector.extract_strided_slice %194 {offsets = [0, 0], sizes = [8, 128], strides = [1, 1]} : vector<8x512xf32> to vector<8x128xf32>
    %196 = arith.negf %195 : vector<8x128xf32>
    %197 = math.exp %196 : vector<8x128xf32>
    %cst_70 = arith.constant 1.000000e+00 : f32
    %198 = vector.broadcast %cst_70 : f32 to vector<8x128xf32>
    %199 = arith.addf %198, %197 : vector<8x128xf32>
    %200 = arith.divf %198, %199 : vector<8x128xf32>
    %201 = vector.extract_strided_slice %194 {offsets = [0, 128], sizes = [8, 128], strides = [1, 1]} : vector<8x512xf32> to vector<8x128xf32>
    %202 = arith.negf %201 : vector<8x128xf32>
    %203 = math.exp %202 : vector<8x128xf32>
    %cst_71 = arith.constant 1.000000e+00 : f32
    %204 = vector.broadcast %cst_71 : f32 to vector<8x128xf32>
    %205 = arith.addf %204, %203 : vector<8x128xf32>
    %206 = arith.divf %204, %205 : vector<8x128xf32>
    %207 = vector.extract_strided_slice %194 {offsets = [0, 256], sizes = [8, 128], strides = [1, 1]} : vector<8x512xf32> to vector<8x128xf32>
    %208 = math.tanh %207 : vector<8x128xf32>
    %209 = vector.extract_strided_slice %194 {offsets = [0, 384], sizes = [8, 128], strides = [1, 1]} : vector<8x512xf32> to vector<8x128xf32>
    %210 = arith.negf %209 : vector<8x128xf32>
    %211 = math.exp %210 : vector<8x128xf32>
    %cst_72 = arith.constant 1.000000e+00 : f32
    %212 = vector.broadcast %cst_72 : f32 to vector<8x128xf32>
    %213 = arith.addf %212, %211 : vector<8x128xf32>
    %214 = arith.divf %212, %213 : vector<8x128xf32>
    %215 = arith.mulf %206, %160 : vector<8x128xf32>
    %216 = arith.mulf %200, %208 : vector<8x128xf32>
    %217 = arith.addf %215, %216 : vector<8x128xf32>
    %218 = math.tanh %217 : vector<8x128xf32>
    %219 = arith.mulf %214, %218 : vector<8x128xf32>
    %220 = arith.truncf %219 : vector<8x128xf32> to vector<8x128xbf16>
    %cst_73 = arith.constant dense<0.000000e+00> : vector<8x512xf32>
    %221 = tpu.matmul %220, %126, %cst_73 {dimension_numbers = #tpu.dot_dimension_numbers<[1], [0], [0], [1], [0, 0, 1, 1], [], []>} : vector<8x128xbf16>, vector<128x512xbf16>, vector<8x512xf32> -> vector<8x512xf32>
    %222 = arith.addf %221, %132 : vector<8x512xf32>
    %223 = arith.truncf %191 : vector<8x128xf32> to vector<8x128xbf16>
    %cst_74 = arith.constant dense<0.000000e+00> : vector<8x512xf32>
    %224 = tpu.matmul %223, %124, %cst_74 {dimension_numbers = #tpu.dot_dimension_numbers<[1], [0], [0], [1], [0, 0, 1, 1], [], []>} : vector<8x128xbf16>, vector<128x512xbf16>, vector<8x512xf32> -> vector<8x512xf32>
    %225 = arith.addf %224, %140 : vector<8x512xf32>
    %226 = vector.extract_strided_slice %225 {offsets = [0, 0], sizes = [8, 128], strides = [1, 1]} : vector<8x512xf32> to vector<8x128xf32>
    %227 = arith.negf %226 : vector<8x128xf32>
    %228 = math.exp %227 : vector<8x128xf32>
    %cst_75 = arith.constant 1.000000e+00 : f32
    %229 = vector.broadcast %cst_75 : f32 to vector<8x128xf32>
    %230 = arith.addf %229, %228 : vector<8x128xf32>
    %231 = arith.divf %229, %230 : vector<8x128xf32>
    %232 = vector.extract_strided_slice %225 {offsets = [0, 128], sizes = [8, 128], strides = [1, 1]} : vector<8x512xf32> to vector<8x128xf32>
    %233 = arith.negf %232 : vector<8x128xf32>
    %234 = math.exp %233 : vector<8x128xf32>
    %cst_76 = arith.constant 1.000000e+00 : f32
    %235 = vector.broadcast %cst_76 : f32 to vector<8x128xf32>
    %236 = arith.addf %235, %234 : vector<8x128xf32>
    %237 = arith.divf %235, %236 : vector<8x128xf32>
    %238 = vector.extract_strided_slice %225 {offsets = [0, 256], sizes = [8, 128], strides = [1, 1]} : vector<8x512xf32> to vector<8x128xf32>
    %239 = math.tanh %238 : vector<8x128xf32>
    %240 = vector.extract_strided_slice %225 {offsets = [0, 384], sizes = [8, 128], strides = [1, 1]} : vector<8x512xf32> to vector<8x128xf32>
    %241 = arith.negf %240 : vector<8x128xf32>
    %242 = math.exp %241 : vector<8x128xf32>
    %cst_77 = arith.constant 1.000000e+00 : f32
    %243 = vector.broadcast %cst_77 : f32 to vector<8x128xf32>
    %244 = arith.addf %243, %242 : vector<8x128xf32>
    %245 = arith.divf %243, %244 : vector<8x128xf32>
    %246 = arith.mulf %237, %189 : vector<8x128xf32>
    %247 = arith.mulf %231, %239 : vector<8x128xf32>
    %248 = arith.addf %246, %247 : vector<8x128xf32>
    %249 = math.tanh %248 : vector<8x128xf32>
    %250 = arith.mulf %245, %249 : vector<8x128xf32>
    %251 = arith.truncf %250 : vector<8x128xf32> to vector<8x128xbf16>
    %cst_78 = arith.constant dense<0.000000e+00> : vector<8x512xf32>
    %252 = tpu.matmul %251, %125, %cst_78 {dimension_numbers = #tpu.dot_dimension_numbers<[1], [0], [0], [1], [0, 0, 1, 1], [], []>} : vector<8x128xbf16>, vector<128x512xbf16>, vector<8x512xf32> -> vector<8x512xf32>
    %253 = arith.addf %252, %222 : vector<8x512xf32>
    %254 = vector.extract_strided_slice %253 {offsets = [0, 0], sizes = [8, 128], strides = [1, 1]} : vector<8x512xf32> to vector<8x128xf32>
    %255 = arith.negf %254 : vector<8x128xf32>
    %256 = math.exp %255 : vector<8x128xf32>
    %cst_79 = arith.constant 1.000000e+00 : f32
    %257 = vector.broadcast %cst_79 : f32 to vector<8x128xf32>
    %258 = arith.addf %257, %256 : vector<8x128xf32>
    %259 = arith.divf %257, %258 : vector<8x128xf32>
    %260 = vector.extract_strided_slice %253 {offsets = [0, 128], sizes = [8, 128], strides = [1, 1]} : vector<8x512xf32> to vector<8x128xf32>
    %261 = arith.negf %260 : vector<8x128xf32>
    %262 = math.exp %261 : vector<8x128xf32>
    %cst_80 = arith.constant 1.000000e+00 : f32
    %263 = vector.broadcast %cst_80 : f32 to vector<8x128xf32>
    %264 = arith.addf %263, %262 : vector<8x128xf32>
    %265 = arith.divf %263, %264 : vector<8x128xf32>
    %266 = vector.extract_strided_slice %253 {offsets = [0, 256], sizes = [8, 128], strides = [1, 1]} : vector<8x512xf32> to vector<8x128xf32>
    %267 = math.tanh %266 : vector<8x128xf32>
    %268 = vector.extract_strided_slice %253 {offsets = [0, 384], sizes = [8, 128], strides = [1, 1]} : vector<8x512xf32> to vector<8x128xf32>
    %269 = arith.negf %268 : vector<8x128xf32>
    %270 = math.exp %269 : vector<8x128xf32>
    %cst_81 = arith.constant 1.000000e+00 : f32
    %271 = vector.broadcast %cst_81 : f32 to vector<8x128xf32>
    %272 = arith.addf %271, %270 : vector<8x128xf32>
    %273 = arith.divf %271, %272 : vector<8x128xf32>
    %274 = arith.mulf %265, %217 : vector<8x128xf32>
    %275 = arith.mulf %259, %267 : vector<8x128xf32>
    %276 = arith.addf %274, %275 : vector<8x128xf32>
    %277 = math.tanh %276 : vector<8x128xf32>
    %278 = arith.mulf %273, %277 : vector<8x128xf32>
    %279 = arith.truncf %278 : vector<8x128xf32> to vector<8x128xbf16>
    %cst_82 = arith.constant dense<0.000000e+00> : vector<8x512xf32>
    %280 = tpu.matmul %279, %126, %cst_82 {dimension_numbers = #tpu.dot_dimension_numbers<[1], [0], [0], [1], [0, 0, 1, 1], [], []>} : vector<8x128xbf16>, vector<128x512xbf16>, vector<8x512xf32> -> vector<8x512xf32>
    %281 = arith.addf %280, %132 : vector<8x512xf32>
    %282 = arith.truncf %250 : vector<8x128xf32> to vector<8x128xbf16>
    %cst_83 = arith.constant dense<0.000000e+00> : vector<8x512xf32>
    %283 = tpu.matmul %282, %124, %cst_83 {dimension_numbers = #tpu.dot_dimension_numbers<[1], [0], [0], [1], [0, 0, 1, 1], [], []>} : vector<8x128xbf16>, vector<128x512xbf16>, vector<8x512xf32> -> vector<8x512xf32>
    %284 = arith.addf %283, %144 : vector<8x512xf32>
    %285 = vector.extract_strided_slice %284 {offsets = [0, 0], sizes = [8, 128], strides = [1, 1]} : vector<8x512xf32> to vector<8x128xf32>
    %286 = arith.negf %285 : vector<8x128xf32>
    %287 = math.exp %286 : vector<8x128xf32>
    %cst_84 = arith.constant 1.000000e+00 : f32
    %288 = vector.broadcast %cst_84 : f32 to vector<8x128xf32>
    %289 = arith.addf %288, %287 : vector<8x128xf32>
    %290 = arith.divf %288, %289 : vector<8x128xf32>
    %291 = vector.extract_strided_slice %284 {offsets = [0, 128], sizes = [8, 128], strides = [1, 1]} : vector<8x512xf32> to vector<8x128xf32>
    %292 = arith.negf %291 : vector<8x128xf32>
    %293 = math.exp %292 : vector<8x128xf32>
    %cst_85 = arith.constant 1.000000e+00 : f32
    %294 = vector.broadcast %cst_85 : f32 to vector<8x128xf32>
    %295 = arith.addf %294, %293 : vector<8x128xf32>
    %296 = arith.divf %294, %295 : vector<8x128xf32>
    %297 = vector.extract_strided_slice %284 {offsets = [0, 256], sizes = [8, 128], strides = [1, 1]} : vector<8x512xf32> to vector<8x128xf32>
    %298 = math.tanh %297 : vector<8x128xf32>
    %299 = vector.extract_strided_slice %284 {offsets = [0, 384], sizes = [8, 128], strides = [1, 1]} : vector<8x512xf32> to vector<8x128xf32>
    %300 = arith.negf %299 : vector<8x128xf32>
    %301 = math.exp %300 : vector<8x128xf32>
    %cst_86 = arith.constant 1.000000e+00 : f32
    %302 = vector.broadcast %cst_86 : f32 to vector<8x128xf32>
    %303 = arith.addf %302, %301 : vector<8x128xf32>
    %304 = arith.divf %302, %303 : vector<8x128xf32>
    %305 = arith.mulf %296, %248 : vector<8x128xf32>
    %306 = arith.mulf %290, %298 : vector<8x128xf32>
    %307 = arith.addf %305, %306 : vector<8x128xf32>
    %308 = math.tanh %307 : vector<8x128xf32>
    %309 = arith.mulf %304, %308 : vector<8x128xf32>
    %310 = arith.truncf %309 : vector<8x128xf32> to vector<8x128xbf16>
    %cst_87 = arith.constant dense<0.000000e+00> : vector<8x512xf32>
    %311 = tpu.matmul %310, %125, %cst_87 {dimension_numbers = #tpu.dot_dimension_numbers<[1], [0], [0], [1], [0, 0, 1, 1], [], []>} : vector<8x128xbf16>, vector<128x512xbf16>, vector<8x512xf32> -> vector<8x512xf32>
    %312 = arith.addf %311, %281 : vector<8x512xf32>
    %313 = vector.extract_strided_slice %312 {offsets = [0, 0], sizes = [8, 128], strides = [1, 1]} : vector<8x512xf32> to vector<8x128xf32>
    %314 = arith.negf %313 : vector<8x128xf32>
    %315 = math.exp %314 : vector<8x128xf32>
    %cst_88 = arith.constant 1.000000e+00 : f32
    %316 = vector.broadcast %cst_88 : f32 to vector<8x128xf32>
    %317 = arith.addf %316, %315 : vector<8x128xf32>
    %318 = arith.divf %316, %317 : vector<8x128xf32>
    %319 = vector.extract_strided_slice %312 {offsets = [0, 128], sizes = [8, 128], strides = [1, 1]} : vector<8x512xf32> to vector<8x128xf32>
    %320 = arith.negf %319 : vector<8x128xf32>
    %321 = math.exp %320 : vector<8x128xf32>
    %cst_89 = arith.constant 1.000000e+00 : f32
    %322 = vector.broadcast %cst_89 : f32 to vector<8x128xf32>
    %323 = arith.addf %322, %321 : vector<8x128xf32>
    %324 = arith.divf %322, %323 : vector<8x128xf32>
    %325 = vector.extract_strided_slice %312 {offsets = [0, 256], sizes = [8, 128], strides = [1, 1]} : vector<8x512xf32> to vector<8x128xf32>
    %326 = math.tanh %325 : vector<8x128xf32>
    %327 = vector.extract_strided_slice %312 {offsets = [0, 384], sizes = [8, 128], strides = [1, 1]} : vector<8x512xf32> to vector<8x128xf32>
    %328 = arith.negf %327 : vector<8x128xf32>
    %329 = math.exp %328 : vector<8x128xf32>
    %cst_90 = arith.constant 1.000000e+00 : f32
    %330 = vector.broadcast %cst_90 : f32 to vector<8x128xf32>
    %331 = arith.addf %330, %329 : vector<8x128xf32>
    %332 = arith.divf %330, %331 : vector<8x128xf32>
    %333 = arith.mulf %324, %276 : vector<8x128xf32>
    %334 = arith.mulf %318, %326 : vector<8x128xf32>
    %335 = arith.addf %333, %334 : vector<8x128xf32>
    %336 = math.tanh %335 : vector<8x128xf32>
    %337 = arith.mulf %332, %336 : vector<8x128xf32>
    %338 = arith.truncf %337 : vector<8x128xf32> to vector<8x128xbf16>
    %cst_91 = arith.constant dense<0.000000e+00> : vector<8x512xf32>
    %339 = tpu.matmul %338, %126, %cst_91 {dimension_numbers = #tpu.dot_dimension_numbers<[1], [0], [0], [1], [0, 0, 1, 1], [], []>} : vector<8x128xbf16>, vector<128x512xbf16>, vector<8x512xf32> -> vector<8x512xf32>
    %340 = arith.addf %339, %132 : vector<8x512xf32>
    %341 = arith.truncf %309 : vector<8x128xf32> to vector<8x128xbf16>
    %cst_92 = arith.constant dense<0.000000e+00> : vector<8x512xf32>
    %342 = tpu.matmul %341, %124, %cst_92 {dimension_numbers = #tpu.dot_dimension_numbers<[1], [0], [0], [1], [0, 0, 1, 1], [], []>} : vector<8x128xbf16>, vector<128x512xbf16>, vector<8x512xf32> -> vector<8x512xf32>
    %343 = arith.addf %342, %148 : vector<8x512xf32>
    %344 = vector.extract_strided_slice %343 {offsets = [0, 0], sizes = [8, 128], strides = [1, 1]} : vector<8x512xf32> to vector<8x128xf32>
    %345 = arith.negf %344 : vector<8x128xf32>
    %346 = math.exp %345 : vector<8x128xf32>
    %cst_93 = arith.constant 1.000000e+00 : f32
    %347 = vector.broadcast %cst_93 : f32 to vector<8x128xf32>
    %348 = arith.addf %347, %346 : vector<8x128xf32>
    %349 = arith.divf %347, %348 : vector<8x128xf32>
    %350 = vector.extract_strided_slice %343 {offsets = [0, 128], sizes = [8, 128], strides = [1, 1]} : vector<8x512xf32> to vector<8x128xf32>
    %351 = arith.negf %350 : vector<8x128xf32>
    %352 = math.exp %351 : vector<8x128xf32>
    %cst_94 = arith.constant 1.000000e+00 : f32
    %353 = vector.broadcast %cst_94 : f32 to vector<8x128xf32>
    %354 = arith.addf %353, %352 : vector<8x128xf32>
    %355 = arith.divf %353, %354 : vector<8x128xf32>
    %356 = vector.extract_strided_slice %343 {offsets = [0, 256], sizes = [8, 128], strides = [1, 1]} : vector<8x512xf32> to vector<8x128xf32>
    %357 = math.tanh %356 : vector<8x128xf32>
    %358 = vector.extract_strided_slice %343 {offsets = [0, 384], sizes = [8, 128], strides = [1, 1]} : vector<8x512xf32> to vector<8x128xf32>
    %359 = arith.negf %358 : vector<8x128xf32>
    %360 = math.exp %359 : vector<8x128xf32>
    %cst_95 = arith.constant 1.000000e+00 : f32
    %361 = vector.broadcast %cst_95 : f32 to vector<8x128xf32>
    %362 = arith.addf %361, %360 : vector<8x128xf32>
    %363 = arith.divf %361, %362 : vector<8x128xf32>
    %364 = arith.mulf %355, %307 : vector<8x128xf32>
    %365 = arith.mulf %349, %357 : vector<8x128xf32>
    %366 = arith.addf %364, %365 : vector<8x128xf32>
    %367 = math.tanh %366 : vector<8x128xf32>
    %368 = arith.mulf %363, %367 : vector<8x128xf32>
    %369 = arith.truncf %368 : vector<8x128xf32> to vector<8x128xbf16>
    %cst_96 = arith.constant dense<0.000000e+00> : vector<8x512xf32>
    %370 = tpu.matmul %369, %125, %cst_96 {dimension_numbers = #tpu.dot_dimension_numbers<[1], [0], [0], [1], [0, 0, 1, 1], [], []>} : vector<8x128xbf16>, vector<128x512xbf16>, vector<8x512xf32> -> vector<8x512xf32>
    %371 = arith.addf %370, %340 : vector<8x512xf32>
    %372 = vector.extract_strided_slice %371 {offsets = [0, 0], sizes = [8, 128], strides = [1, 1]} : vector<8x512xf32> to vector<8x128xf32>
    %373 = arith.negf %372 : vector<8x128xf32>
    %374 = math.exp %373 : vector<8x128xf32>
    %cst_97 = arith.constant 1.000000e+00 : f32
    %375 = vector.broadcast %cst_97 : f32 to vector<8x128xf32>
    %376 = arith.addf %375, %374 : vector<8x128xf32>
    %377 = arith.divf %375, %376 : vector<8x128xf32>
    %378 = vector.extract_strided_slice %371 {offsets = [0, 128], sizes = [8, 128], strides = [1, 1]} : vector<8x512xf32> to vector<8x128xf32>
    %379 = arith.negf %378 : vector<8x128xf32>
    %380 = math.exp %379 : vector<8x128xf32>
    %cst_98 = arith.constant 1.000000e+00 : f32
    %381 = vector.broadcast %cst_98 : f32 to vector<8x128xf32>
    %382 = arith.addf %381, %380 : vector<8x128xf32>
    %383 = arith.divf %381, %382 : vector<8x128xf32>
    %384 = vector.extract_strided_slice %371 {offsets = [0, 256], sizes = [8, 128], strides = [1, 1]} : vector<8x512xf32> to vector<8x128xf32>
    %385 = math.tanh %384 : vector<8x128xf32>
    %386 = vector.extract_strided_slice %371 {offsets = [0, 384], sizes = [8, 128], strides = [1, 1]} : vector<8x512xf32> to vector<8x128xf32>
    %387 = arith.negf %386 : vector<8x128xf32>
    %388 = math.exp %387 : vector<8x128xf32>
    %cst_99 = arith.constant 1.000000e+00 : f32
    %389 = vector.broadcast %cst_99 : f32 to vector<8x128xf32>
    %390 = arith.addf %389, %388 : vector<8x128xf32>
    %391 = arith.divf %389, %390 : vector<8x128xf32>
    %392 = arith.mulf %383, %335 : vector<8x128xf32>
    %393 = arith.mulf %377, %385 : vector<8x128xf32>
    %394 = arith.addf %392, %393 : vector<8x128xf32>
    %395 = math.tanh %394 : vector<8x128xf32>
    %396 = arith.mulf %391, %395 : vector<8x128xf32>
    %397 = arith.truncf %396 : vector<8x128xf32> to vector<8x128xbf16>
    %cst_100 = arith.constant dense<0.000000e+00> : vector<8x512xf32>
    %398 = tpu.matmul %397, %126, %cst_100 {dimension_numbers = #tpu.dot_dimension_numbers<[1], [0], [0], [1], [0, 0, 1, 1], [], []>} : vector<8x128xbf16>, vector<128x512xbf16>, vector<8x512xf32> -> vector<8x512xf32>
    %399 = arith.addf %398, %132 : vector<8x512xf32>
    %400 = arith.truncf %368 : vector<8x128xf32> to vector<8x128xbf16>
    %cst_101 = arith.constant dense<0.000000e+00> : vector<8x512xf32>
    %401 = tpu.matmul %400, %124, %cst_101 {dimension_numbers = #tpu.dot_dimension_numbers<[1], [0], [0], [1], [0, 0, 1, 1], [], []>} : vector<8x128xbf16>, vector<128x512xbf16>, vector<8x512xf32> -> vector<8x512xf32>
    %402 = arith.addf %401, %152 : vector<8x512xf32>
    %403 = vector.extract_strided_slice %402 {offsets = [0, 0], sizes = [8, 128], strides = [1, 1]} : vector<8x512xf32> to vector<8x128xf32>
    %404 = arith.negf %403 : vector<8x128xf32>
    %405 = math.exp %404 : vector<8x128xf32>
    %cst_102 = arith.constant 1.000000e+00 : f32
    %406 = vector.broadcast %cst_102 : f32 to vector<8x128xf32>
    %407 = arith.addf %406, %405 : vector<8x128xf32>
    %408 = arith.divf %406, %407 : vector<8x128xf32>
    %409 = vector.extract_strided_slice %402 {offsets = [0, 128], sizes = [8, 128], strides = [1, 1]} : vector<8x512xf32> to vector<8x128xf32>
    %410 = arith.negf %409 : vector<8x128xf32>
    %411 = math.exp %410 : vector<8x128xf32>
    %cst_103 = arith.constant 1.000000e+00 : f32
    %412 = vector.broadcast %cst_103 : f32 to vector<8x128xf32>
    %413 = arith.addf %412, %411 : vector<8x128xf32>
    %414 = arith.divf %412, %413 : vector<8x128xf32>
    %415 = vector.extract_strided_slice %402 {offsets = [0, 256], sizes = [8, 128], strides = [1, 1]} : vector<8x512xf32> to vector<8x128xf32>
    %416 = math.tanh %415 : vector<8x128xf32>
    %417 = vector.extract_strided_slice %402 {offsets = [0, 384], sizes = [8, 128], strides = [1, 1]} : vector<8x512xf32> to vector<8x128xf32>
    %418 = arith.negf %417 : vector<8x128xf32>
    %419 = math.exp %418 : vector<8x128xf32>
    %cst_104 = arith.constant 1.000000e+00 : f32
    %420 = vector.broadcast %cst_104 : f32 to vector<8x128xf32>
    %421 = arith.addf %420, %419 : vector<8x128xf32>
    %422 = arith.divf %420, %421 : vector<8x128xf32>
    %423 = arith.mulf %414, %366 : vector<8x128xf32>
    %424 = arith.mulf %408, %416 : vector<8x128xf32>
    %425 = arith.addf %423, %424 : vector<8x128xf32>
    %426 = math.tanh %425 : vector<8x128xf32>
    %427 = arith.mulf %422, %426 : vector<8x128xf32>
    %428 = arith.truncf %427 : vector<8x128xf32> to vector<8x128xbf16>
    %cst_105 = arith.constant dense<0.000000e+00> : vector<8x512xf32>
    %429 = tpu.matmul %428, %125, %cst_105 {dimension_numbers = #tpu.dot_dimension_numbers<[1], [0], [0], [1], [0, 0, 1, 1], [], []>} : vector<8x128xbf16>, vector<128x512xbf16>, vector<8x512xf32> -> vector<8x512xf32>
    %430 = arith.addf %429, %399 : vector<8x512xf32>
    %431 = vector.extract_strided_slice %430 {offsets = [0, 0], sizes = [8, 128], strides = [1, 1]} : vector<8x512xf32> to vector<8x128xf32>
    %432 = arith.negf %431 : vector<8x128xf32>
    %433 = math.exp %432 : vector<8x128xf32>
    %cst_106 = arith.constant 1.000000e+00 : f32
    %434 = vector.broadcast %cst_106 : f32 to vector<8x128xf32>
    %435 = arith.addf %434, %433 : vector<8x128xf32>
    %436 = arith.divf %434, %435 : vector<8x128xf32>
    %437 = vector.extract_strided_slice %430 {offsets = [0, 128], sizes = [8, 128], strides = [1, 1]} : vector<8x512xf32> to vector<8x128xf32>
    %438 = arith.negf %437 : vector<8x128xf32>
    %439 = math.exp %438 : vector<8x128xf32>
    %cst_107 = arith.constant 1.000000e+00 : f32
    %440 = vector.broadcast %cst_107 : f32 to vector<8x128xf32>
    %441 = arith.addf %440, %439 : vector<8x128xf32>
    %442 = arith.divf %440, %441 : vector<8x128xf32>
    %443 = vector.extract_strided_slice %430 {offsets = [0, 256], sizes = [8, 128], strides = [1, 1]} : vector<8x512xf32> to vector<8x128xf32>
    %444 = math.tanh %443 : vector<8x128xf32>
    %445 = vector.extract_strided_slice %430 {offsets = [0, 384], sizes = [8, 128], strides = [1, 1]} : vector<8x512xf32> to vector<8x128xf32>
    %446 = arith.negf %445 : vector<8x128xf32>
    %447 = math.exp %446 : vector<8x128xf32>
    %cst_108 = arith.constant 1.000000e+00 : f32
    %448 = vector.broadcast %cst_108 : f32 to vector<8x128xf32>
    %449 = arith.addf %448, %447 : vector<8x128xf32>
    %450 = arith.divf %448, %449 : vector<8x128xf32>
    %451 = arith.mulf %442, %394 : vector<8x128xf32>
    %452 = arith.mulf %436, %444 : vector<8x128xf32>
    %453 = arith.addf %451, %452 : vector<8x128xf32>
    %454 = math.tanh %453 : vector<8x128xf32>
    %455 = arith.mulf %450, %454 : vector<8x128xf32>
    %456 = arith.truncf %455 : vector<8x128xf32> to vector<8x128xbf16>
    %cst_109 = arith.constant dense<0.000000e+00> : vector<8x512xf32>
    %457 = tpu.matmul %456, %126, %cst_109 {dimension_numbers = #tpu.dot_dimension_numbers<[1], [0], [0], [1], [0, 0, 1, 1], [], []>} : vector<8x128xbf16>, vector<128x512xbf16>, vector<8x512xf32> -> vector<8x512xf32>
    %458 = arith.addf %457, %132 : vector<8x512xf32>
    %459 = arith.truncf %427 : vector<8x128xf32> to vector<8x128xbf16>
    %cst_110 = arith.constant dense<0.000000e+00> : vector<8x512xf32>
    %460 = tpu.matmul %459, %124, %cst_110 {dimension_numbers = #tpu.dot_dimension_numbers<[1], [0], [0], [1], [0, 0, 1, 1], [], []>} : vector<8x128xbf16>, vector<128x512xbf16>, vector<8x512xf32> -> vector<8x512xf32>
    %461 = arith.addf %460, %156 : vector<8x512xf32>
    %462 = vector.extract_strided_slice %461 {offsets = [0, 0], sizes = [8, 128], strides = [1, 1]} : vector<8x512xf32> to vector<8x128xf32>
    %463 = arith.negf %462 : vector<8x128xf32>
    %464 = math.exp %463 : vector<8x128xf32>
    %cst_111 = arith.constant 1.000000e+00 : f32
    %465 = vector.broadcast %cst_111 : f32 to vector<8x128xf32>
    %466 = arith.addf %465, %464 : vector<8x128xf32>
    %467 = arith.divf %465, %466 : vector<8x128xf32>
    %468 = vector.extract_strided_slice %461 {offsets = [0, 128], sizes = [8, 128], strides = [1, 1]} : vector<8x512xf32> to vector<8x128xf32>
    %469 = arith.negf %468 : vector<8x128xf32>
    %470 = math.exp %469 : vector<8x128xf32>
    %cst_112 = arith.constant 1.000000e+00 : f32
    %471 = vector.broadcast %cst_112 : f32 to vector<8x128xf32>
    %472 = arith.addf %471, %470 : vector<8x128xf32>
    %473 = arith.divf %471, %472 : vector<8x128xf32>
    %474 = vector.extract_strided_slice %461 {offsets = [0, 256], sizes = [8, 128], strides = [1, 1]} : vector<8x512xf32> to vector<8x128xf32>
    %475 = math.tanh %474 : vector<8x128xf32>
    %476 = vector.extract_strided_slice %461 {offsets = [0, 384], sizes = [8, 128], strides = [1, 1]} : vector<8x512xf32> to vector<8x128xf32>
    %477 = arith.negf %476 : vector<8x128xf32>
    %478 = math.exp %477 : vector<8x128xf32>
    %cst_113 = arith.constant 1.000000e+00 : f32
    %479 = vector.broadcast %cst_113 : f32 to vector<8x128xf32>
    %480 = arith.addf %479, %478 : vector<8x128xf32>
    %481 = arith.divf %479, %480 : vector<8x128xf32>
    %482 = arith.mulf %473, %425 : vector<8x128xf32>
    %483 = arith.mulf %467, %475 : vector<8x128xf32>
    %484 = arith.addf %482, %483 : vector<8x128xf32>
    %485 = math.tanh %484 : vector<8x128xf32>
    %486 = arith.mulf %481, %485 : vector<8x128xf32>
    %487 = arith.truncf %486 : vector<8x128xf32> to vector<8x128xbf16>
    %cst_114 = arith.constant dense<0.000000e+00> : vector<8x512xf32>
    %488 = tpu.matmul %487, %125, %cst_114 {dimension_numbers = #tpu.dot_dimension_numbers<[1], [0], [0], [1], [0, 0, 1, 1], [], []>} : vector<8x128xbf16>, vector<128x512xbf16>, vector<8x512xf32> -> vector<8x512xf32>
    %489 = arith.addf %488, %458 : vector<8x512xf32>
    %490 = vector.extract_strided_slice %489 {offsets = [0, 0], sizes = [8, 128], strides = [1, 1]} : vector<8x512xf32> to vector<8x128xf32>
    %491 = arith.negf %490 : vector<8x128xf32>
    %492 = math.exp %491 : vector<8x128xf32>
    %cst_115 = arith.constant 1.000000e+00 : f32
    %493 = vector.broadcast %cst_115 : f32 to vector<8x128xf32>
    %494 = arith.addf %493, %492 : vector<8x128xf32>
    %495 = arith.divf %493, %494 : vector<8x128xf32>
    %496 = vector.extract_strided_slice %489 {offsets = [0, 128], sizes = [8, 128], strides = [1, 1]} : vector<8x512xf32> to vector<8x128xf32>
    %497 = arith.negf %496 : vector<8x128xf32>
    %498 = math.exp %497 : vector<8x128xf32>
    %cst_116 = arith.constant 1.000000e+00 : f32
    %499 = vector.broadcast %cst_116 : f32 to vector<8x128xf32>
    %500 = arith.addf %499, %498 : vector<8x128xf32>
    %501 = arith.divf %499, %500 : vector<8x128xf32>
    %502 = vector.extract_strided_slice %489 {offsets = [0, 256], sizes = [8, 128], strides = [1, 1]} : vector<8x512xf32> to vector<8x128xf32>
    %503 = math.tanh %502 : vector<8x128xf32>
    %504 = vector.extract_strided_slice %489 {offsets = [0, 384], sizes = [8, 128], strides = [1, 1]} : vector<8x512xf32> to vector<8x128xf32>
    %505 = arith.negf %504 : vector<8x128xf32>
    %506 = math.exp %505 : vector<8x128xf32>
    %cst_117 = arith.constant 1.000000e+00 : f32
    %507 = vector.broadcast %cst_117 : f32 to vector<8x128xf32>
    %508 = arith.addf %507, %506 : vector<8x128xf32>
    %509 = arith.divf %507, %508 : vector<8x128xf32>
    %510 = arith.mulf %501, %453 : vector<8x128xf32>
    %511 = arith.mulf %495, %503 : vector<8x128xf32>
    %512 = arith.addf %510, %511 : vector<8x128xf32>
    %513 = math.tanh %512 : vector<8x128xf32>
    %514 = arith.mulf %509, %513 : vector<8x128xf32>
    %c2_i32_118 = arith.constant 2 : i32
    %515 = tpu.memref_slice %arg18[%c2_i32_118] : memref<3x!tpu.dma_semaphore, #tpu.memory_space<semaphore_mem>> -> memref<1x!tpu.dma_semaphore, #tpu.memory_space<semaphore_mem>>
    %516 = tpu.memref_squeeze %515 : memref<1x!tpu.dma_semaphore, #tpu.memory_space<semaphore_mem>> -> memref<!tpu.dma_semaphore, #tpu.memory_space<semaphore_mem>>
    tpu.wait_dma2 semaphore(%516 : memref<!tpu.dma_semaphore, #tpu.memory_space<semaphore_mem>>) src(%arg13 : memref<128x256xbf16, #tpu.memory_space<any>>) dst(%arg17 : memref<128x256xbf16, #tpu.memory_space<vmem>>)
    %c0_119 = arith.constant 0 : index
    %c0_120 = arith.constant 0 : index
    %517 = vector.load %arg17[%c0_119, %c0_120] : memref<128x256xbf16, #tpu.memory_space<vmem>>, vector<128x128xbf16>
    %c0_121 = arith.constant 0 : index
    %c128 = arith.constant 128 : index
    %518 = vector.load %arg17[%c0_121, %c128] : memref<128x256xbf16, #tpu.memory_space<vmem>>, vector<128x128xbf16>
    %cst_122 = arith.constant dense<0.000000e+00> : vector<8xf32>
    %519 = vector.multi_reduction <add>, %514, %cst_122 [1] : vector<8x128xf32> to vector<8xf32>
    %520 = vector.shape_cast %519 : vector<8xf32> to vector<8x1xf32>
    %cst_123 = arith.constant 1.280000e+02 : f32
    %521 = vector.broadcast %cst_123 : f32 to vector<8x1xf32>
    %522 = arith.divf %520, %521 : vector<8x1xf32>
    %523 = vector.broadcast %522 : vector<8x1xf32> to vector<8x128xf32>
    %524 = arith.subf %514, %523 : vector<8x128xf32>
    %525 = arith.mulf %524, %524 : vector<8x128xf32>
    %cst_124 = arith.constant dense<0.000000e+00> : vector<8xf32>
    %526 = vector.multi_reduction <add>, %525, %cst_124 [1] : vector<8x128xf32> to vector<8xf32>
    %527 = vector.shape_cast %526 : vector<8xf32> to vector<8x1xf32>
    %cst_125 = arith.constant 1.280000e+02 : f32
    %528 = vector.broadcast %cst_125 : f32 to vector<8x1xf32>
    %529 = arith.divf %527, %528 : vector<8x1xf32>
    %cst_126 = arith.constant 9.99999974E-6 : f32
    %530 = vector.broadcast %cst_126 : f32 to vector<8x1xf32>
    %531 = arith.addf %529, %530 : vector<8x1xf32>
    %532 = math.rsqrt %531 : vector<8x1xf32>
    %533 = vector.broadcast %532 : vector<8x1xf32> to vector<8x128xf32>
    %534 = arith.mulf %524, %533 : vector<8x128xf32>
    %c0_127 = arith.constant 0 : index
    %c0_128 = arith.constant 0 : index
    %535 = vector.load %arg7[%c0_127, %c0_128] : memref<1x128xf32, #tpu.memory_space<vmem>>, vector<1x128xf32>
    %536 = vector.broadcast %535 : vector<1x128xf32> to vector<8x128xf32>
    %537 = arith.mulf %534, %536 : vector<8x128xf32>
    %c0_129 = arith.constant 0 : index
    %c0_130 = arith.constant 0 : index
    %538 = vector.load %arg8[%c0_129, %c0_130] : memref<1x128xf32, #tpu.memory_space<vmem>>, vector<1x128xf32>
    %539 = vector.broadcast %538 : vector<1x128xf32> to vector<8x128xf32>
    %540 = arith.addf %537, %539 : vector<8x128xf32>
    %541 = arith.truncf %540 : vector<8x128xf32> to vector<8x128xbf16>
    %cst_131 = arith.constant dense<0.000000e+00> : vector<8x128xf32>
    %542 = tpu.matmul %541, %517, %cst_131 {dimension_numbers = #tpu.dot_dimension_numbers<[1], [0], [0], [1], [0, 0, 1, 1], [], []>} : vector<8x128xbf16>, vector<128x128xbf16>, vector<8x128xf32> -> vector<8x128xf32>
    %c0_132 = arith.constant 0 : index
    %c0_133 = arith.constant 0 : index
    %543 = vector.load %arg9[%c0_132, %c0_133] : memref<1x128xf32, #tpu.memory_space<vmem>>, vector<1x128xf32>
    %544 = vector.broadcast %543 : vector<1x128xf32> to vector<8x128xf32>
    %545 = arith.addf %542, %544 : vector<8x128xf32>
    %546 = arith.mulf %545, %545 : vector<8x128xf32>
    %547 = arith.mulf %545, %546 : vector<8x128xf32>
    %cst_134 = arith.constant 4.471500e-02 : f32
    %548 = vector.broadcast %cst_134 : f32 to vector<8x128xf32>
    %549 = arith.mulf %548, %547 : vector<8x128xf32>
    %550 = arith.addf %545, %549 : vector<8x128xf32>
    %cst_135 = arith.constant 0.797884583 : f32
    %551 = vector.broadcast %cst_135 : f32 to vector<8x128xf32>
    %552 = arith.mulf %551, %550 : vector<8x128xf32>
    %553 = math.tanh %552 : vector<8x128xf32>
    %cst_136 = arith.constant 1.000000e+00 : f32
    %554 = vector.broadcast %cst_136 : f32 to vector<8x128xf32>
    %555 = arith.addf %554, %553 : vector<8x128xf32>
    %cst_137 = arith.constant 5.000000e-01 : f32
    %556 = vector.broadcast %cst_137 : f32 to vector<8x128xf32>
    %557 = arith.mulf %556, %555 : vector<8x128xf32>
    %558 = arith.mulf %545, %557 : vector<8x128xf32>
    %559 = arith.truncf %558 : vector<8x128xf32> to vector<8x128xbf16>
    %cst_138 = arith.constant dense<0.000000e+00> : vector<8x128xf32>
    %560 = tpu.matmul %559, %518, %cst_138 {dimension_numbers = #tpu.dot_dimension_numbers<[1], [0], [0], [1], [0, 0, 1, 1], [], []>} : vector<8x128xbf16>, vector<128x128xbf16>, vector<8x128xf32> -> vector<8x128xf32>
    %c0_139 = arith.constant 0 : index
    %c0_140 = arith.constant 0 : index
    %561 = vector.load %arg10[%c0_139, %c0_140] : memref<1x128xf32, #tpu.memory_space<vmem>>, vector<1x128xf32>
    %562 = vector.broadcast %561 : vector<1x128xf32> to vector<8x128xf32>
    %563 = arith.addf %560, %562 : vector<8x128xf32>
    %c0_141 = arith.constant 0 : index
    %c0_142 = arith.constant 0 : index
    %564 = vector.load %arg14[%c0_141, %c0_142] : memref<8x128xf32, #tpu.memory_space<vmem>>, vector<8x128xf32>
    tpu.vector_store %arg14[%c0_141, %c0_142], %563 {strides = array<i32>} : memref<8x128xf32, #tpu.memory_space<vmem>>, vector<8x128xf32>,
    return
  }
  func.func @transform_0(%arg0: i32) -> (i32, i32) {
    %c0_i32 = arith.constant 0 : i32
    %c0_i32_0 = arith.constant 0 : i32
    %c0_i32_1 = arith.constant 0 : i32
    return %c0_i32, %c0_i32_0 : i32, i32
  }
  func.func @transform_1(%arg0: i32) -> (i32, i32) {
    %c0_i32 = arith.constant 0 : i32
    %c0_i32_0 = arith.constant 0 : i32
    %c0_i32_1 = arith.constant 0 : i32
    return %c0_i32, %c0_i32_0 : i32, i32
  }
  func.func @transform_2(%arg0: i32) -> (i32, i32) {
    %c0_i32 = arith.constant 0 : i32
    %c0_i32_0 = arith.constant 0 : i32
    %c0_i32_1 = arith.constant 0 : i32
    return %c0_i32, %c0_i32_0 : i32, i32
  }
  func.func @transform_3(%arg0: i32) -> (i32, i32) {
    %c0_i32 = arith.constant 0 : i32
    %c0_i32_0 = arith.constant 0 : i32
    %c0_i32_1 = arith.constant 0 : i32
    return %c0_i32, %c0_i32_0 : i32, i32
  }
  func.func @transform_4(%arg0: i32) -> (i32, i32) {
    %c0_i32 = arith.constant 0 : i32
    %c0_i32_0 = arith.constant 0 : i32
    %c0_i32_1 = arith.constant 0 : i32
    return %c0_i32, %c0_i32_0 : i32, i32
  }
  func.func @transform_5(%arg0: i32) -> (i32, i32) {
    %c0_i32 = arith.constant 0 : i32
    %c0_i32_0 = arith.constant 0 : i32
    %c0_i32_1 = arith.constant 0 : i32
    return %c0_i32, %c0_i32_0 : i32, i32
  }
  func.func @transform_6(%arg0: i32) -> (i32, i32) {
    %c0_i32 = arith.constant 0 : i32
    %c0_i32_0 = arith.constant 0 : i32
    %c0_i32_1 = arith.constant 0 : i32
    return %c0_i32, %c0_i32_0 : i32, i32
  }
  func.func @transform_7(%arg0: i32) -> (i32, i32) {
    %c0_i32 = arith.constant 0 : i32
    %c0_i32_0 = arith.constant 0 : i32
    %c0_i32_1 = arith.constant 0 : i32
    return %c0_i32, %c0_i32_0 : i32, i32
  }
  func.func @transform_8(%arg0: i32) -> (i32, i32) {
    %c0_i32 = arith.constant 0 : i32
    %c0_i32_0 = arith.constant 0 : i32
    %c0_i32_1 = arith.constant 0 : i32
    return %c0_i32, %c0_i32_0 : i32, i32
  }
  func.func @transform_9(%arg0: i32) -> (i32, i32) {
    %c0_i32 = arith.constant 0 : i32
    %c0_i32_0 = arith.constant 0 : i32
    %c0_i32_1 = arith.constant 0 : i32
    return %c0_i32, %c0_i32_0 : i32, i32
  }
  func.func @transform_13(%arg0: i32) -> (i32, i32) {
    %c0_i32 = arith.constant 0 : i32
    %c0_i32_0 = arith.constant 0 : i32
    %c0_i32_1 = arith.constant 0 : i32
    return %c0_i32, %c0_i32_0 : i32, i32
  }
}

</mosaic_0001>

<llo_original>
// kernel: tpu_custom_call.1
$region0: #{tpu_custom_call.1}
  #allocation0 [shape = 'u32[]', space=smem, size = 0x4, offset = 0x4, fixed_abs, tag = 'smem constant byte address 0x4 - core index']
  #allocation1 [shape = 'u32[144,128]{1,0:T(1,128)}', space=vmem, size = 0x12000, scoped, tag = 'internal scratch']
  %s0 = inlined_call_operand.hbm [shape: f32[8,128], index: 0, kind: input, shape index: {}]
  %s1 = inlined_call_operand.hbm [shape: f32[8,128], index: 1, kind: output, shape index: {}]
  %s2 = sld [smem:[#allocation0]]
  $region18: #{tpu_custom_call.1} parent=0
    _
  %s4 = ssub.s32 1, %s2
  %s5 = scalar_select 0, %s4, %s2
  $region1: #{tpu_custom_call.1} parent=0
    #allocation2 [shape = 'u8[4096]{0}', space=vmem, size = 0x1000, scoped, tag = 'input window, operand 0, single buffered']
    #allocation3 [shape = 's32[1]{0}', space=sflag, size = 0x4, scoped, tag = 'scoped memory for tpu_custom_call.1']
    #allocation4 [shape = 's32[1]{0}', space=sflag, size = 0x4, scoped, tag = 'scoped memory for tpu_custom_call.1']
    #allocation5 [shape = 'u8[4096]{0}', space=vmem, size = 0x1000, scoped, tag = 'output window, operand 0, single buffered']
    %6 = vsyncpa [#allocation3], 0
    %7 = vsyncpa [#allocation4], 0
    // Predicated region
    $region2: #{tpu_custom_call.1} parent=1 // pred_check
      _
    $region3: #{tpu_custom_call.1} parent=1 // pred_check_branch
      %9 = sbr.rel (0) target = $region5
    $region4: #{tpu_custom_call.1} parent=1 // pred_region
      %s11 = ssub.s32 128, 128
      %12 = vsyncadd [#allocation3], %s11
      %s14 = sshll.u32 [#allocation2], 4
      %s15 = int_to_ptr.vmem [resolvable:$true] %s14
      %17 = dma.hbm_to_vmem [thread:$0]  %s0, 128, %s15, [#allocation3]
    $region5: #{tpu_custom_call.1} parent=1 // pred_fallthru
      _
    // Predicated region
    $region6: #{tpu_custom_call.1} parent=1 // pred_check
      _
    $region7: #{tpu_custom_call.1} parent=1 // pred_check_branch
      %19 = sbr.rel (0) target = $region9
    $region8: #{tpu_custom_call.1} parent=1 // pred_region
      %20 = dma.done [#allocation3], 128
    $region9: #{tpu_custom_call.1} parent=1 // pred_fallthru
      _
    %v21 = vld [vmem:[#allocation2] sm:$0xff]
    %v22 = verf.f32.pop %v21
    %23 = vst [vmem:[#allocation5] sm:$0xff] %v22
    // Predicated region
    $region10: #{tpu_custom_call.1} parent=1 // pred_check
      _
    $region11: #{tpu_custom_call.1} parent=1 // pred_check_branch
      %25 = sbr.rel (0) target = $region13
    $region12: #{tpu_custom_call.1} parent=1 // pred_region
      %s27 = ssub.s32 128, 128
      %28 = vsyncadd [#allocation4], %s27
      %s30 = sshll.u32 [#allocation5], 4
      %s31 = int_to_ptr.vmem [resolvable:$true] %s30
      %33 = dma.vmem_to_hbm [thread:$0]  %s31, 128, %s1, [#allocation4]
    $region13: #{tpu_custom_call.1} parent=1 // pred_fallthru
      _
    // Predicated region
    $region14: #{tpu_custom_call.1} parent=1 // pred_check
      _
    $region15: #{tpu_custom_call.1} parent=1 // pred_check_branch
      %35 = sbr.rel (0) target = $region17
    $region16: #{tpu_custom_call.1} parent=1 // pred_region
      %36 = dma.done [#allocation4], 128
    $region17: #{tpu_custom_call.1} parent=1 // pred_fallthru
      _
    %37 = vsyncpa [#allocation3], 1
    %38 = vsyncpa [#allocation4], 1

// kernel: forward.1
$region0: #{forward.1}
  #allocation0 [shape = 'u32[]', space=smem, size = 0x4, offset = 0x4, fixed_abs, tag = 'smem constant byte address 0x4 - core index']
  #allocation1 [shape = 'u32[144,128]{1,0:T(1,128)}', space=vmem, size = 0x12000, scoped, tag = 'internal scratch']
  #allocation2 [shape = 'bf16[1088,384]{1,0:T(16,128)(2,1)}', space=vmem, size = 0xcc000, scoped, tag = 'scratch operand']
  #allocation3 [shape = 'bf16[448,512]{1,0:T(16,128)(2,1)}', space=vmem, size = 0x70000, scoped, tag = 'scratch operand']
  #allocation4 [shape = 'bf16[128,256]{1,0:T(16,128)(2,1)}', space=vmem, size = 0x10000, scoped, tag = 'scratch operand']
  #allocation5 [shape = 's32[3]{0}', space=sflag, size = 0xc, scoped, tag = 'scratch operand']
  #allocation8 [shape = 's32[]', space=sflag, size = 0x4, offset = 0, fixed_abs, tag = 'sflag constant byte address 0x0 - dummy sync flag']
  #allocation10 [shape = 's32[]', space=sflag, size = 0x4, offset = 0, fixed_abs, tag = 'sflag constant byte address 0x0 - dummy sync flag']
  #allocation12 [shape = 's32[]', space=sflag, size = 0x4, offset = 0, fixed_abs, tag = 'sflag constant byte address 0x0 - dummy sync flag']
  %s0 = inlined_call_operand.vmem [shape: f32[8,1152], index: 0, kind: input, shape index: {}]
  %s1 = inlined_call_operand.hbm [shape: bf16[384,1024], index: 1, kind: input, shape index: {}]
  %s2 = inlined_call_operand.vmem [shape: f32[1,1024], index: 2, kind: input, shape index: {}]
  %s3 = inlined_call_operand.vmem [shape: f32[1,384], index: 3, kind: input, shape index: {}]
  %s4 = inlined_call_operand.vmem [shape: f32[1,512], index: 4, kind: input, shape index: {}]
  %s5 = inlined_call_operand.vmem [shape: f32[1,512], index: 5, kind: input, shape index: {}]
  %s6 = inlined_call_operand.vmem [shape: f32[1,128], index: 6, kind: input, shape index: {}]
  %s7 = inlined_call_operand.vmem [shape: f32[1,128], index: 7, kind: input, shape index: {}]
  %s8 = inlined_call_operand.vmem [shape: f32[1,128], index: 8, kind: input, shape index: {}]
  %s9 = inlined_call_operand.vmem [shape: f32[1,128], index: 9, kind: input, shape index: {}]
  %s10 = inlined_call_operand.hbm [shape: bf16[1088,384], index: 10, kind: input, shape index: {}]
  %s11 = inlined_call_operand.hbm [shape: bf16[448,512], index: 11, kind: input, shape index: {}]
  %s12 = inlined_call_operand.vmem [shape: bf16[128,256], index: 12, kind: input, shape index: {}]
  %s13 = inlined_call_operand.vmem [shape: f32[8,128], index: 13, kind: output, shape index: {}]
  %s14 = sld [smem:[#allocation0]]
  $region91: #{forward.1} parent=0
    _
  %s16 = ssub.s32 1, %s14
  %s17 = scalar_select 0, %s16, %s14
  $region1: #{forward.1} parent=0
    #allocation6 [shape = 'u8[786432]{0}', space=vmem, size = 0xc0000, scoped, tag = 'input window, operand 1, single buffered']
    #allocation7 [shape = 's32[1]{0}', space=sflag, size = 0x4, scoped, tag = 'scoped memory for forward.1']
    #allocation9 [shape = 'u32[9]{0}', space=smem, size = 0x24, scoped, tag = 'DMA stride descriptor']
    #allocation11 [shape = 'u32[9]{0}', space=smem, size = 0x24, scoped, tag = 'DMA stride descriptor']
    %18 = vsyncpa [#allocation7], 0
    // Predicated region
    $region2: #{forward.1} parent=1 // pred_check
      _
    $region3: #{forward.1} parent=1 // pred_check_branch
      %20 = sbr.rel (0) target = $region5
    $region4: #{forward.1} parent=1 // pred_region
      _
    $region5: #{forward.1} parent=1 // pred_fallthru
      _
    // Predicated region
    $region6: #{forward.1} parent=1 // pred_check
      _
    $region7: #{forward.1} parent=1 // pred_check_branch
      %22 = sbr.rel (0) target = $region9
    $region8: #{forward.1} parent=1 // pred_region
      %s24 = ssub.s32 24576, 24576
      %25 = vsyncadd [#allocation7], %s24
      %s26 = sshll.u32 [#allocation6], 4
      %s27 = int_to_ptr.vmem [resolvable:$true] %s26
      %32 = dma.hbm_to_vmem [thread:$0]  %s1, 24576, %s27, [#allocation7], 512, 512, 32
    $region9: #{forward.1} parent=1 // pred_fallthru
      _
    // Predicated region
    $region10: #{forward.1} parent=1 // pred_check
      _
    $region11: #{forward.1} parent=1 // pred_check_branch
      %34 = sbr.rel (0) target = $region13
    $region12: #{forward.1} parent=1 // pred_region
      _
    $region13: #{forward.1} parent=1 // pred_fallthru
      _
    // Predicated region
    $region14: #{forward.1} parent=1 // pred_check
      _
    $region15: #{forward.1} parent=1 // pred_check_branch
      %36 = sbr.rel (0) target = $region17
    $region16: #{forward.1} parent=1 // pred_region
      _
    $region17: #{forward.1} parent=1 // pred_fallthru
      _
    // Predicated region
    $region18: #{forward.1} parent=1 // pred_check
      _
    $region19: #{forward.1} parent=1 // pred_check_branch
      %38 = sbr.rel (0) target = $region21
    $region20: #{forward.1} parent=1 // pred_region
      _
    $region21: #{forward.1} parent=1 // pred_fallthru
      _
    // Predicated region
    $region22: #{forward.1} parent=1 // pred_check
      _
    $region23: #{forward.1} parent=1 // pred_check_branch
      %40 = sbr.rel (0) target = $region25
    $region24: #{forward.1} parent=1 // pred_region
      _
    $region25: #{forward.1} parent=1 // pred_fallthru
      _
    // Predicated region
    $region26: #{forward.1} parent=1 // pred_check
      _
    $region27: #{forward.1} parent=1 // pred_check_branch
      %42 = sbr.rel (0) target = $region29
    $region28: #{forward.1} parent=1 // pred_region
      _
    $region29: #{forward.1} parent=1 // pred_fallthru
      _
    // Predicated region
    $region30: #{forward.1} parent=1 // pred_check
      _
    $region31: #{forward.1} parent=1 // pred_check_branch
      %44 = sbr.rel (0) target = $region33
    $region32: #{forward.1} parent=1 // pred_region
      _
    $region33: #{forward.1} parent=1 // pred_fallthru
      _
    // Predicated region
    $region34: #{forward.1} parent=1 // pred_check
      _
    $region35: #{forward.1} parent=1 // pred_check_branch
      %46 = sbr.rel (0) target = $region37
    $region36: #{forward.1} parent=1 // pred_region
      _
    $region37: #{forward.1} parent=1 // pred_fallthru
      _
    // Predicated region
    $region38: #{forward.1} parent=1 // pred_check
      _
    $region39: #{forward.1} parent=1 // pred_check_branch
      %48 = sbr.rel (0) target = $region41
    $region40: #{forward.1} parent=1 // pred_region
      _
    $region41: #{forward.1} parent=1 // pred_fallthru
      _
    // Predicated region
    $region42: #{forward.1} parent=1 // pred_check
      _
    $region43: #{forward.1} parent=1 // pred_check_branch
      %50 = sbr.rel (0) target = $region45
    $region44: #{forward.1} parent=1 // pred_region
      %51 = dma.done [#allocation7], 24576
    $region45: #{forward.1} parent=1 // pred_fallthru
      _
    %s54 = sshll.u32 1, 14
    %s55 = sxor.u32 4294967295, %s54
    %s57 = sld [smem:[#allocation0]]
    %s58 = sadd.s32 2, %s57
    %s60 = sshll.u32 7, 26
    %s61 = sxor.u32 4294967295, %s60
    %s62 = sand.u32 0, %s61
    %s63 = sshll.u32 %s58, 26
    %s64 = sor.u32 %s62, %s63
    %s65 = sshll.u32 [#allocation2], 4
    %s66 = int_to_ptr.vmem [resolvable:$true] %s65
    %69 = sst [smem:[#allocation9]] 384
    %s70 = scalar_lea.smem [#allocation9], 1
    %71 = sst [smem:[%s70]] 384
    %s72 = scalar_lea.smem [#allocation9], 2
    %73 = sst [smem:[%s72]] 3
    %s74 = scalar_lea.smem [#allocation9], 3
    %75 = sst [smem:[%s74]] 64
    %s76 = scalar_lea.smem [#allocation9], 4
    %77 = sst [smem:[%s76]] 128
    %s78 = scalar_lea.smem [#allocation9], 5
    %79 = sst [smem:[%s78]] 2
    %s80 = scalar_lea.smem [#allocation9], 6
    %81 = sst [smem:[%s80]] 192
    %s82 = scalar_lea.smem [#allocation9], 7
    %83 = sst [smem:[%s82]] 64
    %s84 = scalar_lea.smem [#allocation9], 8
    %85 = sst [smem:[%s84]] 4
    %87 = dma.general %s10, 26112, %s66, [#allocation5], [#allocation8], [#allocation9], %s64, 0
    %s88 = scalar_lea.sflag [#allocation5], 1
    %s90 = sshll.u32 1, 14
    %s91 = sxor.u32 4294967295, %s90
    %s93 = sadd.s32 2, %s57
    %s95 = sshll.u32 7, 26
    %s96 = sxor.u32 4294967295, %s95
    %s97 = sand.u32 0, %s96
    %s98 = sshll.u32 %s93, 26
    %s99 = sor.u32 %s97, %s98
    %s100 = sshll.u32 [#allocation3], 4
    %s101 = int_to_ptr.vmem [resolvable:$true] %s100
    %104 = sst [smem:[#allocation11]] 512
    %s105 = scalar_lea.smem [#allocation11], 1
    %106 = sst [smem:[%s105]] 512
    %s107 = scalar_lea.smem [#allocation11], 2
    %108 = sst [smem:[%s107]] 4
    %s109 = scalar_lea.smem [#allocation11], 3
    %110 = sst [smem:[%s109]] 64
    %s111 = scalar_lea.smem [#allocation11], 4
    %112 = sst [smem:[%s111]] 128
    %s113 = scalar_lea.smem [#allocation11], 5
    %114 = sst [smem:[%s113]] 2
    %s115 = scalar_lea.smem [#allocation11], 6
    %116 = sst [smem:[%s115]] 256
    %s117 = scalar_lea.smem [#allocation11], 7
    %118 = sst [smem:[%s117]] 64
    %s119 = scalar_lea.smem [#allocation11], 8
    %120 = sst [smem:[%s119]] 4
    %122 = dma.general %s11, 14336, %s101, %s88, [#allocation10], [#allocation11], %s99, 0
    %s123 = scalar_lea.sflag [#allocation5], 2
    %p125 = scmp.lt.u32.totalorder 4, 8
    %p126 = pneg %p125
    // Predicated region
    $region46: #{forward.1} parent=1 // pred_check
      _
    $region47: #{forward.1} parent=1 // pred_check_branch
      %128 = sbr.rel (%p125) target = $region49
    $region48: #{forward.1} parent=1 // pred_region
      %s205 = sand.u32 4, 7
      %p206 = scmp.eq.s32.totalorder %s205, 0
      %p207 = pneg %p206
      // Predicated region
      $region61: #{forward.1} parent=48 // pred_check
        _
      $region62: #{forward.1} parent=48 // pred_check_branch
        %209 = sbr.rel (%p206) target = $region64
      $region63: #{forward.1} parent=48 // pred_region
        %s210 = sand.u32 4, 7
        %s211 = ssub.s32 4, %s210
        %s212 = scalar_lea.vmem %s12, %s211
        %s213 = ssub.s32 4, %s210
        %s214 = scalar_lea.vmem [#allocation4], %s213
        loop: start=0, step=1, limit=1
        $region65: #{forward.1} parent=63 // loop_pre_header
          _
        $region66: #{forward.1} parent=63 // loop_header
          %s216 = sphi 0, %s220
          %p217 = scmp.ge.s32.totalorder %s216, 1
          %s221 = sphi %s12, %s12
          %s222 = sphi [#allocation4], [#allocation4]
        $region67: #{forward.1} parent=63 // loop_header_branch
          %219 = sbr.rel (%p217) target = $region71
        $region68: #{forward.1} parent=63 // loop_body
          _
        $region69: #{forward.1} parent=63 // loop_footer
          %s220 = sadd.s32 1, %s216
        $region70: #{forward.1} parent=63 // loop_footer_branch
          %215 = sbr.rel target = $region66
        $region71: #{forward.1} parent=63 // loop_exit
          _
        %s223 = sshllo.u32 0, %s210
        loop: start=0, step=1, limit=1
        $region72: #{forward.1} parent=63 // loop_pre_header
          _
        $region73: #{forward.1} parent=63 // loop_header
          %s225 = sphi 0, %s229
          %p226 = scmp.ge.s32.totalorder %s225, 1
          %s230 = sphi %s212, %s212
          %s231 = sphi %s214, %s214
        $region74: #{forward.1} parent=63 // loop_header_branch
          %228 = sbr.rel (%p226) target = $region78
        $region75: #{forward.1} parent=63 // loop_body
          %v232 = vld [vmem:[%s230] sm:%s223]
          %233 = vst [vmem:[%s231] sm:%s223] %v232
          %v234 = vld [vmem:[%s230 + $0x8] sm:%s223]
          %235 = vst [vmem:[%s231 + $0x4] sm:%s223] %v234
          %v236 = vld [vmem:[%s230 + $0x4] sm:%s223]
          %237 = vst [vmem:[%s231 + $0x8] sm:%s223] %v236
          %v238 = vld [vmem:[%s230 + $0xc] sm:%s223]
          %239 = vst [vmem:[%s231 + $0xc] sm:%s223] %v238
          %v240 = vld [vmem:[%s230 + $0x10] sm:%s223]
          %241 = vst [vmem:[%s231 + $0x10] sm:%s223] %v240
          %v242 = vld [vmem:[%s230 + $0x18] sm:%s223]
          %243 = vst [vmem:[%s231 + $0x14] sm:%s223] %v242
          %v244 = vld [vmem:[%s230 + $0x14] sm:%s223]
          %245 = vst [vmem:[%s231 + $0x18] sm:%s223] %v244
          %v246 = vld [vmem:[%s230 + $0x1c] sm:%s223]
          %247 = vst [vmem:[%s231 + $0x1c] sm:%s223] %v246
          %v248 = vld [vmem:[%s230 + $0x20] sm:%s223]
          %249 = vst [vmem:[%s231 + $0x20] sm:%s223] %v248
          %v250 = vld [vmem:[%s230 + $0x28] sm:%s223]
          %251 = vst [vmem:[%s231 + $0x24] sm:%s223] %v250
          %v252 = vld [vmem:[%s230 + $0x24] sm:%s223]
          %253 = vst [vmem:[%s231 + $0x28] sm:%s223] %v252
          %v254 = vld [vmem:[%s230 + $0x2c] sm:%s223]
          %255 = vst [vmem:[%s231 + $0x2c] sm:%s223] %v254
          %v256 = vld [vmem:[%s230 + $0x30] sm:%s223]
          %257 = vst [vmem:[%s231 + $0x30] sm:%s223] %v256
          %v258 = vld [vmem:[%s230 + $0x38] sm:%s223]
          %259 = vst [vmem:[%s231 + $0x34] sm:%s223] %v258
          %v260 = vld [vmem:[%s230 + $0x34] sm:%s223]
          %261 = vst [vmem:[%s231 + $0x38] sm:%s223] %v260
          %v262 = vld [vmem:[%s230 + $0x3c] sm:%s223]
          %263 = vst [vmem:[%s231 + $0x3c] sm:%s223] %v262
          %v264 = vld [vmem:[%s230 + $0x40] sm:%s223]
          %265 = vst [vmem:[%s231 + $0x40] sm:%s223] %v264
          %v266 = vld [vmem:[%s230 + $0x48] sm:%s223]
          %267 = vst [vmem:[%s231 + $0x44] sm:%s223] %v266
          %v268 = vld [vmem:[%s230 + $0x44] sm:%s223]
          %269 = vst [vmem:[%s231 + $0x48] sm:%s223] %v268
          %v270 = vld [vmem:[%s230 + $0x4c] sm:%s223]
          %271 = vst [vmem:[%s231 + $0x4c] sm:%s223] %v270
          %v272 = vld [vmem:[%s230 + $0x50] sm:%s223]
          %273 = vst [vmem:[%s231 + $0x50] sm:%s223] %v272
          %v274 = vld [vmem:[%s230 + $0x58] sm:%s223]
          %275 = vst [vmem:[%s231 + $0x54] sm:%s223] %v274
          %v276 = vld [vmem:[%s230 + $0x54] sm:%s223]
          %277 = vst [vmem:[%s231 + $0x58] sm:%s223] %v276
          %v278 = vld [vmem:[%s230 + $0x5c] sm:%s223]
          %279 = vst [vmem:[%s231 + $0x5c] sm:%s223] %v278
          %v280 = vld [vmem:[%s230 + $0x60] sm:%s223]
          %281 = vst [vmem:[%s231 + $0x60] sm:%s223] %v280
          %v282 = vld [vmem:[%s230 + $0x68] sm:%s223]
          %283 = vst [vmem:[%s231 + $0x64] sm:%s223] %v282
          %v284 = vld [vmem:[%s230 + $0x64] sm:%s223]
          %285 = vst [vmem:[%s231 + $0x68] sm:%s223] %v284
          %v286 = vld [vmem:[%s230 + $0x6c] sm:%s223]
          %287 = vst [vmem:[%s231 + $0x6c] sm:%s223] %v286
          %v288 = vld [vmem:[%s230 + $0x70] sm:%s223]
          %289 = vst [vmem:[%s231 + $0x70] sm:%s223] %v288
          %v290 = vld [vmem:[%s230 + $0x78] sm:%s223]
          %291 = vst [vmem:[%s231 + $0x74] sm:%s223] %v290
          %v292 = vld [vmem:[%s230 + $0x74] sm:%s223]
          %293 = vst [vmem:[%s231 + $0x78] sm:%s223] %v292
          %v294 = vld [vmem:[%s230 + $0x7c] sm:%s223]
          %295 = vst [vmem:[%s231 + $0x7c] sm:%s223] %v294
        $region76: #{forward.1} parent=63 // loop_footer
          %s229 = sadd.s32 1, %s225
        $region77: #{forward.1} parent=63 // loop_footer_branch
          %224 = sbr.rel target = $region73
        $region78: #{forward.1} parent=63 // loop_exit
          _
      $region64: #{forward.1} parent=48 // pred_fallthru
        _
    $region49: #{forward.1} parent=1 // pred_fallthru
      _
    // Predicated region
    $region50: #{forward.1} parent=1 // pred_check
      %p129 = pneg %p125
    $region51: #{forward.1} parent=1 // pred_check_branch
      %131 = sbr.rel (%p129) target = $region53
    $region52: #{forward.1} parent=1 // pred_region
      %s132 = sshllo.u32 0, 4
      loop: start=0, step=1, limit=1
      $region54: #{forward.1} parent=52 // loop_pre_header
        _
      $region55: #{forward.1} parent=52 // loop_header
        %s134 = sphi 0, %s138
        %p135 = scmp.ge.s32.totalorder %s134, 1
        %s139 = sphi %s12, %s12
        %s140 = sphi [#allocation4], [#allocation4]
      $region56: #{forward.1} parent=52 // loop_header_branch
        %137 = sbr.rel (%p135) target = $region60
      $region57: #{forward.1} parent=52 // loop_body
        %v141 = vld [vmem:[%s139] sm:%s132]
        %142 = vst [vmem:[%s140] sm:%s132] %v141
        %v143 = vld [vmem:[%s139 + $0x8] sm:%s132]
        %144 = vst [vmem:[%s140 + $0x4] sm:%s132] %v143
        %v145 = vld [vmem:[%s139 + $0x4] sm:%s132]
        %146 = vst [vmem:[%s140 + $0x8] sm:%s132] %v145
        %v147 = vld [vmem:[%s139 + $0xc] sm:%s132]
        %148 = vst [vmem:[%s140 + $0xc] sm:%s132] %v147
        %v149 = vld [vmem:[%s139 + $0x10] sm:%s132]
        %150 = vst [vmem:[%s140 + $0x10] sm:%s132] %v149
        %v151 = vld [vmem:[%s139 + $0x18] sm:%s132]
        %152 = vst [vmem:[%s140 + $0x14] sm:%s132] %v151
        %v153 = vld [vmem:[%s139 + $0x14] sm:%s132]
        %154 = vst [vmem:[%s140 + $0x18] sm:%s132] %v153
        %v155 = vld [vmem:[%s139 + $0x1c] sm:%s132]
        %156 = vst [vmem:[%s140 + $0x1c] sm:%s132] %v155
        %v157 = vld [vmem:[%s139 + $0x20] sm:%s132]
        %158 = vst [vmem:[%s140 + $0x20] sm:%s132] %v157
        %v159 = vld [vmem:[%s139 + $0x28] sm:%s132]
        %160 = vst [vmem:[%s140 + $0x24] sm:%s132] %v159
        %v161 = vld [vmem:[%s139 + $0x24] sm:%s132]
        %162 = vst [vmem:[%s140 + $0x28] sm:%s132] %v161
        %v163 = vld [vmem:[%s139 + $0x2c] sm:%s132]
        %164 = vst [vmem:[%s140 + $0x2c] sm:%s132] %v163
        %v165 = vld [vmem:[%s139 + $0x30] sm:%s132]
        %166 = vst [vmem:[%s140 + $0x30] sm:%s132] %v165
        %v167 = vld [vmem:[%s139 + $0x38] sm:%s132]
        %168 = vst [vmem:[%s140 + $0x34] sm:%s132] %v167
        %v169 = vld [vmem:[%s139 + $0x34] sm:%s132]
        %170 = vst [vmem:[%s140 + $0x38] sm:%s132] %v169
        %v171 = vld [vmem:[%s139 + $0x3c] sm:%s132]
        %172 = vst [vmem:[%s140 + $0x3c] sm:%s132] %v171
        %v173 = vld [vmem:[%s139 + $0x40] sm:%s132]
        %174 = vst [vmem:[%s140 + $0x40] sm:%s132] %v173
        %v175 = vld [vmem:[%s139 + $0x48] sm:%s132]
        %176 = vst [vmem:[%s140 + $0x44] sm:%s132] %v175
        %v177 = vld [vmem:[%s139 + $0x44] sm:%s132]
        %178 = vst [vmem:[%s140 + $0x48] sm:%s132] %v177
        %v179 = vld [vmem:[%s139 + $0x4c] sm:%s132]
        %180 = vst [vmem:[%s140 + $0x4c] sm:%s132] %v179
        %v181 = vld [vmem:[%s139 + $0x50] sm:%s132]
        %182 = vst [vmem:[%s140 + $0x50] sm:%s132] %v181
        %v183 = vld [vmem:[%s139 + $0x58] sm:%s132]
        %184 = vst [vmem:[%s140 + $0x54] sm:%s132] %v183
        %v185 = vld [vmem:[%s139 + $0x54] sm:%s132]
        %186 = vst [vmem:[%s140 + $0x58] sm:%s132] %v185
        %v187 = vld [vmem:[%s139 + $0x5c] sm:%s132]
        %188 = vst [vmem:[%s140 + $0x5c] sm:%s132] %v187
        %v189 = vld [vmem:[%s139 + $0x60] sm:%s132]
        %190 = vst [vmem:[%s140 + $0x60] sm:%s132] %v189
        %v191 = vld [vmem:[%s139 + $0x68] sm:%s132]
        %192 = vst [vmem:[%s140 + $0x64] sm:%s132] %v191
        %v193 = vld [vmem:[%s139 + $0x64] sm:%s132]
        %194 = vst [vmem:[%s140 + $0x68] sm:%s132] %v193
        %v195 = vld [vmem:[%s139 + $0x6c] sm:%s132]
        %196 = vst [vmem:[%s140 + $0x6c] sm:%s132] %v195
        %v197 = vld [vmem:[%s139 + $0x70] sm:%s132]
        %198 = vst [vmem:[%s140 + $0x70] sm:%s132] %v197
        %v199 = vld [vmem:[%s139 + $0x78] sm:%s132]
        %200 = vst [vmem:[%s140 + $0x74] sm:%s132] %v199
        %v201 = vld [vmem:[%s139 + $0x74] sm:%s132]
        %202 = vst [vmem:[%s140 + $0x78] sm:%s132] %v201
        %v203 = vld [vmem:[%s139 + $0x7c] sm:%s132]
        %204 = vst [vmem:[%s140 + $0x7c] sm:%s132] %v203
      $region58: #{forward.1} parent=52 // loop_footer
        %s138 = sadd.s32 1, %s134
      $region59: #{forward.1} parent=52 // loop_footer_branch
        %133 = sbr.rel target = $region55
      $region60: #{forward.1} parent=52 // loop_exit
        _
    $region53: #{forward.1} parent=1 // pred_fallthru
      _
    // Predicated region
    $region79: #{forward.1} parent=1 // pred_check
      _
    $region80: #{forward.1} parent=1 // pred_check_branch
      %298 = sbr.rel (0) target = $region82
    $region81: #{forward.1} parent=1 // pred_region
      %299 = vsyncadd %s123, 2048
    $region82: #{forward.1} parent=1 // pred_fallthru
      _
    %v300 = vld [vmem:[#allocation6] sm:$0xff]
    %v301 = vld [vmem:[#allocation6 + $0x8] sm:$0xff]
    %v302 = vld [vmem:[#allocation6 + $0x10] sm:$0xff]
    %v303 = vld [vmem:[#allocation6 + $0x18] sm:$0xff]
    %v304 = vld [vmem:[#allocation6 + $0x20] sm:$0xff]
    %v305 = vld [vmem:[#allocation6 + $0x28] sm:$0xff]
    %v306 = vld [vmem:[#allocation6 + $0x30] sm:$0xff]
    %v307 = vld [vmem:[#allocation6 + $0x38] sm:$0xff]
    %v308 = vld [vmem:[#allocation6 + $0x40] sm:$0xff]
    %v309 = vld [vmem:[#allocation6 + $0x48] sm:$0xff]
    %v310 = vld [vmem:[#allocation6 + $0x50] sm:$0xff]
    %v311 = vld [vmem:[#allocation6 + $0x58] sm:$0xff]
    %v312 = vld [vmem:[#allocation6 + $0x60] sm:$0xff]
    %v313 = vld [vmem:[#allocation6 + $0x68] sm:$0xff]
    %v314 = vld [vmem:[#allocation6 + $0x70] sm:$0xff]
    %v315 = vld [vmem:[#allocation6 + $0x78] sm:$0xff]
    %v316 = vld [vmem:[#allocation6 + $0x80] sm:$0xff]
    %v317 = vld [vmem:[#allocation6 + $0x88] sm:$0xff]
    %v318 = vld [vmem:[#allocation6 + $0x90] sm:$0xff]
    %v319 = vld [vmem:[#allocation6 + $0x98] sm:$0xff]
    %v320 = vld [vmem:[#allocation6 + $0xa0] sm:$0xff]
    %v321 = vld [vmem:[#allocation6 + $0xa8] sm:$0xff]
    %v322 = vld [vmem:[#allocation6 + $0xb0] sm:$0xff]
    %v323 = vld [vmem:[#allocation6 + $0xb8] sm:$0xff]
    %v324 = vld [vmem:[#allocation6 + $0xc0] sm:$0xff]
    %v325 = vld [vmem:[#allocation6 + $0xc8] sm:$0xff]
    %v326 = vld [vmem:[#allocation6 + $0xd0] sm:$0xff]
    %v327 = vld [vmem:[#allocation6 + $0xd8] sm:$0xff]
    %v328 = vld [vmem:[#allocation6 + $0xe0] sm:$0xff]
    %v329 = vld [vmem:[#allocation6 + $0xe8] sm:$0xff]
    %v330 = vld [vmem:[#allocation6 + $0xf0] sm:$0xff]
    %v331 = vld [vmem:[#allocation6 + $0xf8] sm:$0xff]
    %v332 = vld [vmem:[#allocation6 + $0x100] sm:$0xff]
    %v333 = vld [vmem:[#allocation6 + $0x108] sm:$0xff]
    %v334 = vld [vmem:[#allocation6 + $0x110] sm:$0xff]
    %v335 = vld [vmem:[#allocation6 + $0x118] sm:$0xff]
    %v336 = vld [vmem:[#allocation6 + $0x120] sm:$0xff]
    %v337 = vld [vmem:[#allocation6 + $0x128] sm:$0xff]
    %v338 = vld [vmem:[#allocation6 + $0x130] sm:$0xff]
    %v339 = vld [vmem:[#allocation6 + $0x138] sm:$0xff]
    %v340 = vld [vmem:[#allocation6 + $0x140] sm:$0xff]
    %v341 = vld [vmem:[#allocation6 + $0x148] sm:$0xff]
    %v342 = vld [vmem:[#allocation6 + $0x150] sm:$0xff]
    %v343 = vld [vmem:[#allocation6 + $0x158] sm:$0xff]
    %v344 = vld [vmem:[#allocation6 + $0x160] sm:$0xff]
    %v345 = vld [vmem:[#allocation6 + $0x168] sm:$0xff]
    %v346 = vld [vmem:[#allocation6 + $0x170] sm:$0xff]
    %v347 = vld [vmem:[#allocation6 + $0x178] sm:$0xff]
    %v348 = vld [vmem:[#allocation6 + $0x180] sm:$0xff]
    %v349 = vld [vmem:[#allocation6 + $0x188] sm:$0xff]
    %v350 = vld [vmem:[#allocation6 + $0x190] sm:$0xff]
    %v351 = vld [vmem:[#allocation6 + $0x198] sm:$0xff]
    %v352 = vld [vmem:[#allocation6 + $0x1a0] sm:$0xff]
    %v353 = vld [vmem:[#allocation6 + $0x1a8] sm:$0xff]
    %v354 = vld [vmem:[#allocation6 + $0x1b0] sm:$0xff]
    %v355 = vld [vmem:[#allocation6 + $0x1b8] sm:$0xff]
    %v356 = vld [vmem:[#allocation6 + $0x1c0] sm:$0xff]
    %v357 = vld [vmem:[#allocation6 + $0x1c8] sm:$0xff]
    %v358 = vld [vmem:[#allocation6 + $0x1d0] sm:$0xff]
    %v359 = vld [vmem:[#allocation6 + $0x1d8] sm:$0xff]
    %v360 = vld [vmem:[#allocation6 + $0x1e0] sm:$0xff]
    %v361 = vld [vmem:[#allocation6 + $0x1e8] sm:$0xff]
    %v362 = vld [vmem:[#allocation6 + $0x1f0] sm:$0xff]
    %v363 = vld [vmem:[#allocation6 + $0x1f8] sm:$0xff]
    %v364 = vld [vmem:[#allocation6 + $0x200] sm:$0xff]
    %v365 = vld [vmem:[#allocation6 + $0x208] sm:$0xff]
    %v366 = vld [vmem:[#allocation6 + $0x210] sm:$0xff]
    %v367 = vld [vmem:[#allocation6 + $0x218] sm:$0xff]
    %v368 = vld [vmem:[#allocation6 + $0x220] sm:$0xff]
    %v369 = vld [vmem:[#allocation6 + $0x228] sm:$0xff]
    %v370 = vld [vmem:[#allocation6 + $0x230] sm:$0xff]
    %v371 = vld [vmem:[#allocation6 + $0x238] sm:$0xff]
    %v372 = vld [vmem:[#allocation6 + $0x240] sm:$0xff]
    %v373 = vld [vmem:[#allocation6 + $0x248] sm:$0xff]
    %v374 = vld [vmem:[#allocation6 + $0x250] sm:$0xff]
    %v375 = vld [vmem:[#allocation6 + $0x258] sm:$0xff]
    %v376 = vld [vmem:[#allocation6 + $0x260] sm:$0xff]
    %v377 = vld [vmem:[#allocation6 + $0x268] sm:$0xff]
    %v378 = vld [vmem:[#allocation6 + $0x270] sm:$0xff]
    %v379 = vld [vmem:[#allocation6 + $0x278] sm:$0xff]
    %v380 = vld [vmem:[#allocation6 + $0x280] sm:$0xff]
    %v381 = vld [vmem:[#allocation6 + $0x288] sm:$0xff]
    %v382 = vld [vmem:[#allocation6 + $0x290] sm:$0xff]
    %v383 = vld [vmem:[#allocation6 + $0x298] sm:$0xff]
    %v384 = vld [vmem:[#allocation6 + $0x2a0] sm:$0xff]
    %v385 = vld [vmem:[#allocation6 + $0x2a8] sm:$0xff]
    %v386 = vld [vmem:[#allocation6 + $0x2b0] sm:$0xff]
    %v387 = vld [vmem:[#allocation6 + $0x2b8] sm:$0xff]
    %v388 = vld [vmem:[#allocation6 + $0x2c0] sm:$0xff]
    %v389 = vld [vmem:[#allocation6 + $0x2c8] sm:$0xff]
    %v390 = vld [vmem:[#allocation6 + $0x2d0] sm:$0xff]
    %v391 = vld [vmem:[#allocation6 + $0x2d8] sm:$0xff]
    %v392 = vld [vmem:[#allocation6 + $0x2e0] sm:$0xff]
    %v393 = vld [vmem:[#allocation6 + $0x2e8] sm:$0xff]
    %v394 = vld [vmem:[#allocation6 + $0x2f0] sm:$0xff]
    %v395 = vld [vmem:[#allocation6 + $0x2f8] sm:$0xff]
    %v396 = vld [vmem:[#allocation6 + $0x300] sm:$0xff]
    %v397 = vld [vmem:[#allocation6 + $0x308] sm:$0xff]
    %v398 = vld [vmem:[#allocation6 + $0x310] sm:$0xff]
    %v399 = vld [vmem:[#allocation6 + $0x318] sm:$0xff]
    %v400 = vld [vmem:[#allocation6 + $0x320] sm:$0xff]
    %v401 = vld [vmem:[#allocation6 + $0x328] sm:$0xff]
    %v402 = vld [vmem:[#allocation6 + $0x330] sm:$0xff]
    %v403 = vld [vmem:[#allocation6 + $0x338] sm:$0xff]
    %v404 = vld [vmem:[#allocation6 + $0x340] sm:$0xff]
    %v405 = vld [vmem:[#allocation6 + $0x348] sm:$0xff]
    %v406 = vld [vmem:[#allocation6 + $0x350] sm:$0xff]
    %v407 = vld [vmem:[#allocation6 + $0x358] sm:$0xff]
    %v408 = vld [vmem:[#allocation6 + $0x360] sm:$0xff]
    %v409 = vld [vmem:[#allocation6 + $0x368] sm:$0xff]
    %v410 = vld [vmem:[#allocation6 + $0x370] sm:$0xff]
    %v411 = vld [vmem:[#allocation6 + $0x378] sm:$0xff]
    %v412 = vld [vmem:[#allocation6 + $0x380] sm:$0xff]
    %v413 = vld [vmem:[#allocation6 + $0x388] sm:$0xff]
    %v414 = vld [vmem:[#allocation6 + $0x390] sm:$0xff]
    %v415 = vld [vmem:[#allocation6 + $0x398] sm:$0xff]
    %v416 = vld [vmem:[#allocation6 + $0x3a0] sm:$0xff]
    %v417 = vld [vmem:[#allocation6 + $0x3a8] sm:$0xff]
    %v418 = vld [vmem:[#allocation6 + $0x3b0] sm:$0xff]
    %v419 = vld [vmem:[#allocation6 + $0x3b8] sm:$0xff]
    %v420 = vld [vmem:[#allocation6 + $0x3c0] sm:$0xff]
    %v421 = vld [vmem:[#allocation6 + $0x3c8] sm:$0xff]
    %v422 = vld [vmem:[#allocation6 + $0x3d0] sm:$0xff]
    %v423 = vld [vmem:[#allocation6 + $0x3d8] sm:$0xff]
    %v424 = vld [vmem:[#allocation6 + $0x3e0] sm:$0xff]
    %v425 = vld [vmem:[#allocation6 + $0x3e8] sm:$0xff]
    %v426 = vld [vmem:[#allocation6 + $0x3f0] sm:$0xff]
    %v427 = vld [vmem:[#allocation6 + $0x3f8] sm:$0xff]
    %v428 = vld [vmem:[#allocation6 + $0x400] sm:$0xff]
    %v429 = vld [vmem:[#allocation6 + $0x408] sm:$0xff]
    %v430 = vld [vmem:[#allocation6 + $0x410] sm:$0xff]
    %v431 = vld [vmem:[#allocation6 + $0x418] sm:$0xff]
    %v432 = vld [vmem:[#allocation6 + $0x420] sm:$0xff]
    %v433 = vld [vmem:[#allocation6 + $0x428] sm:$0xff]
    %v434 = vld [vmem:[#allocation6 + $0x430] sm:$0xff]
    %v435 = vld [vmem:[#allocation6 + $0x438] sm:$0xff]
    %v436 = vld [vmem:[#allocation6 + $0x440] sm:$0xff]
    %v437 = vld [vmem:[#allocation6 + $0x448] sm:$0xff]
    %v438 = vld [vmem:[#allocation6 + $0x450] sm:$0xff]
    %v439 = vld [vmem:[#allocation6 + $0x458] sm:$0xff]
    %v440 = vld [vmem:[#allocation6 + $0x460] sm:$0xff]
    %v441 = vld [vmem:[#allocation6 + $0x468] sm:$0xff]
    %v442 = vld [vmem:[#allocation6 + $0x470] sm:$0xff]
    %v443 = vld [vmem:[#allocation6 + $0x478] sm:$0xff]
    %v444 = vld [vmem:[#allocation6 + $0x480] sm:$0xff]
    %v445 = vld [vmem:[#allocation6 + $0x488] sm:$0xff]
    %v446 = vld [vmem:[#allocation6 + $0x490] sm:$0xff]
    %v447 = vld [vmem:[#allocation6 + $0x498] sm:$0xff]
    %v448 = vld [vmem:[#allocation6 + $0x4a0] sm:$0xff]
    %v449 = vld [vmem:[#allocation6 + $0x4a8] sm:$0xff]
    %v450 = vld [vmem:[#allocation6 + $0x4b0] sm:$0xff]
    %v451 = vld [vmem:[#allocation6 + $0x4b8] sm:$0xff]
    %v452 = vld [vmem:[#allocation6 + $0x4c0] sm:$0xff]
    %v453 = vld [vmem:[#allocation6 + $0x4c8] sm:$0xff]
    %v454 = vld [vmem:[#allocation6 + $0x4d0] sm:$0xff]
    %v455 = vld [vmem:[#allocation6 + $0x4d8] sm:$0xff]
    %v456 = vld [vmem:[#allocation6 + $0x4e0] sm:$0xff]
    %v457 = vld [vmem:[#allocation6 + $0x4e8] sm:$0xff]
    %v458 = vld [vmem:[#allocation6 + $0x4f0] sm:$0xff]
    %v459 = vld [vmem:[#allocation6 + $0x4f8] sm:$0xff]
    %v460 = vld [vmem:[#allocation6 + $0x500] sm:$0xff]
    %v461 = vld [vmem:[#allocation6 + $0x508] sm:$0xff]
    %v462 = vld [vmem:[#allocation6 + $0x510] sm:$0xff]
    %v463 = vld [vmem:[#allocation6 + $0x518] sm:$0xff]
    %v464 = vld [vmem:[#allocation6 + $0x520] sm:$0xff]
    %v465 = vld [vmem:[#allocation6 + $0x528] sm:$0xff]
    %v466 = vld [vmem:[#allocation6 + $0x530] sm:$0xff]
    %v467 = vld [vmem:[#allocation6 + $0x538] sm:$0xff]
    %v468 = vld [vmem:[#allocation6 + $0x540] sm:$0xff]
    %v469 = vld [vmem:[#allocation6 + $0x548] sm:$0xff]
    %v470 = vld [vmem:[#allocation6 + $0x550] sm:$0xff]
    %v471 = vld [vmem:[#allocation6 + $0x558] sm:$0xff]
    %v472 = vld [vmem:[#allocation6 + $0x560] sm:$0xff]
    %v473 = vld [vmem:[#allocation6 + $0x568] sm:$0xff]
    %v474 = vld [vmem:[#allocation6 + $0x570] sm:$0xff]
    %v475 = vld [vmem:[#allocation6 + $0x578] sm:$0xff]
    %v476 = vld [vmem:[#allocation6 + $0x580] sm:$0xff]
    %v477 = vld [vmem:[#allocation6 + $0x588] sm:$0xff]
    %v478 = vld [vmem:[#allocation6 + $0x590] sm:$0xff]
    %v479 = vld [vmem:[#allocation6 + $0x598] sm:$0xff]
    %v480 = vld [vmem:[#allocation6 + $0x5a0] sm:$0xff]
    %v481 = vld [vmem:[#allocation6 + $0x5a8] sm:$0xff]
    %v482 = vld [vmem:[#allocation6 + $0x5b0] sm:$0xff]
    %v483 = vld [vmem:[#allocation6 + $0x5b8] sm:$0xff]
    %v484 = vld [vmem:[#allocation6 + $0x5c0] sm:$0xff]
    %v485 = vld [vmem:[#allocation6 + $0x5c8] sm:$0xff]
    %v486 = vld [vmem:[#allocation6 + $0x5d0] sm:$0xff]
    %v487 = vld [vmem:[#allocation6 + $0x5d8] sm:$0xff]
    %v488 = vld [vmem:[#allocation6 + $0x5e0] sm:$0xff]
    %v489 = vld [vmem:[#allocation6 + $0x5e8] sm:$0xff]
    %v490 = vld [vmem:[#allocation6 + $0x5f0] sm:$0xff]
    %v491 = vld [vmem:[#allocation6 + $0x5f8] sm:$0xff]
    %v492 = vld [vmem:[%s2] sm:$0xff]
    %v494 = vlaneseq
    %v495 = vshrl.u32 %v494, 7
    %v496 = vsub.s32 0, %v495
    %v497 = vrot.slane %v492, %v496
    %v498 = vlaneseq
    %v499 = vshrl.u32 %v498, 7
    %v500 = vsub.s32 1, %v499
    %v501 = vrot.slane %v492, %v500
    %v502 = vlaneseq
    %v503 = vshrl.u32 %v502, 7
    %v504 = vsub.s32 2, %v503
    %v505 = vrot.slane %v492, %v504
    %v506 = vlaneseq
    %v507 = vshrl.u32 %v506, 7
    %v508 = vsub.s32 3, %v507
    %v509 = vrot.slane %v492, %v508
    %v510 = vlaneseq
    %v511 = vshrl.u32 %v510, 7
    %v512 = vsub.s32 4, %v511
    %v513 = vrot.slane %v492, %v512
    %v514 = vlaneseq
    %v515 = vshrl.u32 %v514, 7
    %v516 = vsub.s32 5, %v515
    %v517 = vrot.slane %v492, %v516
    %v518 = vlaneseq
    %v519 = vshrl.u32 %v518, 7
    %v520 = vsub.s32 6, %v519
    %v521 = vrot.slane %v492, %v520
    %v522 = vlaneseq
    %v523 = vshrl.u32 %v522, 7
    %v524 = vsub.s32 7, %v523
    %v525 = vrot.slane %v492, %v524
    %v534 = vld [vmem:[%s0] sm:$0xff]
    %v535 = vld [vmem:[%s0 + $0x8] sm:$0xff]
    %v536 = vld [vmem:[%s0 + $0x10] sm:$0xff]
    %v537 = vpack.c.bf16 %v534, %v534
    %v538 = vpack.c.bf16 %v535, %v535
    %v539 = vpack.c.bf16 %v536, %v536
    %v732 = vunpack.c.l.b16 %v300
    %v733 = vunpack.c.h.b16 %v300
    %v734 = vunpack.c.l.b16 %v301
    %v735 = vunpack.c.h.b16 %v301
    %v736 = vunpack.c.l.b16 %v302
    %v737 = vunpack.c.h.b16 %v302
    %v738 = vunpack.c.l.b16 %v303
    %v739 = vunpack.c.h.b16 %v303
    %v740 = vunpack.c.l.b16 %v304
    %v741 = vunpack.c.h.b16 %v304
    %v742 = vunpack.c.l.b16 %v305
    %v743 = vunpack.c.h.b16 %v305
    %v744 = vunpack.c.l.b16 %v306
    %v745 = vunpack.c.h.b16 %v306
    %v746 = vunpack.c.l.b16 %v307
    %v747 = vunpack.c.h.b16 %v307
    %v748 = vunpack.c.l.b16 %v308
    %v749 = vunpack.c.h.b16 %v308
    %v750 = vunpack.c.l.b16 %v309
    %v751 = vunpack.c.h.b16 %v309
    %v752 = vunpack.c.l.b16 %v310
    %v753 = vunpack.c.h.b16 %v310
    %v754 = vunpack.c.l.b16 %v311
    %v755 = vunpack.c.h.b16 %v311
    %v756 = vunpack.c.l.b16 %v312
    %v757 = vunpack.c.h.b16 %v312
    %v758 = vunpack.c.l.b16 %v313
    %v759 = vunpack.c.h.b16 %v313
    %v760 = vunpack.c.l.b16 %v314
    %v761 = vunpack.c.h.b16 %v314
    %v762 = vunpack.c.l.b16 %v315
    %v763 = vunpack.c.h.b16 %v315
    %v764 = vunpack.c.l.b16 %v316
    %v765 = vunpack.c.h.b16 %v316
    %v766 = vunpack.c.l.b16 %v317
    %v767 = vunpack.c.h.b16 %v317
    %v768 = vunpack.c.l.b16 %v318
    %v769 = vunpack.c.h.b16 %v318
    %v770 = vunpack.c.l.b16 %v319
    %v771 = vunpack.c.h.b16 %v319
    %v772 = vunpack.c.l.b16 %v320
    %v773 = vunpack.c.h.b16 %v320
    %v774 = vunpack.c.l.b16 %v321
    %v775 = vunpack.c.h.b16 %v321
    %v776 = vunpack.c.l.b16 %v322
    %v777 = vunpack.c.h.b16 %v322
    %v778 = vunpack.c.l.b16 %v323
    %v779 = vunpack.c.h.b16 %v323
    %v780 = vunpack.c.l.b16 %v324
    %v781 = vunpack.c.h.b16 %v324
    %v782 = vunpack.c.l.b16 %v325
    %v783 = vunpack.c.h.b16 %v325
    %v784 = vunpack.c.l.b16 %v326
    %v785 = vunpack.c.h.b16 %v326
    %v786 = vunpack.c.l.b16 %v327
    %v787 = vunpack.c.h.b16 %v327
    %v788 = vunpack.c.l.b16 %v328
    %v789 = vunpack.c.h.b16 %v328
    %v790 = vunpack.c.l.b16 %v329
    %v791 = vunpack.c.h.b16 %v329
    %v792 = vunpack.c.l.b16 %v330
    %v793 = vunpack.c.h.b16 %v330
    %v794 = vunpack.c.l.b16 %v331
    %v795 = vunpack.c.h.b16 %v331
    %v796 = vunpack.c.l.b16 %v332
    %v797 = vunpack.c.h.b16 %v332
    %v798 = vunpack.c.l.b16 %v333
    %v799 = vunpack.c.h.b16 %v333
    %v800 = vunpack.c.l.b16 %v334
    %v801 = vunpack.c.h.b16 %v334
    %v802 = vunpack.c.l.b16 %v335
    %v803 = vunpack.c.h.b16 %v335
    %v804 = vunpack.c.l.b16 %v336
    %v805 = vunpack.c.h.b16 %v336
    %v806 = vunpack.c.l.b16 %v337
    %v807 = vunpack.c.h.b16 %v337
    %v808 = vunpack.c.l.b16 %v338
    %v809 = vunpack.c.h.b16 %v338
    %v810 = vunpack.c.l.b16 %v339
    %v811 = vunpack.c.h.b16 %v339
    %v812 = vunpack.c.l.b16 %v340
    %v813 = vunpack.c.h.b16 %v340
    %v814 = vunpack.c.l.b16 %v341
    %v815 = vunpack.c.h.b16 %v341
    %v816 = vunpack.c.l.b16 %v342
    %v817 = vunpack.c.h.b16 %v342
    %v818 = vunpack.c.l.b16 %v343
    %v819 = vunpack.c.h.b16 %v343
    %v820 = vunpack.c.l.b16 %v344
    %v821 = vunpack.c.h.b16 %v344
    %v822 = vunpack.c.l.b16 %v345
    %v823 = vunpack.c.h.b16 %v345
    %v824 = vunpack.c.l.b16 %v346
    %v825 = vunpack.c.h.b16 %v346
    %v826 = vunpack.c.l.b16 %v347
    %v827 = vunpack.c.h.b16 %v347
    %v828 = vunpack.c.l.b16 %v348
    %v829 = vunpack.c.h.b16 %v348
    %v830 = vunpack.c.l.b16 %v349
    %v831 = vunpack.c.h.b16 %v349
    %v832 = vunpack.c.l.b16 %v350
    %v833 = vunpack.c.h.b16 %v350
    %v834 = vunpack.c.l.b16 %v351
    %v835 = vunpack.c.h.b16 %v351
    %v836 = vunpack.c.l.b16 %v352
    %v837 = vunpack.c.h.b16 %v352
    %v838 = vunpack.c.l.b16 %v353
    %v839 = vunpack.c.h.b16 %v353
    %v840 = vunpack.c.l.b16 %v354
    %v841 = vunpack.c.h.b16 %v354
    %v842 = vunpack.c.l.b16 %v355
    %v843 = vunpack.c.h.b16 %v355
    %v844 = vunpack.c.l.b16 %v356
    %v845 = vunpack.c.h.b16 %v356
    %v846 = vunpack.c.l.b16 %v357
    %v847 = vunpack.c.h.b16 %v357
    %v848 = vunpack.c.l.b16 %v358
    %v849 = vunpack.c.h.b16 %v358
    %v850 = vunpack.c.l.b16 %v359
    %v851 = vunpack.c.h.b16 %v359
    %v852 = vunpack.c.l.b16 %v360
    %v853 = vunpack.c.h.b16 %v360
    %v854 = vunpack.c.l.b16 %v361
    %v855 = vunpack.c.h.b16 %v361
    %v856 = vunpack.c.l.b16 %v362
    %v857 = vunpack.c.h.b16 %v362
    %v858 = vunpack.c.l.b16 %v363
    %v859 = vunpack.c.h.b16 %v363
    %v860 = vunpack.c.l.b16 %v364
    %v861 = vunpack.c.h.b16 %v364
    %v862 = vunpack.c.l.b16 %v365
    %v863 = vunpack.c.h.b16 %v365
    %v864 = vunpack.c.l.b16 %v366
    %v865 = vunpack.c.h.b16 %v366
    %v866 = vunpack.c.l.b16 %v367
    %v867 = vunpack.c.h.b16 %v367
    %v868 = vunpack.c.l.b16 %v368
    %v869 = vunpack.c.h.b16 %v368
    %v870 = vunpack.c.l.b16 %v369
    %v871 = vunpack.c.h.b16 %v369
    %v872 = vunpack.c.l.b16 %v370
    %v873 = vunpack.c.h.b16 %v370
    %v874 = vunpack.c.l.b16 %v371
    %v875 = vunpack.c.h.b16 %v371
    %v876 = vunpack.c.l.b16 %v372
    %v877 = vunpack.c.h.b16 %v372
    %v878 = vunpack.c.l.b16 %v373
    %v879 = vunpack.c.h.b16 %v373
    %v880 = vunpack.c.l.b16 %v374
    %v881 = vunpack.c.h.b16 %v374
    %v882 = vunpack.c.l.b16 %v375
    %v883 = vunpack.c.h.b16 %v375
    %v884 = vunpack.c.l.b16 %v376
    %v885 = vunpack.c.h.b16 %v376
    %v886 = vunpack.c.l.b16 %v377
    %v887 = vunpack.c.h.b16 %v377
    %v888 = vunpack.c.l.b16 %v378
    %v889 = vunpack.c.h.b16 %v378
    %v890 = vunpack.c.l.b16 %v379
    %v891 = vunpack.c.h.b16 %v379
    %v892 = vunpack.c.l.b16 %v380
    %v893 = vunpack.c.h.b16 %v380
    %v894 = vunpack.c.l.b16 %v381
    %v895 = vunpack.c.h.b16 %v381
    %v896 = vunpack.c.l.b16 %v382
    %v897 = vunpack.c.h.b16 %v382
    %v898 = vunpack.c.l.b16 %v383
    %v899 = vunpack.c.h.b16 %v383
    %v900 = vunpack.c.l.b16 %v384
    %v901 = vunpack.c.h.b16 %v384
    %v902 = vunpack.c.l.b16 %v385
    %v903 = vunpack.c.h.b16 %v385
    %v904 = vunpack.c.l.b16 %v386
    %v905 = vunpack.c.h.b16 %v386
    %v906 = vunpack.c.l.b16 %v387
    %v907 = vunpack.c.h.b16 %v387
    %v908 = vunpack.c.l.b16 %v388
    %v909 = vunpack.c.h.b16 %v388
    %v910 = vunpack.c.l.b16 %v389
    %v911 = vunpack.c.h.b16 %v389
    %v912 = vunpack.c.l.b16 %v390
    %v913 = vunpack.c.h.b16 %v390
    %v914 = vunpack.c.l.b16 %v391
    %v915 = vunpack.c.h.b16 %v391
    %v916 = vunpack.c.l.b16 %v392
    %v917 = vunpack.c.h.b16 %v392
    %v918 = vunpack.c.l.b16 %v393
    %v919 = vunpack.c.h.b16 %v393
    %v920 = vunpack.c.l.b16 %v394
    %v921 = vunpack.c.h.b16 %v394
    %v922 = vunpack.c.l.b16 %v395
    %v923 = vunpack.c.h.b16 %v395
    %v924 = vunpack.c.l.b16 %v396
    %v925 = vunpack.c.h.b16 %v396
    %v926 = vunpack.c.l.b16 %v397
    %v927 = vunpack.c.h.b16 %v397
    %v928 = vunpack.c.l.b16 %v398
    %v929 = vunpack.c.h.b16 %v398
    %v930 = vunpack.c.l.b16 %v399
    %v931 = vunpack.c.h.b16 %v399
    %v932 = vunpack.c.l.b16 %v400
    %v933 = vunpack.c.h.b16 %v400
    %v934 = vunpack.c.l.b16 %v401
    %v935 = vunpack.c.h.b16 %v401
    %v936 = vunpack.c.l.b16 %v402
    %v937 = vunpack.c.h.b16 %v402
    %v938 = vunpack.c.l.b16 %v403
    %v939 = vunpack.c.h.b16 %v403
    %v940 = vunpack.c.l.b16 %v404
    %v941 = vunpack.c.h.b16 %v404
    %v942 = vunpack.c.l.b16 %v405
    %v943 = vunpack.c.h.b16 %v405
    %v944 = vunpack.c.l.b16 %v406
    %v945 = vunpack.c.h.b16 %v406
    %v946 = vunpack.c.l.b16 %v407
    %v947 = vunpack.c.h.b16 %v407
    %v948 = vunpack.c.l.b16 %v408
    %v949 = vunpack.c.h.b16 %v408
    %v950 = vunpack.c.l.b16 %v409
    %v951 = vunpack.c.h.b16 %v409
    %v952 = vunpack.c.l.b16 %v410
    %v953 = vunpack.c.h.b16 %v410
    %v954 = vunpack.c.l.b16 %v411
    %v955 = vunpack.c.h.b16 %v411
    %v956 = vunpack.c.l.b16 %v412
    %v957 = vunpack.c.h.b16 %v412
    %v958 = vunpack.c.l.b16 %v413
    %v959 = vunpack.c.h.b16 %v413
    %v960 = vunpack.c.l.b16 %v414
    %v961 = vunpack.c.h.b16 %v414
    %v962 = vunpack.c.l.b16 %v415
    %v963 = vunpack.c.h.b16 %v415
    %v964 = vunpack.c.l.b16 %v416
    %v965 = vunpack.c.h.b16 %v416
    %v966 = vunpack.c.l.b16 %v417
    %v967 = vunpack.c.h.b16 %v417
    %v968 = vunpack.c.l.b16 %v418
    %v969 = vunpack.c.h.b16 %v418
    %v970 = vunpack.c.l.b16 %v419
    %v971 = vunpack.c.h.b16 %v419
    %v972 = vunpack.c.l.b16 %v420
    %v973 = vunpack.c.h.b16 %v420
    %v974 = vunpack.c.l.b16 %v421
    %v975 = vunpack.c.h.b16 %v421
    %v976 = vunpack.c.l.b16 %v422
    %v977 = vunpack.c.h.b16 %v422
    %v978 = vunpack.c.l.b16 %v423
    %v979 = vunpack.c.h.b16 %v423
    %v980 = vunpack.c.l.b16 %v424
    %v981 = vunpack.c.h.b16 %v424
    %v982 = vunpack.c.l.b16 %v425
    %v983 = vunpack.c.h.b16 %v425
    %v984 = vunpack.c.l.b16 %v426
    %v985 = vunpack.c.h.b16 %v426
    %v986 = vunpack.c.l.b16 %v427
    %v987 = vunpack.c.h.b16 %v427
    %v988 = vunpack.c.l.b16 %v428
    %v989 = vunpack.c.h.b16 %v428
    %v990 = vunpack.c.l.b16 %v429
    %v991 = vunpack.c.h.b16 %v429
    %v992 = vunpack.c.l.b16 %v430
    %v993 = vunpack.c.h.b16 %v430
    %v994 = vunpack.c.l.b16 %v431
    %v995 = vunpack.c.h.b16 %v431
    %v996 = vunpack.c.l.b16 %v432
    %v997 = vunpack.c.h.b16 %v432
    %v998 = vunpack.c.l.b16 %v433
    %v999 = vunpack.c.h.b16 %v433
    %v1000 = vunpack.c.l.b16 %v434
    %v1001 = vunpack.c.h.b16 %v434
    %v1002 = vunpack.c.l.b16 %v435
    %v1003 = vunpack.c.h.b16 %v435
    %v1004 = vunpack.c.l.b16 %v436
    %v1005 = vunpack.c.h.b16 %v436
    %v1006 = vunpack.c.l.b16 %v437
    %v1007 = vunpack.c.h.b16 %v437
    %v1008 = vunpack.c.l.b16 %v438
    %v1009 = vunpack.c.h.b16 %v438
    %v1010 = vunpack.c.l.b16 %v439
    %v1011 = vunpack.c.h.b16 %v439
    %v1012 = vunpack.c.l.b16 %v440
    %v1013 = vunpack.c.h.b16 %v440
    %v1014 = vunpack.c.l.b16 %v441
    %v1015 = vunpack.c.h.b16 %v441
    %v1016 = vunpack.c.l.b16 %v442
    %v1017 = vunpack.c.h.b16 %v442
    %v1018 = vunpack.c.l.b16 %v443
    %v1019 = vunpack.c.h.b16 %v443
    %v1020 = vunpack.c.l.b16 %v444
    %v1021 = vunpack.c.h.b16 %v444
    %v1022 = vunpack.c.l.b16 %v445
    %v1023 = vunpack.c.h.b16 %v445
    %v1024 = vunpack.c.l.b16 %v446
    %v1025 = vunpack.c.h.b16 %v446
    %v1026 = vunpack.c.l.b16 %v447
    %v1027 = vunpack.c.h.b16 %v447
    %v1028 = vunpack.c.l.b16 %v448
    %v1029 = vunpack.c.h.b16 %v448
    %v1030 = vunpack.c.l.b16 %v449
    %v1031 = vunpack.c.h.b16 %v449
    %v1032 = vunpack.c.l.b16 %v450
    %v1033 = vunpack.c.h.b16 %v450
    %v1034 = vunpack.c.l.b16 %v451
    %v1035 = vunpack.c.h.b16 %v451
    %v1036 = vunpack.c.l.b16 %v452
    %v1037 = vunpack.c.h.b16 %v452
    %v1038 = vunpack.c.l.b16 %v453
    %v1039 = vunpack.c.h.b16 %v453
    %v1040 = vunpack.c.l.b16 %v454
    %v1041 = vunpack.c.h.b16 %v454
    %v1042 = vunpack.c.l.b16 %v455
    %v1043 = vunpack.c.h.b16 %v455
    %v1044 = vunpack.c.l.b16 %v456
    %v1045 = vunpack.c.h.b16 %v456
    %v1046 = vunpack.c.l.b16 %v457
    %v1047 = vunpack.c.h.b16 %v457
    %v1048 = vunpack.c.l.b16 %v458
    %v1049 = vunpack.c.h.b16 %v458
    %v1050 = vunpack.c.l.b16 %v459
    %v1051 = vunpack.c.h.b16 %v459
    %v1052 = vunpack.c.l.b16 %v460
    %v1053 = vunpack.c.h.b16 %v460
    %v1054 = vunpack.c.l.b16 %v461
    %v1055 = vunpack.c.h.b16 %v461
    %v1056 = vunpack.c.l.b16 %v462
    %v1057 = vunpack.c.h.b16 %v462
    %v1058 = vunpack.c.l.b16 %v463
    %v1059 = vunpack.c.h.b16 %v463
    %v1060 = vunpack.c.l.b16 %v464
    %v1061 = vunpack.c.h.b16 %v464
    %v1062 = vunpack.c.l.b16 %v465
    %v1063 = vunpack.c.h.b16 %v465
    %v1064 = vunpack.c.l.b16 %v466
    %v1065 = vunpack.c.h.b16 %v466
    %v1066 = vunpack.c.l.b16 %v467
    %v1067 = vunpack.c.h.b16 %v467
    %v1068 = vunpack.c.l.b16 %v468
    %v1069 = vunpack.c.h.b16 %v468
    %v1070 = vunpack.c.l.b16 %v469
    %v1071 = vunpack.c.h.b16 %v469
    %v1072 = vunpack.c.l.b16 %v470
    %v1073 = vunpack.c.h.b16 %v470
    %v1074 = vunpack.c.l.b16 %v471
    %v1075 = vunpack.c.h.b16 %v471
    %v1076 = vunpack.c.l.b16 %v472
    %v1077 = vunpack.c.h.b16 %v472
    %v1078 = vunpack.c.l.b16 %v473
    %v1079 = vunpack.c.h.b16 %v473
    %v1080 = vunpack.c.l.b16 %v474
    %v1081 = vunpack.c.h.b16 %v474
    %v1082 = vunpack.c.l.b16 %v475
    %v1083 = vunpack.c.h.b16 %v475
    %v1084 = vunpack.c.l.b16 %v476
    %v1085 = vunpack.c.h.b16 %v476
    %v1086 = vunpack.c.l.b16 %v477
    %v1087 = vunpack.c.h.b16 %v477
    %v1088 = vunpack.c.l.b16 %v478
    %v1089 = vunpack.c.h.b16 %v478
    %v1090 = vunpack.c.l.b16 %v479
    %v1091 = vunpack.c.h.b16 %v479
    %v1092 = vunpack.c.l.b16 %v480
    %v1093 = vunpack.c.h.b16 %v480
    %v1094 = vunpack.c.l.b16 %v481
    %v1095 = vunpack.c.h.b16 %v481
    %v1096 = vunpack.c.l.b16 %v482
    %v1097 = vunpack.c.h.b16 %v482
    %v1098 = vunpack.c.l.b16 %v483
    %v1099 = vunpack.c.h.b16 %v483
    %v1100 = vunpack.c.l.b16 %v484
    %v1101 = vunpack.c.h.b16 %v484
    %v1102 = vunpack.c.l.b16 %v485
    %v1103 = vunpack.c.h.b16 %v485
    %v1104 = vunpack.c.l.b16 %v486
    %v1105 = vunpack.c.h.b16 %v486
    %v1106 = vunpack.c.l.b16 %v487
    %v1107 = vunpack.c.h.b16 %v487
    %v1108 = vunpack.c.l.b16 %v488
    %v1109 = vunpack.c.h.b16 %v488
    %v1110 = vunpack.c.l.b16 %v489
    %v1111 = vunpack.c.h.b16 %v489
    %v1112 = vunpack.c.l.b16 %v490
    %v1113 = vunpack.c.h.b16 %v490
    %v1114 = vunpack.c.l.b16 %v491
    %v1115 = vunpack.c.h.b16 %v491
    %v1116 = vpack.c.b16 %v740, %v732
    %v1117 = vpack.c.b16 %v741, %v733
    %v1118 = vpack.c.b16 %v742, %v734
    %v1119 = vpack.c.b16 %v743, %v735
    %v1120 = vpack.c.b16 %v744, %v736
    %v1121 = vpack.c.b16 %v745, %v737
    %v1122 = vpack.c.b16 %v746, %v738
    %v1123 = vpack.c.b16 %v747, %v739
    %v1124 = vpack.c.b16 %v756, %v748
    %v1125 = vpack.c.b16 %v757, %v749
    %v1126 = vpack.c.b16 %v758, %v750
    %v1127 = vpack.c.b16 %v759, %v751
    %v1128 = vpack.c.b16 %v760, %v752
    %v1129 = vpack.c.b16 %v761, %v753
    %v1130 = vpack.c.b16 %v762, %v754
    %v1131 = vpack.c.b16 %v763, %v755
    %v1132 = vpack.c.b16 %v772, %v764
    %v1133 = vpack.c.b16 %v773, %v765
    %v1134 = vpack.c.b16 %v774, %v766
    %v1135 = vpack.c.b16 %v775, %v767
    %v1136 = vpack.c.b16 %v776, %v768
    %v1137 = vpack.c.b16 %v777, %v769
    %v1138 = vpack.c.b16 %v778, %v770
    %v1139 = vpack.c.b16 %v779, %v771
    %v1140 = vpack.c.b16 %v788, %v780
    %v1141 = vpack.c.b16 %v789, %v781
    %v1142 = vpack.c.b16 %v790, %v782
    %v1143 = vpack.c.b16 %v791, %v783
    %v1144 = vpack.c.b16 %v792, %v784
    %v1145 = vpack.c.b16 %v793, %v785
    %v1146 = vpack.c.b16 %v794, %v786
    %v1147 = vpack.c.b16 %v795, %v787
    %v1148 = vpack.c.b16 %v804, %v796
    %v1149 = vpack.c.b16 %v805, %v797
    %v1150 = vpack.c.b16 %v806, %v798
    %v1151 = vpack.c.b16 %v807, %v799
    %v1152 = vpack.c.b16 %v808, %v800
    %v1153 = vpack.c.b16 %v809, %v801
    %v1154 = vpack.c.b16 %v810, %v802
    %v1155 = vpack.c.b16 %v811, %v803
    %v1156 = vpack.c.b16 %v820, %v812
    %v1157 = vpack.c.b16 %v821, %v813
    %v1158 = vpack.c.b16 %v822, %v814
    %v1159 = vpack.c.b16 %v823, %v815
    %v1160 = vpack.c.b16 %v824, %v816
    %v1161 = vpack.c.b16 %v825, %v817
    %v1162 = vpack.c.b16 %v826, %v818
    %v1163 = vpack.c.b16 %v827, %v819
    %v1164 = vpack.c.b16 %v836, %v828
    %v1165 = vpack.c.b16 %v837, %v829
    %v1166 = vpack.c.b16 %v838, %v830
    %v1167 = vpack.c.b16 %v839, %v831
    %v1168 = vpack.c.b16 %v840, %v832
    %v1169 = vpack.c.b16 %v841, %v833
    %v1170 = vpack.c.b16 %v842, %v834
    %v1171 = vpack.c.b16 %v843, %v835
    %v1172 = vpack.c.b16 %v852, %v844
    %v1173 = vpack.c.b16 %v853, %v845
    %v1174 = vpack.c.b16 %v854, %v846
    %v1175 = vpack.c.b16 %v855, %v847
    %v1176 = vpack.c.b16 %v856, %v848
    %v1177 = vpack.c.b16 %v857, %v849
    %v1178 = vpack.c.b16 %v858, %v850
    %v1179 = vpack.c.b16 %v859, %v851
    %v1180 = vpack.c.b16 %v868, %v860
    %v1181 = vpack.c.b16 %v869, %v861
    %v1182 = vpack.c.b16 %v870, %v862
    %v1183 = vpack.c.b16 %v871, %v863
    %v1184 = vpack.c.b16 %v872, %v864
    %v1185 = vpack.c.b16 %v873, %v865
    %v1186 = vpack.c.b16 %v874, %v866
    %v1187 = vpack.c.b16 %v875, %v867
    %v1188 = vpack.c.b16 %v884, %v876
    %v1189 = vpack.c.b16 %v885, %v877
    %v1190 = vpack.c.b16 %v886, %v878
    %v1191 = vpack.c.b16 %v887, %v879
    %v1192 = vpack.c.b16 %v888, %v880
    %v1193 = vpack.c.b16 %v889, %v881
    %v1194 = vpack.c.b16 %v890, %v882
    %v1195 = vpack.c.b16 %v891, %v883
    %v1196 = vpack.c.b16 %v900, %v892
    %v1197 = vpack.c.b16 %v901, %v893
    %v1198 = vpack.c.b16 %v902, %v894
    %v1199 = vpack.c.b16 %v903, %v895
    %v1200 = vpack.c.b16 %v904, %v896
    %v1201 = vpack.c.b16 %v905, %v897
    %v1202 = vpack.c.b16 %v906, %v898
    %v1203 = vpack.c.b16 %v907, %v899
    %v1204 = vpack.c.b16 %v916, %v908
    %v1205 = vpack.c.b16 %v917, %v909
    %v1206 = vpack.c.b16 %v918, %v910
    %v1207 = vpack.c.b16 %v919, %v911
    %v1208 = vpack.c.b16 %v920, %v912
    %v1209 = vpack.c.b16 %v921, %v913
    %v1210 = vpack.c.b16 %v922, %v914
    %v1211 = vpack.c.b16 %v923, %v915
    %v1212 = vpack.c.b16 %v932, %v924
    %v1213 = vpack.c.b16 %v933, %v925
    %v1214 = vpack.c.b16 %v934, %v926
    %v1215 = vpack.c.b16 %v935, %v927
    %v1216 = vpack.c.b16 %v936, %v928
    %v1217 = vpack.c.b16 %v937, %v929
    %v1218 = vpack.c.b16 %v938, %v930
    %v1219 = vpack.c.b16 %v939, %v931
    %v1220 = vpack.c.b16 %v948, %v940
    %v1221 = vpack.c.b16 %v949, %v941
    %v1222 = vpack.c.b16 %v950, %v942
    %v1223 = vpack.c.b16 %v951, %v943
    %v1224 = vpack.c.b16 %v952, %v944
    %v1225 = vpack.c.b16 %v953, %v945
    %v1226 = vpack.c.b16 %v954, %v946
    %v1227 = vpack.c.b16 %v955, %v947
    %v1228 = vpack.c.b16 %v964, %v956
    %v1229 = vpack.c.b16 %v965, %v957
    %v1230 = vpack.c.b16 %v966, %v958
    %v1231 = vpack.c.b16 %v967, %v959
    %v1232 = vpack.c.b16 %v968, %v960
    %v1233 = vpack.c.b16 %v969, %v961
    %v1234 = vpack.c.b16 %v970, %v962
    %v1235 = vpack.c.b16 %v971, %v963
    %v1236 = vpack.c.b16 %v980, %v972
    %v1237 = vpack.c.b16 %v981, %v973
    %v1238 = vpack.c.b16 %v982, %v974
    %v1239 = vpack.c.b16 %v983, %v975
    %v1240 = vpack.c.b16 %v984, %v976
    %v1241 = vpack.c.b16 %v985, %v977
    %v1242 = vpack.c.b16 %v986, %v978
    %v1243 = vpack.c.b16 %v987, %v979
    %v1244 = vpack.c.b16 %v996, %v988
    %v1245 = vpack.c.b16 %v997, %v989
    %v1246 = vpack.c.b16 %v998, %v990
    %v1247 = vpack.c.b16 %v999, %v991
    %v1248 = vpack.c.b16 %v1000, %v992
    %v1249 = vpack.c.b16 %v1001, %v993
    %v1250 = vpack.c.b16 %v1002, %v994
    %v1251 = vpack.c.b16 %v1003, %v995
    %v1252 = vpack.c.b16 %v1012, %v1004
    %v1253 = vpack.c.b16 %v1013, %v1005
    %v1254 = vpack.c.b16 %v1014, %v1006
    %v1255 = vpack.c.b16 %v1015, %v1007
    %v1256 = vpack.c.b16 %v1016, %v1008
    %v1257 = vpack.c.b16 %v1017, %v1009
    %v1258 = vpack.c.b16 %v1018, %v1010
    %v1259 = vpack.c.b16 %v1019, %v1011
    %v1260 = vpack.c.b16 %v1028, %v1020
    %v1261 = vpack.c.b16 %v1029, %v1021
    %v1262 = vpack.c.b16 %v1030, %v1022
    %v1263 = vpack.c.b16 %v1031, %v1023
    %v1264 = vpack.c.b16 %v1032, %v1024
    %v1265 = vpack.c.b16 %v1033, %v1025
    %v1266 = vpack.c.b16 %v1034, %v1026
    %v1267 = vpack.c.b16 %v1035, %v1027
    %v1268 = vpack.c.b16 %v1044, %v1036
    %v1269 = vpack.c.b16 %v1045, %v1037
    %v1270 = vpack.c.b16 %v1046, %v1038
    %v1271 = vpack.c.b16 %v1047, %v1039
    %v1272 = vpack.c.b16 %v1048, %v1040
    %v1273 = vpack.c.b16 %v1049, %v1041
    %v1274 = vpack.c.b16 %v1050, %v1042
    %v1275 = vpack.c.b16 %v1051, %v1043
    %v1276 = vpack.c.b16 %v1060, %v1052
    %v1277 = vpack.c.b16 %v1061, %v1053
    %v1278 = vpack.c.b16 %v1062, %v1054
    %v1279 = vpack.c.b16 %v1063, %v1055
    %v1280 = vpack.c.b16 %v1064, %v1056
    %v1281 = vpack.c.b16 %v1065, %v1057
    %v1282 = vpack.c.b16 %v1066, %v1058
    %v1283 = vpack.c.b16 %v1067, %v1059
    %v1284 = vpack.c.b16 %v1076, %v1068
    %v1285 = vpack.c.b16 %v1077, %v1069
    %v1286 = vpack.c.b16 %v1078, %v1070
    %v1287 = vpack.c.b16 %v1079, %v1071
    %v1288 = vpack.c.b16 %v1080, %v1072
    %v1289 = vpack.c.b16 %v1081, %v1073
    %v1290 = vpack.c.b16 %v1082, %v1074
    %v1291 = vpack.c.b16 %v1083, %v1075
    %v1292 = vpack.c.b16 %v1092, %v1084
    %v1293 = vpack.c.b16 %v1093, %v1085
    %v1294 = vpack.c.b16 %v1094, %v1086
    %v1295 = vpack.c.b16 %v1095, %v1087
    %v1296 = vpack.c.b16 %v1096, %v1088
    %v1297 = vpack.c.b16 %v1097, %v1089
    %v1298 = vpack.c.b16 %v1098, %v1090
    %v1299 = vpack.c.b16 %v1099, %v1091
    %v1300 = vpack.c.b16 %v1108, %v1100
    %v1301 = vpack.c.b16 %v1109, %v1101
    %v1302 = vpack.c.b16 %v1110, %v1102
    %v1303 = vpack.c.b16 %v1111, %v1103
    %v1304 = vpack.c.b16 %v1112, %v1104
    %v1305 = vpack.c.b16 %v1113, %v1105
    %v1306 = vpack.c.b16 %v1114, %v1106
    %v1307 = vpack.c.b16 %v1115, %v1107
    %1500 = vmatprep.subr.bf16.mxu0 %v1117
    %1501 = vmatpush1.bf16.msra.mxu0 %v1116
    %1502 = vmatprep.subr.bf16.mxu0 %v1125
    %1503 = vmatpush1.bf16.msra.mxu0 %v1124
    %1504 = vmatprep.subr.bf16.mxu0 %v1133
    %1505 = vmatpush1.bf16.msra.mxu0 %v1132
    %1506 = vmatprep.subr.bf16.mxu0 %v1141
    %1507 = vmatpush1.bf16.msra.mxu0 %v1140
    %1508 = vmatprep.subr.bf16.mxu0 %v1149
    %1509 = vmatpush1.bf16.msra.mxu0 %v1148
    %1510 = vmatprep.subr.bf16.mxu0 %v1157
    %1511 = vmatpush1.bf16.msra.mxu0 %v1156
    %1512 = vmatprep.subr.bf16.mxu0 %v1165
    %1513 = vmatpush1.bf16.msra.mxu0 %v1164
    %1514 = vmatprep.subr.bf16.mxu0 %v1173
    %1515 = vmatpush1.bf16.msra.mxu0 %v1172
    %1516 = vmatprep.subr.bf16.mxu0 %v1181
    %1517 = vmatpush1.bf16.msra.mxu0 %v1180
    %1518 = vmatprep.subr.bf16.mxu0 %v1189
    %1519 = vmatpush1.bf16.msra.mxu0 %v1188
    %1520 = vmatprep.subr.bf16.mxu0 %v1197
    %1521 = vmatpush1.bf16.msra.mxu0 %v1196
    %1522 = vmatprep.subr.bf16.mxu0 %v1205
    %1523 = vmatpush1.bf16.msra.mxu0 %v1204
    %1524 = vmatprep.subr.bf16.mxu0 %v1213
    %1525 = vmatpush1.bf16.msra.mxu0 %v1212
    %1526 = vmatprep.subr.bf16.mxu0 %v1221
    %1527 = vmatpush1.bf16.msra.mxu0 %v1220
    %1528 = vmatprep.subr.bf16.mxu0 %v1229
    %1529 = vmatpush1.bf16.msra.mxu0 %v1228
    %1530 = vmatprep.subr.bf16.mxu0 %v1237
    %1531 = vmatpush1.bf16.msra.mxu0 %v1236
    %1532 = vmatprep.mubr.bf16.mxu0 %v538
    %1533 = vmatmul.mubr.bf16.gmra.mrb[0].mxu0 %v537
    %v1534 = vpop.f32.mrb[0].mxu0
    %v1535 = vadd.f32 %v497, %v1534
    %v1536 = vpop.f32.mrb[0].mxu0
    %v1537 = vadd.f32 %v501, %v1536
    %v1538 = vpop.f32.mrb[0].mxu0
    %v1539 = vpop.f32.mrb[0].mxu0
    %1540 = vdwg.mxu0
    %1541 = vmatprep.subr.bf16.mxu0 %v1245
    %1542 = vmatpush1.bf16.msra.mxu0 %v1244
    %1543 = vmatprep.subr.bf16.mxu0 %v1253
    %1544 = vmatpush1.bf16.msra.mxu0 %v1252
    %1545 = vmatprep.subr.bf16.mxu0 %v1261
    %1546 = vmatpush1.bf16.msra.mxu0 %v1260
    %1547 = vmatprep.subr.bf16.mxu0 %v1269
    %1548 = vmatpush1.bf16.msra.mxu0 %v1268
    %1549 = vmatprep.subr.bf16.mxu0 %v1277
    %1550 = vmatpush1.bf16.msra.mxu0 %v1276
    %1551 = vmatprep.subr.bf16.mxu0 %v1285
    %1552 = vmatpush1.bf16.msra.mxu0 %v1284
    %1553 = vmatprep.subr.bf16.mxu0 %v1293
    %1554 = vmatpush1.bf16.msra.mxu0 %v1292
    %1555 = vmatprep.subr.bf16.mxu0 %v1301
    %1556 = vmatpush1.bf16.msra.mxu0 %v1300
    %1557 = vmatprep.subr.bf16.mxu0 0
    %1558 = vmatpush1.bf16.msra.mxu0 0
    %1559 = vmatprep.subr.bf16.mxu0 0
    %1560 = vmatpush1.bf16.msra.mxu0 0
    %1561 = vmatprep.subr.bf16.mxu0 0
    %1562 = vmatpush1.bf16.msra.mxu0 0
    %1563 = vmatprep.subr.bf16.mxu0 0
    %1564 = vmatpush1.bf16.msra.mxu0 0
    %1565 = vmatprep.subr.bf16.mxu0 0
    %1566 = vmatpush1.bf16.msra.mxu0 0
    %1567 = vmatprep.subr.bf16.mxu0 0
    %1568 = vmatpush1.bf16.msra.mxu0 0
    %1569 = vmatprep.subr.bf16.mxu0 0
    %1570 = vmatpush1.bf16.msra.mxu0 0
    %1571 = vmatprep.subr.bf16.mxu0 0
    %1572 = vmatpush1.bf16.msra.mxu0 0
    %1573 = vmatprep.mubr.bf16.mxu0 0
    %1574 = vmatmul.mubr.bf16.gmra.mrb[0].mxu0 %v539
    %v1575 = vpop.f32.mrb[0].mxu0
    %v1576 = vadd.f32 %v1535, %v1575
    %v1577 = vpop.f32.mrb[0].mxu0
    %v1578 = vadd.f32 %v1537, %v1577
    %v1579 = vpop.f32.mrb[0].mxu0
    %v1580 = vpop.f32.mrb[0].mxu0
    %1581 = vdwg.mxu0
    %1582 = vmatprep.subr.bf16.mxu0 %v1119
    %1583 = vmatpush1.bf16.msra.mxu0 %v1118
    %1584 = vmatprep.subr.bf16.mxu0 %v1127
    %1585 = vmatpush1.bf16.msra.mxu0 %v1126
    %1586 = vmatprep.subr.bf16.mxu0 %v1135
    %1587 = vmatpush1.bf16.msra.mxu0 %v1134
    %1588 = vmatprep.subr.bf16.mxu0 %v1143
    %1589 = vmatpush1.bf16.msra.mxu0 %v1142
    %1590 = vmatprep.subr.bf16.mxu0 %v1151
    %1591 = vmatpush1.bf16.msra.mxu0 %v1150
    %1592 = vmatprep.subr.bf16.mxu0 %v1159
    %1593 = vmatpush1.bf16.msra.mxu0 %v1158
    %1594 = vmatprep.subr.bf16.mxu0 %v1167
    %1595 = vmatpush1.bf16.msra.mxu0 %v1166
    %1596 = vmatprep.subr.bf16.mxu0 %v1175
    %1597 = vmatpush1.bf16.msra.mxu0 %v1174
    %1598 = vmatprep.subr.bf16.mxu0 %v1183
    %1599 = vmatpush1.bf16.msra.mxu0 %v1182
    %1600 = vmatprep.subr.bf16.mxu0 %v1191
    %1601 = vmatpush1.bf16.msra.mxu0 %v1190
    %1602 = vmatprep.subr.bf16.mxu0 %v1199
    %1603 = vmatpush1.bf16.msra.mxu0 %v1198
    %1604 = vmatprep.subr.bf16.mxu0 %v1207
    %1605 = vmatpush1.bf16.msra.mxu0 %v1206
    %1606 = vmatprep.subr.bf16.mxu0 %v1215
    %1607 = vmatpush1.bf16.msra.mxu0 %v1214
    %1608 = vmatprep.subr.bf16.mxu0 %v1223
    %1609 = vmatpush1.bf16.msra.mxu0 %v1222
    %1610 = vmatprep.subr.bf16.mxu0 %v1231
    %1611 = vmatpush1.bf16.msra.mxu0 %v1230
    %1612 = vmatprep.subr.bf16.mxu0 %v1239
    %1613 = vmatpush1.bf16.msra.mxu0 %v1238
    %1614 = vmatprep.mubr.bf16.mxu0 %v538
    %1615 = vmatmul.mubr.bf16.gmra.mrb[0].mxu0 %v537
    %v1616 = vpop.f32.mrb[0].mxu0
    %v1617 = vadd.f32 %v505, %v1616
    %v1618 = vpop.f32.mrb[0].mxu0
    %v1619 = vadd.f32 %v509, %v1618
    %v1620 = vpop.f32.mrb[0].mxu0
    %v1621 = vpop.f32.mrb[0].mxu0
    %1622 = vdwg.mxu0
    %1623 = vmatprep.subr.bf16.mxu0 %v1247
    %1624 = vmatpush1.bf16.msra.mxu0 %v1246
    %1625 = vmatprep.subr.bf16.mxu0 %v1255
    %1626 = vmatpush1.bf16.msra.mxu0 %v1254
    %1627 = vmatprep.subr.bf16.mxu0 %v1263
    %1628 = vmatpush1.bf16.msra.mxu0 %v1262
    %1629 = vmatprep.subr.bf16.mxu0 %v1271
    %1630 = vmatpush1.bf16.msra.mxu0 %v1270
    %1631 = vmatprep.subr.bf16.mxu0 %v1279
    %1632 = vmatpush1.bf16.msra.mxu0 %v1278
    %1633 = vmatprep.subr.bf16.mxu0 %v1287
    %1634 = vmatpush1.bf16.msra.mxu0 %v1286
    %1635 = vmatprep.subr.bf16.mxu0 %v1295
    %1636 = vmatpush1.bf16.msra.mxu0 %v1294
    %1637 = vmatprep.subr.bf16.mxu0 %v1303
    %1638 = vmatpush1.bf16.msra.mxu0 %v1302
    %1639 = vmatprep.subr.bf16.mxu0 0
    %1640 = vmatpush1.bf16.msra.mxu0 0
    %1641 = vmatprep.subr.bf16.mxu0 0
    %1642 = vmatpush1.bf16.msra.mxu0 0
    %1643 = vmatprep.subr.bf16.mxu0 0
    %1644 = vmatpush1.bf16.msra.mxu0 0
    %1645 = vmatprep.subr.bf16.mxu0 0
    %1646 = vmatpush1.bf16.msra.mxu0 0
    %1647 = vmatprep.subr.bf16.mxu0 0
    %1648 = vmatpush1.bf16.msra.mxu0 0
    %1649 = vmatprep.subr.bf16.mxu0 0
    %1650 = vmatpush1.bf16.msra.mxu0 0
    %1651 = vmatprep.subr.bf16.mxu0 0
    %1652 = vmatpush1.bf16.msra.mxu0 0
    %1653 = vmatprep.subr.bf16.mxu0 0
    %1654 = vmatpush1.bf16.msra.mxu0 0
    %1655 = vmatprep.mubr.bf16.mxu0 0
    %1656 = vmatmul.mubr.bf16.gmra.mrb[0].mxu0 %v539
    %v1657 = vpop.f32.mrb[0].mxu0
    %v1658 = vadd.f32 %v1617, %v1657
    %v1659 = vpop.f32.mrb[0].mxu0
    %v1660 = vadd.f32 %v1619, %v1659
    %v1661 = vpop.f32.mrb[0].mxu0
    %v1662 = vpop.f32.mrb[0].mxu0
    %1663 = vdwg.mxu0
    %1664 = vmatprep.subr.bf16.mxu0 %v1121
    %1665 = vmatpush1.bf16.msra.mxu0 %v1120
    %1666 = vmatprep.subr.bf16.mxu0 %v1129
    %1667 = vmatpush1.bf16.msra.mxu0 %v1128
    %1668 = vmatprep.subr.bf16.mxu0 %v1137
    %1669 = vmatpush1.bf16.msra.mxu0 %v1136
    %1670 = vmatprep.subr.bf16.mxu0 %v1145
    %1671 = vmatpush1.bf16.msra.mxu0 %v1144
    %1672 = vmatprep.subr.bf16.mxu0 %v1153
    %1673 = vmatpush1.bf16.msra.mxu0 %v1152
    %1674 = vmatprep.subr.bf16.mxu0 %v1161
    %1675 = vmatpush1.bf16.msra.mxu0 %v1160
    %1676 = vmatprep.subr.bf16.mxu0 %v1169
    %1677 = vmatpush1.bf16.msra.mxu0 %v1168
    %1678 = vmatprep.subr.bf16.mxu0 %v1177
    %1679 = vmatpush1.bf16.msra.mxu0 %v1176
    %1680 = vmatprep.subr.bf16.mxu0 %v1185
    %1681 = vmatpush1.bf16.msra.mxu0 %v1184
    %1682 = vmatprep.subr.bf16.mxu0 %v1193
    %1683 = vmatpush1.bf16.msra.mxu0 %v1192
    %1684 = vmatprep.subr.bf16.mxu0 %v1201
    %1685 = vmatpush1.bf16.msra.mxu0 %v1200
    %1686 = vmatprep.subr.bf16.mxu0 %v1209
    %1687 = vmatpush1.bf16.msra.mxu0 %v1208
    %1688 = vmatprep.subr.bf16.mxu0 %v1217
    %1689 = vmatpush1.bf16.msra.mxu0 %v1216
    %1690 = vmatprep.subr.bf16.mxu0 %v1225
    %1691 = vmatpush1.bf16.msra.mxu0 %v1224
    %1692 = vmatprep.subr.bf16.mxu0 %v1233
    %1693 = vmatpush1.bf16.msra.mxu0 %v1232
    %1694 = vmatprep.subr.bf16.mxu0 %v1241
    %1695 = vmatpush1.bf16.msra.mxu0 %v1240
    %1696 = vmatprep.mubr.bf16.mxu0 %v538
    %1697 = vmatmul.mubr.bf16.gmra.mrb[0].mxu0 %v537
    %v1698 = vpop.f32.mrb[0].mxu0
    %v1699 = vadd.f32 %v513, %v1698
    %v1700 = vpop.f32.mrb[0].mxu0
    %v1701 = vadd.f32 %v517, %v1700
    %v1702 = vpop.f32.mrb[0].mxu0
    %v1703 = vpop.f32.mrb[0].mxu0
    %1704 = vdwg.mxu0
    %1705 = vmatprep.subr.bf16.mxu0 %v1249
    %1706 = vmatpush1.bf16.msra.mxu0 %v1248
    %1707 = vmatprep.subr.bf16.mxu0 %v1257
    %1708 = vmatpush1.bf16.msra.mxu0 %v1256
    %1709 = vmatprep.subr.bf16.mxu0 %v1265
    %1710 = vmatpush1.bf16.msra.mxu0 %v1264
    %1711 = vmatprep.subr.bf16.mxu0 %v1273
    %1712 = vmatpush1.bf16.msra.mxu0 %v1272
    %1713 = vmatprep.subr.bf16.mxu0 %v1281
    %1714 = vmatpush1.bf16.msra.mxu0 %v1280
    %1715 = vmatprep.subr.bf16.mxu0 %v1289
    %1716 = vmatpush1.bf16.msra.mxu0 %v1288
    %1717 = vmatprep.subr.bf16.mxu0 %v1297
    %1718 = vmatpush1.bf16.msra.mxu0 %v1296
    %1719 = vmatprep.subr.bf16.mxu0 %v1305
    %1720 = vmatpush1.bf16.msra.mxu0 %v1304
    %1721 = vmatprep.subr.bf16.mxu0 0
    %1722 = vmatpush1.bf16.msra.mxu0 0
    %1723 = vmatprep.subr.bf16.mxu0 0
    %1724 = vmatpush1.bf16.msra.mxu0 0
    %1725 = vmatprep.subr.bf16.mxu0 0
    %1726 = vmatpush1.bf16.msra.mxu0 0
    %1727 = vmatprep.subr.bf16.mxu0 0
    %1728 = vmatpush1.bf16.msra.mxu0 0
    %1729 = vmatprep.subr.bf16.mxu0 0
    %1730 = vmatpush1.bf16.msra.mxu0 0
    %1731 = vmatprep.subr.bf16.mxu0 0
    %1732 = vmatpush1.bf16.msra.mxu0 0
    %1733 = vmatprep.subr.bf16.mxu0 0
    %1734 = vmatpush1.bf16.msra.mxu0 0
    %1735 = vmatprep.subr.bf16.mxu0 0
    %1736 = vmatpush1.bf16.msra.mxu0 0
    %1737 = vmatprep.mubr.bf16.mxu0 0
    %1738 = vmatmul.mubr.bf16.gmra.mrb[0].mxu0 %v539
    %v1739 = vpop.f32.mrb[0].mxu0
    %v1740 = vadd.f32 %v1699, %v1739
    %v1741 = vpop.f32.mrb[0].mxu0
    %v1742 = vadd.f32 %v1701, %v1741
    %v1743 = vpop.f32.mrb[0].mxu0
    %v1744 = vpop.f32.mrb[0].mxu0
    %1745 = vdwg.mxu0
    %1746 = vmatprep.subr.bf16.mxu0 %v1123
    %1747 = vmatpush1.bf16.msra.mxu0 %v1122
    %1748 = vmatprep.subr.bf16.mxu0 %v1131
    %1749 = vmatpush1.bf16.msra.mxu0 %v1130
    %1750 = vmatprep.subr.bf16.mxu0 %v1139
    %1751 = vmatpush1.bf16.msra.mxu0 %v1138
    %1752 = vmatprep.subr.bf16.mxu0 %v1147
    %1753 = vmatpush1.bf16.msra.mxu0 %v1146
    %1754 = vmatprep.subr.bf16.mxu0 %v1155
    %1755 = vmatpush1.bf16.msra.mxu0 %v1154
    %1756 = vmatprep.subr.bf16.mxu0 %v1163
    %1757 = vmatpush1.bf16.msra.mxu0 %v1162
    %1758 = vmatprep.subr.bf16.mxu0 %v1171
    %1759 = vmatpush1.bf16.msra.mxu0 %v1170
    %1760 = vmatprep.subr.bf16.mxu0 %v1179
    %1761 = vmatpush1.bf16.msra.mxu0 %v1178
    %1762 = vmatprep.subr.bf16.mxu0 %v1187
    %1763 = vmatpush1.bf16.msra.mxu0 %v1186
    %1764 = vmatprep.subr.bf16.mxu0 %v1195
    %1765 = vmatpush1.bf16.msra.mxu0 %v1194
    %1766 = vmatprep.subr.bf16.mxu0 %v1203
    %1767 = vmatpush1.bf16.msra.mxu0 %v1202
    %1768 = vmatprep.subr.bf16.mxu0 %v1211
    %1769 = vmatpush1.bf16.msra.mxu0 %v1210
    %1770 = vmatprep.subr.bf16.mxu0 %v1219
    %1771 = vmatpush1.bf16.msra.mxu0 %v1218
    %1772 = vmatprep.subr.bf16.mxu0 %v1227
    %1773 = vmatpush1.bf16.msra.mxu0 %v1226
    %1774 = vmatprep.subr.bf16.mxu0 %v1235
    %1775 = vmatpush1.bf16.msra.mxu0 %v1234
    %1776 = vmatprep.subr.bf16.mxu0 %v1243
    %1777 = vmatpush1.bf16.msra.mxu0 %v1242
    %1778 = vmatprep.mubr.bf16.mxu0 %v538
    %1779 = vmatmul.mubr.bf16.gmra.mrb[0].mxu0 %v537
    %v1780 = vpop.f32.mrb[0].mxu0
    %v1781 = vadd.f32 %v521, %v1780
    %v1782 = vpop.f32.mrb[0].mxu0
    %v1783 = vadd.f32 %v525, %v1782
    %v1784 = vpop.f32.mrb[0].mxu0
    %v1785 = vpop.f32.mrb[0].mxu0
    %1786 = vdwg.mxu0
    %1787 = vmatprep.subr.bf16.mxu0 %v1251
    %1788 = vmatpush1.bf16.msra.mxu0 %v1250
    %1789 = vmatprep.subr.bf16.mxu0 %v1259
    %1790 = vmatpush1.bf16.msra.mxu0 %v1258
    %1791 = vmatprep.subr.bf16.mxu0 %v1267
    %1792 = vmatpush1.bf16.msra.mxu0 %v1266
    %1793 = vmatprep.subr.bf16.mxu0 %v1275
    %1794 = vmatpush1.bf16.msra.mxu0 %v1274
    %1795 = vmatprep.subr.bf16.mxu0 %v1283
    %1796 = vmatpush1.bf16.msra.mxu0 %v1282
    %1797 = vmatprep.subr.bf16.mxu0 %v1291
    %1798 = vmatpush1.bf16.msra.mxu0 %v1290
    %1799 = vmatprep.subr.bf16.mxu0 %v1299
    %1800 = vmatpush1.bf16.msra.mxu0 %v1298
    %1801 = vmatprep.subr.bf16.mxu0 %v1307
    %1802 = vmatpush1.bf16.msra.mxu0 %v1306
    %1803 = vmatprep.subr.bf16.mxu0 0
    %1804 = vmatpush1.bf16.msra.mxu0 0
    %1805 = vmatprep.subr.bf16.mxu0 0
    %1806 = vmatpush1.bf16.msra.mxu0 0
    %1807 = vmatprep.subr.bf16.mxu0 0
    %1808 = vmatpush1.bf16.msra.mxu0 0
    %1809 = vmatprep.subr.bf16.mxu0 0
    %1810 = vmatpush1.bf16.msra.mxu0 0
    %1811 = vmatprep.subr.bf16.mxu0 0
    %1812 = vmatpush1.bf16.msra.mxu0 0
    %1813 = vmatprep.subr.bf16.mxu0 0
    %1814 = vmatpush1.bf16.msra.mxu0 0
    %1815 = vmatprep.subr.bf16.mxu0 0
    %1816 = vmatpush1.bf16.msra.mxu0 0
    %1817 = vmatprep.subr.bf16.mxu0 0
    %1818 = vmatpush1.bf16.msra.mxu0 0
    %1819 = vmatprep.mubr.bf16.mxu0 0
    %1820 = vmatmul.mubr.bf16.gmra.mrb[0].mxu0 %v539
    %v1821 = vpop.f32.mrb[0].mxu0
    %v1822 = vadd.f32 %v1781, %v1821
    %v1823 = vpop.f32.mrb[0].mxu0
    %v1824 = vadd.f32 %v1783, %v1823
    %v1825 = vpop.f32.mrb[0].mxu0
    %v1826 = vpop.f32.mrb[0].mxu0
    %1827 = vdwg.mxu0
    %v1828 = vmul.f32 %v1576, %v1576
    %v1829 = vmul.f32 %v1578, %v1578
    %v1830 = vmul.f32 %v1658, %v1658
    %v1831 = vmul.f32 %v1660, %v1660
    %v1832 = vmul.f32 %v1740, %v1740
    %v1833 = vmul.f32 %v1742, %v1742
    %v1834 = vmul.f32 %v1822, %v1822
    %v1835 = vmul.f32 %v1824, %v1824
    %v1836 = vmul.f32 %v1576, %v1828
    %v1837 = vmul.f32 %v1578, %v1829
    %v1838 = vmul.f32 %v1658, %v1830
    %v1839 = vmul.f32 %v1660, %v1831
    %v1840 = vmul.f32 %v1740, %v1832
    %v1841 = vmul.f32 %v1742, %v1833
    %v1842 = vmul.f32 %v1822, %v1834
    %v1843 = vmul.f32 %v1824, %v1835
    %v1844 = vmul.f32 %v1836, 0.044715
    %v1845 = vmul.f32 %v1837, 0.044715
    %v1846 = vmul.f32 %v1838, 0.044715
    %v1847 = vmul.f32 %v1839, 0.044715
    %v1848 = vmul.f32 %v1840, 0.044715
    %v1849 = vmul.f32 %v1841, 0.044715
    %v1850 = vmul.f32 %v1842, 0.044715
    %v1851 = vmul.f32 %v1843, 0.044715
    %v1852 = vadd.f32 %v1576, %v1844
    %v1853 = vadd.f32 %v1578, %v1845
    %v1854 = vadd.f32 %v1658, %v1846
    %v1855 = vadd.f32 %v1660, %v1847
    %v1856 = vadd.f32 %v1740, %v1848
    %v1857 = vadd.f32 %v1742, %v1849
    %v1858 = vadd.f32 %v1822, %v1850
    %v1859 = vadd.f32 %v1824, %v1851
    %v1860 = vmul.f32 %v1852, 0.7978846
    %v1861 = vmul.f32 %v1853, 0.7978846
    %v1862 = vmul.f32 %v1854, 0.7978846
    %v1863 = vmul.f32 %v1855, 0.7978846
    %v1864 = vmul.f32 %v1856, 0.7978846
    %v1865 = vmul.f32 %v1857, 0.7978846
    %v1866 = vmul.f32 %v1858, 0.7978846
    %v1867 = vmul.f32 %v1859, 0.7978846
    %v1868 = vtanh.pop %v1860
    %v1869 = vtanh.pop %v1861
    %v1870 = vtanh.pop %v1862
    %v1871 = vtanh.pop %v1863
    %v1872 = vtanh.pop %v1864
    %v1873 = vtanh.pop %v1865
    %v1874 = vtanh.pop %v1866
    %v1875 = vtanh.pop %v1867
    %v1876 = vadd.f32 %v1868, 1.0
    %v1877 = vadd.f32 %v1869, 1.0
    %v1878 = vadd.f32 %v1870, 1.0
    %v1879 = vadd.f32 %v1871, 1.0
    %v1880 = vadd.f32 %v1872, 1.0
    %v1881 = vadd.f32 %v1873, 1.0
    %v1882 = vadd.f32 %v1874, 1.0
    %v1883 = vadd.f32 %v1875, 1.0
    %v1884 = vmul.f32 %v1876, 0.5
    %v1885 = vmul.f32 %v1877, 0.5
    %v1886 = vmul.f32 %v1878, 0.5
    %v1887 = vmul.f32 %v1879, 0.5
    %v1888 = vmul.f32 %v1880, 0.5
    %v1889 = vmul.f32 %v1881, 0.5
    %v1890 = vmul.f32 %v1882, 0.5
    %v1891 = vmul.f32 %v1883, 0.5
    %v1892 = vmul.f32 %v1576, %v1884
    %v1893 = vmul.f32 %v1578, %v1885
    %v1894 = vmul.f32 %v1658, %v1886
    %v1895 = vmul.f32 %v1660, %v1887
    %v1896 = vmul.f32 %v1740, %v1888
    %v1897 = vmul.f32 %v1742, %v1889
    %v1898 = vmul.f32 %v1822, %v1890
    %v1899 = vmul.f32 %v1824, %v1891
    %v1900 = vld [vmem:[%s0 + $0x18] sm:$0xff]
    %v1901 = vld [vmem:[%s0 + $0x20] sm:$0xff]
    %v1902 = vld [vmem:[%s0 + $0x28] sm:$0xff]
    %v1903 = vpack.c.bf16 %v1900, %v1900
    %v1904 = vpack.c.bf16 %v1901, %v1901
    %v1905 = vpack.c.bf16 %v1902, %v1902
    %1906 = vmatprep.subr.bf16.mxu0 %v1117
    %1907 = vmatpush1.bf16.msra.mxu0 %v1116
    %1908 = vmatprep.subr.bf16.mxu0 %v1125
    %1909 = vmatpush1.bf16.msra.mxu0 %v1124
    %1910 = vmatprep.subr.bf16.mxu0 %v1133
    %1911 = vmatpush1.bf16.msra.mxu0 %v1132
    %1912 = vmatprep.subr.bf16.mxu0 %v1141
    %1913 = vmatpush1.bf16.msra.mxu0 %v1140
    %1914 = vmatprep.subr.bf16.mxu0 %v1149
    %1915 = vmatpush1.bf16.msra.mxu0 %v1148
    %1916 = vmatprep.subr.bf16.mxu0 %v1157
    %1917 = vmatpush1.bf16.msra.mxu0 %v1156
    %1918 = vmatprep.subr.bf16.mxu0 %v1165
    %1919 = vmatpush1.bf16.msra.mxu0 %v1164
    %1920 = vmatprep.subr.bf16.mxu0 %v1173
    %1921 = vmatpush1.bf16.msra.mxu0 %v1172
    %1922 = vmatprep.subr.bf16.mxu0 %v1181
    %1923 = vmatpush1.bf16.msra.mxu0 %v1180
    %1924 = vmatprep.subr.bf16.mxu0 %v1189
    %1925 = vmatpush1.bf16.msra.mxu0 %v1188
    %1926 = vmatprep.subr.bf16.mxu0 %v1197
    %1927 = vmatpush1.bf16.msra.mxu0 %v1196
    %1928 = vmatprep.subr.bf16.mxu0 %v1205
    %1929 = vmatpush1.bf16.msra.mxu0 %v1204
    %1930 = vmatprep.subr.bf16.mxu0 %v1213
    %1931 = vmatpush1.bf16.msra.mxu0 %v1212
    %1932 = vmatprep.subr.bf16.mxu0 %v1221
    %1933 = vmatpush1.bf16.msra.mxu0 %v1220
    %1934 = vmatprep.subr.bf16.mxu0 %v1229
    %1935 = vmatpush1.bf16.msra.mxu0 %v1228
    %1936 = vmatprep.subr.bf16.mxu0 %v1237
    %1937 = vmatpush1.bf16.msra.mxu0 %v1236
    %1938 = vmatprep.mubr.bf16.mxu0 %v1904
    %1939 = vmatmul.mubr.bf16.gmra.mrb[0].mxu0 %v1903
    %v1940 = vpop.f32.mrb[0].mxu0
    %v1941 = vadd.f32 %v497, %v1940
    %v1942 = vpop.f32.mrb[0].mxu0
    %v1943 = vadd.f32 %v501, %v1942
    %v1944 = vpop.f32.mrb[0].mxu0
    %v1945 = vpop.f32.mrb[0].mxu0
    %1946 = vdwg.mxu0
    %1947 = vmatprep.subr.bf16.mxu0 %v1245
    %1948 = vmatpush1.bf16.msra.mxu0 %v1244
    %1949 = vmatprep.subr.bf16.mxu0 %v1253
    %1950 = vmatpush1.bf16.msra.mxu0 %v1252
    %1951 = vmatprep.subr.bf16.mxu0 %v1261
    %1952 = vmatpush1.bf16.msra.mxu0 %v1260
    %1953 = vmatprep.subr.bf16.mxu0 %v1269
    %1954 = vmatpush1.bf16.msra.mxu0 %v1268
    %1955 = vmatprep.subr.bf16.mxu0 %v1277
    %1956 = vmatpush1.bf16.msra.mxu0 %v1276
    %1957 = vmatprep.subr.bf16.mxu0 %v1285
    %1958 = vmatpush1.bf16.msra.mxu0 %v1284
    %1959 = vmatprep.subr.bf16.mxu0 %v1293
    %1960 = vmatpush1.bf16.msra.mxu0 %v1292
    %1961 = vmatprep.subr.bf16.mxu0 %v1301
    %1962 = vmatpush1.bf16.msra.mxu0 %v1300
    %1963 = vmatprep.subr.bf16.mxu0 0
    %1964 = vmatpush1.bf16.msra.mxu0 0
    %1965 = vmatprep.subr.bf16.mxu0 0
    %1966 = vmatpush1.bf16.msra.mxu0 0
    %1967 = vmatprep.subr.bf16.mxu0 0
    %1968 = vmatpush1.bf16.msra.mxu0 0
    %1969 = vmatprep.subr.bf16.mxu0 0
    %1970 = vmatpush1.bf16.msra.mxu0 0
    %1971 = vmatprep.subr.bf16.mxu0 0
    %1972 = vmatpush1.bf16.msra.mxu0 0
    %1973 = vmatprep.subr.bf16.mxu0 0
    %1974 = vmatpush1.bf16.msra.mxu0 0
    %1975 = vmatprep.subr.bf16.mxu0 0
    %1976 = vmatpush1.bf16.msra.mxu0 0
    %1977 = vmatprep.subr.bf16.mxu0 0
    %1978 = vmatpush1.bf16.msra.mxu0 0
    %1979 = vmatprep.mubr.bf16.mxu0 0
    %1980 = vmatmul.mubr.bf16.gmra.mrb[0].mxu0 %v1905
    %v1981 = vpop.f32.mrb[0].mxu0
    %v1982 = vadd.f32 %v1941, %v1981
    %v1983 = vpop.f32.mrb[0].mxu0
    %v1984 = vadd.f32 %v1943, %v1983
    %v1985 = vpop.f32.mrb[0].mxu0
    %v1986 = vpop.f32.mrb[0].mxu0
    %1987 = vdwg.mxu0
    %1988 = vmatprep.subr.bf16.mxu0 %v1119
    %1989 = vmatpush1.bf16.msra.mxu0 %v1118
    %1990 = vmatprep.subr.bf16.mxu0 %v1127
    %1991 = vmatpush1.bf16.msra.mxu0 %v1126
    %1992 = vmatprep.subr.bf16.mxu0 %v1135
    %1993 = vmatpush1.bf16.msra.mxu0 %v1134
    %1994 = vmatprep.subr.bf16.mxu0 %v1143
    %1995 = vmatpush1.bf16.msra.mxu0 %v1142
    %1996 = vmatprep.subr.bf16.mxu0 %v1151
    %1997 = vmatpush1.bf16.msra.mxu0 %v1150
    %1998 = vmatprep.subr.bf16.mxu0 %v1159
    %1999 = vmatpush1.bf16.msra.mxu0 %v1158
    %2000 = vmatprep.subr.bf16.mxu0 %v1167
    %2001 = vmatpush1.bf16.msra.mxu0 %v1166
    %2002 = vmatprep.subr.bf16.mxu0 %v1175
    %2003 = vmatpush1.bf16.msra.mxu0 %v1174
    %2004 = vmatprep.subr.bf16.mxu0 %v1183
    %2005 = vmatpush1.bf16.msra.mxu0 %v1182
    %2006 = vmatprep.subr.bf16.mxu0 %v1191
    %2007 = vmatpush1.bf16.msra.mxu0 %v1190
    %2008 = vmatprep.subr.bf16.mxu0 %v1199
    %2009 = vmatpush1.bf16.msra.mxu0 %v1198
    %2010 = vmatprep.subr.bf16.mxu0 %v1207
    %2011 = vmatpush1.bf16.msra.mxu0 %v1206
    %2012 = vmatprep.subr.bf16.mxu0 %v1215
    %2013 = vmatpush1.bf16.msra.mxu0 %v1214
    %2014 = vmatprep.subr.bf16.mxu0 %v1223
    %2015 = vmatpush1.bf16.msra.mxu0 %v1222
    %2016 = vmatprep.subr.bf16.mxu0 %v1231
    %2017 = vmatpush1.bf16.msra.mxu0 %v1230
    %2018 = vmatprep.subr.bf16.mxu0 %v1239
    %2019 = vmatpush1.bf16.msra.mxu0 %v1238
    %2020 = vmatprep.mubr.bf16.mxu0 %v1904
    %2021 = vmatmul.mubr.bf16.gmra.mrb[0].mxu0 %v1903
    %v2022 = vpop.f32.mrb[0].mxu0
    %v2023 = vadd.f32 %v505, %v2022
    %v2024 = vpop.f32.mrb[0].mxu0
    %v2025 = vadd.f32 %v509, %v2024
    %v2026 = vpop.f32.mrb[0].mxu0
    %v2027 = vpop.f32.mrb[0].mxu0
    %2028 = vdwg.mxu0
    %2029 = vmatprep.subr.bf16.mxu0 %v1247
    %2030 = vmatpush1.bf16.msra.mxu0 %v1246
    %2031 = vmatprep.subr.bf16.mxu0 %v1255
    %2032 = vmatpush1.bf16.msra.mxu0 %v1254
    %2033 = vmatprep.subr.bf16.mxu0 %v1263
    %2034 = vmatpush1.bf16.msra.mxu0 %v1262
    %2035 = vmatprep.subr.bf16.mxu0 %v1271
    %2036 = vmatpush1.bf16.msra.mxu0 %v1270
    %2037 = vmatprep.subr.bf16.mxu0 %v1279
    %2038 = vmatpush1.bf16.msra.mxu0 %v1278
    %2039 = vmatprep.subr.bf16.mxu0 %v1287
    %2040 = vmatpush1.bf16.msra.mxu0 %v1286
    %2041 = vmatprep.subr.bf16.mxu0 %v1295
    %2042 = vmatpush1.bf16.msra.mxu0 %v1294
    %2043 = vmatprep.subr.bf16.mxu0 %v1303
    %2044 = vmatpush1.bf16.msra.mxu0 %v1302
    %2045 = vmatprep.subr.bf16.mxu0 0
    %2046 = vmatpush1.bf16.msra.mxu0 0
    %2047 = vmatprep.subr.bf16.mxu0 0
    %2048 = vmatpush1.bf16.msra.mxu0 0
    %2049 = vmatprep.subr.bf16.mxu0 0
    %2050 = vmatpush1.bf16.msra.mxu0 0
    %2051 = vmatprep.subr.bf16.mxu0 0
    %2052 = vmatpush1.bf16.msra.mxu0 0
    %2053 = vmatprep.subr.bf16.mxu0 0
    %2054 = vmatpush1.bf16.msra.mxu0 0
    %2055 = vmatprep.subr.bf16.mxu0 0
    %2056 = vmatpush1.bf16.msra.mxu0 0
    %2057 = vmatprep.subr.bf16.mxu0 0
    %2058 = vmatpush1.bf16.msra.mxu0 0
    %2059 = vmatprep.subr.bf16.mxu0 0
    %2060 = vmatpush1.bf16.msra.mxu0 0
    %2061 = vmatprep.mubr.bf16.mxu0 0
    %2062 = vmatmul.mubr.bf16.gmra.mrb[0].mxu0 %v1905
    %v2063 = vpop.f32.mrb[0].mxu0
    %v2064 = vadd.f32 %v2023, %v2063
    %v2065 = vpop.f32.mrb[0].mxu0
    %v2066 = vadd.f32 %v2025, %v2065
    %v2067 = vpop.f32.mrb[0].mxu0
    %v2068 = vpop.f32.mrb[0].mxu0
    %2069 = vdwg.mxu0
    %2070 = vmatprep.subr.bf16.mxu0 %v1121
    %2071 = vmatpush1.bf16.msra.mxu0 %v1120
    %2072 = vmatprep.subr.bf16.mxu0 %v1129
    %2073 = vmatpush1.bf16.msra.mxu0 %v1128
    %2074 = vmatprep.subr.bf16.mxu0 %v1137
    %2075 = vmatpush1.bf16.msra.mxu0 %v1136
    %2076 = vmatprep.subr.bf16.mxu0 %v1145
    %2077 = vmatpush1.bf16.msra.mxu0 %v1144
    %2078 = vmatprep.subr.bf16.mxu0 %v1153
    %2079 = vmatpush1.bf16.msra.mxu0 %v1152
    %2080 = vmatprep.subr.bf16.mxu0 %v1161
    %2081 = vmatpush1.bf16.msra.mxu0 %v1160
    %2082 = vmatprep.subr.bf16.mxu0 %v1169
    %2083 = vmatpush1.bf16.msra.mxu0 %v1168
    %2084 = vmatprep.subr.bf16.mxu0 %v1177
    %2085 = vmatpush1.bf16.msra.mxu0 %v1176
    %2086 = vmatprep.subr.bf16.mxu0 %v1185
    %2087 = vmatpush1.bf16.msra.mxu0 %v1184
    %2088 = vmatprep.subr.bf16.mxu0 %v1193
    %2089 = vmatpush1.bf16.msra.mxu0 %v1192
    %2090 = vmatprep.subr.bf16.mxu0 %v1201
    %2091 = vmatpush1.bf16.msra.mxu0 %v1200
    %2092 = vmatprep.subr.bf16.mxu0 %v1209
    %2093 = vmatpush1.bf16.msra.mxu0 %v1208
    %2094 = vmatprep.subr.bf16.mxu0 %v1217
    %2095 = vmatpush1.bf16.msra.mxu0 %v1216
    %2096 = vmatprep.subr.bf16.mxu0 %v1225
    %2097 = vmatpush1.bf16.msra.mxu0 %v1224
    %2098 = vmatprep.subr.bf16.mxu0 %v1233
    %2099 = vmatpush1.bf16.msra.mxu0 %v1232
    %2100 = vmatprep.subr.bf16.mxu0 %v1241
    %2101 = vmatpush1.bf16.msra.mxu0 %v1240
    %2102 = vmatprep.mubr.bf16.mxu0 %v1904
    %2103 = vmatmul.mubr.bf16.gmra.mrb[0].mxu0 %v1903
    %v2104 = vpop.f32.mrb[0].mxu0
    %v2105 = vadd.f32 %v513, %v2104
    %v2106 = vpop.f32.mrb[0].mxu0
    %v2107 = vadd.f32 %v517, %v2106
    %v2108 = vpop.f32.mrb[0].mxu0
    %v2109 = vpop.f32.mrb[0].mxu0
    %2110 = vdwg.mxu0
    %2111 = vmatprep.subr.bf16.mxu0 %v1249
    %2112 = vmatpush1.bf16.msra.mxu0 %v1248
    %2113 = vmatprep.subr.bf16.mxu0 %v1257
    %2114 = vmatpush1.bf16.msra.mxu0 %v1256
    %2115 = vmatprep.subr.bf16.mxu0 %v1265
    %2116 = vmatpush1.bf16.msra.mxu0 %v1264
    %2117 = vmatprep.subr.bf16.mxu0 %v1273
    %2118 = vmatpush1.bf16.msra.mxu0 %v1272
    %2119 = vmatprep.subr.bf16.mxu0 %v1281
    %2120 = vmatpush1.bf16.msra.mxu0 %v1280
    %2121 = vmatprep.subr.bf16.mxu0 %v1289
    %2122 = vmatpush1.bf16.msra.mxu0 %v1288
    %2123 = vmatprep.subr.bf16.mxu0 %v1297
    %2124 = vmatpush1.bf16.msra.mxu0 %v1296
    %2125 = vmatprep.subr.bf16.mxu0 %v1305
    %2126 = vmatpush1.bf16.msra.mxu0 %v1304
    %2127 = vmatprep.subr.bf16.mxu0 0
    %2128 = vmatpush1.bf16.msra.mxu0 0
    %2129 = vmatprep.subr.bf16.mxu0 0
    %2130 = vmatpush1.bf16.msra.mxu0 0
    %2131 = vmatprep.subr.bf16.mxu0 0
    %2132 = vmatpush1.bf16.msra.mxu0 0
    %2133 = vmatprep.subr.bf16.mxu0 0
    %2134 = vmatpush1.bf16.msra.mxu0 0
    %2135 = vmatprep.subr.bf16.mxu0 0
    %2136 = vmatpush1.bf16.msra.mxu0 0
    %2137 = vmatprep.subr.bf16.mxu0 0
    %2138 = vmatpush1.bf16.msra.mxu0 0
    %2139 = vmatprep.subr.bf16.mxu0 0
    %2140 = vmatpush1.bf16.msra.mxu0 0
    %2141 = vmatprep.subr.bf16.mxu0 0
    %2142 = vmatpush1.bf16.msra.mxu0 0
    %2143 = vmatprep.mubr.bf16.mxu0 0
    %2144 = vmatmul.mubr.bf16.gmra.mrb[0].mxu0 %v1905
    %v2145 = vpop.f32.mrb[0].mxu0
    %v2146 = vadd.f32 %v2105, %v2145
    %v2147 = vpop.f32.mrb[0].mxu0
    %v2148 = vadd.f32 %v2107, %v2147
    %v2149 = vpop.f32.mrb[0].mxu0
    %v2150 = vpop.f32.mrb[0].mxu0
    %2151 = vdwg.mxu0
    %2152 = vmatprep.subr.bf16.mxu0 %v1123
    %2153 = vmatpush1.bf16.msra.mxu0 %v1122
    %2154 = vmatprep.subr.bf16.mxu0 %v1131
    %2155 = vmatpush1.bf16.msra.mxu0 %v1130
    %2156 = vmatprep.subr.bf16.mxu0 %v1139
    %2157 = vmatpush1.bf16.msra.mxu0 %v1138
    %2158 = vmatprep.subr.bf16.mxu0 %v1147
    %2159 = vmatpush1.bf16.msra.mxu0 %v1146
    %2160 = vmatprep.subr.bf16.mxu0 %v1155
    %2161 = vmatpush1.bf16.msra.mxu0 %v1154
    %2162 = vmatprep.subr.bf16.mxu0 %v1163
    %2163 = vmatpush1.bf16.msra.mxu0 %v1162
    %2164 = vmatprep.subr.bf16.mxu0 %v1171
    %2165 = vmatpush1.bf16.msra.mxu0 %v1170
    %2166 = vmatprep.subr.bf16.mxu0 %v1179
    %2167 = vmatpush1.bf16.msra.mxu0 %v1178
    %2168 = vmatprep.subr.bf16.mxu0 %v1187
    %2169 = vmatpush1.bf16.msra.mxu0 %v1186
    %2170 = vmatprep.subr.bf16.mxu0 %v1195
    %2171 = vmatpush1.bf16.msra.mxu0 %v1194
    %2172 = vmatprep.subr.bf16.mxu0 %v1203
    %2173 = vmatpush1.bf16.msra.mxu0 %v1202
    %2174 = vmatprep.subr.bf16.mxu0 %v1211
    %2175 = vmatpush1.bf16.msra.mxu0 %v1210
    %2176 = vmatprep.subr.bf16.mxu0 %v1219
    %2177 = vmatpush1.bf16.msra.mxu0 %v1218
    %2178 = vmatprep.subr.bf16.mxu0 %v1227
    %2179 = vmatpush1.bf16.msra.mxu0 %v1226
    %2180 = vmatprep.subr.bf16.mxu0 %v1235
    %2181 = vmatpush1.bf16.msra.mxu0 %v1234
    %2182 = vmatprep.subr.bf16.mxu0 %v1243
    %2183 = vmatpush1.bf16.msra.mxu0 %v1242
    %2184 = vmatprep.mubr.bf16.mxu0 %v1904
    %2185 = vmatmul.mubr.bf16.gmra.mrb[0].mxu0 %v1903
    %v2186 = vpop.f32.mrb[0].mxu0
    %v2187 = vadd.f32 %v521, %v2186
    %v2188 = vpop.f32.mrb[0].mxu0
    %v2189 = vadd.f32 %v525, %v2188
    %v2190 = vpop.f32.mrb[0].mxu0
    %v2191 = vpop.f32.mrb[0].mxu0
    %2192 = vdwg.mxu0
    %2193 = vmatprep.subr.bf16.mxu0 %v1251
    %2194 = vmatpush1.bf16.msra.mxu0 %v1250
    %2195 = vmatprep.subr.bf16.mxu0 %v1259
    %2196 = vmatpush1.bf16.msra.mxu0 %v1258
    %2197 = vmatprep.subr.bf16.mxu0 %v1267
    %2198 = vmatpush1.bf16.msra.mxu0 %v1266
    %2199 = vmatprep.subr.bf16.mxu0 %v1275
    %2200 = vmatpush1.bf16.msra.mxu0 %v1274
    %2201 = vmatprep.subr.bf16.mxu0 %v1283
    %2202 = vmatpush1.bf16.msra.mxu0 %v1282
    %2203 = vmatprep.subr.bf16.mxu0 %v1291
    %2204 = vmatpush1.bf16.msra.mxu0 %v1290
    %2205 = vmatprep.subr.bf16.mxu0 %v1299
    %2206 = vmatpush1.bf16.msra.mxu0 %v1298
    %2207 = vmatprep.subr.bf16.mxu0 %v1307
    %2208 = vmatpush1.bf16.msra.mxu0 %v1306
    %2209 = vmatprep.subr.bf16.mxu0 0
    %2210 = vmatpush1.bf16.msra.mxu0 0
    %2211 = vmatprep.subr.bf16.mxu0 0
    %2212 = vmatpush1.bf16.msra.mxu0 0
    %2213 = vmatprep.subr.bf16.mxu0 0
    %2214 = vmatpush1.bf16.msra.mxu0 0
    %2215 = vmatprep.subr.bf16.mxu0 0
    %2216 = vmatpush1.bf16.msra.mxu0 0
    %2217 = vmatprep.subr.bf16.mxu0 0
    %2218 = vmatpush1.bf16.msra.mxu0 0
    %2219 = vmatprep.subr.bf16.mxu0 0
    %2220 = vmatpush1.bf16.msra.mxu0 0
    %2221 = vmatprep.subr.bf16.mxu0 0
    %2222 = vmatpush1.bf16.msra.mxu0 0
    %2223 = vmatprep.subr.bf16.mxu0 0
    %2224 = vmatpush1.bf16.msra.mxu0 0
    %2225 = vmatprep.mubr.bf16.mxu0 0
    %2226 = vmatmul.mubr.bf16.gmra.mrb[0].mxu0 %v1905
    %v2227 = vpop.f32.mrb[0].mxu0
    %v2228 = vadd.f32 %v2187, %v2227
    %v2229 = vpop.f32.mrb[0].mxu0
    %v2230 = vadd.f32 %v2189, %v2229
    %v2231 = vpop.f32.mrb[0].mxu0
    %v2232 = vpop.f32.mrb[0].mxu0
    %2233 = vdwg.mxu0
    %v2234 = vmul.f32 %v1982, %v1982
    %v2235 = vmul.f32 %v1984, %v1984
    %v2236 = vmul.f32 %v2064, %v2064
    %v2237 = vmul.f32 %v2066, %v2066
    %v2238 = vmul.f32 %v2146, %v2146
    %v2239 = vmul.f32 %v2148, %v2148
    %v2240 = vmul.f32 %v2228, %v2228
    %v2241 = vmul.f32 %v2230, %v2230
    %v2242 = vmul.f32 %v1982, %v2234
    %v2243 = vmul.f32 %v1984, %v2235
    %v2244 = vmul.f32 %v2064, %v2236
    %v2245 = vmul.f32 %v2066, %v2237
    %v2246 = vmul.f32 %v2146, %v2238
    %v2247 = vmul.f32 %v2148, %v2239
    %v2248 = vmul.f32 %v2228, %v2240
    %v2249 = vmul.f32 %v2230, %v2241
    %v2250 = vmul.f32 %v2242, 0.044715
    %v2251 = vmul.f32 %v2243, 0.044715
    %v2252 = vmul.f32 %v2244, 0.044715
    %v2253 = vmul.f32 %v2245, 0.044715
    %v2254 = vmul.f32 %v2246, 0.044715
    %v2255 = vmul.f32 %v2247, 0.044715
    %v2256 = vmul.f32 %v2248, 0.044715
    %v2257 = vmul.f32 %v2249, 0.044715
    %v2258 = vadd.f32 %v1982, %v2250
    %v2259 = vadd.f32 %v1984, %v2251
    %v2260 = vadd.f32 %v2064, %v2252
    %v2261 = vadd.f32 %v2066, %v2253
    %v2262 = vadd.f32 %v2146, %v2254
    %v2263 = vadd.f32 %v2148, %v2255
    %v2264 = vadd.f32 %v2228, %v2256
    %v2265 = vadd.f32 %v2230, %v2257
    %v2266 = vmul.f32 %v2258, 0.7978846
    %v2267 = vmul.f32 %v2259, 0.7978846
    %v2268 = vmul.f32 %v2260, 0.7978846
    %v2269 = vmul.f32 %v2261, 0.7978846
    %v2270 = vmul.f32 %v2262, 0.7978846
    %v2271 = vmul.f32 %v2263, 0.7978846
    %v2272 = vmul.f32 %v2264, 0.7978846
    %v2273 = vmul.f32 %v2265, 0.7978846
    %v2274 = vtanh.pop %v2266
    %v2275 = vtanh.pop %v2267
    %v2276 = vtanh.pop %v2268
    %v2277 = vtanh.pop %v2269
    %v2278 = vtanh.pop %v2270
    %v2279 = vtanh.pop %v2271
    %v2280 = vtanh.pop %v2272
    %v2281 = vtanh.pop %v2273
    %v2282 = vadd.f32 %v2274, 1.0
    %v2283 = vadd.f32 %v2275, 1.0
    %v2284 = vadd.f32 %v2276, 1.0
    %v2285 = vadd.f32 %v2277, 1.0
    %v2286 = vadd.f32 %v2278, 1.0
    %v2287 = vadd.f32 %v2279, 1.0
    %v2288 = vadd.f32 %v2280, 1.0
    %v2289 = vadd.f32 %v2281, 1.0
    %v2290 = vmul.f32 %v2282, 0.5
    %v2291 = vmul.f32 %v2283, 0.5
    %v2292 = vmul.f32 %v2284, 0.5
    %v2293 = vmul.f32 %v2285, 0.5
    %v2294 = vmul.f32 %v2286, 0.5
    %v2295 = vmul.f32 %v2287, 0.5
    %v2296 = vmul.f32 %v2288, 0.5
    %v2297 = vmul.f32 %v2289, 0.5
    %v2298 = vmul.f32 %v1982, %v2290
    %v2299 = vmul.f32 %v1984, %v2291
    %v2300 = vmul.f32 %v2064, %v2292
    %v2301 = vmul.f32 %v2066, %v2293
    %v2302 = vmul.f32 %v2146, %v2294
    %v2303 = vmul.f32 %v2148, %v2295
    %v2304 = vmul.f32 %v2228, %v2296
    %v2305 = vmul.f32 %v2230, %v2297
    %v2306 = vmax.f32 %v1892, %v2298
    %v2307 = vmax.f32 %v1893, %v2299
    %v2308 = vmax.f32 %v1894, %v2300
    %v2309 = vmax.f32 %v1895, %v2301
    %v2310 = vmax.f32 %v1896, %v2302
    %v2311 = vmax.f32 %v1897, %v2303
    %v2312 = vmax.f32 %v1898, %v2304
    %v2313 = vmax.f32 %v1899, %v2305
    %v2314 = vld [vmem:[%s0 + $0x30] sm:$0xff]
    %v2315 = vld [vmem:[%s0 + $0x38] sm:$0xff]
    %v2316 = vld [vmem:[%s0 + $0x40] sm:$0xff]
    %v2317 = vpack.c.bf16 %v2314, %v2314
    %v2318 = vpack.c.bf16 %v2315, %v2315
    %v2319 = vpack.c.bf16 %v2316, %v2316
    %2320 = vmatprep.subr.bf16.mxu0 %v1117
    %2321 = vmatpush1.bf16.msra.mxu0 %v1116
    %2322 = vmatprep.subr.bf16.mxu0 %v1125
    %2323 = vmatpush1.bf16.msra.mxu0 %v1124
    %2324 = vmatprep.subr.bf16.mxu0 %v1133
    %2325 = vmatpush1.bf16.msra.mxu0 %v1132
    %2326 = vmatprep.subr.bf16.mxu0 %v1141
    %2327 = vmatpush1.bf16.msra.mxu0 %v1140
    %2328 = vmatprep.subr.bf16.mxu0 %v1149
    %2329 = vmatpush1.bf16.msra.mxu0 %v1148
    %2330 = vmatprep.subr.bf16.mxu0 %v1157
    %2331 = vmatpush1.bf16.msra.mxu0 %v1156
    %2332 = vmatprep.subr.bf16.mxu0 %v1165
    %2333 = vmatpush1.bf16.msra.mxu0 %v1164
    %2334 = vmatprep.subr.bf16.mxu0 %v1173
    %2335 = vmatpush1.bf16.msra.mxu0 %v1172
    %2336 = vmatprep.subr.bf16.mxu0 %v1181
    %2337 = vmatpush1.bf16.msra.mxu0 %v1180
    %2338 = vmatprep.subr.bf16.mxu0 %v1189
    %2339 = vmatpush1.bf16.msra.mxu0 %v1188
    %2340 = vmatprep.subr.bf16.mxu0 %v1197
    %2341 = vmatpush1.bf16.msra.mxu0 %v1196
    %2342 = vmatprep.subr.bf16.mxu0 %v1205
    %2343 = vmatpush1.bf16.msra.mxu0 %v1204
    %2344 = vmatprep.subr.bf16.mxu0 %v1213
    %2345 = vmatpush1.bf16.msra.mxu0 %v1212
    %2346 = vmatprep.subr.bf16.mxu0 %v1221
    %2347 = vmatpush1.bf16.msra.mxu0 %v1220
    %2348 = vmatprep.subr.bf16.mxu0 %v1229
    %2349 = vmatpush1.bf16.msra.mxu0 %v1228
    %2350 = vmatprep.subr.bf16.mxu0 %v1237
    %2351 = vmatpush1.bf16.msra.mxu0 %v1236
    %2352 = vmatprep.mubr.bf16.mxu0 %v2318
    %2353 = vmatmul.mubr.bf16.gmra.mrb[0].mxu0 %v2317
    %v2354 = vpop.f32.mrb[0].mxu0
    %v2355 = vadd.f32 %v497, %v2354
    %v2356 = vpop.f32.mrb[0].mxu0
    %v2357 = vadd.f32 %v501, %v2356
    %v2358 = vpop.f32.mrb[0].mxu0
    %v2359 = vpop.f32.mrb[0].mxu0
    %2360 = vdwg.mxu0
    %2361 = vmatprep.subr.bf16.mxu0 %v1245
    %2362 = vmatpush1.bf16.msra.mxu0 %v1244
    %2363 = vmatprep.subr.bf16.mxu0 %v1253
    %2364 = vmatpush1.bf16.msra.mxu0 %v1252
    %2365 = vmatprep.subr.bf16.mxu0 %v1261
    %2366 = vmatpush1.bf16.msra.mxu0 %v1260
    %2367 = vmatprep.subr.bf16.mxu0 %v1269
    %2368 = vmatpush1.bf16.msra.mxu0 %v1268
    %2369 = vmatprep.subr.bf16.mxu0 %v1277
    %2370 = vmatpush1.bf16.msra.mxu0 %v1276
    %2371 = vmatprep.subr.bf16.mxu0 %v1285
    %2372 = vmatpush1.bf16.msra.mxu0 %v1284
    %2373 = vmatprep.subr.bf16.mxu0 %v1293
    %2374 = vmatpush1.bf16.msra.mxu0 %v1292
    %2375 = vmatprep.subr.bf16.mxu0 %v1301
    %2376 = vmatpush1.bf16.msra.mxu0 %v1300
    %2377 = vmatprep.subr.bf16.mxu0 0
    %2378 = vmatpush1.bf16.msra.mxu0 0
    %2379 = vmatprep.subr.bf16.mxu0 0
    %2380 = vmatpush1.bf16.msra.mxu0 0
    %2381 = vmatprep.subr.bf16.mxu0 0
    %2382 = vmatpush1.bf16.msra.mxu0 0
    %2383 = vmatprep.subr.bf16.mxu0 0
    %2384 = vmatpush1.bf16.msra.mxu0 0
    %2385 = vmatprep.subr.bf16.mxu0 0
    %2386 = vmatpush1.bf16.msra.mxu0 0
    %2387 = vmatprep.subr.bf16.mxu0 0
    %2388 = vmatpush1.bf16.msra.mxu0 0
    %2389 = vmatprep.subr.bf16.mxu0 0
    %2390 = vmatpush1.bf16.msra.mxu0 0
    %2391 = vmatprep.subr.bf16.mxu0 0
    %2392 = vmatpush1.bf16.msra.mxu0 0
    %2393 = vmatprep.mubr.bf16.mxu0 0
    %2394 = vmatmul.mubr.bf16.gmra.mrb[0].mxu0 %v2319
    %v2395 = vpop.f32.mrb[0].mxu0
    %v2396 = vadd.f32 %v2355, %v2395
    %v2397 = vpop.f32.mrb[0].mxu0
    %v2398 = vadd.f32 %v2357, %v2397
    %v2399 = vpop.f32.mrb[0].mxu0
    %v2400 = vpop.f32.mrb[0].mxu0
    %2401 = vdwg.mxu0
    %2402 = vmatprep.subr.bf16.mxu0 %v1119
    %2403 = vmatpush1.bf16.msra.mxu0 %v1118
    %2404 = vmatprep.subr.bf16.mxu0 %v1127
    %2405 = vmatpush1.bf16.msra.mxu0 %v1126
    %2406 = vmatprep.subr.bf16.mxu0 %v1135
    %2407 = vmatpush1.bf16.msra.mxu0 %v1134
    %2408 = vmatprep.subr.bf16.mxu0 %v1143
    %2409 = vmatpush1.bf16.msra.mxu0 %v1142
    %2410 = vmatprep.subr.bf16.mxu0 %v1151
    %2411 = vmatpush1.bf16.msra.mxu0 %v1150
    %2412 = vmatprep.subr.bf16.mxu0 %v1159
    %2413 = vmatpush1.bf16.msra.mxu0 %v1158
    %2414 = vmatprep.subr.bf16.mxu0 %v1167
    %2415 = vmatpush1.bf16.msra.mxu0 %v1166
    %2416 = vmatprep.subr.bf16.mxu0 %v1175
    %2417 = vmatpush1.bf16.msra.mxu0 %v1174
    %2418 = vmatprep.subr.bf16.mxu0 %v1183
    %2419 = vmatpush1.bf16.msra.mxu0 %v1182
    %2420 = vmatprep.subr.bf16.mxu0 %v1191
    %2421 = vmatpush1.bf16.msra.mxu0 %v1190
    %2422 = vmatprep.subr.bf16.mxu0 %v1199
    %2423 = vmatpush1.bf16.msra.mxu0 %v1198
    %2424 = vmatprep.subr.bf16.mxu0 %v1207
    %2425 = vmatpush1.bf16.msra.mxu0 %v1206
    %2426 = vmatprep.subr.bf16.mxu0 %v1215
    %2427 = vmatpush1.bf16.msra.mxu0 %v1214
    %2428 = vmatprep.subr.bf16.mxu0 %v1223
    %2429 = vmatpush1.bf16.msra.mxu0 %v1222
    %2430 = vmatprep.subr.bf16.mxu0 %v1231
    %2431 = vmatpush1.bf16.msra.mxu0 %v1230
    %2432 = vmatprep.subr.bf16.mxu0 %v1239
    %2433 = vmatpush1.bf16.msra.mxu0 %v1238
    %2434 = vmatprep.mubr.bf16.mxu0 %v2318
    %2435 = vmatmul.mubr.bf16.gmra.mrb[0].mxu0 %v2317
    %v2436 = vpop.f32.mrb[0].mxu0
    %v2437 = vadd.f32 %v505, %v2436
    %v2438 = vpop.f32.mrb[0].mxu0
    %v2439 = vadd.f32 %v509, %v2438
    %v2440 = vpop.f32.mrb[0].mxu0
    %v2441 = vpop.f32.mrb[0].mxu0
    %2442 = vdwg.mxu0
    %2443 = vmatprep.subr.bf16.mxu0 %v1247
    %2444 = vmatpush1.bf16.msra.mxu0 %v1246
    %2445 = vmatprep.subr.bf16.mxu0 %v1255
    %2446 = vmatpush1.bf16.msra.mxu0 %v1254
    %2447 = vmatprep.subr.bf16.mxu0 %v1263
    %2448 = vmatpush1.bf16.msra.mxu0 %v1262
    %2449 = vmatprep.subr.bf16.mxu0 %v1271
    %2450 = vmatpush1.bf16.msra.mxu0 %v1270
    %2451 = vmatprep.subr.bf16.mxu0 %v1279
    %2452 = vmatpush1.bf16.msra.mxu0 %v1278
    %2453 = vmatprep.subr.bf16.mxu0 %v1287
    %2454 = vmatpush1.bf16.msra.mxu0 %v1286
    %2455 = vmatprep.subr.bf16.mxu0 %v1295
    %2456 = vmatpush1.bf16.msra.mxu0 %v1294
    %2457 = vmatprep.subr.bf16.mxu0 %v1303
    %2458 = vmatpush1.bf16.msra.mxu0 %v1302
    %2459 = vmatprep.subr.bf16.mxu0 0
    %2460 = vmatpush1.bf16.msra.mxu0 0
    %2461 = vmatprep.subr.bf16.mxu0 0
    %2462 = vmatpush1.bf16.msra.mxu0 0
    %2463 = vmatprep.subr.bf16.mxu0 0
    %2464 = vmatpush1.bf16.msra.mxu0 0
    %2465 = vmatprep.subr.bf16.mxu0 0
    %2466 = vmatpush1.bf16.msra.mxu0 0
    %2467 = vmatprep.subr.bf16.mxu0 0
    %2468 = vmatpush1.bf16.msra.mxu0 0
    %2469 = vmatprep.subr.bf16.mxu0 0
    %2470 = vmatpush1.bf16.msra.mxu0 0
    %2471 = vmatprep.subr.bf16.mxu0 0
    %2472 = vmatpush1.bf16.msra.mxu0 0
    %2473 = vmatprep.subr.bf16.mxu0 0
    %2474 = vmatpush1.bf16.msra.mxu0 0
    %2475 = vmatprep.mubr.bf16.mxu0 0
    %2476 = vmatmul.mubr.bf16.gmra.mrb[0].mxu0 %v2319
    %v2477 = vpop.f32.mrb[0].mxu0
    %v2478 = vadd.f32 %v2437, %v2477
    %v2479 = vpop.f32.mrb[0].mxu0
    %v2480 = vadd.f32 %v2439, %v2479
    %v2481 = vpop.f32.mrb[0].mxu0
    %v2482 = vpop.f32.mrb[0].mxu0
    %2483 = vdwg.mxu0
    %2484 = vmatprep.subr.bf16.mxu0 %v1121
    %2485 = vmatpush1.bf16.msra.mxu0 %v1120
    %2486 = vmatprep.subr.bf16.mxu0 %v1129
    %2487 = vmatpush1.bf16.msra.mxu0 %v1128
    %2488 = vmatprep.subr.bf16.mxu0 %v1137
    %2489 = vmatpush1.bf16.msra.mxu0 %v1136
    %2490 = vmatprep.subr.bf16.mxu0 %v1145
    %2491 = vmatpush1.bf16.msra.mxu0 %v1144
    %2492 = vmatprep.subr.bf16.mxu0 %v1153
    %2493 = vmatpush1.bf16.msra.mxu0 %v1152
    %2494 = vmatprep.subr.bf16.mxu0 %v1161
    %2495 = vmatpush1.bf16.msra.mxu0 %v1160
    %2496 = vmatprep.subr.bf16.mxu0 %v1169
    %2497 = vmatpush1.bf16.msra.mxu0 %v1168
    %2498 = vmatprep.subr.bf16.mxu0 %v1177
    %2499 = vmatpush1.bf16.msra.mxu0 %v1176
    %2500 = vmatprep.subr.bf16.mxu0 %v1185
    %2501 = vmatpush1.bf16.msra.mxu0 %v1184
    %2502 = vmatprep.subr.bf16.mxu0 %v1193
    %2503 = vmatpush1.bf16.msra.mxu0 %v1192
    %2504 = vmatprep.subr.bf16.mxu0 %v1201
    %2505 = vmatpush1.bf16.msra.mxu0 %v1200
    %2506 = vmatprep.subr.bf16.mxu0 %v1209
    %2507 = vmatpush1.bf16.msra.mxu0 %v1208
    %2508 = vmatprep.subr.bf16.mxu0 %v1217
    %2509 = vmatpush1.bf16.msra.mxu0 %v1216
    %2510 = vmatprep.subr.bf16.mxu0 %v1225
    %2511 = vmatpush1.bf16.msra.mxu0 %v1224
    %2512 = vmatprep.subr.bf16.mxu0 %v1233
    %2513 = vmatpush1.bf16.msra.mxu0 %v1232
    %2514 = vmatprep.subr.bf16.mxu0 %v1241
    %2515 = vmatpush1.bf16.msra.mxu0 %v1240
    %2516 = vmatprep.mubr.bf16.mxu0 %v2318
    %2517 = vmatmul.mubr.bf16.gmra.mrb[0].mxu0 %v2317
    %v2518 = vpop.f32.mrb[0].mxu0
    %v2519 = vadd.f32 %v513, %v2518
    %v2520 = vpop.f32.mrb[0].mxu0
    %v2521 = vadd.f32 %v517, %v2520
    %v2522 = vpop.f32.mrb[0].mxu0
    %v2523 = vpop.f32.mrb[0].mxu0
    %2524 = vdwg.mxu0
    %2525 = vmatprep.subr.bf16.mxu0 %v1249
    %2526 = vmatpush1.bf16.msra.mxu0 %v1248
    %2527 = vmatprep.subr.bf16.mxu0 %v1257
    %2528 = vmatpush1.bf16.msra.mxu0 %v1256
    %2529 = vmatprep.subr.bf16.mxu0 %v1265
    %2530 = vmatpush1.bf16.msra.mxu0 %v1264
    %2531 = vmatprep.subr.bf16.mxu0 %v1273
    %2532 = vmatpush1.bf16.msra.mxu0 %v1272
    %2533 = vmatprep.subr.bf16.mxu0 %v1281
    %2534 = vmatpush1.bf16.msra.mxu0 %v1280
    %2535 = vmatprep.subr.bf16.mxu0 %v1289
    %2536 = vmatpush1.bf16.msra.mxu0 %v1288
    %2537 = vmatprep.subr.bf16.mxu0 %v1297
    %2538 = vmatpush1.bf16.msra.mxu0 %v1296
    %2539 = vmatprep.subr.bf16.mxu0 %v1305
    %2540 = vmatpush1.bf16.msra.mxu0 %v1304
    %2541 = vmatprep.subr.bf16.mxu0 0
    %2542 = vmatpush1.bf16.msra.mxu0 0
    %2543 = vmatprep.subr.bf16.mxu0 0
    %2544 = vmatpush1.bf16.msra.mxu0 0
    %2545 = vmatprep.subr.bf16.mxu0 0
    %2546 = vmatpush1.bf16.msra.mxu0 0
    %2547 = vmatprep.subr.bf16.mxu0 0
    %2548 = vmatpush1.bf16.msra.mxu0 0
    %2549 = vmatprep.subr.bf16.mxu0 0
    %2550 = vmatpush1.bf16.msra.mxu0 0
    %2551 = vmatprep.subr.bf16.mxu0 0
    %2552 = vmatpush1.bf16.msra.mxu0 0
    %2553 = vmatprep.subr.bf16.mxu0 0
    %2554 = vmatpush1.bf16.msra.mxu0 0
    %2555 = vmatprep.subr.bf16.mxu0 0
    %2556 = vmatpush1.bf16.msra.mxu0 0
    %2557 = vmatprep.mubr.bf16.mxu0 0
    %2558 = vmatmul.mubr.bf16.gmra.mrb[0].mxu0 %v2319
    %v2559 = vpop.f32.mrb[0].mxu0
    %v2560 = vadd.f32 %v2519, %v2559
    %v2561 = vpop.f32.mrb[0].mxu0
    %v2562 = vadd.f32 %v2521, %v2561
    %v2563 = vpop.f32.mrb[0].mxu0
    %v2564 = vpop.f32.mrb[0].mxu0
    %2565 = vdwg.mxu0
    %2566 = vmatprep.subr.bf16.mxu0 %v1123
    %2567 = vmatpush1.bf16.msra.mxu0 %v1122
    %2568 = vmatprep.subr.bf16.mxu0 %v1131
    %2569 = vmatpush1.bf16.msra.mxu0 %v1130
    %2570 = vmatprep.subr.bf16.mxu0 %v1139
    %2571 = vmatpush1.bf16.msra.mxu0 %v1138
    %2572 = vmatprep.subr.bf16.mxu0 %v1147
    %2573 = vmatpush1.bf16.msra.mxu0 %v1146
    %2574 = vmatprep.subr.bf16.mxu0 %v1155
    %2575 = vmatpush1.bf16.msra.mxu0 %v1154
    %2576 = vmatprep.subr.bf16.mxu0 %v1163
    %2577 = vmatpush1.bf16.msra.mxu0 %v1162
    %2578 = vmatprep.subr.bf16.mxu0 %v1171
    %2579 = vmatpush1.bf16.msra.mxu0 %v1170
    %2580 = vmatprep.subr.bf16.mxu0 %v1179
    %2581 = vmatpush1.bf16.msra.mxu0 %v1178
    %2582 = vmatprep.subr.bf16.mxu0 %v1187
    %2583 = vmatpush1.bf16.msra.mxu0 %v1186
    %2584 = vmatprep.subr.bf16.mxu0 %v1195
    %2585 = vmatpush1.bf16.msra.mxu0 %v1194
    %2586 = vmatprep.subr.bf16.mxu0 %v1203
    %2587 = vmatpush1.bf16.msra.mxu0 %v1202
    %2588 = vmatprep.subr.bf16.mxu0 %v1211
    %2589 = vmatpush1.bf16.msra.mxu0 %v1210
    %2590 = vmatprep.subr.bf16.mxu0 %v1219
    %2591 = vmatpush1.bf16.msra.mxu0 %v1218
    %2592 = vmatprep.subr.bf16.mxu0 %v1227
    %2593 = vmatpush1.bf16.msra.mxu0 %v1226
    %2594 = vmatprep.subr.bf16.mxu0 %v1235
    %2595 = vmatpush1.bf16.msra.mxu0 %v1234
    %2596 = vmatprep.subr.bf16.mxu0 %v1243
    %2597 = vmatpush1.bf16.msra.mxu0 %v1242
    %2598 = vmatprep.mubr.bf16.mxu0 %v2318
    %2599 = vmatmul.mubr.bf16.gmra.mrb[0].mxu0 %v2317
    %v2600 = vpop.f32.mrb[0].mxu0
    %v2601 = vadd.f32 %v521, %v2600
    %v2602 = vpop.f32.mrb[0].mxu0
    %v2603 = vadd.f32 %v525, %v2602
    %v2604 = vpop.f32.mrb[0].mxu0
    %v2605 = vpop.f32.mrb[0].mxu0
    %2606 = vdwg.mxu0
    %2607 = vmatprep.subr.bf16.mxu0 %v1251
    %2608 = vmatpush1.bf16.msra.mxu0 %v1250
    %2609 = vmatprep.subr.bf16.mxu0 %v1259
    %2610 = vmatpush1.bf16.msra.mxu0 %v1258
    %2611 = vmatprep.subr.bf16.mxu0 %v1267
    %2612 = vmatpush1.bf16.msra.mxu0 %v1266
    %2613 = vmatprep.subr.bf16.mxu0 %v1275
    %2614 = vmatpush1.bf16.msra.mxu0 %v1274
    %2615 = vmatprep.subr.bf16.mxu0 %v1283
    %2616 = vmatpush1.bf16.msra.mxu0 %v1282
    %2617 = vmatprep.subr.bf16.mxu0 %v1291
    %2618 = vmatpush1.bf16.msra.mxu0 %v1290
    %2619 = vmatprep.subr.bf16.mxu0 %v1299
    %2620 = vmatpush1.bf16.msra.mxu0 %v1298
    %2621 = vmatprep.subr.bf16.mxu0 %v1307
    %2622 = vmatpush1.bf16.msra.mxu0 %v1306
    %2623 = vmatprep.subr.bf16.mxu0 0
    %2624 = vmatpush1.bf16.msra.mxu0 0
    %2625 = vmatprep.subr.bf16.mxu0 0
    %2626 = vmatpush1.bf16.msra.mxu0 0
    %2627 = vmatprep.subr.bf16.mxu0 0
    %2628 = vmatpush1.bf16.msra.mxu0 0
    %2629 = vmatprep.subr.bf16.mxu0 0
    %2630 = vmatpush1.bf16.msra.mxu0 0
    %2631 = vmatprep.subr.bf16.mxu0 0
    %2632 = vmatpush1.bf16.msra.mxu0 0
    %2633 = vmatprep.subr.bf16.mxu0 0
    %2634 = vmatpush1.bf16.msra.mxu0 0
    %2635 = vmatprep.subr.bf16.mxu0 0
    %2636 = vmatpush1.bf16.msra.mxu0 0
    %2637 = vmatprep.subr.bf16.mxu0 0
    %2638 = vmatpush1.bf16.msra.mxu0 0
    %2639 = vmatprep.mubr.bf16.mxu0 0
    %2640 = vmatmul.mubr.bf16.gmra.mrb[0].mxu0 %v2319
    %v2641 = vpop.f32.mrb[0].mxu0
    %v2642 = vadd.f32 %v2601, %v2641
    %v2643 = vpop.f32.mrb[0].mxu0
    %v2644 = vadd.f32 %v2603, %v2643
    %v2645 = vpop.f32.mrb[0].mxu0
    %v2646 = vpop.f32.mrb[0].mxu0
    %2647 = vdwg.mxu0
    %v2648 = vmul.f32 %v2396, %v2396
    %v2649 = vmul.f32 %v2398, %v2398
    %v2650 = vmul.f32 %v2478, %v2478
    %v2651 = vmul.f32 %v2480, %v2480
    %v2652 = vmul.f32 %v2560, %v2560
    %v2653 = vmul.f32 %v2562, %v2562
    %v2654 = vmul.f32 %v2642, %v2642
    %v2655 = vmul.f32 %v2644, %v2644
    %v2656 = vmul.f32 %v2396, %v2648
    %v2657 = vmul.f32 %v2398, %v2649
    %v2658 = vmul.f32 %v2478, %v2650
    %v2659 = vmul.f32 %v2480, %v2651
    %v2660 = vmul.f32 %v2560, %v2652
    %v2661 = vmul.f32 %v2562, %v2653
    %v2662 = vmul.f32 %v2642, %v2654
    %v2663 = vmul.f32 %v2644, %v2655
    %v2664 = vmul.f32 %v2656, 0.044715
    %v2665 = vmul.f32 %v2657, 0.044715
    %v2666 = vmul.f32 %v2658, 0.044715
    %v2667 = vmul.f32 %v2659, 0.044715
    %v2668 = vmul.f32 %v2660, 0.044715
    %v2669 = vmul.f32 %v2661, 0.044715
    %v2670 = vmul.f32 %v2662, 0.044715
    %v2671 = vmul.f32 %v2663, 0.044715
    %v2672 = vadd.f32 %v2396, %v2664
    %v2673 = vadd.f32 %v2398, %v2665
    %v2674 = vadd.f32 %v2478, %v2666
    %v2675 = vadd.f32 %v2480, %v2667
    %v2676 = vadd.f32 %v2560, %v2668
    %v2677 = vadd.f32 %v2562, %v2669
    %v2678 = vadd.f32 %v2642, %v2670
    %v2679 = vadd.f32 %v2644, %v2671
    %v2680 = vmul.f32 %v2672, 0.7978846
    %v2681 = vmul.f32 %v2673, 0.7978846
    %v2682 = vmul.f32 %v2674, 0.7978846
    %v2683 = vmul.f32 %v2675, 0.7978846
    %v2684 = vmul.f32 %v2676, 0.7978846
    %v2685 = vmul.f32 %v2677, 0.7978846
    %v2686 = vmul.f32 %v2678, 0.7978846
    %v2687 = vmul.f32 %v2679, 0.7978846
    %v2688 = vtanh.pop %v2680
    %v2689 = vtanh.pop %v2681
    %v2690 = vtanh.pop %v2682
    %v2691 = vtanh.pop %v2683
    %v2692 = vtanh.pop %v2684
    %v2693 = vtanh.pop %v2685
    %v2694 = vtanh.pop %v2686
    %v2695 = vtanh.pop %v2687
    %v2696 = vadd.f32 %v2688, 1.0
    %v2697 = vadd.f32 %v2689, 1.0
    %v2698 = vadd.f32 %v2690, 1.0
    %v2699 = vadd.f32 %v2691, 1.0
    %v2700 = vadd.f32 %v2692, 1.0
    %v2701 = vadd.f32 %v2693, 1.0
    %v2702 = vadd.f32 %v2694, 1.0
    %v2703 = vadd.f32 %v2695, 1.0
    %v2704 = vmul.f32 %v2696, 0.5
    %v2705 = vmul.f32 %v2697, 0.5
    %v2706 = vmul.f32 %v2698, 0.5
    %v2707 = vmul.f32 %v2699, 0.5
    %v2708 = vmul.f32 %v2700, 0.5
    %v2709 = vmul.f32 %v2701, 0.5
    %v2710 = vmul.f32 %v2702, 0.5
    %v2711 = vmul.f32 %v2703, 0.5
    %v2712 = vmul.f32 %v2396, %v2704
    %v2713 = vmul.f32 %v2398, %v2705
    %v2714 = vmul.f32 %v2478, %v2706
    %v2715 = vmul.f32 %v2480, %v2707
    %v2716 = vmul.f32 %v2560, %v2708
    %v2717 = vmul.f32 %v2562, %v2709
    %v2718 = vmul.f32 %v2642, %v2710
    %v2719 = vmul.f32 %v2644, %v2711
    %v2720 = vmax.f32 %v2306, %v2712
    %v2721 = vmax.f32 %v2307, %v2713
    %v2722 = vmax.f32 %v2308, %v2714
    %v2723 = vmax.f32 %v2309, %v2715
    %v2724 = vmax.f32 %v2310, %v2716
    %v2725 = vmax.f32 %v2311, %v2717
    %v2726 = vmax.f32 %v2312, %v2718
    %v2727 = vmax.f32 %v2313, %v2719
    %s2728 = smul.u32 4, 136
    %s2729 = smul.u32 %s2728, 3
    %s2730 = sshll.u32 %s2729, 4
    %2731 = dma.done [#allocation5], %s2730
    %v2732 = vld [vmem:[%s3] sm:$0x7]
    %v2734 = vlaneseq
    %v2735 = vshrl.u32 %v2734, 7
    %v2736 = vsub.s32 0, %v2735
    %v2737 = vrot.slane %v2732, %v2736
    %v2738 = vlaneseq
    %v2739 = vshrl.u32 %v2738, 7
    %v2740 = vsub.s32 1, %v2739
    %v2741 = vrot.slane %v2732, %v2740
    %v2742 = vlaneseq
    %v2743 = vshrl.u32 %v2742, 7
    %v2744 = vsub.s32 2, %v2743
    %v2745 = vrot.slane %v2732, %v2744
    %v2749 = vld [vmem:[#allocation2 + $0x60] sm:$0xff]
    %v2750 = vld [vmem:[#allocation2 + $0x68] sm:$0xff]
    %v2751 = vld [vmem:[#allocation2 + $0x70] sm:$0xff]
    %v2752 = vld [vmem:[#allocation2 + $0x78] sm:$0xff]
    %v2753 = vld [vmem:[#allocation2 + $0x80] sm:$0xff]
    %v2754 = vld [vmem:[#allocation2 + $0x88] sm:$0xff]
    %v2755 = vld [vmem:[#allocation2 + $0x90] sm:$0xff]
    %v2756 = vld [vmem:[#allocation2 + $0x98] sm:$0xff]
    %v2757 = vld [vmem:[#allocation2 + $0xa0] sm:$0xff]
    %v2758 = vld [vmem:[#allocation2 + $0xa8] sm:$0xff]
    %v2759 = vld [vmem:[#allocation2 + $0xb0] sm:$0xff]
    %v2760 = vld [vmem:[#allocation2 + $0xb8] sm:$0xff]
    %v2761 = vld [vmem:[#allocation2 + $0xc0] sm:$0xff]
    %v2762 = vld [vmem:[#allocation2 + $0xc8] sm:$0xff]
    %v2763 = vld [vmem:[#allocation2 + $0xd0] sm:$0xff]
    %v2764 = vld [vmem:[#allocation2 + $0xd8] sm:$0xff]
    %v2765 = vld [vmem:[#allocation2 + $0xe0] sm:$0xff]
    %v2766 = vld [vmem:[#allocation2 + $0xe8] sm:$0xff]
    %v2767 = vld [vmem:[#allocation2 + $0xf0] sm:$0xff]
    %v2768 = vld [vmem:[#allocation2 + $0xf8] sm:$0xff]
    %v2769 = vld [vmem:[#allocation2 + $0x100] sm:$0xff]
    %v2770 = vld [vmem:[#allocation2 + $0x108] sm:$0xff]
    %v2771 = vld [vmem:[#allocation2 + $0x110] sm:$0xff]
    %v2772 = vld [vmem:[#allocation2 + $0x118] sm:$0xff]
    %v2773 = vld [vmem:[#allocation2 + $0x120] sm:$0xff]
    %v2774 = vld [vmem:[#allocation2 + $0x128] sm:$0xff]
    %v2775 = vld [vmem:[#allocation2 + $0x130] sm:$0xff]
    %v2776 = vld [vmem:[#allocation2 + $0x138] sm:$0xff]
    %v2777 = vld [vmem:[#allocation2 + $0x140] sm:$0xff]
    %v2778 = vld [vmem:[#allocation2 + $0x148] sm:$0xff]
    %v2779 = vld [vmem:[#allocation2 + $0x150] sm:$0xff]
    %v2780 = vld [vmem:[#allocation2 + $0x158] sm:$0xff]
    %v2781 = vld [vmem:[#allocation2 + $0x160] sm:$0xff]
    %v2782 = vld [vmem:[#allocation2 + $0x168] sm:$0xff]
    %v2783 = vld [vmem:[#allocation2 + $0x170] sm:$0xff]
    %v2784 = vld [vmem:[#allocation2 + $0x178] sm:$0xff]
    %v2785 = vld [vmem:[#allocation2 + $0x180] sm:$0xff]
    %v2786 = vld [vmem:[#allocation2 + $0x188] sm:$0xff]
    %v2787 = vld [vmem:[#allocation2 + $0x190] sm:$0xff]
    %v2788 = vld [vmem:[#allocation2 + $0x198] sm:$0xff]
    %v2789 = vld [vmem:[#allocation2 + $0x1a0] sm:$0xff]
    %v2790 = vld [vmem:[#allocation2 + $0x1a8] sm:$0xff]
    %v2791 = vld [vmem:[#allocation2 + $0x1b0] sm:$0xff]
    %v2792 = vld [vmem:[#allocation2 + $0x1b8] sm:$0xff]
    %v2793 = vld [vmem:[#allocation2 + $0x1c0] sm:$0xff]
    %v2794 = vld [vmem:[#allocation2 + $0x1c8] sm:$0xff]
    %v2795 = vld [vmem:[#allocation2 + $0x1d0] sm:$0xff]
    %v2796 = vld [vmem:[#allocation2 + $0x1d8] sm:$0xff]
    %v2797 = vld [vmem:[#allocation2 + $0x1e0] sm:$0xff]
    %v2798 = vld [vmem:[#allocation2 + $0x1e8] sm:$0xff]
    %v2799 = vld [vmem:[#allocation2 + $0x1f0] sm:$0xff]
    %v2800 = vld [vmem:[#allocation2 + $0x1f8] sm:$0xff]
    %v2801 = vld [vmem:[#allocation2 + $0x200] sm:$0xff]
    %v2802 = vld [vmem:[#allocation2 + $0x208] sm:$0xff]
    %v2803 = vld [vmem:[#allocation2 + $0x210] sm:$0xff]
    %v2804 = vld [vmem:[#allocation2 + $0x218] sm:$0xff]
    %v2805 = vld [vmem:[#allocation2 + $0x220] sm:$0xff]
    %v2806 = vld [vmem:[#allocation2 + $0x228] sm:$0xff]
    %v2807 = vld [vmem:[#allocation2 + $0x230] sm:$0xff]
    %v2808 = vld [vmem:[#allocation2 + $0x238] sm:$0xff]
    %v2809 = vld [vmem:[#allocation2 + $0x240] sm:$0xff]
    %v2810 = vld [vmem:[#allocation2 + $0x248] sm:$0xff]
    %v2811 = vld [vmem:[#allocation2 + $0x250] sm:$0xff]
    %v2812 = vld [vmem:[#allocation2 + $0x258] sm:$0xff]
    %v2813 = vld [vmem:[#allocation2 + $0x260] sm:$0xff]
    %v2814 = vld [vmem:[#allocation2 + $0x268] sm:$0xff]
    %v2815 = vld [vmem:[#allocation2 + $0x270] sm:$0xff]
    %v2816 = vld [vmem:[#allocation2 + $0x278] sm:$0xff]
    %v2817 = vld [vmem:[#allocation2 + $0x280] sm:$0xff]
    %v2818 = vld [vmem:[#allocation2 + $0x288] sm:$0xff]
    %v2819 = vld [vmem:[#allocation2 + $0x290] sm:$0xff]
    %v2820 = vld [vmem:[#allocation2 + $0x298] sm:$0xff]
    %v2821 = vld [vmem:[#allocation2 + $0x2a0] sm:$0xff]
    %v2822 = vld [vmem:[#allocation2 + $0x2a8] sm:$0xff]
    %v2823 = vld [vmem:[#allocation2 + $0x2b0] sm:$0xff]
    %v2824 = vld [vmem:[#allocation2 + $0x2b8] sm:$0xff]
    %v2825 = vld [vmem:[#allocation2 + $0x2c0] sm:$0xff]
    %v2826 = vld [vmem:[#allocation2 + $0x2c8] sm:$0xff]
    %v2827 = vld [vmem:[#allocation2 + $0x2d0] sm:$0xff]
    %v2828 = vld [vmem:[#allocation2 + $0x2d8] sm:$0xff]
    %v2829 = vld [vmem:[#allocation2 + $0x2e0] sm:$0xff]
    %v2830 = vld [vmem:[#allocation2 + $0x2e8] sm:$0xff]
    %v2831 = vld [vmem:[#allocation2 + $0x2f0] sm:$0xff]
    %v2832 = vld [vmem:[#allocation2 + $0x2f8] sm:$0xff]
    %v2833 = vld [vmem:[#allocation2 + $0x300] sm:$0xff]
    %v2834 = vld [vmem:[#allocation2 + $0x308] sm:$0xff]
    %v2835 = vld [vmem:[#allocation2 + $0x310] sm:$0xff]
    %v2836 = vld [vmem:[#allocation2 + $0x318] sm:$0xff]
    %v2837 = vld [vmem:[#allocation2 + $0x320] sm:$0xff]
    %v2838 = vld [vmem:[#allocation2 + $0x328] sm:$0xff]
    %v2839 = vld [vmem:[#allocation2 + $0x330] sm:$0xff]
    %v2840 = vld [vmem:[#allocation2 + $0x338] sm:$0xff]
    %v2841 = vld [vmem:[#allocation2 + $0x340] sm:$0xff]
    %v2842 = vld [vmem:[#allocation2 + $0x348] sm:$0xff]
    %v2843 = vld [vmem:[#allocation2 + $0x350] sm:$0xff]
    %v2844 = vld [vmem:[#allocation2 + $0x358] sm:$0xff]
    %v2845 = vld [vmem:[#allocation2 + $0x360] sm:$0xff]
    %v2846 = vld [vmem:[#allocation2 + $0x368] sm:$0xff]
    %v2847 = vld [vmem:[#allocation2 + $0x370] sm:$0xff]
    %v2848 = vld [vmem:[#allocation2 + $0x378] sm:$0xff]
    %v2849 = vld [vmem:[#allocation2 + $0x380] sm:$0xff]
    %v2850 = vld [vmem:[#allocation2 + $0x388] sm:$0xff]
    %v2851 = vld [vmem:[#allocation2 + $0x390] sm:$0xff]
    %v2852 = vld [vmem:[#allocation2 + $0x398] sm:$0xff]
    %v2853 = vld [vmem:[#allocation2 + $0x3a0] sm:$0xff]
    %v2854 = vld [vmem:[#allocation2 + $0x3a8] sm:$0xff]
    %v2855 = vld [vmem:[#allocation2 + $0x3b0] sm:$0xff]
    %v2856 = vld [vmem:[#allocation2 + $0x3b8] sm:$0xff]
    %v2857 = vld [vmem:[#allocation2 + $0x3c0] sm:$0xff]
    %v2858 = vld [vmem:[#allocation2 + $0x3c8] sm:$0xff]
    %v2859 = vld [vmem:[#allocation2 + $0x3d0] sm:$0xff]
    %v2860 = vld [vmem:[#allocation2 + $0x3d8] sm:$0xff]
    %v2861 = vld [vmem:[#allocation2 + $0x3e0] sm:$0xff]
    %v2862 = vld [vmem:[#allocation2 + $0x3e8] sm:$0xff]
    %v2863 = vld [vmem:[#allocation2 + $0x3f0] sm:$0xff]
    %v2864 = vld [vmem:[#allocation2 + $0x3f8] sm:$0xff]
    %v2865 = vld [vmem:[#allocation2 + $0x400] sm:$0xff]
    %v2866 = vld [vmem:[#allocation2 + $0x408] sm:$0xff]
    %v2867 = vld [vmem:[#allocation2 + $0x410] sm:$0xff]
    %v2868 = vld [vmem:[#allocation2 + $0x418] sm:$0xff]
    %v2869 = vld [vmem:[#allocation2 + $0x420] sm:$0xff]
    %v2870 = vld [vmem:[#allocation2 + $0x428] sm:$0xff]
    %v2871 = vld [vmem:[#allocation2 + $0x430] sm:$0xff]
    %v2872 = vld [vmem:[#allocation2 + $0x438] sm:$0xff]
    %v2873 = vld [vmem:[#allocation2 + $0x440] sm:$0xff]
    %v2874 = vld [vmem:[#allocation2 + $0x448] sm:$0xff]
    %v2875 = vld [vmem:[#allocation2 + $0x450] sm:$0xff]
    %v2876 = vld [vmem:[#allocation2 + $0x458] sm:$0xff]
    %v2877 = vld [vmem:[#allocation2 + $0x460] sm:$0xff]
    %v2878 = vld [vmem:[#allocation2 + $0x468] sm:$0xff]
    %v2879 = vld [vmem:[#allocation2 + $0x470] sm:$0xff]
    %v2880 = vld [vmem:[#allocation2 + $0x478] sm:$0xff]
    %v2881 = vld [vmem:[#allocation2 + $0x480] sm:$0xff]
    %v2882 = vld [vmem:[#allocation2 + $0x488] sm:$0xff]
    %v2883 = vld [vmem:[#allocation2 + $0x490] sm:$0xff]
    %v2884 = vld [vmem:[#allocation2 + $0x498] sm:$0xff]
    %v2885 = vld [vmem:[#allocation2 + $0x4a0] sm:$0xff]
    %v2886 = vld [vmem:[#allocation2 + $0x4a8] sm:$0xff]
    %v2887 = vld [vmem:[#allocation2 + $0x4b0] sm:$0xff]
    %v2888 = vld [vmem:[#allocation2 + $0x4b8] sm:$0xff]
    %v2889 = vld [vmem:[#allocation2 + $0x4c0] sm:$0xff]
    %v2890 = vld [vmem:[#allocation2 + $0x4c8] sm:$0xff]
    %v2891 = vld [vmem:[#allocation2 + $0x4d0] sm:$0xff]
    %v2892 = vld [vmem:[#allocation2 + $0x4d8] sm:$0xff]
    %v2893 = vld [vmem:[#allocation2 + $0x4e0] sm:$0xff]
    %v2894 = vld [vmem:[#allocation2 + $0x4e8] sm:$0xff]
    %v2895 = vld [vmem:[#allocation2 + $0x4f0] sm:$0xff]
    %v2896 = vld [vmem:[#allocation2 + $0x4f8] sm:$0xff]
    %v2897 = vld [vmem:[#allocation2 + $0x500] sm:$0xff]
    %v2898 = vld [vmem:[#allocation2 + $0x508] sm:$0xff]
    %v2899 = vld [vmem:[#allocation2 + $0x510] sm:$0xff]
    %v2900 = vld [vmem:[#allocation2 + $0x518] sm:$0xff]
    %v2901 = vld [vmem:[#allocation2 + $0x520] sm:$0xff]
    %v2902 = vld [vmem:[#allocation2 + $0x528] sm:$0xff]
    %v2903 = vld [vmem:[#allocation2 + $0x530] sm:$0xff]
    %v2904 = vld [vmem:[#allocation2 + $0x538] sm:$0xff]
    %v2905 = vld [vmem:[#allocation2 + $0x540] sm:$0xff]
    %v2906 = vld [vmem:[#allocation2 + $0x548] sm:$0xff]
    %v2907 = vld [vmem:[#allocation2 + $0x550] sm:$0xff]
    %v2908 = vld [vmem:[#allocation2 + $0x558] sm:$0xff]
    %v2909 = vld [vmem:[#allocation2 + $0x560] sm:$0xff]
    %v2910 = vld [vmem:[#allocation2 + $0x568] sm:$0xff]
    %v2911 = vld [vmem:[#allocation2 + $0x570] sm:$0xff]
    %v2912 = vld [vmem:[#allocation2 + $0x578] sm:$0xff]
    %v2913 = vld [vmem:[#allocation2 + $0x580] sm:$0xff]
    %v2914 = vld [vmem:[#allocation2 + $0x588] sm:$0xff]
    %v2915 = vld [vmem:[#allocation2 + $0x590] sm:$0xff]
    %v2916 = vld [vmem:[#allocation2 + $0x598] sm:$0xff]
    %v2917 = vld [vmem:[#allocation2 + $0x5a0] sm:$0xff]
    %v2918 = vld [vmem:[#allocation2 + $0x5a8] sm:$0xff]
    %v2919 = vld [vmem:[#allocation2 + $0x5b0] sm:$0xff]
    %v2920 = vld [vmem:[#allocation2 + $0x5b8] sm:$0xff]
    %v2921 = vld [vmem:[#allocation2 + $0x5c0] sm:$0xff]
    %v2922 = vld [vmem:[#allocation2 + $0x5c8] sm:$0xff]
    %v2923 = vld [vmem:[#allocation2 + $0x5d0] sm:$0xff]
    %v2924 = vld [vmem:[#allocation2 + $0x5d8] sm:$0xff]
    %v2925 = vld [vmem:[#allocation2 + $0x5e0] sm:$0xff]
    %v2926 = vld [vmem:[#allocation2 + $0x5e8] sm:$0xff]
    %v2927 = vld [vmem:[#allocation2 + $0x5f0] sm:$0xff]
    %v2928 = vld [vmem:[#allocation2 + $0x5f8] sm:$0xff]
    %v2929 = vld [vmem:[#allocation2 + $0x600] sm:$0xff]
    %v2930 = vld [vmem:[#allocation2 + $0x608] sm:$0xff]
    %v2931 = vld [vmem:[#allocation2 + $0x610] sm:$0xff]
    %v2932 = vld [vmem:[#allocation2 + $0x618] sm:$0xff]
    %v2933 = vld [vmem:[#allocation2 + $0x620] sm:$0xff]
    %v2934 = vld [vmem:[#allocation2 + $0x628] sm:$0xff]
    %v2935 = vld [vmem:[#allocation2 + $0x630] sm:$0xff]
    %v2936 = vld [vmem:[#allocation2 + $0x638] sm:$0xff]
    %v2937 = vld [vmem:[#allocation2 + $0x640] sm:$0xff]
    %v2938 = vld [vmem:[#allocation2 + $0x648] sm:$0xff]
    %v2939 = vld [vmem:[#allocation2 + $0x650] sm:$0xff]
    %v2940 = vld [vmem:[#allocation2 + $0x658] sm:$0xff]
    %v2941 = vpack.c.bf16 %v2720, %v2720
    %v2942 = vpack.c.bf16 %v2721, %v2721
    %v2943 = vpack.c.bf16 %v2722, %v2722
    %v2944 = vpack.c.bf16 %v2723, %v2723
    %v2945 = vpack.c.bf16 %v2724, %v2724
    %v2946 = vpack.c.bf16 %v2725, %v2725
    %v2947 = vpack.c.bf16 %v2726, %v2726
    %v2948 = vpack.c.bf16 %v2727, %v2727
    %2949 = vmatprep.subr.bf16.mxu0 %v2750
    %2950 = vmatpush1.bf16.msra.mxu0 %v2749
    %2951 = vmatprep.subr.bf16.mxu0 %v2753
    %2952 = vmatpush1.bf16.msra.mxu0 %v2752
    %2953 = vmatprep.subr.bf16.mxu0 %v2756
    %2954 = vmatpush1.bf16.msra.mxu0 %v2755
    %2955 = vmatprep.subr.bf16.mxu0 %v2759
    %2956 = vmatpush1.bf16.msra.mxu0 %v2758
    %2957 = vmatprep.subr.bf16.mxu0 %v2762
    %2958 = vmatpush1.bf16.msra.mxu0 %v2761
    %2959 = vmatprep.subr.bf16.mxu0 %v2765
    %2960 = vmatpush1.bf16.msra.mxu0 %v2764
    %2961 = vmatprep.subr.bf16.mxu0 %v2768
    %2962 = vmatpush1.bf16.msra.mxu0 %v2767
    %2963 = vmatprep.subr.bf16.mxu0 %v2771
    %2964 = vmatpush1.bf16.msra.mxu0 %v2770
    %2965 = vmatprep.subr.bf16.mxu0 %v2774
    %2966 = vmatpush1.bf16.msra.mxu0 %v2773
    %2967 = vmatprep.subr.bf16.mxu0 %v2777
    %2968 = vmatpush1.bf16.msra.mxu0 %v2776
    %2969 = vmatprep.subr.bf16.mxu0 %v2780
    %2970 = vmatpush1.bf16.msra.mxu0 %v2779
    %2971 = vmatprep.subr.bf16.mxu0 %v2783
    %2972 = vmatpush1.bf16.msra.mxu0 %v2782
    %2973 = vmatprep.subr.bf16.mxu0 %v2786
    %2974 = vmatpush1.bf16.msra.mxu0 %v2785
    %2975 = vmatprep.subr.bf16.mxu0 %v2789
    %2976 = vmatpush1.bf16.msra.mxu0 %v2788
    %2977 = vmatprep.subr.bf16.mxu0 %v2792
    %2978 = vmatpush1.bf16.msra.mxu0 %v2791
    %2979 = vmatprep.subr.bf16.mxu0 %v2795
    %2980 = vmatpush1.bf16.msra.mxu0 %v2794
    %2981 = vmatprep.mubr.bf16.mxu0 %v2942
    %2982 = vmatmul.mubr.bf16.gmra.mrb[0].mxu0 %v2941
    %v2983 = vpop.f32.mrb[0].mxu0
    %v2984 = vadd.f32 %v2737, %v2983
    %v2985 = vpop.f32.mrb[0].mxu0
    %v2986 = vadd.f32 %v2741, %v2985
    %v2987 = vpop.f32.mrb[0].mxu0
    %v2988 = vpop.f32.mrb[0].mxu0
    %2989 = vdwg.mxu0
    %2990 = vmatprep.subr.bf16.mxu0 %v2798
    %2991 = vmatpush1.bf16.msra.mxu0 %v2797
    %2992 = vmatprep.subr.bf16.mxu0 %v2801
    %2993 = vmatpush1.bf16.msra.mxu0 %v2800
    %2994 = vmatprep.subr.bf16.mxu0 %v2804
    %2995 = vmatpush1.bf16.msra.mxu0 %v2803
    %2996 = vmatprep.subr.bf16.mxu0 %v2807
    %2997 = vmatpush1.bf16.msra.mxu0 %v2806
    %2998 = vmatprep.subr.bf16.mxu0 %v2810
    %2999 = vmatpush1.bf16.msra.mxu0 %v2809
    %3000 = vmatprep.subr.bf16.mxu0 %v2813
    %3001 = vmatpush1.bf16.msra.mxu0 %v2812
    %3002 = vmatprep.subr.bf16.mxu0 %v2816
    %3003 = vmatpush1.bf16.msra.mxu0 %v2815
    %3004 = vmatprep.subr.bf16.mxu0 %v2819
    %3005 = vmatpush1.bf16.msra.mxu0 %v2818
    %3006 = vmatprep.subr.bf16.mxu0 %v2822
    %3007 = vmatpush1.bf16.msra.mxu0 %v2821
    %3008 = vmatprep.subr.bf16.mxu0 %v2825
    %3009 = vmatpush1.bf16.msra.mxu0 %v2824
    %3010 = vmatprep.subr.bf16.mxu0 %v2828
    %3011 = vmatpush1.bf16.msra.mxu0 %v2827
    %3012 = vmatprep.subr.bf16.mxu0 %v2831
    %3013 = vmatpush1.bf16.msra.mxu0 %v2830
    %3014 = vmatprep.subr.bf16.mxu0 %v2834
    %3015 = vmatpush1.bf16.msra.mxu0 %v2833
    %3016 = vmatprep.subr.bf16.mxu0 %v2837
    %3017 = vmatpush1.bf16.msra.mxu0 %v2836
    %3018 = vmatprep.subr.bf16.mxu0 %v2840
    %3019 = vmatpush1.bf16.msra.mxu0 %v2839
    %3020 = vmatprep.subr.bf16.mxu0 %v2843
    %3021 = vmatpush1.bf16.msra.mxu0 %v2842
    %3022 = vmatprep.mubr.bf16.mxu0 %v2944
    %3023 = vmatmul.mubr.bf16.gmra.mrb[0].mxu0 %v2943
    %v3024 = vpop.f32.mrb[0].mxu0
    %v3025 = vadd.f32 %v2984, %v3024
    %v3026 = vpop.f32.mrb[0].mxu0
    %v3027 = vadd.f32 %v2986, %v3026
    %v3028 = vpop.f32.mrb[0].mxu0
    %v3029 = vpop.f32.mrb[0].mxu0
    %3030 = vdwg.mxu0
    %3031 = vmatprep.subr.bf16.mxu0 %v2846
    %3032 = vmatpush1.bf16.msra.mxu0 %v2845
    %3033 = vmatprep.subr.bf16.mxu0 %v2849
    %3034 = vmatpush1.bf16.msra.mxu0 %v2848
    %3035 = vmatprep.subr.bf16.mxu0 %v2852
    %3036 = vmatpush1.bf16.msra.mxu0 %v2851
    %3037 = vmatprep.subr.bf16.mxu0 %v2855
    %3038 = vmatpush1.bf16.msra.mxu0 %v2854
    %3039 = vmatprep.subr.bf16.mxu0 %v2858
    %3040 = vmatpush1.bf16.msra.mxu0 %v2857
    %3041 = vmatprep.subr.bf16.mxu0 %v2861
    %3042 = vmatpush1.bf16.msra.mxu0 %v2860
    %3043 = vmatprep.subr.bf16.mxu0 %v2864
    %3044 = vmatpush1.bf16.msra.mxu0 %v2863
    %3045 = vmatprep.subr.bf16.mxu0 %v2867
    %3046 = vmatpush1.bf16.msra.mxu0 %v2866
    %3047 = vmatprep.subr.bf16.mxu0 %v2870
    %3048 = vmatpush1.bf16.msra.mxu0 %v2869
    %3049 = vmatprep.subr.bf16.mxu0 %v2873
    %3050 = vmatpush1.bf16.msra.mxu0 %v2872
    %3051 = vmatprep.subr.bf16.mxu0 %v2876
    %3052 = vmatpush1.bf16.msra.mxu0 %v2875
    %3053 = vmatprep.subr.bf16.mxu0 %v2879
    %3054 = vmatpush1.bf16.msra.mxu0 %v2878
    %3055 = vmatprep.subr.bf16.mxu0 %v2882
    %3056 = vmatpush1.bf16.msra.mxu0 %v2881
    %3057 = vmatprep.subr.bf16.mxu0 %v2885
    %3058 = vmatpush1.bf16.msra.mxu0 %v2884
    %3059 = vmatprep.subr.bf16.mxu0 %v2888
    %3060 = vmatpush1.bf16.msra.mxu0 %v2887
    %3061 = vmatprep.subr.bf16.mxu0 %v2891
    %3062 = vmatpush1.bf16.msra.mxu0 %v2890
    %3063 = vmatprep.mubr.bf16.mxu0 %v2946
    %3064 = vmatmul.mubr.bf16.gmra.mrb[0].mxu0 %v2945
    %v3065 = vpop.f32.mrb[0].mxu0
    %v3066 = vadd.f32 %v3025, %v3065
    %v3067 = vpop.f32.mrb[0].mxu0
    %v3068 = vadd.f32 %v3027, %v3067
    %v3069 = vpop.f32.mrb[0].mxu0
    %v3070 = vpop.f32.mrb[0].mxu0
    %3071 = vdwg.mxu0
    %3072 = vmatprep.subr.bf16.mxu0 %v2894
    %3073 = vmatpush1.bf16.msra.mxu0 %v2893
    %3074 = vmatprep.subr.bf16.mxu0 %v2897
    %3075 = vmatpush1.bf16.msra.mxu0 %v2896
    %3076 = vmatprep.subr.bf16.mxu0 %v2900
    %3077 = vmatpush1.bf16.msra.mxu0 %v2899
    %3078 = vmatprep.subr.bf16.mxu0 %v2903
    %3079 = vmatpush1.bf16.msra.mxu0 %v2902
    %3080 = vmatprep.subr.bf16.mxu0 %v2906
    %3081 = vmatpush1.bf16.msra.mxu0 %v2905
    %3082 = vmatprep.subr.bf16.mxu0 %v2909
    %3083 = vmatpush1.bf16.msra.mxu0 %v2908
    %3084 = vmatprep.subr.bf16.mxu0 %v2912
    %3085 = vmatpush1.bf16.msra.mxu0 %v2911
    %3086 = vmatprep.subr.bf16.mxu0 %v2915
    %3087 = vmatpush1.bf16.msra.mxu0 %v2914
    %3088 = vmatprep.subr.bf16.mxu0 %v2918
    %3089 = vmatpush1.bf16.msra.mxu0 %v2917
    %3090 = vmatprep.subr.bf16.mxu0 %v2921
    %3091 = vmatpush1.bf16.msra.mxu0 %v2920
    %3092 = vmatprep.subr.bf16.mxu0 %v2924
    %3093 = vmatpush1.bf16.msra.mxu0 %v2923
    %3094 = vmatprep.subr.bf16.mxu0 %v2927
    %3095 = vmatpush1.bf16.msra.mxu0 %v2926
    %3096 = vmatprep.subr.bf16.mxu0 %v2930
    %3097 = vmatpush1.bf16.msra.mxu0 %v2929
    %3098 = vmatprep.subr.bf16.mxu0 %v2933
    %3099 = vmatpush1.bf16.msra.mxu0 %v2932
    %3100 = vmatprep.subr.bf16.mxu0 %v2936
    %3101 = vmatpush1.bf16.msra.mxu0 %v2935
    %3102 = vmatprep.subr.bf16.mxu0 %v2939
    %3103 = vmatpush1.bf16.msra.mxu0 %v2938
    %3104 = vmatprep.mubr.bf16.mxu0 %v2948
    %3105 = vmatmul.mubr.bf16.gmra.mrb[0].mxu0 %v2947
    %v3106 = vpop.f32.mrb[0].mxu0
    %v3107 = vadd.f32 %v3066, %v3106
    %v3108 = vpop.f32.mrb[0].mxu0
    %v3109 = vadd.f32 %v3068, %v3108
    %v3110 = vpop.f32.mrb[0].mxu0
    %v3111 = vpop.f32.mrb[0].mxu0
    %3112 = vdwg.mxu0
    %3113 = vmatprep.subr.bf16.mxu0 0
    %3114 = vmatpush1.bf16.msra.mxu0 %v2751
    %3115 = vmatprep.subr.bf16.mxu0 0
    %3116 = vmatpush1.bf16.msra.mxu0 %v2754
    %3117 = vmatprep.subr.bf16.mxu0 0
    %3118 = vmatpush1.bf16.msra.mxu0 %v2757
    %3119 = vmatprep.subr.bf16.mxu0 0
    %3120 = vmatpush1.bf16.msra.mxu0 %v2760
    %3121 = vmatprep.subr.bf16.mxu0 0
    %3122 = vmatpush1.bf16.msra.mxu0 %v2763
    %3123 = vmatprep.subr.bf16.mxu0 0
    %3124 = vmatpush1.bf16.msra.mxu0 %v2766
    %3125 = vmatprep.subr.bf16.mxu0 0
    %3126 = vmatpush1.bf16.msra.mxu0 %v2769
    %3127 = vmatprep.subr.bf16.mxu0 0
    %3128 = vmatpush1.bf16.msra.mxu0 %v2772
    %3129 = vmatprep.subr.bf16.mxu0 0
    %3130 = vmatpush1.bf16.msra.mxu0 %v2775
    %3131 = vmatprep.subr.bf16.mxu0 0
    %3132 = vmatpush1.bf16.msra.mxu0 %v2778
    %3133 = vmatprep.subr.bf16.mxu0 0
    %3134 = vmatpush1.bf16.msra.mxu0 %v2781
    %3135 = vmatprep.subr.bf16.mxu0 0
    %3136 = vmatpush1.bf16.msra.mxu0 %v2784
    %3137 = vmatprep.subr.bf16.mxu0 0
    %3138 = vmatpush1.bf16.msra.mxu0 %v2787
    %3139 = vmatprep.subr.bf16.mxu0 0
    %3140 = vmatpush1.bf16.msra.mxu0 %v2790
    %3141 = vmatprep.subr.bf16.mxu0 0
    %3142 = vmatpush1.bf16.msra.mxu0 %v2793
    %3143 = vmatprep.subr.bf16.mxu0 0
    %3144 = vmatpush1.bf16.msra.mxu0 %v2796
    %3145 = vmatprep.mubr.bf16.mxu0 %v2942
    %3146 = vmatmul.mubr.bf16.gmra.mrb[0].mxu0 %v2941
    %v3147 = vpop.f32.mrb[0].mxu0
    %v3148 = vadd.f32 %v2745, %v3147
    %v3149 = vpop.f32.mrb[0].mxu0
    %v3150 = vpop.f32.mrb[0].mxu0
    %v3151 = vpop.f32.mrb[0].mxu0
    %3152 = vdwg.mxu0
    %3153 = vmatprep.subr.bf16.mxu0 0
    %3154 = vmatpush1.bf16.msra.mxu0 %v2799
    %3155 = vmatprep.subr.bf16.mxu0 0
    %3156 = vmatpush1.bf16.msra.mxu0 %v2802
    %3157 = vmatprep.subr.bf16.mxu0 0
    %3158 = vmatpush1.bf16.msra.mxu0 %v2805
    %3159 = vmatprep.subr.bf16.mxu0 0
    %3160 = vmatpush1.bf16.msra.mxu0 %v2808
    %3161 = vmatprep.subr.bf16.mxu0 0
    %3162 = vmatpush1.bf16.msra.mxu0 %v2811
    %3163 = vmatprep.subr.bf16.mxu0 0
    %3164 = vmatpush1.bf16.msra.mxu0 %v2814
    %3165 = vmatprep.subr.bf16.mxu0 0
    %3166 = vmatpush1.bf16.msra.mxu0 %v2817
    %3167 = vmatprep.subr.bf16.mxu0 0
    %3168 = vmatpush1.bf16.msra.mxu0 %v2820
    %3169 = vmatprep.subr.bf16.mxu0 0
    %3170 = vmatpush1.bf16.msra.mxu0 %v2823
    %3171 = vmatprep.subr.bf16.mxu0 0
    %3172 = vmatpush1.bf16.msra.mxu0 %v2826
    %3173 = vmatprep.subr.bf16.mxu0 0
    %3174 = vmatpush1.bf16.msra.mxu0 %v2829
    %3175 = vmatprep.subr.bf16.mxu0 0
    %3176 = vmatpush1.bf16.msra.mxu0 %v2832
    %3177 = vmatprep.subr.bf16.mxu0 0
    %3178 = vmatpush1.bf16.msra.mxu0 %v2835
    %3179 = vmatprep.subr.bf16.mxu0 0
    %3180 = vmatpush1.bf16.msra.mxu0 %v2838
    %3181 = vmatprep.subr.bf16.mxu0 0
    %3182 = vmatpush1.bf16.msra.mxu0 %v2841
    %3183 = vmatprep.subr.bf16.mxu0 0
    %3184 = vmatpush1.bf16.msra.mxu0 %v2844
    %3185 = vmatprep.mubr.bf16.mxu0 %v2944
    %3186 = vmatmul.mubr.bf16.gmra.mrb[0].mxu0 %v2943
    %v3187 = vpop.f32.mrb[0].mxu0
    %v3188 = vadd.f32 %v3148, %v3187
    %v3189 = vpop.f32.mrb[0].mxu0
    %v3190 = vpop.f32.mrb[0].mxu0
    %v3191 = vpop.f32.mrb[0].mxu0
    %3192 = vdwg.mxu0
    %3193 = vmatprep.subr.bf16.mxu0 0
    %3194 = vmatpush1.bf16.msra.mxu0 %v2847
    %3195 = vmatprep.subr.bf16.mxu0 0
    %3196 = vmatpush1.bf16.msra.mxu0 %v2850
    %3197 = vmatprep.subr.bf16.mxu0 0
    %3198 = vmatpush1.bf16.msra.mxu0 %v2853
    %3199 = vmatprep.subr.bf16.mxu0 0
    %3200 = vmatpush1.bf16.msra.mxu0 %v2856
    %3201 = vmatprep.subr.bf16.mxu0 0
    %3202 = vmatpush1.bf16.msra.mxu0 %v2859
    %3203 = vmatprep.subr.bf16.mxu0 0
    %3204 = vmatpush1.bf16.msra.mxu0 %v2862
    %3205 = vmatprep.subr.bf16.mxu0 0
    %3206 = vmatpush1.bf16.msra.mxu0 %v2865
    %3207 = vmatprep.subr.bf16.mxu0 0
    %3208 = vmatpush1.bf16.msra.mxu0 %v2868
    %3209 = vmatprep.subr.bf16.mxu0 0
    %3210 = vmatpush1.bf16.msra.mxu0 %v2871
    %3211 = vmatprep.subr.bf16.mxu0 0
    %3212 = vmatpush1.bf16.msra.mxu0 %v2874
    %3213 = vmatprep.subr.bf16.mxu0 0
    %3214 = vmatpush1.bf16.msra.mxu0 %v2877
    %3215 = vmatprep.subr.bf16.mxu0 0
    %3216 = vmatpush1.bf16.msra.mxu0 %v2880
    %3217 = vmatprep.subr.bf16.mxu0 0
    %3218 = vmatpush1.bf16.msra.mxu0 %v2883
    %3219 = vmatprep.subr.bf16.mxu0 0
    %3220 = vmatpush1.bf16.msra.mxu0 %v2886
    %3221 = vmatprep.subr.bf16.mxu0 0
    %3222 = vmatpush1.bf16.msra.mxu0 %v2889
    %3223 = vmatprep.subr.bf16.mxu0 0
    %3224 = vmatpush1.bf16.msra.mxu0 %v2892
    %3225 = vmatprep.mubr.bf16.mxu0 %v2946
    %3226 = vmatmul.mubr.bf16.gmra.mrb[0].mxu0 %v2945
    %v3227 = vpop.f32.mrb[0].mxu0
    %v3228 = vadd.f32 %v3188, %v3227
    %v3229 = vpop.f32.mrb[0].mxu0
    %v3230 = vpop.f32.mrb[0].mxu0
    %v3231 = vpop.f32.mrb[0].mxu0
    %3232 = vdwg.mxu0
    %3233 = vmatprep.subr.bf16.mxu0 0
    %3234 = vmatpush1.bf16.msra.mxu0 %v2895
    %3235 = vmatprep.subr.bf16.mxu0 0
    %3236 = vmatpush1.bf16.msra.mxu0 %v2898
    %3237 = vmatprep.subr.bf16.mxu0 0
    %3238 = vmatpush1.bf16.msra.mxu0 %v2901
    %3239 = vmatprep.subr.bf16.mxu0 0
    %3240 = vmatpush1.bf16.msra.mxu0 %v2904
    %3241 = vmatprep.subr.bf16.mxu0 0
    %3242 = vmatpush1.bf16.msra.mxu0 %v2907
    %3243 = vmatprep.subr.bf16.mxu0 0
    %3244 = vmatpush1.bf16.msra.mxu0 %v2910
    %3245 = vmatprep.subr.bf16.mxu0 0
    %3246 = vmatpush1.bf16.msra.mxu0 %v2913
    %3247 = vmatprep.subr.bf16.mxu0 0
    %3248 = vmatpush1.bf16.msra.mxu0 %v2916
    %3249 = vmatprep.subr.bf16.mxu0 0
    %3250 = vmatpush1.bf16.msra.mxu0 %v2919
    %3251 = vmatprep.subr.bf16.mxu0 0
    %3252 = vmatpush1.bf16.msra.mxu0 %v2922
    %3253 = vmatprep.subr.bf16.mxu0 0
    %3254 = vmatpush1.bf16.msra.mxu0 %v2925
    %3255 = vmatprep.subr.bf16.mxu0 0
    %3256 = vmatpush1.bf16.msra.mxu0 %v2928
    %3257 = vmatprep.subr.bf16.mxu0 0
    %3258 = vmatpush1.bf16.msra.mxu0 %v2931
    %3259 = vmatprep.subr.bf16.mxu0 0
    %3260 = vmatpush1.bf16.msra.mxu0 %v2934
    %3261 = vmatprep.subr.bf16.mxu0 0
    %3262 = vmatpush1.bf16.msra.mxu0 %v2937
    %3263 = vmatprep.subr.bf16.mxu0 0
    %3264 = vmatpush1.bf16.msra.mxu0 %v2940
    %3265 = vmatprep.mubr.bf16.mxu0 %v2948
    %3266 = vmatmul.mubr.bf16.gmra.mrb[0].mxu0 %v2947
    %v3267 = vpop.f32.mrb[0].mxu0
    %v3268 = vadd.f32 %v3228, %v3267
    %v3269 = vpop.f32.mrb[0].mxu0
    %v3270 = vpop.f32.mrb[0].mxu0
    %v3271 = vpop.f32.mrb[0].mxu0
    %3272 = vdwg.mxu0
    %v3273 = vmul.f32 %v3107, %v3107
    %v3274 = vmul.f32 %v3109, %v3109
    %v3275 = vmul.f32 %v3268, %v3268
    %v3276 = vmul.f32 %v3107, %v3273
    %v3277 = vmul.f32 %v3109, %v3274
    %v3278 = vmul.f32 %v3268, %v3275
    %v3279 = vmul.f32 %v3276, 0.044715
    %v3280 = vmul.f32 %v3277, 0.044715
    %v3281 = vmul.f32 %v3278, 0.044715
    %v3282 = vadd.f32 %v3107, %v3279
    %v3283 = vadd.f32 %v3109, %v3280
    %v3284 = vadd.f32 %v3268, %v3281
    %v3285 = vmul.f32 %v3282, 0.7978846
    %v3286 = vmul.f32 %v3283, 0.7978846
    %v3287 = vmul.f32 %v3284, 0.7978846
    %v3288 = vtanh.pop %v3285
    %v3289 = vtanh.pop %v3286
    %v3290 = vtanh.pop %v3287
    %v3291 = vadd.f32 %v3288, 1.0
    %v3292 = vadd.f32 %v3289, 1.0
    %v3293 = vadd.f32 %v3290, 1.0
    %v3294 = vmul.f32 %v3291, 0.5
    %v3295 = vmul.f32 %v3292, 0.5
    %v3296 = vmul.f32 %v3293, 0.5
    %v3297 = vmul.f32 %v3107, %v3294
    %v3298 = vmul.f32 %v3109, %v3295
    %v3299 = vmul.f32 %v3268, %v3296
    %v3300 = vld [vmem:[#allocation2 + $0x30] sm:$0xff]
    %v3301 = vld [vmem:[#allocation2 + $0x38] sm:$0xff]
    %v3302 = vld [vmem:[#allocation2 + $0x40] sm:$0xff]
    %v3303 = vld [vmem:[#allocation2 + $0x48] sm:$0xff]
    %v3304 = vld [vmem:[#allocation2 + $0x50] sm:$0xff]
    %v3305 = vld [vmem:[#allocation2 + $0x58] sm:$0xff]
    %v3306 = vld [vmem:[#allocation2 + $0x60] sm:$0xff]
    %v3307 = vld [vmem:[#allocation2 + $0x68] sm:$0xff]
    %v3308 = vld [vmem:[#allocation2 + $0x70] sm:$0xff]
    %v3309 = vld [vmem:[#allocation2 + $0x78] sm:$0xff]
    %v3310 = vld [vmem:[#allocation2 + $0x80] sm:$0xff]
    %v3311 = vld [vmem:[#allocation2 + $0x88] sm:$0xff]
    %v3312 = vld [vmem:[#allocation2 + $0x90] sm:$0xff]
    %v3313 = vld [vmem:[#allocation2 + $0x98] sm:$0xff]
    %v3314 = vld [vmem:[#allocation2 + $0xa0] sm:$0xff]
    %v3315 = vld [vmem:[#allocation2 + $0xa8] sm:$0xff]
    %v3316 = vld [vmem:[#allocation2 + $0xb0] sm:$0xff]
    %v3317 = vld [vmem:[#allocation2 + $0xb8] sm:$0xff]
    %v3318 = vld [vmem:[#allocation2 + $0xc0] sm:$0xff]
    %v3319 = vld [vmem:[#allocation2 + $0xc8] sm:$0xff]
    %v3320 = vld [vmem:[#allocation2 + $0xd0] sm:$0xff]
    %v3321 = vld [vmem:[#allocation2 + $0xd8] sm:$0xff]
    %v3322 = vld [vmem:[#allocation2 + $0xe0] sm:$0xff]
    %v3323 = vld [vmem:[#allocation2 + $0xe8] sm:$0xff]
    %v3324 = vld [vmem:[#allocation2 + $0xf0] sm:$0xff]
    %v3325 = vld [vmem:[#allocation2 + $0xf8] sm:$0xff]
    %v3326 = vld [vmem:[#allocation2 + $0x100] sm:$0xff]
    %v3327 = vld [vmem:[#allocation2 + $0x108] sm:$0xff]
    %v3328 = vld [vmem:[#allocation2 + $0x110] sm:$0xff]
    %v3329 = vld [vmem:[#allocation2 + $0x118] sm:$0xff]
    %v3330 = vld [vmem:[#allocation2 + $0x120] sm:$0xff]
    %v3331 = vld [vmem:[#allocation2 + $0x128] sm:$0xff]
    %v3332 = vld [vmem:[#allocation2 + $0x130] sm:$0xff]
    %v3333 = vld [vmem:[#allocation2 + $0x138] sm:$0xff]
    %v3334 = vld [vmem:[#allocation2 + $0x140] sm:$0xff]
    %v3335 = vld [vmem:[#allocation2 + $0x148] sm:$0xff]
    %v3336 = vld [vmem:[#allocation2 + $0x150] sm:$0xff]
    %v3337 = vld [vmem:[#allocation2 + $0x158] sm:$0xff]
    %v3338 = vld [vmem:[#allocation2 + $0x160] sm:$0xff]
    %v3339 = vld [vmem:[#allocation2 + $0x168] sm:$0xff]
    %v3340 = vld [vmem:[#allocation2 + $0x170] sm:$0xff]
    %v3341 = vld [vmem:[#allocation2 + $0x178] sm:$0xff]
    %v3342 = vld [vmem:[#allocation2 + $0x180] sm:$0xff]
    %v3343 = vld [vmem:[#allocation2 + $0x188] sm:$0xff]
    %v3344 = vld [vmem:[#allocation2 + $0x190] sm:$0xff]
    %v3345 = vld [vmem:[#allocation2 + $0x198] sm:$0xff]
    %v3346 = vld [vmem:[#allocation2 + $0x1a0] sm:$0xff]
    %v3347 = vld [vmem:[#allocation2 + $0x1a8] sm:$0xff]
    %v3348 = vld [vmem:[#allocation2 + $0x1b0] sm:$0xff]
    %v3349 = vld [vmem:[#allocation2 + $0x1b8] sm:$0xff]
    %v3350 = vld [vmem:[#allocation2 + $0x1c0] sm:$0xff]
    %v3351 = vld [vmem:[#allocation2 + $0x1c8] sm:$0xff]
    %v3352 = vld [vmem:[#allocation2 + $0x1d0] sm:$0xff]
    %v3353 = vld [vmem:[#allocation2 + $0x1d8] sm:$0xff]
    %v3354 = vld [vmem:[#allocation2 + $0x1e0] sm:$0xff]
    %v3355 = vld [vmem:[#allocation2 + $0x1e8] sm:$0xff]
    %v3356 = vld [vmem:[#allocation2 + $0x1f0] sm:$0xff]
    %v3357 = vld [vmem:[#allocation2 + $0x1f8] sm:$0xff]
    %v3358 = vld [vmem:[#allocation2 + $0x200] sm:$0xff]
    %v3359 = vld [vmem:[#allocation2 + $0x208] sm:$0xff]
    %v3360 = vld [vmem:[#allocation2 + $0x210] sm:$0xff]
    %v3361 = vld [vmem:[#allocation2 + $0x218] sm:$0xff]
    %v3362 = vld [vmem:[#allocation2 + $0x220] sm:$0xff]
    %v3363 = vld [vmem:[#allocation2 + $0x228] sm:$0xff]
    %v3364 = vld [vmem:[#allocation2 + $0x230] sm:$0xff]
    %v3365 = vld [vmem:[#allocation2 + $0x238] sm:$0xff]
    %v3366 = vld [vmem:[#allocation2 + $0x240] sm:$0xff]
    %v3367 = vld [vmem:[#allocation2 + $0x248] sm:$0xff]
    %v3368 = vld [vmem:[#allocation2 + $0x250] sm:$0xff]
    %v3369 = vld [vmem:[#allocation2 + $0x258] sm:$0xff]
    %v3370 = vld [vmem:[#allocation2 + $0x260] sm:$0xff]
    %v3371 = vld [vmem:[#allocation2 + $0x268] sm:$0xff]
    %v3372 = vld [vmem:[#allocation2 + $0x270] sm:$0xff]
    %v3373 = vld [vmem:[#allocation2 + $0x278] sm:$0xff]
    %v3374 = vld [vmem:[#allocation2 + $0x280] sm:$0xff]
    %v3375 = vld [vmem:[#allocation2 + $0x288] sm:$0xff]
    %v3376 = vld [vmem:[#allocation2 + $0x290] sm:$0xff]
    %v3377 = vld [vmem:[#allocation2 + $0x298] sm:$0xff]
    %v3378 = vld [vmem:[#allocation2 + $0x2a0] sm:$0xff]
    %v3379 = vld [vmem:[#allocation2 + $0x2a8] sm:$0xff]
    %v3380 = vld [vmem:[#allocation2 + $0x2b0] sm:$0xff]
    %v3381 = vld [vmem:[#allocation2 + $0x2b8] sm:$0xff]
    %v3382 = vld [vmem:[#allocation2 + $0x2c0] sm:$0xff]
    %v3383 = vld [vmem:[#allocation2 + $0x2c8] sm:$0xff]
    %v3384 = vld [vmem:[#allocation2 + $0x2d0] sm:$0xff]
    %v3385 = vld [vmem:[#allocation2 + $0x2d8] sm:$0xff]
    %v3386 = vld [vmem:[#allocation2 + $0x2e0] sm:$0xff]
    %v3387 = vld [vmem:[#allocation2 + $0x2e8] sm:$0xff]
    %v3388 = vld [vmem:[#allocation2 + $0x2f0] sm:$0xff]
    %v3389 = vld [vmem:[#allocation2 + $0x2f8] sm:$0xff]
    %v3390 = vld [vmem:[#allocation2 + $0x300] sm:$0xff]
    %v3391 = vld [vmem:[#allocation2 + $0x308] sm:$0xff]
    %v3392 = vld [vmem:[#allocation2 + $0x310] sm:$0xff]
    %v3393 = vld [vmem:[#allocation2 + $0x318] sm:$0xff]
    %v3394 = vld [vmem:[#allocation2 + $0x320] sm:$0xff]
    %v3395 = vld [vmem:[#allocation2 + $0x328] sm:$0xff]
    %v3396 = vld [vmem:[#allocation2 + $0x330] sm:$0xff]
    %v3397 = vld [vmem:[#allocation2 + $0x338] sm:$0xff]
    %v3398 = vld [vmem:[#allocation2 + $0x340] sm:$0xff]
    %v3399 = vld [vmem:[#allocation2 + $0x348] sm:$0xff]
    %v3400 = vld [vmem:[#allocation2 + $0x350] sm:$0xff]
    %v3401 = vld [vmem:[#allocation2 + $0x358] sm:$0xff]
    %v3402 = vld [vmem:[#allocation2 + $0x360] sm:$0xff]
    %v3403 = vld [vmem:[#allocation2 + $0x368] sm:$0xff]
    %v3404 = vld [vmem:[#allocation2 + $0x370] sm:$0xff]
    %v3405 = vld [vmem:[#allocation2 + $0x378] sm:$0xff]
    %v3406 = vld [vmem:[#allocation2 + $0x380] sm:$0xff]
    %v3407 = vld [vmem:[#allocation2 + $0x388] sm:$0xff]
    %v3408 = vld [vmem:[#allocation2 + $0x390] sm:$0xff]
    %v3409 = vld [vmem:[#allocation2 + $0x398] sm:$0xff]
    %v3410 = vld [vmem:[#allocation2 + $0x3a0] sm:$0xff]
    %v3411 = vld [vmem:[#allocation2 + $0x3a8] sm:$0xff]
    %v3412 = vld [vmem:[#allocation2 + $0x3b0] sm:$0xff]
    %v3413 = vld [vmem:[#allocation2 + $0x3b8] sm:$0xff]
    %v3414 = vld [vmem:[#allocation2 + $0x3c0] sm:$0xff]
    %v3415 = vld [vmem:[#allocation2 + $0x3c8] sm:$0xff]
    %v3416 = vld [vmem:[#allocation2 + $0x3d0] sm:$0xff]
    %v3417 = vld [vmem:[#allocation2 + $0x3d8] sm:$0xff]
    %v3418 = vld [vmem:[#allocation2 + $0x3e0] sm:$0xff]
    %v3419 = vld [vmem:[#allocation2 + $0x3e8] sm:$0xff]
    %v3420 = vld [vmem:[#allocation2 + $0x3f0] sm:$0xff]
    %v3421 = vld [vmem:[#allocation2 + $0x3f8] sm:$0xff]
    %v3422 = vld [vmem:[#allocation2 + $0x400] sm:$0xff]
    %v3423 = vld [vmem:[#allocation2 + $0x408] sm:$0xff]
    %v3424 = vld [vmem:[#allocation2 + $0x410] sm:$0xff]
    %v3425 = vld [vmem:[#allocation2 + $0x418] sm:$0xff]
    %v3426 = vld [vmem:[#allocation2 + $0x420] sm:$0xff]
    %v3427 = vld [vmem:[#allocation2 + $0x428] sm:$0xff]
    %v3428 = vld [vmem:[#allocation2 + $0x430] sm:$0xff]
    %v3429 = vld [vmem:[#allocation2 + $0x438] sm:$0xff]
    %v3430 = vld [vmem:[#allocation2 + $0x440] sm:$0xff]
    %v3431 = vld [vmem:[#allocation2 + $0x448] sm:$0xff]
    %v3432 = vld [vmem:[#allocation2 + $0x450] sm:$0xff]
    %v3433 = vld [vmem:[#allocation2 + $0x458] sm:$0xff]
    %v3434 = vld [vmem:[#allocation2 + $0x460] sm:$0xff]
    %v3435 = vld [vmem:[#allocation2 + $0x468] sm:$0xff]
    %v3436 = vld [vmem:[#allocation2 + $0x470] sm:$0xff]
    %v3437 = vld [vmem:[#allocation2 + $0x478] sm:$0xff]
    %v3438 = vld [vmem:[#allocation2 + $0x480] sm:$0xff]
    %v3439 = vld [vmem:[#allocation2 + $0x488] sm:$0xff]
    %v3440 = vld [vmem:[#allocation2 + $0x490] sm:$0xff]
    %v3441 = vld [vmem:[#allocation2 + $0x498] sm:$0xff]
    %v3442 = vld [vmem:[#allocation2 + $0x4a0] sm:$0xff]
    %v3443 = vld [vmem:[#allocation2 + $0x4a8] sm:$0xff]
    %v3444 = vld [vmem:[#allocation2 + $0x4b0] sm:$0xff]
    %v3445 = vld [vmem:[#allocation2 + $0x4b8] sm:$0xff]
    %v3446 = vld [vmem:[#allocation2 + $0x4c0] sm:$0xff]
    %v3447 = vld [vmem:[#allocation2 + $0x4c8] sm:$0xff]
    %v3448 = vld [vmem:[#allocation2 + $0x4d0] sm:$0xff]
    %v3449 = vld [vmem:[#allocation2 + $0x4d8] sm:$0xff]
    %v3450 = vld [vmem:[#allocation2 + $0x4e0] sm:$0xff]
    %v3451 = vld [vmem:[#allocation2 + $0x4e8] sm:$0xff]
    %v3452 = vld [vmem:[#allocation2 + $0x4f0] sm:$0xff]
    %v3453 = vld [vmem:[#allocation2 + $0x4f8] sm:$0xff]
    %v3454 = vld [vmem:[#allocation2 + $0x500] sm:$0xff]
    %v3455 = vld [vmem:[#allocation2 + $0x508] sm:$0xff]
    %v3456 = vld [vmem:[#allocation2 + $0x510] sm:$0xff]
    %v3457 = vld [vmem:[#allocation2 + $0x518] sm:$0xff]
    %v3458 = vld [vmem:[#allocation2 + $0x520] sm:$0xff]
    %v3459 = vld [vmem:[#allocation2 + $0x528] sm:$0xff]
    %v3460 = vld [vmem:[#allocation2 + $0x530] sm:$0xff]
    %v3461 = vld [vmem:[#allocation2 + $0x538] sm:$0xff]
    %v3462 = vld [vmem:[#allocation2 + $0x540] sm:$0xff]
    %v3463 = vld [vmem:[#allocation2 + $0x548] sm:$0xff]
    %v3464 = vld [vmem:[#allocation2 + $0x550] sm:$0xff]
    %v3465 = vld [vmem:[#allocation2 + $0x558] sm:$0xff]
    %v3466 = vld [vmem:[#allocation2 + $0x560] sm:$0xff]
    %v3467 = vld [vmem:[#allocation2 + $0x568] sm:$0xff]
    %v3468 = vld [vmem:[#allocation2 + $0x570] sm:$0xff]
    %v3469 = vld [vmem:[#allocation2 + $0x578] sm:$0xff]
    %v3470 = vld [vmem:[#allocation2 + $0x580] sm:$0xff]
    %v3471 = vld [vmem:[#allocation2 + $0x588] sm:$0xff]
    %v3472 = vld [vmem:[#allocation2 + $0x590] sm:$0xff]
    %v3473 = vld [vmem:[#allocation2 + $0x598] sm:$0xff]
    %v3474 = vld [vmem:[#allocation2 + $0x5a0] sm:$0xff]
    %v3475 = vld [vmem:[#allocation2 + $0x5a8] sm:$0xff]
    %v3476 = vld [vmem:[#allocation2 + $0x5b0] sm:$0xff]
    %v3477 = vld [vmem:[#allocation2 + $0x5b8] sm:$0xff]
    %v3478 = vld [vmem:[#allocation2 + $0x5c0] sm:$0xff]
    %v3479 = vld [vmem:[#allocation2 + $0x5c8] sm:$0xff]
    %v3480 = vld [vmem:[#allocation2 + $0x5d0] sm:$0xff]
    %v3481 = vld [vmem:[#allocation2 + $0x5d8] sm:$0xff]
    %v3482 = vld [vmem:[#allocation2 + $0x5e0] sm:$0xff]
    %v3483 = vld [vmem:[#allocation2 + $0x5e8] sm:$0xff]
    %v3484 = vld [vmem:[#allocation2 + $0x5f0] sm:$0xff]
    %v3485 = vld [vmem:[#allocation2 + $0x5f8] sm:$0xff]
    %v3486 = vld [vmem:[#allocation2 + $0x600] sm:$0xff]
    %v3487 = vld [vmem:[#allocation2 + $0x608] sm:$0xff]
    %v3488 = vld [vmem:[#allocation2 + $0x610] sm:$0xff]
    %v3489 = vld [vmem:[#allocation2 + $0x618] sm:$0xff]
    %v3490 = vld [vmem:[#allocation2 + $0x620] sm:$0xff]
    %v3491 = vld [vmem:[#allocation2 + $0x628] sm:$0xff]
    %3492 = vmatprep.subr.bf16.mxu0 %v3301
    %3493 = vmatpush1.bf16.msra.mxu0 %v3300
    %3494 = vmatprep.subr.bf16.mxu0 %v3304
    %3495 = vmatpush1.bf16.msra.mxu0 %v3303
    %3496 = vmatprep.subr.bf16.mxu0 %v3307
    %3497 = vmatpush1.bf16.msra.mxu0 %v3306
    %3498 = vmatprep.subr.bf16.mxu0 %v3310
    %3499 = vmatpush1.bf16.msra.mxu0 %v3309
    %3500 = vmatprep.subr.bf16.mxu0 %v3313
    %3501 = vmatpush1.bf16.msra.mxu0 %v3312
    %3502 = vmatprep.subr.bf16.mxu0 %v3316
    %3503 = vmatpush1.bf16.msra.mxu0 %v3315
    %3504 = vmatprep.subr.bf16.mxu0 %v3319
    %3505 = vmatpush1.bf16.msra.mxu0 %v3318
    %3506 = vmatprep.subr.bf16.mxu0 %v3322
    %3507 = vmatpush1.bf16.msra.mxu0 %v3321
    %3508 = vmatprep.subr.bf16.mxu0 %v3325
    %3509 = vmatpush1.bf16.msra.mxu0 %v3324
    %3510 = vmatprep.subr.bf16.mxu0 %v3328
    %3511 = vmatpush1.bf16.msra.mxu0 %v3327
    %3512 = vmatprep.subr.bf16.mxu0 %v3331
    %3513 = vmatpush1.bf16.msra.mxu0 %v3330
    %3514 = vmatprep.subr.bf16.mxu0 %v3334
    %3515 = vmatpush1.bf16.msra.mxu0 %v3333
    %3516 = vmatprep.subr.bf16.mxu0 %v3337
    %3517 = vmatpush1.bf16.msra.mxu0 %v3336
    %3518 = vmatprep.subr.bf16.mxu0 %v3340
    %3519 = vmatpush1.bf16.msra.mxu0 %v3339
    %3520 = vmatprep.subr.bf16.mxu0 %v3343
    %3521 = vmatpush1.bf16.msra.mxu0 %v3342
    %3522 = vmatprep.subr.bf16.mxu0 %v3346
    %3523 = vmatpush1.bf16.msra.mxu0 %v3345
    %3524 = vmatprep.mubr.bf16.mxu0 %v2942
    %3525 = vmatmul.mubr.bf16.gmra.mrb[0].mxu0 %v2941
    %v3526 = vpop.f32.mrb[0].mxu0
    %v3527 = vadd.f32 %v2737, %v3526
    %v3528 = vpop.f32.mrb[0].mxu0
    %v3529 = vadd.f32 %v2741, %v3528
    %v3530 = vpop.f32.mrb[0].mxu0
    %v3531 = vpop.f32.mrb[0].mxu0
    %3532 = vdwg.mxu0
    %3533 = vmatprep.subr.bf16.mxu0 %v3349
    %3534 = vmatpush1.bf16.msra.mxu0 %v3348
    %3535 = vmatprep.subr.bf16.mxu0 %v3352
    %3536 = vmatpush1.bf16.msra.mxu0 %v3351
    %3537 = vmatprep.subr.bf16.mxu0 %v3355
    %3538 = vmatpush1.bf16.msra.mxu0 %v3354
    %3539 = vmatprep.subr.bf16.mxu0 %v3358
    %3540 = vmatpush1.bf16.msra.mxu0 %v3357
    %3541 = vmatprep.subr.bf16.mxu0 %v3361
    %3542 = vmatpush1.bf16.msra.mxu0 %v3360
    %3543 = vmatprep.subr.bf16.mxu0 %v3364
    %3544 = vmatpush1.bf16.msra.mxu0 %v3363
    %3545 = vmatprep.subr.bf16.mxu0 %v3367
    %3546 = vmatpush1.bf16.msra.mxu0 %v3366
    %3547 = vmatprep.subr.bf16.mxu0 %v3370
    %3548 = vmatpush1.bf16.msra.mxu0 %v3369
    %3549 = vmatprep.subr.bf16.mxu0 %v3373
    %3550 = vmatpush1.bf16.msra.mxu0 %v3372
    %3551 = vmatprep.subr.bf16.mxu0 %v3376
    %3552 = vmatpush1.bf16.msra.mxu0 %v3375
    %3553 = vmatprep.subr.bf16.mxu0 %v3379
    %3554 = vmatpush1.bf16.msra.mxu0 %v3378
    %3555 = vmatprep.subr.bf16.mxu0 %v3382
    %3556 = vmatpush1.bf16.msra.mxu0 %v3381
    %3557 = vmatprep.subr.bf16.mxu0 %v3385
    %3558 = vmatpush1.bf16.msra.mxu0 %v3384
    %3559 = vmatprep.subr.bf16.mxu0 %v3388
    %3560 = vmatpush1.bf16.msra.mxu0 %v3387
    %3561 = vmatprep.subr.bf16.mxu0 %v3391
    %3562 = vmatpush1.bf16.msra.mxu0 %v3390
    %3563 = vmatprep.subr.bf16.mxu0 %v3394
    %3564 = vmatpush1.bf16.msra.mxu0 %v3393
    %3565 = vmatprep.mubr.bf16.mxu0 %v2944
    %3566 = vmatmul.mubr.bf16.gmra.mrb[0].mxu0 %v2943
    %v3567 = vpop.f32.mrb[0].mxu0
    %v3568 = vadd.f32 %v3527, %v3567
    %v3569 = vpop.f32.mrb[0].mxu0
    %v3570 = vadd.f32 %v3529, %v3569
    %v3571 = vpop.f32.mrb[0].mxu0
    %v3572 = vpop.f32.mrb[0].mxu0
    %3573 = vdwg.mxu0
    %3574 = vmatprep.subr.bf16.mxu0 %v3397
    %3575 = vmatpush1.bf16.msra.mxu0 %v3396
    %3576 = vmatprep.subr.bf16.mxu0 %v3400
    %3577 = vmatpush1.bf16.msra.mxu0 %v3399
    %3578 = vmatprep.subr.bf16.mxu0 %v3403
    %3579 = vmatpush1.bf16.msra.mxu0 %v3402
    %3580 = vmatprep.subr.bf16.mxu0 %v3406
    %3581 = vmatpush1.bf16.msra.mxu0 %v3405
    %3582 = vmatprep.subr.bf16.mxu0 %v3409
    %3583 = vmatpush1.bf16.msra.mxu0 %v3408
    %3584 = vmatprep.subr.bf16.mxu0 %v3412
    %3585 = vmatpush1.bf16.msra.mxu0 %v3411
    %3586 = vmatprep.subr.bf16.mxu0 %v3415
    %3587 = vmatpush1.bf16.msra.mxu0 %v3414
    %3588 = vmatprep.subr.bf16.mxu0 %v3418
    %3589 = vmatpush1.bf16.msra.mxu0 %v3417
    %3590 = vmatprep.subr.bf16.mxu0 %v3421
    %3591 = vmatpush1.bf16.msra.mxu0 %v3420
    %3592 = vmatprep.subr.bf16.mxu0 %v3424
    %3593 = vmatpush1.bf16.msra.mxu0 %v3423
    %3594 = vmatprep.subr.bf16.mxu0 %v3427
    %3595 = vmatpush1.bf16.msra.mxu0 %v3426
    %3596 = vmatprep.subr.bf16.mxu0 %v3430
    %3597 = vmatpush1.bf16.msra.mxu0 %v3429
    %3598 = vmatprep.subr.bf16.mxu0 %v3433
    %3599 = vmatpush1.bf16.msra.mxu0 %v3432
    %3600 = vmatprep.subr.bf16.mxu0 %v3436
    %3601 = vmatpush1.bf16.msra.mxu0 %v3435
    %3602 = vmatprep.subr.bf16.mxu0 %v3439
    %3603 = vmatpush1.bf16.msra.mxu0 %v3438
    %3604 = vmatprep.subr.bf16.mxu0 %v3442
    %3605 = vmatpush1.bf16.msra.mxu0 %v3441
    %3606 = vmatprep.mubr.bf16.mxu0 %v2946
    %3607 = vmatmul.mubr.bf16.gmra.mrb[0].mxu0 %v2945
    %v3608 = vpop.f32.mrb[0].mxu0
    %v3609 = vadd.f32 %v3568, %v3608
    %v3610 = vpop.f32.mrb[0].mxu0
    %v3611 = vadd.f32 %v3570, %v3610
    %v3612 = vpop.f32.mrb[0].mxu0
    %v3613 = vpop.f32.mrb[0].mxu0
    %3614 = vdwg.mxu0
    %3615 = vmatprep.subr.bf16.mxu0 %v3445
    %3616 = vmatpush1.bf16.msra.mxu0 %v3444
    %3617 = vmatprep.subr.bf16.mxu0 %v3448
    %3618 = vmatpush1.bf16.msra.mxu0 %v3447
    %3619 = vmatprep.subr.bf16.mxu0 %v3451
    %3620 = vmatpush1.bf16.msra.mxu0 %v3450
    %3621 = vmatprep.subr.bf16.mxu0 %v3454
    %3622 = vmatpush1.bf16.msra.mxu0 %v3453
    %3623 = vmatprep.subr.bf16.mxu0 %v3457
    %3624 = vmatpush1.bf16.msra.mxu0 %v3456
    %3625 = vmatprep.subr.bf16.mxu0 %v3460
    %3626 = vmatpush1.bf16.msra.mxu0 %v3459
    %3627 = vmatprep.subr.bf16.mxu0 %v3463
    %3628 = vmatpush1.bf16.msra.mxu0 %v3462
    %3629 = vmatprep.subr.bf16.mxu0 %v3466
    %3630 = vmatpush1.bf16.msra.mxu0 %v3465
    %3631 = vmatprep.subr.bf16.mxu0 %v3469
    %3632 = vmatpush1.bf16.msra.mxu0 %v3468
    %3633 = vmatprep.subr.bf16.mxu0 %v3472
    %3634 = vmatpush1.bf16.msra.mxu0 %v3471
    %3635 = vmatprep.subr.bf16.mxu0 %v3475
    %3636 = vmatpush1.bf16.msra.mxu0 %v3474
    %3637 = vmatprep.subr.bf16.mxu0 %v3478
    %3638 = vmatpush1.bf16.msra.mxu0 %v3477
    %3639 = vmatprep.subr.bf16.mxu0 %v3481
    %3640 = vmatpush1.bf16.msra.mxu0 %v3480
    %3641 = vmatprep.subr.bf16.mxu0 %v3484
    %3642 = vmatpush1.bf16.msra.mxu0 %v3483
    %3643 = vmatprep.subr.bf16.mxu0 %v3487
    %3644 = vmatpush1.bf16.msra.mxu0 %v3486
    %3645 = vmatprep.subr.bf16.mxu0 %v3490
    %3646 = vmatpush1.bf16.msra.mxu0 %v3489
    %3647 = vmatprep.mubr.bf16.mxu0 %v2948
    %3648 = vmatmul.mubr.bf16.gmra.mrb[0].mxu0 %v2947
    %v3649 = vpop.f32.mrb[0].mxu0
    %v3650 = vadd.f32 %v3609, %v3649
    %v3651 = vpop.f32.mrb[0].mxu0
    %v3652 = vadd.f32 %v3611, %v3651
    %v3653 = vpop.f32.mrb[0].mxu0
    %v3654 = vpop.f32.mrb[0].mxu0
    %3655 = vdwg.mxu0
    %3656 = vmatprep.subr.bf16.mxu0 0
    %3657 = vmatpush1.bf16.msra.mxu0 %v3302
    %3658 = vmatprep.subr.bf16.mxu0 0
    %3659 = vmatpush1.bf16.msra.mxu0 %v3305
    %3660 = vmatprep.subr.bf16.mxu0 0
    %3661 = vmatpush1.bf16.msra.mxu0 %v3308
    %3662 = vmatprep.subr.bf16.mxu0 0
    %3663 = vmatpush1.bf16.msra.mxu0 %v3311
    %3664 = vmatprep.subr.bf16.mxu0 0
    %3665 = vmatpush1.bf16.msra.mxu0 %v3314
    %3666 = vmatprep.subr.bf16.mxu0 0
    %3667 = vmatpush1.bf16.msra.mxu0 %v3317
    %3668 = vmatprep.subr.bf16.mxu0 0
    %3669 = vmatpush1.bf16.msra.mxu0 %v3320
    %3670 = vmatprep.subr.bf16.mxu0 0
    %3671 = vmatpush1.bf16.msra.mxu0 %v3323
    %3672 = vmatprep.subr.bf16.mxu0 0
    %3673 = vmatpush1.bf16.msra.mxu0 %v3326
    %3674 = vmatprep.subr.bf16.mxu0 0
    %3675 = vmatpush1.bf16.msra.mxu0 %v3329
    %3676 = vmatprep.subr.bf16.mxu0 0
    %3677 = vmatpush1.bf16.msra.mxu0 %v3332
    %3678 = vmatprep.subr.bf16.mxu0 0
    %3679 = vmatpush1.bf16.msra.mxu0 %v3335
    %3680 = vmatprep.subr.bf16.mxu0 0
    %3681 = vmatpush1.bf16.msra.mxu0 %v3338
    %3682 = vmatprep.subr.bf16.mxu0 0
    %3683 = vmatpush1.bf16.msra.mxu0 %v3341
    %3684 = vmatprep.subr.bf16.mxu0 0
    %3685 = vmatpush1.bf16.msra.mxu0 %v3344
    %3686 = vmatprep.subr.bf16.mxu0 0
    %3687 = vmatpush1.bf16.msra.mxu0 %v3347
    %3688 = vmatprep.mubr.bf16.mxu0 %v2942
    %3689 = vmatmul.mubr.bf16.gmra.mrb[0].mxu0 %v2941
    %v3690 = vpop.f32.mrb[0].mxu0
    %v3691 = vadd.f32 %v2745, %v3690
    %v3692 = vpop.f32.mrb[0].mxu0
    %v3693 = vpop.f32.mrb[0].mxu0
    %v3694 = vpop.f32.mrb[0].mxu0
    %3695 = vdwg.mxu0
    %3696 = vmatprep.subr.bf16.mxu0 0
    %3697 = vmatpush1.bf16.msra.mxu0 %v3350
    %3698 = vmatprep.subr.bf16.mxu0 0
    %3699 = vmatpush1.bf16.msra.mxu0 %v3353
    %3700 = vmatprep.subr.bf16.mxu0 0
    %3701 = vmatpush1.bf16.msra.mxu0 %v3356
    %3702 = vmatprep.subr.bf16.mxu0 0
    %3703 = vmatpush1.bf16.msra.mxu0 %v3359
    %3704 = vmatprep.subr.bf16.mxu0 0
    %3705 = vmatpush1.bf16.msra.mxu0 %v3362
    %3706 = vmatprep.subr.bf16.mxu0 0
    %3707 = vmatpush1.bf16.msra.mxu0 %v3365
    %3708 = vmatprep.subr.bf16.mxu0 0
    %3709 = vmatpush1.bf16.msra.mxu0 %v3368
    %3710 = vmatprep.subr.bf16.mxu0 0
    %3711 = vmatpush1.bf16.msra.mxu0 %v3371
    %3712 = vmatprep.subr.bf16.mxu0 0
    %3713 = vmatpush1.bf16.msra.mxu0 %v3374
    %3714 = vmatprep.subr.bf16.mxu0 0
    %3715 = vmatpush1.bf16.msra.mxu0 %v3377
    %3716 = vmatprep.subr.bf16.mxu0 0
    %3717 = vmatpush1.bf16.msra.mxu0 %v3380
    %3718 = vmatprep.subr.bf16.mxu0 0
    %3719 = vmatpush1.bf16.msra.mxu0 %v3383
    %3720 = vmatprep.subr.bf16.mxu0 0
    %3721 = vmatpush1.bf16.msra.mxu0 %v3386
    %3722 = vmatprep.subr.bf16.mxu0 0
    %3723 = vmatpush1.bf16.msra.mxu0 %v3389
    %3724 = vmatprep.subr.bf16.mxu0 0
    %3725 = vmatpush1.bf16.msra.mxu0 %v3392
    %3726 = vmatprep.subr.bf16.mxu0 0
    %3727 = vmatpush1.bf16.msra.mxu0 %v3395
    %3728 = vmatprep.mubr.bf16.mxu0 %v2944
    %3729 = vmatmul.mubr.bf16.gmra.mrb[0].mxu0 %v2943
    %v3730 = vpop.f32.mrb[0].mxu0
    %v3731 = vadd.f32 %v3691, %v3730
    %v3732 = vpop.f32.mrb[0].mxu0
    %v3733 = vpop.f32.mrb[0].mxu0
    %v3734 = vpop.f32.mrb[0].mxu0
    %3735 = vdwg.mxu0
    %3736 = vmatprep.subr.bf16.mxu0 0
    %3737 = vmatpush1.bf16.msra.mxu0 %v3398
    %3738 = vmatprep.subr.bf16.mxu0 0
    %3739 = vmatpush1.bf16.msra.mxu0 %v3401
    %3740 = vmatprep.subr.bf16.mxu0 0
    %3741 = vmatpush1.bf16.msra.mxu0 %v3404
    %3742 = vmatprep.subr.bf16.mxu0 0
    %3743 = vmatpush1.bf16.msra.mxu0 %v3407
    %3744 = vmatprep.subr.bf16.mxu0 0
    %3745 = vmatpush1.bf16.msra.mxu0 %v3410
    %3746 = vmatprep.subr.bf16.mxu0 0
    %3747 = vmatpush1.bf16.msra.mxu0 %v3413
    %3748 = vmatprep.subr.bf16.mxu0 0
    %3749 = vmatpush1.bf16.msra.mxu0 %v3416
    %3750 = vmatprep.subr.bf16.mxu0 0
    %3751 = vmatpush1.bf16.msra.mxu0 %v3419
    %3752 = vmatprep.subr.bf16.mxu0 0
    %3753 = vmatpush1.bf16.msra.mxu0 %v3422
    %3754 = vmatprep.subr.bf16.mxu0 0
    %3755 = vmatpush1.bf16.msra.mxu0 %v3425
    %3756 = vmatprep.subr.bf16.mxu0 0
    %3757 = vmatpush1.bf16.msra.mxu0 %v3428
    %3758 = vmatprep.subr.bf16.mxu0 0
    %3759 = vmatpush1.bf16.msra.mxu0 %v3431
    %3760 = vmatprep.subr.bf16.mxu0 0
    %3761 = vmatpush1.bf16.msra.mxu0 %v3434
    %3762 = vmatprep.subr.bf16.mxu0 0
    %3763 = vmatpush1.bf16.msra.mxu0 %v3437
    %3764 = vmatprep.subr.bf16.mxu0 0
    %3765 = vmatpush1.bf16.msra.mxu0 %v3440
    %3766 = vmatprep.subr.bf16.mxu0 0
    %3767 = vmatpush1.bf16.msra.mxu0 %v3443
    %3768 = vmatprep.mubr.bf16.mxu0 %v2946
    %3769 = vmatmul.mubr.bf16.gmra.mrb[0].mxu0 %v2945
    %v3770 = vpop.f32.mrb[0].mxu0
    %v3771 = vadd.f32 %v3731, %v3770
    %v3772 = vpop.f32.mrb[0].mxu0
    %v3773 = vpop.f32.mrb[0].mxu0
    %v3774 = vpop.f32.mrb[0].mxu0
    %3775 = vdwg.mxu0
    %3776 = vmatprep.subr.bf16.mxu0 0
    %3777 = vmatpush1.bf16.msra.mxu0 %v3446
    %3778 = vmatprep.subr.bf16.mxu0 0
    %3779 = vmatpush1.bf16.msra.mxu0 %v3449
    %3780 = vmatprep.subr.bf16.mxu0 0
    %3781 = vmatpush1.bf16.msra.mxu0 %v3452
    %3782 = vmatprep.subr.bf16.mxu0 0
    %3783 = vmatpush1.bf16.msra.mxu0 %v3455
    %3784 = vmatprep.subr.bf16.mxu0 0
    %3785 = vmatpush1.bf16.msra.mxu0 %v3458
    %3786 = vmatprep.subr.bf16.mxu0 0
    %3787 = vmatpush1.bf16.msra.mxu0 %v3461
    %3788 = vmatprep.subr.bf16.mxu0 0
    %3789 = vmatpush1.bf16.msra.mxu0 %v3464
    %3790 = vmatprep.subr.bf16.mxu0 0
    %3791 = vmatpush1.bf16.msra.mxu0 %v3467
    %3792 = vmatprep.subr.bf16.mxu0 0
    %3793 = vmatpush1.bf16.msra.mxu0 %v3470
    %3794 = vmatprep.subr.bf16.mxu0 0
    %3795 = vmatpush1.bf16.msra.mxu0 %v3473
    %3796 = vmatprep.subr.bf16.mxu0 0
    %3797 = vmatpush1.bf16.msra.mxu0 %v3476
    %3798 = vmatprep.subr.bf16.mxu0 0
    %3799 = vmatpush1.bf16.msra.mxu0 %v3479
    %3800 = vmatprep.subr.bf16.mxu0 0
    %3801 = vmatpush1.bf16.msra.mxu0 %v3482
    %3802 = vmatprep.subr.bf16.mxu0 0
    %3803 = vmatpush1.bf16.msra.mxu0 %v3485
    %3804 = vmatprep.subr.bf16.mxu0 0
    %3805 = vmatpush1.bf16.msra.mxu0 %v3488
    %3806 = vmatprep.subr.bf16.mxu0 0
    %3807 = vmatpush1.bf16.msra.mxu0 %v3491
    %3808 = vmatprep.mubr.bf16.mxu0 %v2948
    %3809 = vmatmul.mubr.bf16.gmra.mrb[0].mxu0 %v2947
    %v3810 = vpop.f32.mrb[0].mxu0
    %v3811 = vadd.f32 %v3771, %v3810
    %v3812 = vpop.f32.mrb[0].mxu0
    %v3813 = vpop.f32.mrb[0].mxu0
    %v3814 = vpop.f32.mrb[0].mxu0
    %3815 = vdwg.mxu0
    %v3816 = vmul.f32 %v3650, %v3650
    %v3817 = vmul.f32 %v3652, %v3652
    %v3818 = vmul.f32 %v3811, %v3811
    %v3819 = vmul.f32 %v3650, %v3816
    %v3820 = vmul.f32 %v3652, %v3817
    %v3821 = vmul.f32 %v3811, %v3818
    %v3822 = vmul.f32 %v3819, 0.044715
    %v3823 = vmul.f32 %v3820, 0.044715
    %v3824 = vmul.f32 %v3821, 0.044715
    %v3825 = vadd.f32 %v3650, %v3822
    %v3826 = vadd.f32 %v3652, %v3823
    %v3827 = vadd.f32 %v3811, %v3824
    %v3828 = vmul.f32 %v3825, 0.7978846
    %v3829 = vmul.f32 %v3826, 0.7978846
    %v3830 = vmul.f32 %v3827, 0.7978846
    %v3831 = vtanh.pop %v3828
    %v3832 = vtanh.pop %v3829
    %v3833 = vtanh.pop %v3830
    %v3834 = vadd.f32 %v3831, 1.0
    %v3835 = vadd.f32 %v3832, 1.0
    %v3836 = vadd.f32 %v3833, 1.0
    %v3837 = vmul.f32 %v3834, 0.5
    %v3838 = vmul.f32 %v3835, 0.5
    %v3839 = vmul.f32 %v3836, 0.5
    %v3840 = vmul.f32 %v3650, %v3837
    %v3841 = vmul.f32 %v3652, %v3838
    %v3842 = vmul.f32 %v3811, %v3839
    %v3843 = vmax.f32 %v3297, %v3840
    %v3844 = vmax.f32 %v3298, %v3841
    %v3845 = vmax.f32 %v3299, %v3842
    %v3846 = vld [vmem:[#allocation2] sm:$0xff]
    %v3847 = vld [vmem:[#allocation2 + $0x8] sm:$0xff]
    %v3848 = vld [vmem:[#allocation2 + $0x10] sm:$0xff]
    %v3849 = vld [vmem:[#allocation2 + $0x18] sm:$0xff]
    %v3850 = vld [vmem:[#allocation2 + $0x20] sm:$0xff]
    %v3851 = vld [vmem:[#allocation2 + $0x28] sm:$0xff]
    %v3852 = vld [vmem:[#allocation2 + $0x30] sm:$0xff]
    %v3853 = vld [vmem:[#allocation2 + $0x38] sm:$0xff]
    %v3854 = vld [vmem:[#allocation2 + $0x40] sm:$0xff]
    %v3855 = vld [vmem:[#allocation2 + $0x48] sm:$0xff]
    %v3856 = vld [vmem:[#allocation2 + $0x50] sm:$0xff]
    %v3857 = vld [vmem:[#allocation2 + $0x58] sm:$0xff]
    %v3858 = vld [vmem:[#allocation2 + $0x60] sm:$0xff]
    %v3859 = vld [vmem:[#allocation2 + $0x68] sm:$0xff]
    %v3860 = vld [vmem:[#allocation2 + $0x70] sm:$0xff]
    %v3861 = vld [vmem:[#allocation2 + $0x78] sm:$0xff]
    %v3862 = vld [vmem:[#allocation2 + $0x80] sm:$0xff]
    %v3863 = vld [vmem:[#allocation2 + $0x88] sm:$0xff]
    %v3864 = vld [vmem:[#allocation2 + $0x90] sm:$0xff]
    %v3865 = vld [vmem:[#allocation2 + $0x98] sm:$0xff]
    %v3866 = vld [vmem:[#allocation2 + $0xa0] sm:$0xff]
    %v3867 = vld [vmem:[#allocation2 + $0xa8] sm:$0xff]
    %v3868 = vld [vmem:[#allocation2 + $0xb0] sm:$0xff]
    %v3869 = vld [vmem:[#allocation2 + $0xb8] sm:$0xff]
    %v3870 = vld [vmem:[#allocation2 + $0xc0] sm:$0xff]
    %v3871 = vld [vmem:[#allocation2 + $0xc8] sm:$0xff]
    %v3872 = vld [vmem:[#allocation2 + $0xd0] sm:$0xff]
    %v3873 = vld [vmem:[#allocation2 + $0xd8] sm:$0xff]
    %v3874 = vld [vmem:[#allocation2 + $0xe0] sm:$0xff]
    %v3875 = vld [vmem:[#allocation2 + $0xe8] sm:$0xff]
    %v3876 = vld [vmem:[#allocation2 + $0xf0] sm:$0xff]
    %v3877 = vld [vmem:[#allocation2 + $0xf8] sm:$0xff]
    %v3878 = vld [vmem:[#allocation2 + $0x100] sm:$0xff]
    %v3879 = vld [vmem:[#allocation2 + $0x108] sm:$0xff]
    %v3880 = vld [vmem:[#allocation2 + $0x110] sm:$0xff]
    %v3881 = vld [vmem:[#allocation2 + $0x118] sm:$0xff]
    %v3882 = vld [vmem:[#allocation2 + $0x120] sm:$0xff]
    %v3883 = vld [vmem:[#allocation2 + $0x128] sm:$0xff]
    %v3884 = vld [vmem:[#allocation2 + $0x130] sm:$0xff]
    %v3885 = vld [vmem:[#allocation2 + $0x138] sm:$0xff]
    %v3886 = vld [vmem:[#allocation2 + $0x140] sm:$0xff]
    %v3887 = vld [vmem:[#allocation2 + $0x148] sm:$0xff]
    %v3888 = vld [vmem:[#allocation2 + $0x150] sm:$0xff]
    %v3889 = vld [vmem:[#allocation2 + $0x158] sm:$0xff]
    %v3890 = vld [vmem:[#allocation2 + $0x160] sm:$0xff]
    %v3891 = vld [vmem:[#allocation2 + $0x168] sm:$0xff]
    %v3892 = vld [vmem:[#allocation2 + $0x170] sm:$0xff]
    %v3893 = vld [vmem:[#allocation2 + $0x178] sm:$0xff]
    %v3894 = vld [vmem:[#allocation2 + $0x180] sm:$0xff]
    %v3895 = vld [vmem:[#allocation2 + $0x188] sm:$0xff]
    %v3896 = vld [vmem:[#allocation2 + $0x190] sm:$0xff]
    %v3897 = vld [vmem:[#allocation2 + $0x198] sm:$0xff]
    %v3898 = vld [vmem:[#allocation2 + $0x1a0] sm:$0xff]
    %v3899 = vld [vmem:[#allocation2 + $0x1a8] sm:$0xff]
    %v3900 = vld [vmem:[#allocation2 + $0x1b0] sm:$0xff]
    %v3901 = vld [vmem:[#allocation2 + $0x1b8] sm:$0xff]
    %v3902 = vld [vmem:[#allocation2 + $0x1c0] sm:$0xff]
    %v3903 = vld [vmem:[#allocation2 + $0x1c8] sm:$0xff]
    %v3904 = vld [vmem:[#allocation2 + $0x1d0] sm:$0xff]
    %v3905 = vld [vmem:[#allocation2 + $0x1d8] sm:$0xff]
    %v3906 = vld [vmem:[#allocation2 + $0x1e0] sm:$0xff]
    %v3907 = vld [vmem:[#allocation2 + $0x1e8] sm:$0xff]
    %v3908 = vld [vmem:[#allocation2 + $0x1f0] sm:$0xff]
    %v3909 = vld [vmem:[#allocation2 + $0x1f8] sm:$0xff]
    %v3910 = vld [vmem:[#allocation2 + $0x200] sm:$0xff]
    %v3911 = vld [vmem:[#allocation2 + $0x208] sm:$0xff]
    %v3912 = vld [vmem:[#allocation2 + $0x210] sm:$0xff]
    %v3913 = vld [vmem:[#allocation2 + $0x218] sm:$0xff]
    %v3914 = vld [vmem:[#allocation2 + $0x220] sm:$0xff]
    %v3915 = vld [vmem:[#allocation2 + $0x228] sm:$0xff]
    %v3916 = vld [vmem:[#allocation2 + $0x230] sm:$0xff]
    %v3917 = vld [vmem:[#allocation2 + $0x238] sm:$0xff]
    %v3918 = vld [vmem:[#allocation2 + $0x240] sm:$0xff]
    %v3919 = vld [vmem:[#allocation2 + $0x248] sm:$0xff]
    %v3920 = vld [vmem:[#allocation2 + $0x250] sm:$0xff]
    %v3921 = vld [vmem:[#allocation2 + $0x258] sm:$0xff]
    %v3922 = vld [vmem:[#allocation2 + $0x260] sm:$0xff]
    %v3923 = vld [vmem:[#allocation2 + $0x268] sm:$0xff]
    %v3924 = vld [vmem:[#allocation2 + $0x270] sm:$0xff]
    %v3925 = vld [vmem:[#allocation2 + $0x278] sm:$0xff]
    %v3926 = vld [vmem:[#allocation2 + $0x280] sm:$0xff]
    %v3927 = vld [vmem:[#allocation2 + $0x288] sm:$0xff]
    %v3928 = vld [vmem:[#allocation2 + $0x290] sm:$0xff]
    %v3929 = vld [vmem:[#allocation2 + $0x298] sm:$0xff]
    %v3930 = vld [vmem:[#allocation2 + $0x2a0] sm:$0xff]
    %v3931 = vld [vmem:[#allocation2 + $0x2a8] sm:$0xff]
    %v3932 = vld [vmem:[#allocation2 + $0x2b0] sm:$0xff]
    %v3933 = vld [vmem:[#allocation2 + $0x2b8] sm:$0xff]
    %v3934 = vld [vmem:[#allocation2 + $0x2c0] sm:$0xff]
    %v3935 = vld [vmem:[#allocation2 + $0x2c8] sm:$0xff]
    %v3936 = vld [vmem:[#allocation2 + $0x2d0] sm:$0xff]
    %v3937 = vld [vmem:[#allocation2 + $0x2d8] sm:$0xff]
    %v3938 = vld [vmem:[#allocation2 + $0x2e0] sm:$0xff]
    %v3939 = vld [vmem:[#allocation2 + $0x2e8] sm:$0xff]
    %v3940 = vld [vmem:[#allocation2 + $0x2f0] sm:$0xff]
    %v3941 = vld [vmem:[#allocation2 + $0x2f8] sm:$0xff]
    %v3942 = vld [vmem:[#allocation2 + $0x300] sm:$0xff]
    %v3943 = vld [vmem:[#allocation2 + $0x308] sm:$0xff]
    %v3944 = vld [vmem:[#allocation2 + $0x310] sm:$0xff]
    %v3945 = vld [vmem:[#allocation2 + $0x318] sm:$0xff]
    %v3946 = vld [vmem:[#allocation2 + $0x320] sm:$0xff]
    %v3947 = vld [vmem:[#allocation2 + $0x328] sm:$0xff]
    %v3948 = vld [vmem:[#allocation2 + $0x330] sm:$0xff]
    %v3949 = vld [vmem:[#allocation2 + $0x338] sm:$0xff]
    %v3950 = vld [vmem:[#allocation2 + $0x340] sm:$0xff]
    %v3951 = vld [vmem:[#allocation2 + $0x348] sm:$0xff]
    %v3952 = vld [vmem:[#allocation2 + $0x350] sm:$0xff]
    %v3953 = vld [vmem:[#allocation2 + $0x358] sm:$0xff]
    %v3954 = vld [vmem:[#allocation2 + $0x360] sm:$0xff]
    %v3955 = vld [vmem:[#allocation2 + $0x368] sm:$0xff]
    %v3956 = vld [vmem:[#allocation2 + $0x370] sm:$0xff]
    %v3957 = vld [vmem:[#allocation2 + $0x378] sm:$0xff]
    %v3958 = vld [vmem:[#allocation2 + $0x380] sm:$0xff]
    %v3959 = vld [vmem:[#allocation2 + $0x388] sm:$0xff]
    %v3960 = vld [vmem:[#allocation2 + $0x390] sm:$0xff]
    %v3961 = vld [vmem:[#allocation2 + $0x398] sm:$0xff]
    %v3962 = vld [vmem:[#allocation2 + $0x3a0] sm:$0xff]
    %v3963 = vld [vmem:[#allocation2 + $0x3a8] sm:$0xff]
    %v3964 = vld [vmem:[#allocation2 + $0x3b0] sm:$0xff]
    %v3965 = vld [vmem:[#allocation2 + $0x3b8] sm:$0xff]
    %v3966 = vld [vmem:[#allocation2 + $0x3c0] sm:$0xff]
    %v3967 = vld [vmem:[#allocation2 + $0x3c8] sm:$0xff]
    %v3968 = vld [vmem:[#allocation2 + $0x3d0] sm:$0xff]
    %v3969 = vld [vmem:[#allocation2 + $0x3d8] sm:$0xff]
    %v3970 = vld [vmem:[#allocation2 + $0x3e0] sm:$0xff]
    %v3971 = vld [vmem:[#allocation2 + $0x3e8] sm:$0xff]
    %v3972 = vld [vmem:[#allocation2 + $0x3f0] sm:$0xff]
    %v3973 = vld [vmem:[#allocation2 + $0x3f8] sm:$0xff]
    %v3974 = vld [vmem:[#allocation2 + $0x400] sm:$0xff]
    %v3975 = vld [vmem:[#allocation2 + $0x408] sm:$0xff]
    %v3976 = vld [vmem:[#allocation2 + $0x410] sm:$0xff]
    %v3977 = vld [vmem:[#allocation2 + $0x418] sm:$0xff]
    %v3978 = vld [vmem:[#allocation2 + $0x420] sm:$0xff]
    %v3979 = vld [vmem:[#allocation2 + $0x428] sm:$0xff]
    %v3980 = vld [vmem:[#allocation2 + $0x430] sm:$0xff]
    %v3981 = vld [vmem:[#allocation2 + $0x438] sm:$0xff]
    %v3982 = vld [vmem:[#allocation2 + $0x440] sm:$0xff]
    %v3983 = vld [vmem:[#allocation2 + $0x448] sm:$0xff]
    %v3984 = vld [vmem:[#allocation2 + $0x450] sm:$0xff]
    %v3985 = vld [vmem:[#allocation2 + $0x458] sm:$0xff]
    %v3986 = vld [vmem:[#allocation2 + $0x460] sm:$0xff]
    %v3987 = vld [vmem:[#allocation2 + $0x468] sm:$0xff]
    %v3988 = vld [vmem:[#allocation2 + $0x470] sm:$0xff]
    %v3989 = vld [vmem:[#allocation2 + $0x478] sm:$0xff]
    %v3990 = vld [vmem:[#allocation2 + $0x480] sm:$0xff]
    %v3991 = vld [vmem:[#allocation2 + $0x488] sm:$0xff]
    %v3992 = vld [vmem:[#allocation2 + $0x490] sm:$0xff]
    %v3993 = vld [vmem:[#allocation2 + $0x498] sm:$0xff]
    %v3994 = vld [vmem:[#allocation2 + $0x4a0] sm:$0xff]
    %v3995 = vld [vmem:[#allocation2 + $0x4a8] sm:$0xff]
    %v3996 = vld [vmem:[#allocation2 + $0x4b0] sm:$0xff]
    %v3997 = vld [vmem:[#allocation2 + $0x4b8] sm:$0xff]
    %v3998 = vld [vmem:[#allocation2 + $0x4c0] sm:$0xff]
    %v3999 = vld [vmem:[#allocation2 + $0x4c8] sm:$0xff]
    %v4000 = vld [vmem:[#allocation2 + $0x4d0] sm:$0xff]
    %v4001 = vld [vmem:[#allocation2 + $0x4d8] sm:$0xff]
    %v4002 = vld [vmem:[#allocation2 + $0x4e0] sm:$0xff]
    %v4003 = vld [vmem:[#allocation2 + $0x4e8] sm:$0xff]
    %v4004 = vld [vmem:[#allocation2 + $0x4f0] sm:$0xff]
    %v4005 = vld [vmem:[#allocation2 + $0x4f8] sm:$0xff]
    %v4006 = vld [vmem:[#allocation2 + $0x500] sm:$0xff]
    %v4007 = vld [vmem:[#allocation2 + $0x508] sm:$0xff]
    %v4008 = vld [vmem:[#allocation2 + $0x510] sm:$0xff]
    %v4009 = vld [vmem:[#allocation2 + $0x518] sm:$0xff]
    %v4010 = vld [vmem:[#allocation2 + $0x520] sm:$0xff]
    %v4011 = vld [vmem:[#allocation2 + $0x528] sm:$0xff]
    %v4012 = vld [vmem:[#allocation2 + $0x530] sm:$0xff]
    %v4013 = vld [vmem:[#allocation2 + $0x538] sm:$0xff]
    %v4014 = vld [vmem:[#allocation2 + $0x540] sm:$0xff]
    %v4015 = vld [vmem:[#allocation2 + $0x548] sm:$0xff]
    %v4016 = vld [vmem:[#allocation2 + $0x550] sm:$0xff]
    %v4017 = vld [vmem:[#allocation2 + $0x558] sm:$0xff]
    %v4018 = vld [vmem:[#allocation2 + $0x560] sm:$0xff]
    %v4019 = vld [vmem:[#allocation2 + $0x568] sm:$0xff]
    %v4020 = vld [vmem:[#allocation2 + $0x570] sm:$0xff]
    %v4021 = vld [vmem:[#allocation2 + $0x578] sm:$0xff]
    %v4022 = vld [vmem:[#allocation2 + $0x580] sm:$0xff]
    %v4023 = vld [vmem:[#allocation2 + $0x588] sm:$0xff]
    %v4024 = vld [vmem:[#allocation2 + $0x590] sm:$0xff]
    %v4025 = vld [vmem:[#allocation2 + $0x598] sm:$0xff]
    %v4026 = vld [vmem:[#allocation2 + $0x5a0] sm:$0xff]
    %v4027 = vld [vmem:[#allocation2 + $0x5a8] sm:$0xff]
    %v4028 = vld [vmem:[#allocation2 + $0x5b0] sm:$0xff]
    %v4029 = vld [vmem:[#allocation2 + $0x5b8] sm:$0xff]
    %v4030 = vld [vmem:[#allocation2 + $0x5c0] sm:$0xff]
    %v4031 = vld [vmem:[#allocation2 + $0x5c8] sm:$0xff]
    %v4032 = vld [vmem:[#allocation2 + $0x5d0] sm:$0xff]
    %v4033 = vld [vmem:[#allocation2 + $0x5d8] sm:$0xff]
    %v4034 = vld [vmem:[#allocation2 + $0x5e0] sm:$0xff]
    %v4035 = vld [vmem:[#allocation2 + $0x5e8] sm:$0xff]
    %v4036 = vld [vmem:[#allocation2 + $0x5f0] sm:$0xff]
    %v4037 = vld [vmem:[#allocation2 + $0x5f8] sm:$0xff]
    %4038 = vmatprep.subr.bf16.mxu0 %v3847
    %4039 = vmatpush1.bf16.msra.mxu0 %v3846
    %4040 = vmatprep.subr.bf16.mxu0 %v3850
    %4041 = vmatpush1.bf16.msra.mxu0 %v3849
    %4042 = vmatprep.subr.bf16.mxu0 %v3853
    %4043 = vmatpush1.bf16.msra.mxu0 %v3852
    %4044 = vmatprep.subr.bf16.mxu0 %v3856
    %4045 = vmatpush1.bf16.msra.mxu0 %v3855
    %4046 = vmatprep.subr.bf16.mxu0 %v3859
    %4047 = vmatpush1.bf16.msra.mxu0 %v3858
    %4048 = vmatprep.subr.bf16.mxu0 %v3862
    %4049 = vmatpush1.bf16.msra.mxu0 %v3861
    %4050 = vmatprep.subr.bf16.mxu0 %v3865
    %4051 = vmatpush1.bf16.msra.mxu0 %v3864
    %4052 = vmatprep.subr.bf16.mxu0 %v3868
    %4053 = vmatpush1.bf16.msra.mxu0 %v3867
    %4054 = vmatprep.subr.bf16.mxu0 %v3871
    %4055 = vmatpush1.bf16.msra.mxu0 %v3870
    %4056 = vmatprep.subr.bf16.mxu0 %v3874
    %4057 = vmatpush1.bf16.msra.mxu0 %v3873
    %4058 = vmatprep.subr.bf16.mxu0 %v3877
    %4059 = vmatpush1.bf16.msra.mxu0 %v3876
    %4060 = vmatprep.subr.bf16.mxu0 %v3880
    %4061 = vmatpush1.bf16.msra.mxu0 %v3879
    %4062 = vmatprep.subr.bf16.mxu0 %v3883
    %4063 = vmatpush1.bf16.msra.mxu0 %v3882
    %4064 = vmatprep.subr.bf16.mxu0 %v3886
    %4065 = vmatpush1.bf16.msra.mxu0 %v3885
    %4066 = vmatprep.subr.bf16.mxu0 %v3889
    %4067 = vmatpush1.bf16.msra.mxu0 %v3888
    %4068 = vmatprep.subr.bf16.mxu0 %v3892
    %4069 = vmatpush1.bf16.msra.mxu0 %v3891
    %4070 = vmatprep.mubr.bf16.mxu0 %v2942
    %4071 = vmatmul.mubr.bf16.gmra.mrb[0].mxu0 %v2941
    %v4072 = vpop.f32.mrb[0].mxu0
    %v4073 = vadd.f32 %v2737, %v4072
    %v4074 = vpop.f32.mrb[0].mxu0
    %v4075 = vadd.f32 %v2741, %v4074
    %v4076 = vpop.f32.mrb[0].mxu0
    %v4077 = vpop.f32.mrb[0].mxu0
    %4078 = vdwg.mxu0
    %4079 = vmatprep.subr.bf16.mxu0 %v3895
    %4080 = vmatpush1.bf16.msra.mxu0 %v3894
    %4081 = vmatprep.subr.bf16.mxu0 %v3898
    %4082 = vmatpush1.bf16.msra.mxu0 %v3897
    %4083 = vmatprep.subr.bf16.mxu0 %v3901
    %4084 = vmatpush1.bf16.msra.mxu0 %v3900
    %4085 = vmatprep.subr.bf16.mxu0 %v3904
    %4086 = vmatpush1.bf16.msra.mxu0 %v3903
    %4087 = vmatprep.subr.bf16.mxu0 %v3907
    %4088 = vmatpush1.bf16.msra.mxu0 %v3906
    %4089 = vmatprep.subr.bf16.mxu0 %v3910
    %4090 = vmatpush1.bf16.msra.mxu0 %v3909
    %4091 = vmatprep.subr.bf16.mxu0 %v3913
    %4092 = vmatpush1.bf16.msra.mxu0 %v3912
    %4093 = vmatprep.subr.bf16.mxu0 %v3916
    %4094 = vmatpush1.bf16.msra.mxu0 %v3915
    %4095 = vmatprep.subr.bf16.mxu0 %v3919
    %4096 = vmatpush1.bf16.msra.mxu0 %v3918
    %4097 = vmatprep.subr.bf16.mxu0 %v3922
    %4098 = vmatpush1.bf16.msra.mxu0 %v3921
    %4099 = vmatprep.subr.bf16.mxu0 %v3925
    %4100 = vmatpush1.bf16.msra.mxu0 %v3924
    %4101 = vmatprep.subr.bf16.mxu0 %v3928
    %4102 = vmatpush1.bf16.msra.mxu0 %v3927
    %4103 = vmatprep.subr.bf16.mxu0 %v3931
    %4104 = vmatpush1.bf16.msra.mxu0 %v3930
    %4105 = vmatprep.subr.bf16.mxu0 %v3934
    %4106 = vmatpush1.bf16.msra.mxu0 %v3933
    %4107 = vmatprep.subr.bf16.mxu0 %v3937
    %4108 = vmatpush1.bf16.msra.mxu0 %v3936
    %4109 = vmatprep.subr.bf16.mxu0 %v3940
    %4110 = vmatpush1.bf16.msra.mxu0 %v3939
    %4111 = vmatprep.mubr.bf16.mxu0 %v2944
    %4112 = vmatmul.mubr.bf16.gmra.mrb[0].mxu0 %v2943
    %v4113 = vpop.f32.mrb[0].mxu0
    %v4114 = vadd.f32 %v4073, %v4113
    %v4115 = vpop.f32.mrb[0].mxu0
    %v4116 = vadd.f32 %v4075, %v4115
    %v4117 = vpop.f32.mrb[0].mxu0
    %v4118 = vpop.f32.mrb[0].mxu0
    %4119 = vdwg.mxu0
    %4120 = vmatprep.subr.bf16.mxu0 %v3943
    %4121 = vmatpush1.bf16.msra.mxu0 %v3942
    %4122 = vmatprep.subr.bf16.mxu0 %v3946
    %4123 = vmatpush1.bf16.msra.mxu0 %v3945
    %4124 = vmatprep.subr.bf16.mxu0 %v3949
    %4125 = vmatpush1.bf16.msra.mxu0 %v3948
    %4126 = vmatprep.subr.bf16.mxu0 %v3952
    %4127 = vmatpush1.bf16.msra.mxu0 %v3951
    %4128 = vmatprep.subr.bf16.mxu0 %v3955
    %4129 = vmatpush1.bf16.msra.mxu0 %v3954
    %4130 = vmatprep.subr.bf16.mxu0 %v3958
    %4131 = vmatpush1.bf16.msra.mxu0 %v3957
    %4132 = vmatprep.subr.bf16.mxu0 %v3961
    %4133 = vmatpush1.bf16.msra.mxu0 %v3960
    %4134 = vmatprep.subr.bf16.mxu0 %v3964
    %4135 = vmatpush1.bf16.msra.mxu0 %v3963
    %4136 = vmatprep.subr.bf16.mxu0 %v3967
    %4137 = vmatpush1.bf16.msra.mxu0 %v3966
    %4138 = vmatprep.subr.bf16.mxu0 %v3970
    %4139 = vmatpush1.bf16.msra.mxu0 %v3969
    %4140 = vmatprep.subr.bf16.mxu0 %v3973
    %4141 = vmatpush1.bf16.msra.mxu0 %v3972
    %4142 = vmatprep.subr.bf16.mxu0 %v3976
    %4143 = vmatpush1.bf16.msra.mxu0 %v3975
    %4144 = vmatprep.subr.bf16.mxu0 %v3979
    %4145 = vmatpush1.bf16.msra.mxu0 %v3978
    %4146 = vmatprep.subr.bf16.mxu0 %v3982
    %4147 = vmatpush1.bf16.msra.mxu0 %v3981
    %4148 = vmatprep.subr.bf16.mxu0 %v3985
    %4149 = vmatpush1.bf16.msra.mxu0 %v3984
    %4150 = vmatprep.subr.bf16.mxu0 %v3988
    %4151 = vmatpush1.bf16.msra.mxu0 %v3987
    %4152 = vmatprep.mubr.bf16.mxu0 %v2946
    %4153 = vmatmul.mubr.bf16.gmra.mrb[0].mxu0 %v2945
    %v4154 = vpop.f32.mrb[0].mxu0
    %v4155 = vadd.f32 %v4114, %v4154
    %v4156 = vpop.f32.mrb[0].mxu0
    %v4157 = vadd.f32 %v4116, %v4156
    %v4158 = vpop.f32.mrb[0].mxu0
    %v4159 = vpop.f32.mrb[0].mxu0
    %4160 = vdwg.mxu0
    %4161 = vmatprep.subr.bf16.mxu0 %v3991
    %4162 = vmatpush1.bf16.msra.mxu0 %v3990
    %4163 = vmatprep.subr.bf16.mxu0 %v3994
    %4164 = vmatpush1.bf16.msra.mxu0 %v3993
    %4165 = vmatprep.subr.bf16.mxu0 %v3997
    %4166 = vmatpush1.bf16.msra.mxu0 %v3996
    %4167 = vmatprep.subr.bf16.mxu0 %v4000
    %4168 = vmatpush1.bf16.msra.mxu0 %v3999
    %4169 = vmatprep.subr.bf16.mxu0 %v4003
    %4170 = vmatpush1.bf16.msra.mxu0 %v4002
    %4171 = vmatprep.subr.bf16.mxu0 %v4006
    %4172 = vmatpush1.bf16.msra.mxu0 %v4005
    %4173 = vmatprep.subr.bf16.mxu0 %v4009
    %4174 = vmatpush1.bf16.msra.mxu0 %v4008
    %4175 = vmatprep.subr.bf16.mxu0 %v4012
    %4176 = vmatpush1.bf16.msra.mxu0 %v4011
    %4177 = vmatprep.subr.bf16.mxu0 %v4015
    %4178 = vmatpush1.bf16.msra.mxu0 %v4014
    %4179 = vmatprep.subr.bf16.mxu0 %v4018
    %4180 = vmatpush1.bf16.msra.mxu0 %v4017
    %4181 = vmatprep.subr.bf16.mxu0 %v4021
    %4182 = vmatpush1.bf16.msra.mxu0 %v4020
    %4183 = vmatprep.subr.bf16.mxu0 %v4024
    %4184 = vmatpush1.bf16.msra.mxu0 %v4023
    %4185 = vmatprep.subr.bf16.mxu0 %v4027
    %4186 = vmatpush1.bf16.msra.mxu0 %v4026
    %4187 = vmatprep.subr.bf16.mxu0 %v4030
    %4188 = vmatpush1.bf16.msra.mxu0 %v4029
    %4189 = vmatprep.subr.bf16.mxu0 %v4033
    %4190 = vmatpush1.bf16.msra.mxu0 %v4032
    %4191 = vmatprep.subr.bf16.mxu0 %v4036
    %4192 = vmatpush1.bf16.msra.mxu0 %v4035
    %4193 = vmatprep.mubr.bf16.mxu0 %v2948
    %4194 = vmatmul.mubr.bf16.gmra.mrb[0].mxu0 %v2947
    %v4195 = vpop.f32.mrb[0].mxu0
    %v4196 = vadd.f32 %v4155, %v4195
    %v4197 = vpop.f32.mrb[0].mxu0
    %v4198 = vadd.f32 %v4157, %v4197
    %v4199 = vpop.f32.mrb[0].mxu0
    %v4200 = vpop.f32.mrb[0].mxu0
    %4201 = vdwg.mxu0
    %4202 = vmatprep.subr.bf16.mxu0 0
    %4203 = vmatpush1.bf16.msra.mxu0 %v3848
    %4204 = vmatprep.subr.bf16.mxu0 0
    %4205 = vmatpush1.bf16.msra.mxu0 %v3851
    %4206 = vmatprep.subr.bf16.mxu0 0
    %4207 = vmatpush1.bf16.msra.mxu0 %v3854
    %4208 = vmatprep.subr.bf16.mxu0 0
    %4209 = vmatpush1.bf16.msra.mxu0 %v3857
    %4210 = vmatprep.subr.bf16.mxu0 0
    %4211 = vmatpush1.bf16.msra.mxu0 %v3860
    %4212 = vmatprep.subr.bf16.mxu0 0
    %4213 = vmatpush1.bf16.msra.mxu0 %v3863
    %4214 = vmatprep.subr.bf16.mxu0 0
    %4215 = vmatpush1.bf16.msra.mxu0 %v3866
    %4216 = vmatprep.subr.bf16.mxu0 0
    %4217 = vmatpush1.bf16.msra.mxu0 %v3869
    %4218 = vmatprep.subr.bf16.mxu0 0
    %4219 = vmatpush1.bf16.msra.mxu0 %v3872
    %4220 = vmatprep.subr.bf16.mxu0 0
    %4221 = vmatpush1.bf16.msra.mxu0 %v3875
    %4222 = vmatprep.subr.bf16.mxu0 0
    %4223 = vmatpush1.bf16.msra.mxu0 %v3878
    %4224 = vmatprep.subr.bf16.mxu0 0
    %4225 = vmatpush1.bf16.msra.mxu0 %v3881
    %4226 = vmatprep.subr.bf16.mxu0 0
    %4227 = vmatpush1.bf16.msra.mxu0 %v3884
    %4228 = vmatprep.subr.bf16.mxu0 0
    %4229 = vmatpush1.bf16.msra.mxu0 %v3887
    %4230 = vmatprep.subr.bf16.mxu0 0
    %4231 = vmatpush1.bf16.msra.mxu0 %v3890
    %4232 = vmatprep.subr.bf16.mxu0 0
    %4233 = vmatpush1.bf16.msra.mxu0 %v3893
    %4234 = vmatprep.mubr.bf16.mxu0 %v2942
    %4235 = vmatmul.mubr.bf16.gmra.mrb[0].mxu0 %v2941
    %v4236 = vpop.f32.mrb[0].mxu0
    %v4237 = vadd.f32 %v2745, %v4236
    %v4238 = vpop.f32.mrb[0].mxu0
    %v4239 = vpop.f32.mrb[0].mxu0
    %v4240 = vpop.f32.mrb[0].mxu0
    %4241 = vdwg.mxu0
    %4242 = vmatprep.subr.bf16.mxu0 0
    %4243 = vmatpush1.bf16.msra.mxu0 %v3896
    %4244 = vmatprep.subr.bf16.mxu0 0
    %4245 = vmatpush1.bf16.msra.mxu0 %v3899
    %4246 = vmatprep.subr.bf16.mxu0 0
    %4247 = vmatpush1.bf16.msra.mxu0 %v3902
    %4248 = vmatprep.subr.bf16.mxu0 0
    %4249 = vmatpush1.bf16.msra.mxu0 %v3905
    %4250 = vmatprep.subr.bf16.mxu0 0
    %4251 = vmatpush1.bf16.msra.mxu0 %v3908
    %4252 = vmatprep.subr.bf16.mxu0 0
    %4253 = vmatpush1.bf16.msra.mxu0 %v3911
    %4254 = vmatprep.subr.bf16.mxu0 0
    %4255 = vmatpush1.bf16.msra.mxu0 %v3914
    %4256 = vmatprep.subr.bf16.mxu0 0
    %4257 = vmatpush1.bf16.msra.mxu0 %v3917
    %4258 = vmatprep.subr.bf16.mxu0 0
    %4259 = vmatpush1.bf16.msra.mxu0 %v3920
    %4260 = vmatprep.subr.bf16.mxu0 0
    %4261 = vmatpush1.bf16.msra.mxu0 %v3923
    %4262 = vmatprep.subr.bf16.mxu0 0
    %4263 = vmatpush1.bf16.msra.mxu0 %v3926
    %4264 = vmatprep.subr.bf16.mxu0 0
    %4265 = vmatpush1.bf16.msra.mxu0 %v3929
    %4266 = vmatprep.subr.bf16.mxu0 0
    %4267 = vmatpush1.bf16.msra.mxu0 %v3932
    %4268 = vmatprep.subr.bf16.mxu0 0
    %4269 = vmatpush1.bf16.msra.mxu0 %v3935
    %4270 = vmatprep.subr.bf16.mxu0 0
    %4271 = vmatpush1.bf16.msra.mxu0 %v3938
    %4272 = vmatprep.subr.bf16.mxu0 0
    %4273 = vmatpush1.bf16.msra.mxu0 %v3941
    %4274 = vmatprep.mubr.bf16.mxu0 %v2944
    %4275 = vmatmul.mubr.bf16.gmra.mrb[0].mxu0 %v2943
    %v4276 = vpop.f32.mrb[0].mxu0
    %v4277 = vadd.f32 %v4237, %v4276
    %v4278 = vpop.f32.mrb[0].mxu0
    %v4279 = vpop.f32.mrb[0].mxu0
    %v4280 = vpop.f32.mrb[0].mxu0
    %4281 = vdwg.mxu0
    %4282 = vmatprep.subr.bf16.mxu0 0
    %4283 = vmatpush1.bf16.msra.mxu0 %v3944
    %4284 = vmatprep.subr.bf16.mxu0 0
    %4285 = vmatpush1.bf16.msra.mxu0 %v3947
    %4286 = vmatprep.subr.bf16.mxu0 0
    %4287 = vmatpush1.bf16.msra.mxu0 %v3950
    %4288 = vmatprep.subr.bf16.mxu0 0
    %4289 = vmatpush1.bf16.msra.mxu0 %v3953
    %4290 = vmatprep.subr.bf16.mxu0 0
    %4291 = vmatpush1.bf16.msra.mxu0 %v3956
    %4292 = vmatprep.subr.bf16.mxu0 0
    %4293 = vmatpush1.bf16.msra.mxu0 %v3959
    %4294 = vmatprep.subr.bf16.mxu0 0
    %4295 = vmatpush1.bf16.msra.mxu0 %v3962
    %4296 = vmatprep.subr.bf16.mxu0 0
    %4297 = vmatpush1.bf16.msra.mxu0 %v3965
    %4298 = vmatprep.subr.bf16.mxu0 0
    %4299 = vmatpush1.bf16.msra.mxu0 %v3968
    %4300 = vmatprep.subr.bf16.mxu0 0
    %4301 = vmatpush1.bf16.msra.mxu0 %v3971
    %4302 = vmatprep.subr.bf16.mxu0 0
    %4303 = vmatpush1.bf16.msra.mxu0 %v3974
    %4304 = vmatprep.subr.bf16.mxu0 0
    %4305 = vmatpush1.bf16.msra.mxu0 %v3977
    %4306 = vmatprep.subr.bf16.mxu0 0
    %4307 = vmatpush1.bf16.msra.mxu0 %v3980
    %4308 = vmatprep.subr.bf16.mxu0 0
    %4309 = vmatpush1.bf16.msra.mxu0 %v3983
    %4310 = vmatprep.subr.bf16.mxu0 0
    %4311 = vmatpush1.bf16.msra.mxu0 %v3986
    %4312 = vmatprep.subr.bf16.mxu0 0
    %4313 = vmatpush1.bf16.msra.mxu0 %v3989
    %4314 = vmatprep.mubr.bf16.mxu0 %v2946
    %4315 = vmatmul.mubr.bf16.gmra.mrb[0].mxu0 %v2945
    %v4316 = vpop.f32.mrb[0].mxu0
    %v4317 = vadd.f32 %v4277, %v4316
    %v4318 = vpop.f32.mrb[0].mxu0
    %v4319 = vpop.f32.mrb[0].mxu0
    %v4320 = vpop.f32.mrb[0].mxu0
    %4321 = vdwg.mxu0
    %4322 = vmatprep.subr.bf16.mxu0 0
    %4323 = vmatpush1.bf16.msra.mxu0 %v3992
    %4324 = vmatprep.subr.bf16.mxu0 0
    %4325 = vmatpush1.bf16.msra.mxu0 %v3995
    %4326 = vmatprep.subr.bf16.mxu0 0
    %4327 = vmatpush1.bf16.msra.mxu0 %v3998
    %4328 = vmatprep.subr.bf16.mxu0 0
    %4329 = vmatpush1.bf16.msra.mxu0 %v4001
    %4330 = vmatprep.subr.bf16.mxu0 0
    %4331 = vmatpush1.bf16.msra.mxu0 %v4004
    %4332 = vmatprep.subr.bf16.mxu0 0
    %4333 = vmatpush1.bf16.msra.mxu0 %v4007
    %4334 = vmatprep.subr.bf16.mxu0 0
    %4335 = vmatpush1.bf16.msra.mxu0 %v4010
    %4336 = vmatprep.subr.bf16.mxu0 0
    %4337 = vmatpush1.bf16.msra.mxu0 %v4013
    %4338 = vmatprep.subr.bf16.mxu0 0
    %4339 = vmatpush1.bf16.msra.mxu0 %v4016
    %4340 = vmatprep.subr.bf16.mxu0 0
    %4341 = vmatpush1.bf16.msra.mxu0 %v4019
    %4342 = vmatprep.subr.bf16.mxu0 0
    %4343 = vmatpush1.bf16.msra.mxu0 %v4022
    %4344 = vmatprep.subr.bf16.mxu0 0
    %4345 = vmatpush1.bf16.msra.mxu0 %v4025
    %4346 = vmatprep.subr.bf16.mxu0 0
    %4347 = vmatpush1.bf16.msra.mxu0 %v4028
    %4348 = vmatprep.subr.bf16.mxu0 0
    %4349 = vmatpush1.bf16.msra.mxu0 %v4031
    %4350 = vmatprep.subr.bf16.mxu0 0
    %4351 = vmatpush1.bf16.msra.mxu0 %v4034
    %4352 = vmatprep.subr.bf16.mxu0 0
    %4353 = vmatpush1.bf16.msra.mxu0 %v4037
    %4354 = vmatprep.mubr.bf16.mxu0 %v2948
    %4355 = vmatmul.mubr.bf16.gmra.mrb[0].mxu0 %v2947
    %v4356 = vpop.f32.mrb[0].mxu0
    %v4357 = vadd.f32 %v4317, %v4356
    %v4358 = vpop.f32.mrb[0].mxu0
    %v4359 = vpop.f32.mrb[0].mxu0
    %v4360 = vpop.f32.mrb[0].mxu0
    %4361 = vdwg.mxu0
    %v4362 = vmul.f32 %v4196, %v4196
    %v4363 = vmul.f32 %v4198, %v4198
    %v4364 = vmul.f32 %v4357, %v4357
    %v4365 = vmul.f32 %v4196, %v4362
    %v4366 = vmul.f32 %v4198, %v4363
    %v4367 = vmul.f32 %v4357, %v4364
    %v4368 = vmul.f32 %v4365, 0.044715
    %v4369 = vmul.f32 %v4366, 0.044715
    %v4370 = vmul.f32 %v4367, 0.044715
    %v4371 = vadd.f32 %v4196, %v4368
    %v4372 = vadd.f32 %v4198, %v4369
    %v4373 = vadd.f32 %v4357, %v4370
    %v4374 = vmul.f32 %v4371, 0.7978846
    %v4375 = vmul.f32 %v4372, 0.7978846
    %v4376 = vmul.f32 %v4373, 0.7978846
    %v4377 = vtanh.pop %v4374
    %v4378 = vtanh.pop %v4375
    %v4379 = vtanh.pop %v4376
    %v4380 = vadd.f32 %v4377, 1.0
    %v4381 = vadd.f32 %v4378, 1.0
    %v4382 = vadd.f32 %v4379, 1.0
    %v4383 = vmul.f32 %v4380, 0.5
    %v4384 = vmul.f32 %v4381, 0.5
    %v4385 = vmul.f32 %v4382, 0.5
    %v4386 = vmul.f32 %v4196, %v4383
    %v4387 = vmul.f32 %v4198, %v4384
    %v4388 = vmul.f32 %v4357, %v4385
    %v4389 = vmax.f32 %v3843, %v4386
    %v4390 = vmax.f32 %v3844, %v4387
    %v4391 = vmax.f32 %v3845, %v4388
    %s4392 = smul.u32 4, 56
    %s4393 = smul.u32 %s4392, 4
    %s4394 = sshll.u32 %s4393, 4
    %4395 = dma.done %s88, %s4394
    %v4396 = vld [vmem:[#allocation3] sm:$0xff]
    %v4397 = vld [vmem:[#allocation3 + $0x8] sm:$0xff]
    %v4398 = vld [vmem:[#allocation3 + $0x10] sm:$0xff]
    %v4399 = vld [vmem:[#allocation3 + $0x18] sm:$0xff]
    %v4400 = vld [vmem:[#allocation3 + $0x20] sm:$0xff]
    %v4401 = vld [vmem:[#allocation3 + $0x28] sm:$0xff]
    %v4402 = vld [vmem:[#allocation3 + $0x30] sm:$0xff]
    %v4403 = vld [vmem:[#allocation3 + $0x38] sm:$0xff]
    %v4404 = vld [vmem:[#allocation3 + $0x40] sm:$0xff]
    %v4405 = vld [vmem:[#allocation3 + $0x48] sm:$0xff]
    %v4406 = vld [vmem:[#allocation3 + $0x50] sm:$0xff]
    %v4407 = vld [vmem:[#allocation3 + $0x58] sm:$0xff]
    %v4408 = vld [vmem:[#allocation3 + $0x60] sm:$0xff]
    %v4409 = vld [vmem:[#allocation3 + $0x68] sm:$0xff]
    %v4410 = vld [vmem:[#allocation3 + $0x70] sm:$0xff]
    %v4411 = vld [vmem:[#allocation3 + $0x78] sm:$0xff]
    %v4412 = vld [vmem:[#allocation3 + $0x80] sm:$0xff]
    %v4413 = vld [vmem:[#allocation3 + $0x88] sm:$0xff]
    %v4414 = vld [vmem:[#allocation3 + $0x90] sm:$0xff]
    %v4415 = vld [vmem:[#allocation3 + $0x98] sm:$0xff]
    %v4416 = vld [vmem:[#allocation3 + $0xa0] sm:$0xff]
    %v4417 = vld [vmem:[#allocation3 + $0xa8] sm:$0xff]
    %v4418 = vld [vmem:[#allocation3 + $0xb0] sm:$0xff]
    %v4419 = vld [vmem:[#allocation3 + $0xb8] sm:$0xff]
    %v4420 = vld [vmem:[#allocation3 + $0xc0] sm:$0xff]
    %v4421 = vld [vmem:[#allocation3 + $0xc8] sm:$0xff]
    %v4422 = vld [vmem:[#allocation3 + $0xd0] sm:$0xff]
    %v4423 = vld [vmem:[#allocation3 + $0xd8] sm:$0xff]
    %v4424 = vld [vmem:[#allocation3 + $0xe0] sm:$0xff]
    %v4425 = vld [vmem:[#allocation3 + $0xe8] sm:$0xff]
    %v4426 = vld [vmem:[#allocation3 + $0xf0] sm:$0xff]
    %v4427 = vld [vmem:[#allocation3 + $0xf8] sm:$0xff]
    %v4428 = vld [vmem:[#allocation3 + $0x100] sm:$0xff]
    %v4429 = vld [vmem:[#allocation3 + $0x108] sm:$0xff]
    %v4430 = vld [vmem:[#allocation3 + $0x110] sm:$0xff]
    %v4431 = vld [vmem:[#allocation3 + $0x118] sm:$0xff]
    %v4432 = vld [vmem:[#allocation3 + $0x120] sm:$0xff]
    %v4433 = vld [vmem:[#allocation3 + $0x128] sm:$0xff]
    %v4434 = vld [vmem:[#allocation3 + $0x130] sm:$0xff]
    %v4435 = vld [vmem:[#allocation3 + $0x138] sm:$0xff]
    %v4436 = vld [vmem:[#allocation3 + $0x140] sm:$0xff]
    %v4437 = vld [vmem:[#allocation3 + $0x148] sm:$0xff]
    %v4438 = vld [vmem:[#allocation3 + $0x150] sm:$0xff]
    %v4439 = vld [vmem:[#allocation3 + $0x158] sm:$0xff]
    %v4440 = vld [vmem:[#allocation3 + $0x160] sm:$0xff]
    %v4441 = vld [vmem:[#allocation3 + $0x168] sm:$0xff]
    %v4442 = vld [vmem:[#allocation3 + $0x170] sm:$0xff]
    %v4443 = vld [vmem:[#allocation3 + $0x178] sm:$0xff]
    %v4444 = vld [vmem:[#allocation3 + $0x180] sm:$0xff]
    %v4445 = vld [vmem:[#allocation3 + $0x188] sm:$0xff]
    %v4446 = vld [vmem:[#allocation3 + $0x190] sm:$0xff]
    %v4447 = vld [vmem:[#allocation3 + $0x198] sm:$0xff]
    %v4448 = vld [vmem:[#allocation3 + $0x1a0] sm:$0xff]
    %v4449 = vld [vmem:[#allocation3 + $0x1a8] sm:$0xff]
    %v4450 = vld [vmem:[#allocation3 + $0x1b0] sm:$0xff]
    %v4451 = vld [vmem:[#allocation3 + $0x1b8] sm:$0xff]
    %v4452 = vld [vmem:[#allocation3 + $0x1c0] sm:$0xff]
    %v4453 = vld [vmem:[#allocation3 + $0x1c8] sm:$0xff]
    %v4454 = vld [vmem:[#allocation3 + $0x1d0] sm:$0xff]
    %v4455 = vld [vmem:[#allocation3 + $0x1d8] sm:$0xff]
    %v4456 = vld [vmem:[#allocation3 + $0x1e0] sm:$0xff]
    %v4457 = vld [vmem:[#allocation3 + $0x1e8] sm:$0xff]
    %v4458 = vld [vmem:[#allocation3 + $0x1f0] sm:$0xff]
    %v4459 = vld [vmem:[#allocation3 + $0x1f8] sm:$0xff]
    %v4460 = vld [vmem:[#allocation3 + $0x200] sm:$0xff]
    %v4461 = vld [vmem:[#allocation3 + $0x208] sm:$0xff]
    %v4462 = vld [vmem:[#allocation3 + $0x210] sm:$0xff]
    %v4463 = vld [vmem:[#allocation3 + $0x218] sm:$0xff]
    %v4464 = vld [vmem:[#allocation3 + $0x220] sm:$0xff]
    %v4465 = vld [vmem:[#allocation3 + $0x228] sm:$0xff]
    %v4466 = vld [vmem:[#allocation3 + $0x230] sm:$0xff]
    %v4467 = vld [vmem:[#allocation3 + $0x238] sm:$0xff]
    %v4468 = vld [vmem:[#allocation3 + $0x240] sm:$0xff]
    %v4469 = vld [vmem:[#allocation3 + $0x248] sm:$0xff]
    %v4470 = vld [vmem:[#allocation3 + $0x250] sm:$0xff]
    %v4471 = vld [vmem:[#allocation3 + $0x258] sm:$0xff]
    %v4472 = vld [vmem:[#allocation3 + $0x260] sm:$0xff]
    %v4473 = vld [vmem:[#allocation3 + $0x268] sm:$0xff]
    %v4474 = vld [vmem:[#allocation3 + $0x270] sm:$0xff]
    %v4475 = vld [vmem:[#allocation3 + $0x278] sm:$0xff]
    %v4476 = vld [vmem:[#allocation3 + $0x280] sm:$0xff]
    %v4477 = vld [vmem:[#allocation3 + $0x288] sm:$0xff]
    %v4478 = vld [vmem:[#allocation3 + $0x290] sm:$0xff]
    %v4479 = vld [vmem:[#allocation3 + $0x298] sm:$0xff]
    %v4480 = vld [vmem:[#allocation3 + $0x2a0] sm:$0xff]
    %v4481 = vld [vmem:[#allocation3 + $0x2a8] sm:$0xff]
    %v4482 = vld [vmem:[#allocation3 + $0x2b0] sm:$0xff]
    %v4483 = vld [vmem:[#allocation3 + $0x2b8] sm:$0xff]
    %v4484 = vld [vmem:[#allocation3 + $0x2c0] sm:$0xff]
    %v4485 = vld [vmem:[#allocation3 + $0x2c8] sm:$0xff]
    %v4486 = vld [vmem:[#allocation3 + $0x2d0] sm:$0xff]
    %v4487 = vld [vmem:[#allocation3 + $0x2d8] sm:$0xff]
    %v4488 = vld [vmem:[#allocation3 + $0x2e0] sm:$0xff]
    %v4489 = vld [vmem:[#allocation3 + $0x2e8] sm:$0xff]
    %v4490 = vld [vmem:[#allocation3 + $0x2f0] sm:$0xff]
    %v4491 = vld [vmem:[#allocation3 + $0x2f8] sm:$0xff]
    %v4492 = vld [vmem:[#allocation3 + $0x300] sm:$0xff]
    %v4493 = vld [vmem:[#allocation3 + $0x308] sm:$0xff]
    %v4494 = vld [vmem:[#allocation3 + $0x310] sm:$0xff]
    %v4495 = vld [vmem:[#allocation3 + $0x318] sm:$0xff]
    %v4496 = vld [vmem:[#allocation3 + $0x320] sm:$0xff]
    %v4497 = vld [vmem:[#allocation3 + $0x328] sm:$0xff]
    %v4498 = vld [vmem:[#allocation3 + $0x330] sm:$0xff]
    %v4499 = vld [vmem:[#allocation3 + $0x338] sm:$0xff]
    %v4500 = vld [vmem:[#allocation3 + $0x340] sm:$0xff]
    %v4501 = vld [vmem:[#allocation3 + $0x348] sm:$0xff]
    %v4502 = vld [vmem:[#allocation3 + $0x350] sm:$0xff]
    %v4503 = vld [vmem:[#allocation3 + $0x358] sm:$0xff]
    %v4504 = vld [vmem:[#allocation3 + $0x360] sm:$0xff]
    %v4505 = vld [vmem:[#allocation3 + $0x368] sm:$0xff]
    %v4506 = vld [vmem:[#allocation3 + $0x370] sm:$0xff]
    %v4507 = vld [vmem:[#allocation3 + $0x378] sm:$0xff]
    %v4508 = vld [vmem:[%s4] sm:$0xf]
    %v4510 = vlaneseq
    %v4511 = vshrl.u32 %v4510, 7
    %v4512 = vsub.s32 0, %v4511
    %v4513 = vrot.slane %v4508, %v4512
    %v4514 = vlaneseq
    %v4515 = vshrl.u32 %v4514, 7
    %v4516 = vsub.s32 1, %v4515
    %v4517 = vrot.slane %v4508, %v4516
    %v4518 = vlaneseq
    %v4519 = vshrl.u32 %v4518, 7
    %v4520 = vsub.s32 2, %v4519
    %v4521 = vrot.slane %v4508, %v4520
    %v4522 = vlaneseq
    %v4523 = vshrl.u32 %v4522, 7
    %v4524 = vsub.s32 3, %v4523
    %v4525 = vrot.slane %v4508, %v4524
    %v4530 = vld [vmem:[%s5] sm:$0xf]
    %v4532 = vlaneseq
    %v4533 = vshrl.u32 %v4532, 7
    %v4534 = vsub.s32 0, %v4533
    %v4535 = vrot.slane %v4530, %v4534
    %v4536 = vlaneseq
    %v4537 = vshrl.u32 %v4536, 7
    %v4538 = vsub.s32 1, %v4537
    %v4539 = vrot.slane %v4530, %v4538
    %v4540 = vlaneseq
    %v4541 = vshrl.u32 %v4540, 7
    %v4542 = vsub.s32 2, %v4541
    %v4543 = vrot.slane %v4530, %v4542
    %v4544 = vlaneseq
    %v4545 = vshrl.u32 %v4544, 7
    %v4546 = vsub.s32 3, %v4545
    %v4547 = vrot.slane %v4530, %v4546
    %v4552 = vpack.c.bf16 %v4389, %v4389
    %vm4553 = vcmask 523264
    %v4555 = vsel %vm4553, %v4552, 0
    %4557 = vmatprep.subr.bf16.mxu0 %v4397
    %4558 = vmatpush1.bf16.msra.mxu0 %v4396
    %4559 = vmatprep.subr.bf16.mxu0 %v4401
    %4560 = vmatpush1.bf16.msra.mxu0 %v4400
    %4561 = vmatprep.subr.bf16.mxu0 %v4405
    %4562 = vmatpush1.bf16.msra.mxu0 %v4404
    %4563 = vmatprep.subr.bf16.mxu0 %v4409
    %4564 = vmatpush1.bf16.msra.mxu0 %v4408
    %4565 = vmatprep.subr.bf16.mxu0 0
    %4566 = vmatpush1.bf16.msra.mxu0 0
    %4567 = vmatprep.subr.bf16.mxu0 0
    %4568 = vmatpush1.bf16.msra.mxu0 0
    %4569 = vmatprep.subr.bf16.mxu0 0
    %4570 = vmatpush1.bf16.msra.mxu0 0
    %4571 = vmatprep.subr.bf16.mxu0 0
    %4572 = vmatpush1.bf16.msra.mxu0 0
    %4573 = vmatprep.subr.bf16.mxu0 0
    %4574 = vmatpush1.bf16.msra.mxu0 0
    %4575 = vmatprep.subr.bf16.mxu0 0
    %4576 = vmatpush1.bf16.msra.mxu0 0
    %4577 = vmatprep.subr.bf16.mxu0 0
    %4578 = vmatpush1.bf16.msra.mxu0 0
    %4579 = vmatprep.subr.bf16.mxu0 0
    %4580 = vmatpush1.bf16.msra.mxu0 0
    %4581 = vmatprep.subr.bf16.mxu0 0
    %4582 = vmatpush1.bf16.msra.mxu0 0
    %4583 = vmatprep.subr.bf16.mxu0 0
    %4584 = vmatpush1.bf16.msra.mxu0 0
    %4585 = vmatprep.subr.bf16.mxu0 0
    %4586 = vmatpush1.bf16.msra.mxu0 0
    %4587 = vmatprep.subr.bf16.mxu0 0
    %4588 = vmatpush1.bf16.msra.mxu0 0
    %4589 = vmatprep.mubr.bf16.mxu0 0
    %4590 = vmatmul.mubr.bf16.gmra.mrb[0].mxu0 %v4555
    %v4591 = vpop.f32.mrb[0].mxu0
    %v4592 = vadd.f32 %v4513, %v4591
    %v4593 = vpop.f32.mrb[0].mxu0
    %v4594 = vadd.f32 %v4517, %v4593
    %v4595 = vpop.f32.mrb[0].mxu0
    %v4596 = vpop.f32.mrb[0].mxu0
    %4597 = vdwg.mxu0
    %4598 = vmatprep.subr.bf16.mxu0 %v4399
    %4599 = vmatpush1.bf16.msra.mxu0 %v4398
    %4600 = vmatprep.subr.bf16.mxu0 %v4403
    %4601 = vmatpush1.bf16.msra.mxu0 %v4402
    %4602 = vmatprep.subr.bf16.mxu0 %v4407
    %4603 = vmatpush1.bf16.msra.mxu0 %v4406
    %4604 = vmatprep.subr.bf16.mxu0 %v4411
    %4605 = vmatpush1.bf16.msra.mxu0 %v4410
    %4606 = vmatprep.subr.bf16.mxu0 0
    %4607 = vmatpush1.bf16.msra.mxu0 0
    %4608 = vmatprep.subr.bf16.mxu0 0
    %4609 = vmatpush1.bf16.msra.mxu0 0
    %4610 = vmatprep.subr.bf16.mxu0 0
    %4611 = vmatpush1.bf16.msra.mxu0 0
    %4612 = vmatprep.subr.bf16.mxu0 0
    %4613 = vmatpush1.bf16.msra.mxu0 0
    %4614 = vmatprep.subr.bf16.mxu0 0
    %4615 = vmatpush1.bf16.msra.mxu0 0
    %4616 = vmatprep.subr.bf16.mxu0 0
    %4617 = vmatpush1.bf16.msra.mxu0 0
    %4618 = vmatprep.subr.bf16.mxu0 0
    %4619 = vmatpush1.bf16.msra.mxu0 0
    %4620 = vmatprep.subr.bf16.mxu0 0
    %4621 = vmatpush1.bf16.msra.mxu0 0
    %4622 = vmatprep.subr.bf16.mxu0 0
    %4623 = vmatpush1.bf16.msra.mxu0 0
    %4624 = vmatprep.subr.bf16.mxu0 0
    %4625 = vmatpush1.bf16.msra.mxu0 0
    %4626 = vmatprep.subr.bf16.mxu0 0
    %4627 = vmatpush1.bf16.msra.mxu0 0
    %4628 = vmatprep.subr.bf16.mxu0 0
    %4629 = vmatpush1.bf16.msra.mxu0 0
    %4630 = vmatprep.mubr.bf16.mxu0 0
    %4631 = vmatmul.mubr.bf16.gmra.mrb[0].mxu0 %v4555
    %v4632 = vpop.f32.mrb[0].mxu0
    %v4633 = vadd.f32 %v4521, %v4632
    %v4634 = vpop.f32.mrb[0].mxu0
    %v4635 = vadd.f32 %v4525, %v4634
    %v4636 = vpop.f32.mrb[0].mxu0
    %v4637 = vpop.f32.mrb[0].mxu0
    %4638 = vdwg.mxu0
    %4640 = vrot.lane.b32.xlu0 %v4552, 64
    %v4641 = vpop.permute.xlu0 %4640
    %v4643 = vsel %vm4553, %v4641, 0
    %4645 = vmatprep.subr.bf16.mxu0 %v4397
    %4646 = vmatpush1.bf16.msra.mxu0 %v4396
    %4647 = vmatprep.subr.bf16.mxu0 %v4401
    %4648 = vmatpush1.bf16.msra.mxu0 %v4400
    %4649 = vmatprep.subr.bf16.mxu0 %v4405
    %4650 = vmatpush1.bf16.msra.mxu0 %v4404
    %4651 = vmatprep.subr.bf16.mxu0 %v4409
    %4652 = vmatpush1.bf16.msra.mxu0 %v4408
    %4653 = vmatprep.subr.bf16.mxu0 0
    %4654 = vmatpush1.bf16.msra.mxu0 0
    %4655 = vmatprep.subr.bf16.mxu0 0
    %4656 = vmatpush1.bf16.msra.mxu0 0
    %4657 = vmatprep.subr.bf16.mxu0 0
    %4658 = vmatpush1.bf16.msra.mxu0 0
    %4659 = vmatprep.subr.bf16.mxu0 0
    %4660 = vmatpush1.bf16.msra.mxu0 0
    %4661 = vmatprep.subr.bf16.mxu0 0
    %4662 = vmatpush1.bf16.msra.mxu0 0
    %4663 = vmatprep.subr.bf16.mxu0 0
    %4664 = vmatpush1.bf16.msra.mxu0 0
    %4665 = vmatprep.subr.bf16.mxu0 0
    %4666 = vmatpush1.bf16.msra.mxu0 0
    %4667 = vmatprep.subr.bf16.mxu0 0
    %4668 = vmatpush1.bf16.msra.mxu0 0
    %4669 = vmatprep.subr.bf16.mxu0 0
    %4670 = vmatpush1.bf16.msra.mxu0 0
    %4671 = vmatprep.subr.bf16.mxu0 0
    %4672 = vmatpush1.bf16.msra.mxu0 0
    %4673 = vmatprep.subr.bf16.mxu0 0
    %4674 = vmatpush1.bf16.msra.mxu0 0
    %4675 = vmatprep.subr.bf16.mxu0 0
    %4676 = vmatpush1.bf16.msra.mxu0 0
    %4677 = vmatprep.mubr.bf16.mxu0 0
    %4678 = vmatmul.mubr.bf16.gmra.mrb[0].mxu0 %v4643
    %v4679 = vpop.f32.mrb[0].mxu0
    %v4680 = vadd.f32 %v4513, %v4679
    %v4681 = vpop.f32.mrb[0].mxu0
    %v4682 = vadd.f32 %v4517, %v4681
    %v4683 = vpop.f32.mrb[0].mxu0
    %v4684 = vpop.f32.mrb[0].mxu0
    %4685 = vdwg.mxu0
    %4686 = vmatprep.subr.bf16.mxu0 %v4399
    %4687 = vmatpush1.bf16.msra.mxu0 %v4398
    %4688 = vmatprep.subr.bf16.mxu0 %v4403
    %4689 = vmatpush1.bf16.msra.mxu0 %v4402
    %4690 = vmatprep.subr.bf16.mxu0 %v4407
    %4691 = vmatpush1.bf16.msra.mxu0 %v4406
    %4692 = vmatprep.subr.bf16.mxu0 %v4411
    %4693 = vmatpush1.bf16.msra.mxu0 %v4410
    %4694 = vmatprep.subr.bf16.mxu0 0
    %4695 = vmatpush1.bf16.msra.mxu0 0
    %4696 = vmatprep.subr.bf16.mxu0 0
    %4697 = vmatpush1.bf16.msra.mxu0 0
    %4698 = vmatprep.subr.bf16.mxu0 0
    %4699 = vmatpush1.bf16.msra.mxu0 0
    %4700 = vmatprep.subr.bf16.mxu0 0
    %4701 = vmatpush1.bf16.msra.mxu0 0
    %4702 = vmatprep.subr.bf16.mxu0 0
    %4703 = vmatpush1.bf16.msra.mxu0 0
    %4704 = vmatprep.subr.bf16.mxu0 0
    %4705 = vmatpush1.bf16.msra.mxu0 0
    %4706 = vmatprep.subr.bf16.mxu0 0
    %4707 = vmatpush1.bf16.msra.mxu0 0
    %4708 = vmatprep.subr.bf16.mxu0 0
    %4709 = vmatpush1.bf16.msra.mxu0 0
    %4710 = vmatprep.subr.bf16.mxu0 0
    %4711 = vmatpush1.bf16.msra.mxu0 0
    %4712 = vmatprep.subr.bf16.mxu0 0
    %4713 = vmatpush1.bf16.msra.mxu0 0
    %4714 = vmatprep.subr.bf16.mxu0 0
    %4715 = vmatpush1.bf16.msra.mxu0 0
    %4716 = vmatprep.subr.bf16.mxu0 0
    %4717 = vmatpush1.bf16.msra.mxu0 0
    %4718 = vmatprep.mubr.bf16.mxu0 0
    %4719 = vmatmul.mubr.bf16.gmra.mrb[0].mxu0 %v4643
    %v4720 = vpop.f32.mrb[0].mxu0
    %v4721 = vadd.f32 %v4521, %v4720
    %v4722 = vpop.f32.mrb[0].mxu0
    %v4723 = vadd.f32 %v4525, %v4722
    %v4724 = vpop.f32.mrb[0].mxu0
    %v4725 = vpop.f32.mrb[0].mxu0
    %4726 = vdwg.mxu0
    %v4727 = vpack.c.bf16 %v4390, %v4390
    %v4729 = vsel %vm4553, %v4727, 0
    %4731 = vmatprep.subr.bf16.mxu0 %v4397
    %4732 = vmatpush1.bf16.msra.mxu0 %v4396
    %4733 = vmatprep.subr.bf16.mxu0 %v4401
    %4734 = vmatpush1.bf16.msra.mxu0 %v4400
    %4735 = vmatprep.subr.bf16.mxu0 %v4405
    %4736 = vmatpush1.bf16.msra.mxu0 %v4404
    %4737 = vmatprep.subr.bf16.mxu0 %v4409
    %4738 = vmatpush1.bf16.msra.mxu0 %v4408
    %4739 = vmatprep.subr.bf16.mxu0 0
    %4740 = vmatpush1.bf16.msra.mxu0 0
    %4741 = vmatprep.subr.bf16.mxu0 0
    %4742 = vmatpush1.bf16.msra.mxu0 0
    %4743 = vmatprep.subr.bf16.mxu0 0
    %4744 = vmatpush1.bf16.msra.mxu0 0
    %4745 = vmatprep.subr.bf16.mxu0 0
    %4746 = vmatpush1.bf16.msra.mxu0 0
    %4747 = vmatprep.subr.bf16.mxu0 0
    %4748 = vmatpush1.bf16.msra.mxu0 0
    %4749 = vmatprep.subr.bf16.mxu0 0
    %4750 = vmatpush1.bf16.msra.mxu0 0
    %4751 = vmatprep.subr.bf16.mxu0 0
    %4752 = vmatpush1.bf16.msra.mxu0 0
    %4753 = vmatprep.subr.bf16.mxu0 0
    %4754 = vmatpush1.bf16.msra.mxu0 0
    %4755 = vmatprep.subr.bf16.mxu0 0
    %4756 = vmatpush1.bf16.msra.mxu0 0
    %4757 = vmatprep.subr.bf16.mxu0 0
    %4758 = vmatpush1.bf16.msra.mxu0 0
    %4759 = vmatprep.subr.bf16.mxu0 0
    %4760 = vmatpush1.bf16.msra.mxu0 0
    %4761 = vmatprep.subr.bf16.mxu0 0
    %4762 = vmatpush1.bf16.msra.mxu0 0
    %4763 = vmatprep.mubr.bf16.mxu0 0
    %4764 = vmatmul.mubr.bf16.gmra.mrb[0].mxu0 %v4729
    %v4765 = vpop.f32.mrb[0].mxu0
    %v4766 = vadd.f32 %v4513, %v4765
    %v4767 = vpop.f32.mrb[0].mxu0
    %v4768 = vadd.f32 %v4517, %v4767
    %v4769 = vpop.f32.mrb[0].mxu0
    %v4770 = vpop.f32.mrb[0].mxu0
    %4771 = vdwg.mxu0
    %4772 = vmatprep.subr.bf16.mxu0 %v4399
    %4773 = vmatpush1.bf16.msra.mxu0 %v4398
    %4774 = vmatprep.subr.bf16.mxu0 %v4403
    %4775 = vmatpush1.bf16.msra.mxu0 %v4402
    %4776 = vmatprep.subr.bf16.mxu0 %v4407
    %4777 = vmatpush1.bf16.msra.mxu0 %v4406
    %4778 = vmatprep.subr.bf16.mxu0 %v4411
    %4779 = vmatpush1.bf16.msra.mxu0 %v4410
    %4780 = vmatprep.subr.bf16.mxu0 0
    %4781 = vmatpush1.bf16.msra.mxu0 0
    %4782 = vmatprep.subr.bf16.mxu0 0
    %4783 = vmatpush1.bf16.msra.mxu0 0
    %4784 = vmatprep.subr.bf16.mxu0 0
    %4785 = vmatpush1.bf16.msra.mxu0 0
    %4786 = vmatprep.subr.bf16.mxu0 0
    %4787 = vmatpush1.bf16.msra.mxu0 0
    %4788 = vmatprep.subr.bf16.mxu0 0
    %4789 = vmatpush1.bf16.msra.mxu0 0
    %4790 = vmatprep.subr.bf16.mxu0 0
    %4791 = vmatpush1.bf16.msra.mxu0 0
    %4792 = vmatprep.subr.bf16.mxu0 0
    %4793 = vmatpush1.bf16.msra.mxu0 0
    %4794 = vmatprep.subr.bf16.mxu0 0
    %4795 = vmatpush1.bf16.msra.mxu0 0
    %4796 = vmatprep.subr.bf16.mxu0 0
    %4797 = vmatpush1.bf16.msra.mxu0 0
    %4798 = vmatprep.subr.bf16.mxu0 0
    %4799 = vmatpush1.bf16.msra.mxu0 0
    %4800 = vmatprep.subr.bf16.mxu0 0
    %4801 = vmatpush1.bf16.msra.mxu0 0
    %4802 = vmatprep.subr.bf16.mxu0 0
    %4803 = vmatpush1.bf16.msra.mxu0 0
    %4804 = vmatprep.mubr.bf16.mxu0 0
    %4805 = vmatmul.mubr.bf16.gmra.mrb[0].mxu0 %v4729
    %v4806 = vpop.f32.mrb[0].mxu0
    %v4807 = vadd.f32 %v4521, %v4806
    %v4808 = vpop.f32.mrb[0].mxu0
    %v4809 = vadd.f32 %v4525, %v4808
    %v4810 = vpop.f32.mrb[0].mxu0
    %v4811 = vpop.f32.mrb[0].mxu0
    %4812 = vdwg.mxu0
    %4814 = vrot.lane.b32.xlu0 %v4727, 64
    %v4815 = vpop.permute.xlu0 %4814
    %v4817 = vsel %vm4553, %v4815, 0
    %4819 = vmatprep.subr.bf16.mxu0 %v4397
    %4820 = vmatpush1.bf16.msra.mxu0 %v4396
    %4821 = vmatprep.subr.bf16.mxu0 %v4401
    %4822 = vmatpush1.bf16.msra.mxu0 %v4400
    %4823 = vmatprep.subr.bf16.mxu0 %v4405
    %4824 = vmatpush1.bf16.msra.mxu0 %v4404
    %4825 = vmatprep.subr.bf16.mxu0 %v4409
    %4826 = vmatpush1.bf16.msra.mxu0 %v4408
    %4827 = vmatprep.subr.bf16.mxu0 0
    %4828 = vmatpush1.bf16.msra.mxu0 0
    %4829 = vmatprep.subr.bf16.mxu0 0
    %4830 = vmatpush1.bf16.msra.mxu0 0
    %4831 = vmatprep.subr.bf16.mxu0 0
    %4832 = vmatpush1.bf16.msra.mxu0 0
    %4833 = vmatprep.subr.bf16.mxu0 0
    %4834 = vmatpush1.bf16.msra.mxu0 0
    %4835 = vmatprep.subr.bf16.mxu0 0
    %4836 = vmatpush1.bf16.msra.mxu0 0
    %4837 = vmatprep.subr.bf16.mxu0 0
    %4838 = vmatpush1.bf16.msra.mxu0 0
    %4839 = vmatprep.subr.bf16.mxu0 0
    %4840 = vmatpush1.bf16.msra.mxu0 0
    %4841 = vmatprep.subr.bf16.mxu0 0
    %4842 = vmatpush1.bf16.msra.mxu0 0
    %4843 = vmatprep.subr.bf16.mxu0 0
    %4844 = vmatpush1.bf16.msra.mxu0 0
    %4845 = vmatprep.subr.bf16.mxu0 0
    %4846 = vmatpush1.bf16.msra.mxu0 0
    %4847 = vmatprep.subr.bf16.mxu0 0
    %4848 = vmatpush1.bf16.msra.mxu0 0
    %4849 = vmatprep.subr.bf16.mxu0 0
    %4850 = vmatpush1.bf16.msra.mxu0 0
    %4851 = vmatprep.mubr.bf16.mxu0 0
    %4852 = vmatmul.mubr.bf16.gmra.mrb[0].mxu0 %v4817
    %v4853 = vpop.f32.mrb[0].mxu0
    %v4854 = vadd.f32 %v4513, %v4853
    %v4855 = vpop.f32.mrb[0].mxu0
    %v4856 = vadd.f32 %v4517, %v4855
    %v4857 = vpop.f32.mrb[0].mxu0
    %v4858 = vpop.f32.mrb[0].mxu0
    %4859 = vdwg.mxu0
    %4860 = vmatprep.subr.bf16.mxu0 %v4399
    %4861 = vmatpush1.bf16.msra.mxu0 %v4398
    %4862 = vmatprep.subr.bf16.mxu0 %v4403
    %4863 = vmatpush1.bf16.msra.mxu0 %v4402
    %4864 = vmatprep.subr.bf16.mxu0 %v4407
    %4865 = vmatpush1.bf16.msra.mxu0 %v4406
    %4866 = vmatprep.subr.bf16.mxu0 %v4411
    %4867 = vmatpush1.bf16.msra.mxu0 %v4410
    %4868 = vmatprep.subr.bf16.mxu0 0
    %4869 = vmatpush1.bf16.msra.mxu0 0
    %4870 = vmatprep.subr.bf16.mxu0 0
    %4871 = vmatpush1.bf16.msra.mxu0 0
    %4872 = vmatprep.subr.bf16.mxu0 0
    %4873 = vmatpush1.bf16.msra.mxu0 0
    %4874 = vmatprep.subr.bf16.mxu0 0
    %4875 = vmatpush1.bf16.msra.mxu0 0
    %4876 = vmatprep.subr.bf16.mxu0 0
    %4877 = vmatpush1.bf16.msra.mxu0 0
    %4878 = vmatprep.subr.bf16.mxu0 0
    %4879 = vmatpush1.bf16.msra.mxu0 0
    %4880 = vmatprep.subr.bf16.mxu0 0
    %4881 = vmatpush1.bf16.msra.mxu0 0
    %4882 = vmatprep.subr.bf16.mxu0 0
    %4883 = vmatpush1.bf16.msra.mxu0 0
    %4884 = vmatprep.subr.bf16.mxu0 0
    %4885 = vmatpush1.bf16.msra.mxu0 0
    %4886 = vmatprep.subr.bf16.mxu0 0
    %4887 = vmatpush1.bf16.msra.mxu0 0
    %4888 = vmatprep.subr.bf16.mxu0 0
    %4889 = vmatpush1.bf16.msra.mxu0 0
    %4890 = vmatprep.subr.bf16.mxu0 0
    %4891 = vmatpush1.bf16.msra.mxu0 0
    %4892 = vmatprep.mubr.bf16.mxu0 0
    %4893 = vmatmul.mubr.bf16.gmra.mrb[0].mxu0 %v4817
    %v4894 = vpop.f32.mrb[0].mxu0
    %v4895 = vadd.f32 %v4521, %v4894
    %v4896 = vpop.f32.mrb[0].mxu0
    %v4897 = vadd.f32 %v4525, %v4896
    %v4898 = vpop.f32.mrb[0].mxu0
    %v4899 = vpop.f32.mrb[0].mxu0
    %4900 = vdwg.mxu0
    %v4901 = vpack.c.bf16 %v4391, %v4391
    %v4903 = vsel %vm4553, %v4901, 0
    %4905 = vmatprep.subr.bf16.mxu0 %v4397
    %4906 = vmatpush1.bf16.msra.mxu0 %v4396
    %4907 = vmatprep.subr.bf16.mxu0 %v4401
    %4908 = vmatpush1.bf16.msra.mxu0 %v4400
    %4909 = vmatprep.subr.bf16.mxu0 %v4405
    %4910 = vmatpush1.bf16.msra.mxu0 %v4404
    %4911 = vmatprep.subr.bf16.mxu0 %v4409
    %4912 = vmatpush1.bf16.msra.mxu0 %v4408
    %4913 = vmatprep.subr.bf16.mxu0 0
    %4914 = vmatpush1.bf16.msra.mxu0 0
    %4915 = vmatprep.subr.bf16.mxu0 0
    %4916 = vmatpush1.bf16.msra.mxu0 0
    %4917 = vmatprep.subr.bf16.mxu0 0
    %4918 = vmatpush1.bf16.msra.mxu0 0
    %4919 = vmatprep.subr.bf16.mxu0 0
    %4920 = vmatpush1.bf16.msra.mxu0 0
    %4921 = vmatprep.subr.bf16.mxu0 0
    %4922 = vmatpush1.bf16.msra.mxu0 0
    %4923 = vmatprep.subr.bf16.mxu0 0
    %4924 = vmatpush1.bf16.msra.mxu0 0
    %4925 = vmatprep.subr.bf16.mxu0 0
    %4926 = vmatpush1.bf16.msra.mxu0 0
    %4927 = vmatprep.subr.bf16.mxu0 0
    %4928 = vmatpush1.bf16.msra.mxu0 0
    %4929 = vmatprep.subr.bf16.mxu0 0
    %4930 = vmatpush1.bf16.msra.mxu0 0
    %4931 = vmatprep.subr.bf16.mxu0 0
    %4932 = vmatpush1.bf16.msra.mxu0 0
    %4933 = vmatprep.subr.bf16.mxu0 0
    %4934 = vmatpush1.bf16.msra.mxu0 0
    %4935 = vmatprep.subr.bf16.mxu0 0
    %4936 = vmatpush1.bf16.msra.mxu0 0
    %4937 = vmatprep.mubr.bf16.mxu0 0
    %4938 = vmatmul.mubr.bf16.gmra.mrb[0].mxu0 %v4903
    %v4939 = vpop.f32.mrb[0].mxu0
    %v4940 = vadd.f32 %v4513, %v4939
    %v4941 = vpop.f32.mrb[0].mxu0
    %v4942 = vadd.f32 %v4517, %v4941
    %v4943 = vpop.f32.mrb[0].mxu0
    %v4944 = vpop.f32.mrb[0].mxu0
    %4945 = vdwg.mxu0
    %4946 = vmatprep.subr.bf16.mxu0 %v4399
    %4947 = vmatpush1.bf16.msra.mxu0 %v4398
    %4948 = vmatprep.subr.bf16.mxu0 %v4403
    %4949 = vmatpush1.bf16.msra.mxu0 %v4402
    %4950 = vmatprep.subr.bf16.mxu0 %v4407
    %4951 = vmatpush1.bf16.msra.mxu0 %v4406
    %4952 = vmatprep.subr.bf16.mxu0 %v4411
    %4953 = vmatpush1.bf16.msra.mxu0 %v4410
    %4954 = vmatprep.subr.bf16.mxu0 0
    %4955 = vmatpush1.bf16.msra.mxu0 0
    %4956 = vmatprep.subr.bf16.mxu0 0
    %4957 = vmatpush1.bf16.msra.mxu0 0
    %4958 = vmatprep.subr.bf16.mxu0 0
    %4959 = vmatpush1.bf16.msra.mxu0 0
    %4960 = vmatprep.subr.bf16.mxu0 0
    %4961 = vmatpush1.bf16.msra.mxu0 0
    %4962 = vmatprep.subr.bf16.mxu0 0
    %4963 = vmatpush1.bf16.msra.mxu0 0
    %4964 = vmatprep.subr.bf16.mxu0 0
    %4965 = vmatpush1.bf16.msra.mxu0 0
    %4966 = vmatprep.subr.bf16.mxu0 0
    %4967 = vmatpush1.bf16.msra.mxu0 0
    %4968 = vmatprep.subr.bf16.mxu0 0
    %4969 = vmatpush1.bf16.msra.mxu0 0
    %4970 = vmatprep.subr.bf16.mxu0 0
    %4971 = vmatpush1.bf16.msra.mxu0 0
    %4972 = vmatprep.subr.bf16.mxu0 0
    %4973 = vmatpush1.bf16.msra.mxu0 0
    %4974 = vmatprep.subr.bf16.mxu0 0
    %4975 = vmatpush1.bf16.msra.mxu0 0
    %4976 = vmatprep.subr.bf16.mxu0 0
    %4977 = vmatpush1.bf16.msra.mxu0 0
    %4978 = vmatprep.mubr.bf16.mxu0 0
    %4979 = vmatmul.mubr.bf16.gmra.mrb[0].mxu0 %v4903
    %v4980 = vpop.f32.mrb[0].mxu0
    %v4981 = vadd.f32 %v4521, %v4980
    %v4982 = vpop.f32.mrb[0].mxu0
    %v4983 = vadd.f32 %v4525, %v4982
    %v4984 = vpop.f32.mrb[0].mxu0
    %v4985 = vpop.f32.mrb[0].mxu0
    %4986 = vdwg.mxu0
    %4988 = vrot.lane.b32.xlu0 %v4901, 64
    %v4989 = vpop.permute.xlu0 %4988
    %v4991 = vsel %vm4553, %v4989, 0
    %4993 = vmatprep.subr.bf16.mxu0 %v4397
    %4994 = vmatpush1.bf16.msra.mxu0 %v4396
    %4995 = vmatprep.subr.bf16.mxu0 %v4401
    %4996 = vmatpush1.bf16.msra.mxu0 %v4400
    %4997 = vmatprep.subr.bf16.mxu0 %v4405
    %4998 = vmatpush1.bf16.msra.mxu0 %v4404
    %4999 = vmatprep.subr.bf16.mxu0 %v4409
    %5000 = vmatpush1.bf16.msra.mxu0 %v4408
    %5001 = vmatprep.subr.bf16.mxu0 0
    %5002 = vmatpush1.bf16.msra.mxu0 0
    %5003 = vmatprep.subr.bf16.mxu0 0
    %5004 = vmatpush1.bf16.msra.mxu0 0
    %5005 = vmatprep.subr.bf16.mxu0 0
    %5006 = vmatpush1.bf16.msra.mxu0 0
    %5007 = vmatprep.subr.bf16.mxu0 0
    %5008 = vmatpush1.bf16.msra.mxu0 0
    %5009 = vmatprep.subr.bf16.mxu0 0
    %5010 = vmatpush1.bf16.msra.mxu0 0
    %5011 = vmatprep.subr.bf16.mxu0 0
    %5012 = vmatpush1.bf16.msra.mxu0 0
    %5013 = vmatprep.subr.bf16.mxu0 0
    %5014 = vmatpush1.bf16.msra.mxu0 0
    %5015 = vmatprep.subr.bf16.mxu0 0
    %5016 = vmatpush1.bf16.msra.mxu0 0
    %5017 = vmatprep.subr.bf16.mxu0 0
    %5018 = vmatpush1.bf16.msra.mxu0 0
    %5019 = vmatprep.subr.bf16.mxu0 0
    %5020 = vmatpush1.bf16.msra.mxu0 0
    %5021 = vmatprep.subr.bf16.mxu0 0
    %5022 = vmatpush1.bf16.msra.mxu0 0
    %5023 = vmatprep.subr.bf16.mxu0 0
    %5024 = vmatpush1.bf16.msra.mxu0 0
    %5025 = vmatprep.mubr.bf16.mxu0 0
    %5026 = vmatmul.mubr.bf16.gmra.mrb[0].mxu0 %v4991
    %v5027 = vpop.f32.mrb[0].mxu0
    %v5028 = vadd.f32 %v4513, %v5027
    %v5029 = vpop.f32.mrb[0].mxu0
    %v5030 = vadd.f32 %v4517, %v5029
    %v5031 = vpop.f32.mrb[0].mxu0
    %v5032 = vpop.f32.mrb[0].mxu0
    %5033 = vdwg.mxu0
    %5034 = vmatprep.subr.bf16.mxu0 %v4399
    %5035 = vmatpush1.bf16.msra.mxu0 %v4398
    %5036 = vmatprep.subr.bf16.mxu0 %v4403
    %5037 = vmatpush1.bf16.msra.mxu0 %v4402
    %5038 = vmatprep.subr.bf16.mxu0 %v4407
    %5039 = vmatpush1.bf16.msra.mxu0 %v4406
    %5040 = vmatprep.subr.bf16.mxu0 %v4411
    %5041 = vmatpush1.bf16.msra.mxu0 %v4410
    %5042 = vmatprep.subr.bf16.mxu0 0
    %5043 = vmatpush1.bf16.msra.mxu0 0
    %5044 = vmatprep.subr.bf16.mxu0 0
    %5045 = vmatpush1.bf16.msra.mxu0 0
    %5046 = vmatprep.subr.bf16.mxu0 0
    %5047 = vmatpush1.bf16.msra.mxu0 0
    %5048 = vmatprep.subr.bf16.mxu0 0
    %5049 = vmatpush1.bf16.msra.mxu0 0
    %5050 = vmatprep.subr.bf16.mxu0 0
    %5051 = vmatpush1.bf16.msra.mxu0 0
    %5052 = vmatprep.subr.bf16.mxu0 0
    %5053 = vmatpush1.bf16.msra.mxu0 0
    %5054 = vmatprep.subr.bf16.mxu0 0
    %5055 = vmatpush1.bf16.msra.mxu0 0
    %5056 = vmatprep.subr.bf16.mxu0 0
    %5057 = vmatpush1.bf16.msra.mxu0 0
    %5058 = vmatprep.subr.bf16.mxu0 0
    %5059 = vmatpush1.bf16.msra.mxu0 0
    %5060 = vmatprep.subr.bf16.mxu0 0
    %5061 = vmatpush1.bf16.msra.mxu0 0
    %5062 = vmatprep.subr.bf16.mxu0 0
    %5063 = vmatpush1.bf16.msra.mxu0 0
    %5064 = vmatprep.subr.bf16.mxu0 0
    %5065 = vmatpush1.bf16.msra.mxu0 0
    %5066 = vmatprep.mubr.bf16.mxu0 0
    %5067 = vmatmul.mubr.bf16.gmra.mrb[0].mxu0 %v4991
    %v5068 = vpop.f32.mrb[0].mxu0
    %v5069 = vadd.f32 %v4521, %v5068
    %v5070 = vpop.f32.mrb[0].mxu0
    %v5071 = vadd.f32 %v4525, %v5070
    %v5072 = vpop.f32.mrb[0].mxu0
    %v5073 = vpop.f32.mrb[0].mxu0
    %5074 = vdwg.mxu0
    %5075 = vmatprep.subr.bf16.mxu0 %v4477
    %5076 = vmatpush1.bf16.msra.mxu0 %v4476
    %5077 = vmatprep.subr.bf16.mxu0 %v4481
    %5078 = vmatpush1.bf16.msra.mxu0 %v4480
    %5079 = vmatprep.subr.bf16.mxu0 %v4485
    %5080 = vmatpush1.bf16.msra.mxu0 %v4484
    %5081 = vmatprep.subr.bf16.mxu0 %v4489
    %5082 = vmatpush1.bf16.msra.mxu0 %v4488
    %5083 = vmatprep.subr.bf16.mxu0 %v4493
    %5084 = vmatpush1.bf16.msra.mxu0 %v4492
    %5085 = vmatprep.subr.bf16.mxu0 %v4497
    %5086 = vmatpush1.bf16.msra.mxu0 %v4496
    %5087 = vmatprep.subr.bf16.mxu0 %v4501
    %5088 = vmatpush1.bf16.msra.mxu0 %v4500
    %5089 = vmatprep.subr.bf16.mxu0 %v4505
    %5090 = vmatpush1.bf16.msra.mxu0 %v4504
    %5091 = vmatprep.subr.bf16.mxu0 0
    %5092 = vmatpush1.bf16.msra.mxu0 0
    %5093 = vmatprep.subr.bf16.mxu0 0
    %5094 = vmatpush1.bf16.msra.mxu0 0
    %5095 = vmatprep.subr.bf16.mxu0 0
    %5096 = vmatpush1.bf16.msra.mxu0 0
    %5097 = vmatprep.subr.bf16.mxu0 0
    %5098 = vmatpush1.bf16.msra.mxu0 0
    %5099 = vmatprep.subr.bf16.mxu0 0
    %5100 = vmatpush1.bf16.msra.mxu0 0
    %5101 = vmatprep.subr.bf16.mxu0 0
    %5102 = vmatpush1.bf16.msra.mxu0 0
    %5103 = vmatprep.subr.bf16.mxu0 0
    %5104 = vmatpush1.bf16.msra.mxu0 0
    %5105 = vmatprep.subr.bf16.mxu0 0
    %5106 = vmatpush1.bf16.msra.mxu0 0
    %5107 = vmatprep.mubr.bf16.mxu0 0
    %5108 = vmatmul.mubr.bf16.gmra.mrb[0].mxu0 0
    %v5109 = vpop.f32.mrb[0].mxu0
    %v5110 = vadd.f32 %v4535, %v5109
    %v5111 = vpop.f32.mrb[0].mxu0
    %v5112 = vadd.f32 %v4539, %v5111
    %v5113 = vpop.f32.mrb[0].mxu0
    %v5114 = vpop.f32.mrb[0].mxu0
    %5115 = vdwg.mxu0
    %5116 = vmatprep.subr.bf16.mxu0 %v4479
    %5117 = vmatpush1.bf16.msra.mxu0 %v4478
    %5118 = vmatprep.subr.bf16.mxu0 %v4483
    %5119 = vmatpush1.bf16.msra.mxu0 %v4482
    %5120 = vmatprep.subr.bf16.mxu0 %v4487
    %5121 = vmatpush1.bf16.msra.mxu0 %v4486
    %5122 = vmatprep.subr.bf16.mxu0 %v4491
    %5123 = vmatpush1.bf16.msra.mxu0 %v4490
    %5124 = vmatprep.subr.bf16.mxu0 %v4495
    %5125 = vmatpush1.bf16.msra.mxu0 %v4494
    %5126 = vmatprep.subr.bf16.mxu0 %v4499
    %5127 = vmatpush1.bf16.msra.mxu0 %v4498
    %5128 = vmatprep.subr.bf16.mxu0 %v4503
    %5129 = vmatpush1.bf16.msra.mxu0 %v4502
    %5130 = vmatprep.subr.bf16.mxu0 %v4507
    %5131 = vmatpush1.bf16.msra.mxu0 %v4506
    %5132 = vmatprep.subr.bf16.mxu0 0
    %5133 = vmatpush1.bf16.msra.mxu0 0
    %5134 = vmatprep.subr.bf16.mxu0 0
    %5135 = vmatpush1.bf16.msra.mxu0 0
    %5136 = vmatprep.subr.bf16.mxu0 0
    %5137 = vmatpush1.bf16.msra.mxu0 0
    %5138 = vmatprep.subr.bf16.mxu0 0
    %5139 = vmatpush1.bf16.msra.mxu0 0
    %5140 = vmatprep.subr.bf16.mxu0 0
    %5141 = vmatpush1.bf16.msra.mxu0 0
    %5142 = vmatprep.subr.bf16.mxu0 0
    %5143 = vmatpush1.bf16.msra.mxu0 0
    %5144 = vmatprep.subr.bf16.mxu0 0
    %5145 = vmatpush1.bf16.msra.mxu0 0
    %5146 = vmatprep.subr.bf16.mxu0 0
    %5147 = vmatpush1.bf16.msra.mxu0 0
    %5148 = vmatprep.mubr.bf16.mxu0 0
    %5149 = vmatmul.mubr.bf16.gmra.mrb[0].mxu0 0
    %v5150 = vpop.f32.mrb[0].mxu0
    %v5151 = vadd.f32 %v4543, %v5150
    %v5152 = vpop.f32.mrb[0].mxu0
    %v5153 = vadd.f32 %v4547, %v5152
    %v5154 = vpop.f32.mrb[0].mxu0
    %v5155 = vpop.f32.mrb[0].mxu0
    %5156 = vdwg.mxu0
    %5157 = vmatprep.subr.bf16.mxu0 %v4413
    %5158 = vmatpush1.bf16.msra.mxu0 %v4412
    %5159 = vmatprep.subr.bf16.mxu0 %v4417
    %5160 = vmatpush1.bf16.msra.mxu0 %v4416
    %5161 = vmatprep.subr.bf16.mxu0 %v4421
    %5162 = vmatpush1.bf16.msra.mxu0 %v4420
    %5163 = vmatprep.subr.bf16.mxu0 %v4425
    %5164 = vmatpush1.bf16.msra.mxu0 %v4424
    %5165 = vmatprep.subr.bf16.mxu0 %v4429
    %5166 = vmatpush1.bf16.msra.mxu0 %v4428
    %5167 = vmatprep.subr.bf16.mxu0 %v4433
    %5168 = vmatpush1.bf16.msra.mxu0 %v4432
    %5169 = vmatprep.subr.bf16.mxu0 %v4437
    %5170 = vmatpush1.bf16.msra.mxu0 %v4436
    %5171 = vmatprep.subr.bf16.mxu0 %v4441
    %5172 = vmatpush1.bf16.msra.mxu0 %v4440
    %5173 = vmatprep.subr.bf16.mxu0 0
    %5174 = vmatpush1.bf16.msra.mxu0 0
    %5175 = vmatprep.subr.bf16.mxu0 0
    %5176 = vmatpush1.bf16.msra.mxu0 0
    %5177 = vmatprep.subr.bf16.mxu0 0
    %5178 = vmatpush1.bf16.msra.mxu0 0
    %5179 = vmatprep.subr.bf16.mxu0 0
    %5180 = vmatpush1.bf16.msra.mxu0 0
    %5181 = vmatprep.subr.bf16.mxu0 0
    %5182 = vmatpush1.bf16.msra.mxu0 0
    %5183 = vmatprep.subr.bf16.mxu0 0
    %5184 = vmatpush1.bf16.msra.mxu0 0
    %5185 = vmatprep.subr.bf16.mxu0 0
    %5186 = vmatpush1.bf16.msra.mxu0 0
    %5187 = vmatprep.subr.bf16.mxu0 0
    %5188 = vmatpush1.bf16.msra.mxu0 0
    %5189 = vmatprep.mubr.bf16.mxu0 0
    %5190 = vmatmul.mubr.bf16.gmra.mrb[0].mxu0 0
    %v5191 = vpop.f32.mrb[0].mxu0
    %v5192 = vadd.f32 %v4592, %v5191
    %v5193 = vpop.f32.mrb[0].mxu0
    %v5194 = vadd.f32 %v4594, %v5193
    %v5195 = vpop.f32.mrb[0].mxu0
    %v5196 = vpop.f32.mrb[0].mxu0
    %5197 = vdwg.mxu0
    %5198 = vmatprep.subr.bf16.mxu0 %v4415
    %5199 = vmatpush1.bf16.msra.mxu0 %v4414
    %5200 = vmatprep.subr.bf16.mxu0 %v4419
    %5201 = vmatpush1.bf16.msra.mxu0 %v4418
    %5202 = vmatprep.subr.bf16.mxu0 %v4423
    %5203 = vmatpush1.bf16.msra.mxu0 %v4422
    %5204 = vmatprep.subr.bf16.mxu0 %v4427
    %5205 = vmatpush1.bf16.msra.mxu0 %v4426
    %5206 = vmatprep.subr.bf16.mxu0 %v4431
    %5207 = vmatpush1.bf16.msra.mxu0 %v4430
    %5208 = vmatprep.subr.bf16.mxu0 %v4435
    %5209 = vmatpush1.bf16.msra.mxu0 %v4434
    %5210 = vmatprep.subr.bf16.mxu0 %v4439
    %5211 = vmatpush1.bf16.msra.mxu0 %v4438
    %5212 = vmatprep.subr.bf16.mxu0 %v4443
    %5213 = vmatpush1.bf16.msra.mxu0 %v4442
    %5214 = vmatprep.subr.bf16.mxu0 0
    %5215 = vmatpush1.bf16.msra.mxu0 0
    %5216 = vmatprep.subr.bf16.mxu0 0
    %5217 = vmatpush1.bf16.msra.mxu0 0
    %5218 = vmatprep.subr.bf16.mxu0 0
    %5219 = vmatpush1.bf16.msra.mxu0 0
    %5220 = vmatprep.subr.bf16.mxu0 0
    %5221 = vmatpush1.bf16.msra.mxu0 0
    %5222 = vmatprep.subr.bf16.mxu0 0
    %5223 = vmatpush1.bf16.msra.mxu0 0
    %5224 = vmatprep.subr.bf16.mxu0 0
    %5225 = vmatpush1.bf16.msra.mxu0 0
    %5226 = vmatprep.subr.bf16.mxu0 0
    %5227 = vmatpush1.bf16.msra.mxu0 0
    %5228 = vmatprep.subr.bf16.mxu0 0
    %5229 = vmatpush1.bf16.msra.mxu0 0
    %5230 = vmatprep.mubr.bf16.mxu0 0
    %5231 = vmatmul.mubr.bf16.gmra.mrb[0].mxu0 0
    %v5232 = vpop.f32.mrb[0].mxu0
    %v5233 = vadd.f32 %v4633, %v5232
    %v5234 = vpop.f32.mrb[0].mxu0
    %v5235 = vadd.f32 %v4635, %v5234
    %v5236 = vpop.f32.mrb[0].mxu0
    %v5237 = vpop.f32.mrb[0].mxu0
    %5238 = vdwg.mxu0
    %v5239 = vxor.u32 %v5192, 2147483648
    %v5240 = vmul.f32 %v5239, 1.442695
    %v5241 = vpow.pop %v5240
    %v5242 = vadd.f32 %v5241, 1.0
    %v5243 = vrcp.pop %v5242
    %v5244 = vmul.f32 1.0, %v5243
    %v5245 = vxor.u32 %v5194, 2147483648
    %v5246 = vmul.f32 %v5245, 1.442695
    %v5247 = vpow.pop %v5246
    %v5248 = vadd.f32 %v5247, 1.0
    %v5249 = vrcp.pop %v5248
    %v5250 = vmul.f32 1.0, %v5249
    %v5251 = vtanh.pop %v5233
    %v5252 = vxor.u32 %v5235, 2147483648
    %v5253 = vmul.f32 %v5252, 1.442695
    %v5254 = vpow.pop %v5253
    %v5255 = vadd.f32 %v5254, 1.0
    %v5256 = vrcp.pop %v5255
    %v5257 = vmul.f32 1.0, %v5256
    %v5258 = vmul.f32 %v5250, 0.0
    %v5259 = vmul.f32 %v5244, %v5251
    %v5260 = vadd.f32 %v5258, %v5259
    %v5261 = vtanh.pop %v5260
    %v5262 = vmul.f32 %v5257, %v5261
    %v5263 = vpack.c.bf16 %v5262, %v5262
    %5264 = vmatprep.subr.bf16.mxu0 %v4445
    %5265 = vmatpush1.bf16.msra.mxu0 %v4444
    %5266 = vmatprep.subr.bf16.mxu0 %v4449
    %5267 = vmatpush1.bf16.msra.mxu0 %v4448
    %5268 = vmatprep.subr.bf16.mxu0 %v4453
    %5269 = vmatpush1.bf16.msra.mxu0 %v4452
    %5270 = vmatprep.subr.bf16.mxu0 %v4457
    %5271 = vmatpush1.bf16.msra.mxu0 %v4456
    %5272 = vmatprep.subr.bf16.mxu0 %v4461
    %5273 = vmatpush1.bf16.msra.mxu0 %v4460
    %5274 = vmatprep.subr.bf16.mxu0 %v4465
    %5275 = vmatpush1.bf16.msra.mxu0 %v4464
    %5276 = vmatprep.subr.bf16.mxu0 %v4469
    %5277 = vmatpush1.bf16.msra.mxu0 %v4468
    %5278 = vmatprep.subr.bf16.mxu0 %v4473
    %5279 = vmatpush1.bf16.msra.mxu0 %v4472
    %5280 = vmatprep.subr.bf16.mxu0 0
    %5281 = vmatpush1.bf16.msra.mxu0 0
    %5282 = vmatprep.subr.bf16.mxu0 0
    %5283 = vmatpush1.bf16.msra.mxu0 0
    %5284 = vmatprep.subr.bf16.mxu0 0
    %5285 = vmatpush1.bf16.msra.mxu0 0
    %5286 = vmatprep.subr.bf16.mxu0 0
    %5287 = vmatpush1.bf16.msra.mxu0 0
    %5288 = vmatprep.subr.bf16.mxu0 0
    %5289 = vmatpush1.bf16.msra.mxu0 0
    %5290 = vmatprep.subr.bf16.mxu0 0
    %5291 = vmatpush1.bf16.msra.mxu0 0
    %5292 = vmatprep.subr.bf16.mxu0 0
    %5293 = vmatpush1.bf16.msra.mxu0 0
    %5294 = vmatprep.subr.bf16.mxu0 0
    %5295 = vmatpush1.bf16.msra.mxu0 0
    %5296 = vmatprep.mubr.bf16.mxu0 0
    %5297 = vmatmul.mubr.bf16.gmra.mrb[0].mxu0 %v5263
    %v5298 = vpop.f32.mrb[0].mxu0
    %v5299 = vadd.f32 %v5110, %v5298
    %v5300 = vpop.f32.mrb[0].mxu0
    %v5301 = vadd.f32 %v5112, %v5300
    %v5302 = vpop.f32.mrb[0].mxu0
    %v5303 = vpop.f32.mrb[0].mxu0
    %5304 = vdwg.mxu0
    %5305 = vmatprep.subr.bf16.mxu0 %v4447
    %5306 = vmatpush1.bf16.msra.mxu0 %v4446
    %5307 = vmatprep.subr.bf16.mxu0 %v4451
    %5308 = vmatpush1.bf16.msra.mxu0 %v4450
    %5309 = vmatprep.subr.bf16.mxu0 %v4455
    %5310 = vmatpush1.bf16.msra.mxu0 %v4454
    %5311 = vmatprep.subr.bf16.mxu0 %v4459
    %5312 = vmatpush1.bf16.msra.mxu0 %v4458
    %5313 = vmatprep.subr.bf16.mxu0 %v4463
    %5314 = vmatpush1.bf16.msra.mxu0 %v4462
    %5315 = vmatprep.subr.bf16.mxu0 %v4467
    %5316 = vmatpush1.bf16.msra.mxu0 %v4466
    %5317 = vmatprep.subr.bf16.mxu0 %v4471
    %5318 = vmatpush1.bf16.msra.mxu0 %v4470
    %5319 = vmatprep.subr.bf16.mxu0 %v4475
    %5320 = vmatpush1.bf16.msra.mxu0 %v4474
    %5321 = vmatprep.subr.bf16.mxu0 0
    %5322 = vmatpush1.bf16.msra.mxu0 0
    %5323 = vmatprep.subr.bf16.mxu0 0
    %5324 = vmatpush1.bf16.msra.mxu0 0
    %5325 = vmatprep.subr.bf16.mxu0 0
    %5326 = vmatpush1.bf16.msra.mxu0 0
    %5327 = vmatprep.subr.bf16.mxu0 0
    %5328 = vmatpush1.bf16.msra.mxu0 0
    %5329 = vmatprep.subr.bf16.mxu0 0
    %5330 = vmatpush1.bf16.msra.mxu0 0
    %5331 = vmatprep.subr.bf16.mxu0 0
    %5332 = vmatpush1.bf16.msra.mxu0 0
    %5333 = vmatprep.subr.bf16.mxu0 0
    %5334 = vmatpush1.bf16.msra.mxu0 0
    %5335 = vmatprep.subr.bf16.mxu0 0
    %5336 = vmatpush1.bf16.msra.mxu0 0
    %5337 = vmatprep.mubr.bf16.mxu0 0
    %5338 = vmatmul.mubr.bf16.gmra.mrb[0].mxu0 %v5263
    %v5339 = vpop.f32.mrb[0].mxu0
    %v5340 = vadd.f32 %v5151, %v5339
    %v5341 = vpop.f32.mrb[0].mxu0
    %v5342 = vadd.f32 %v5153, %v5341
    %v5343 = vpop.f32.mrb[0].mxu0
    %v5344 = vpop.f32.mrb[0].mxu0
    %5345 = vdwg.mxu0
    %v5346 = vxor.u32 %v5299, 2147483648
    %v5347 = vmul.f32 %v5346, 1.442695
    %v5348 = vpow.pop %v5347
    %v5349 = vadd.f32 %v5348, 1.0
    %v5350 = vrcp.pop %v5349
    %v5351 = vmul.f32 1.0, %v5350
    %v5352 = vxor.u32 %v5301, 2147483648
    %v5353 = vmul.f32 %v5352, 1.442695
    %v5354 = vpow.pop %v5353
    %v5355 = vadd.f32 %v5354, 1.0
    %v5356 = vrcp.pop %v5355
    %v5357 = vmul.f32 1.0, %v5356
    %v5358 = vtanh.pop %v5340
    %v5359 = vxor.u32 %v5342, 2147483648
    %v5360 = vmul.f32 %v5359, 1.442695
    %v5361 = vpow.pop %v5360
    %v5362 = vadd.f32 %v5361, 1.0
    %v5363 = vrcp.pop %v5362
    %v5364 = vmul.f32 1.0, %v5363
    %v5365 = vmul.f32 %v5357, 0.0
    %v5366 = vmul.f32 %v5351, %v5358
    %v5367 = vadd.f32 %v5365, %v5366
    %v5368 = vtanh.pop %v5367
    %v5369 = vmul.f32 %v5364, %v5368
    %v5370 = vpack.c.bf16 %v5369, %v5369
    %5371 = vmatprep.subr.bf16.mxu0 %v4477
    %5372 = vmatpush1.bf16.msra.mxu0 %v4476
    %5373 = vmatprep.subr.bf16.mxu0 %v4481
    %5374 = vmatpush1.bf16.msra.mxu0 %v4480
    %5375 = vmatprep.subr.bf16.mxu0 %v4485
    %5376 = vmatpush1.bf16.msra.mxu0 %v4484
    %5377 = vmatprep.subr.bf16.mxu0 %v4489
    %5378 = vmatpush1.bf16.msra.mxu0 %v4488
    %5379 = vmatprep.subr.bf16.mxu0 %v4493
    %5380 = vmatpush1.bf16.msra.mxu0 %v4492
    %5381 = vmatprep.subr.bf16.mxu0 %v4497
    %5382 = vmatpush1.bf16.msra.mxu0 %v4496
    %5383 = vmatprep.subr.bf16.mxu0 %v4501
    %5384 = vmatpush1.bf16.msra.mxu0 %v4500
    %5385 = vmatprep.subr.bf16.mxu0 %v4505
    %5386 = vmatpush1.bf16.msra.mxu0 %v4504
    %5387 = vmatprep.subr.bf16.mxu0 0
    %5388 = vmatpush1.bf16.msra.mxu0 0
    %5389 = vmatprep.subr.bf16.mxu0 0
    %5390 = vmatpush1.bf16.msra.mxu0 0
    %5391 = vmatprep.subr.bf16.mxu0 0
    %5392 = vmatpush1.bf16.msra.mxu0 0
    %5393 = vmatprep.subr.bf16.mxu0 0
    %5394 = vmatpush1.bf16.msra.mxu0 0
    %5395 = vmatprep.subr.bf16.mxu0 0
    %5396 = vmatpush1.bf16.msra.mxu0 0
    %5397 = vmatprep.subr.bf16.mxu0 0
    %5398 = vmatpush1.bf16.msra.mxu0 0
    %5399 = vmatprep.subr.bf16.mxu0 0
    %5400 = vmatpush1.bf16.msra.mxu0 0
    %5401 = vmatprep.subr.bf16.mxu0 0
    %5402 = vmatpush1.bf16.msra.mxu0 0
    %5403 = vmatprep.mubr.bf16.mxu0 0
    %5404 = vmatmul.mubr.bf16.gmra.mrb[0].mxu0 %v5370
    %v5405 = vpop.f32.mrb[0].mxu0
    %v5406 = vadd.f32 %v4535, %v5405
    %v5407 = vpop.f32.mrb[0].mxu0
    %v5408 = vadd.f32 %v4539, %v5407
    %v5409 = vpop.f32.mrb[0].mxu0
    %v5410 = vpop.f32.mrb[0].mxu0
    %5411 = vdwg.mxu0
    %5412 = vmatprep.subr.bf16.mxu0 %v4479
    %5413 = vmatpush1.bf16.msra.mxu0 %v4478
    %5414 = vmatprep.subr.bf16.mxu0 %v4483
    %5415 = vmatpush1.bf16.msra.mxu0 %v4482
    %5416 = vmatprep.subr.bf16.mxu0 %v4487
    %5417 = vmatpush1.bf16.msra.mxu0 %v4486
    %5418 = vmatprep.subr.bf16.mxu0 %v4491
    %5419 = vmatpush1.bf16.msra.mxu0 %v4490
    %5420 = vmatprep.subr.bf16.mxu0 %v4495
    %5421 = vmatpush1.bf16.msra.mxu0 %v4494
    %5422 = vmatprep.subr.bf16.mxu0 %v4499
    %5423 = vmatpush1.bf16.msra.mxu0 %v4498
    %5424 = vmatprep.subr.bf16.mxu0 %v4503
    %5425 = vmatpush1.bf16.msra.mxu0 %v4502
    %5426 = vmatprep.subr.bf16.mxu0 %v4507
    %5427 = vmatpush1.bf16.msra.mxu0 %v4506
    %5428 = vmatprep.subr.bf16.mxu0 0
    %5429 = vmatpush1.bf16.msra.mxu0 0
    %5430 = vmatprep.subr.bf16.mxu0 0
    %5431 = vmatpush1.bf16.msra.mxu0 0
    %5432 = vmatprep.subr.bf16.mxu0 0
    %5433 = vmatpush1.bf16.msra.mxu0 0
    %5434 = vmatprep.subr.bf16.mxu0 0
    %5435 = vmatpush1.bf16.msra.mxu0 0
    %5436 = vmatprep.subr.bf16.mxu0 0
    %5437 = vmatpush1.bf16.msra.mxu0 0
    %5438 = vmatprep.subr.bf16.mxu0 0
    %5439 = vmatpush1.bf16.msra.mxu0 0
    %5440 = vmatprep.subr.bf16.mxu0 0
    %5441 = vmatpush1.bf16.msra.mxu0 0
    %5442 = vmatprep.subr.bf16.mxu0 0
    %5443 = vmatpush1.bf16.msra.mxu0 0
    %5444 = vmatprep.mubr.bf16.mxu0 0
    %5445 = vmatmul.mubr.bf16.gmra.mrb[0].mxu0 %v5370
    %v5446 = vpop.f32.mrb[0].mxu0
    %v5447 = vadd.f32 %v4543, %v5446
    %v5448 = vpop.f32.mrb[0].mxu0
    %v5449 = vadd.f32 %v4547, %v5448
    %v5450 = vpop.f32.mrb[0].mxu0
    %v5451 = vpop.f32.mrb[0].mxu0
    %5452 = vdwg.mxu0
    %5453 = vmatprep.subr.bf16.mxu0 %v4413
    %5454 = vmatpush1.bf16.msra.mxu0 %v4412
    %5455 = vmatprep.subr.bf16.mxu0 %v4417
    %5456 = vmatpush1.bf16.msra.mxu0 %v4416
    %5457 = vmatprep.subr.bf16.mxu0 %v4421
    %5458 = vmatpush1.bf16.msra.mxu0 %v4420
    %5459 = vmatprep.subr.bf16.mxu0 %v4425
    %5460 = vmatpush1.bf16.msra.mxu0 %v4424
    %5461 = vmatprep.subr.bf16.mxu0 %v4429
    %5462 = vmatpush1.bf16.msra.mxu0 %v4428
    %5463 = vmatprep.subr.bf16.mxu0 %v4433
    %5464 = vmatpush1.bf16.msra.mxu0 %v4432
    %5465 = vmatprep.subr.bf16.mxu0 %v4437
    %5466 = vmatpush1.bf16.msra.mxu0 %v4436
    %5467 = vmatprep.subr.bf16.mxu0 %v4441
    %5468 = vmatpush1.bf16.msra.mxu0 %v4440
    %5469 = vmatprep.subr.bf16.mxu0 0
    %5470 = vmatpush1.bf16.msra.mxu0 0
    %5471 = vmatprep.subr.bf16.mxu0 0
    %5472 = vmatpush1.bf16.msra.mxu0 0
    %5473 = vmatprep.subr.bf16.mxu0 0
    %5474 = vmatpush1.bf16.msra.mxu0 0
    %5475 = vmatprep.subr.bf16.mxu0 0
    %5476 = vmatpush1.bf16.msra.mxu0 0
    %5477 = vmatprep.subr.bf16.mxu0 0
    %5478 = vmatpush1.bf16.msra.mxu0 0
    %5479 = vmatprep.subr.bf16.mxu0 0
    %5480 = vmatpush1.bf16.msra.mxu0 0
    %5481 = vmatprep.subr.bf16.mxu0 0
    %5482 = vmatpush1.bf16.msra.mxu0 0
    %5483 = vmatprep.subr.bf16.mxu0 0
    %5484 = vmatpush1.bf16.msra.mxu0 0
    %5485 = vmatprep.mubr.bf16.mxu0 0
    %5486 = vmatmul.mubr.bf16.gmra.mrb[0].mxu0 %v5263
    %v5487 = vpop.f32.mrb[0].mxu0
    %v5488 = vadd.f32 %v4680, %v5487
    %v5489 = vpop.f32.mrb[0].mxu0
    %v5490 = vadd.f32 %v4682, %v5489
    %v5491 = vpop.f32.mrb[0].mxu0
    %v5492 = vpop.f32.mrb[0].mxu0
    %5493 = vdwg.mxu0
    %5494 = vmatprep.subr.bf16.mxu0 %v4415
    %5495 = vmatpush1.bf16.msra.mxu0 %v4414
    %5496 = vmatprep.subr.bf16.mxu0 %v4419
    %5497 = vmatpush1.bf16.msra.mxu0 %v4418
    %5498 = vmatprep.subr.bf16.mxu0 %v4423
    %5499 = vmatpush1.bf16.msra.mxu0 %v4422
    %5500 = vmatprep.subr.bf16.mxu0 %v4427
    %5501 = vmatpush1.bf16.msra.mxu0 %v4426
    %5502 = vmatprep.subr.bf16.mxu0 %v4431
    %5503 = vmatpush1.bf16.msra.mxu0 %v4430
    %5504 = vmatprep.subr.bf16.mxu0 %v4435
    %5505 = vmatpush1.bf16.msra.mxu0 %v4434
    %5506 = vmatprep.subr.bf16.mxu0 %v4439
    %5507 = vmatpush1.bf16.msra.mxu0 %v4438
    %5508 = vmatprep.subr.bf16.mxu0 %v4443
    %5509 = vmatpush1.bf16.msra.mxu0 %v4442
    %5510 = vmatprep.subr.bf16.mxu0 0
    %5511 = vmatpush1.bf16.msra.mxu0 0
    %5512 = vmatprep.subr.bf16.mxu0 0
    %5513 = vmatpush1.bf16.msra.mxu0 0
    %5514 = vmatprep.subr.bf16.mxu0 0
    %5515 = vmatpush1.bf16.msra.mxu0 0
    %5516 = vmatprep.subr.bf16.mxu0 0
    %5517 = vmatpush1.bf16.msra.mxu0 0
    %5518 = vmatprep.subr.bf16.mxu0 0
    %5519 = vmatpush1.bf16.msra.mxu0 0
    %5520 = vmatprep.subr.bf16.mxu0 0
    %5521 = vmatpush1.bf16.msra.mxu0 0
    %5522 = vmatprep.subr.bf16.mxu0 0
    %5523 = vmatpush1.bf16.msra.mxu0 0
    %5524 = vmatprep.subr.bf16.mxu0 0
    %5525 = vmatpush1.bf16.msra.mxu0 0
    %5526 = vmatprep.mubr.bf16.mxu0 0
    %5527 = vmatmul.mubr.bf16.gmra.mrb[0].mxu0 %v5263
    %v5528 = vpop.f32.mrb[0].mxu0
    %v5529 = vadd.f32 %v4721, %v5528
    %v5530 = vpop.f32.mrb[0].mxu0
    %v5531 = vadd.f32 %v4723, %v5530
    %v5532 = vpop.f32.mrb[0].mxu0
    %v5533 = vpop.f32.mrb[0].mxu0
    %5534 = vdwg.mxu0
    %v5535 = vxor.u32 %v5488, 2147483648
    %v5536 = vmul.f32 %v5535, 1.442695
    %v5537 = vpow.pop %v5536
    %v5538 = vadd.f32 %v5537, 1.0
    %v5539 = vrcp.pop %v5538
    %v5540 = vmul.f32 1.0, %v5539
    %v5541 = vxor.u32 %v5490, 2147483648
    %v5542 = vmul.f32 %v5541, 1.442695
    %v5543 = vpow.pop %v5542
    %v5544 = vadd.f32 %v5543, 1.0
    %v5545 = vrcp.pop %v5544
    %v5546 = vmul.f32 1.0, %v5545
    %v5547 = vtanh.pop %v5529
    %v5548 = vxor.u32 %v5531, 2147483648
    %v5549 = vmul.f32 %v5548, 1.442695
    %v5550 = vpow.pop %v5549
    %v5551 = vadd.f32 %v5550, 1.0
    %v5552 = vrcp.pop %v5551
    %v5553 = vmul.f32 1.0, %v5552
    %v5554 = vmul.f32 %v5546, %v5260
    %v5555 = vmul.f32 %v5540, %v5547
    %v5556 = vadd.f32 %v5554, %v5555
    %v5557 = vtanh.pop %v5556
    %v5558 = vmul.f32 %v5553, %v5557
    %v5559 = vpack.c.bf16 %v5558, %v5558
    %5560 = vmatprep.subr.bf16.mxu0 %v4445
    %5561 = vmatpush1.bf16.msra.mxu0 %v4444
    %5562 = vmatprep.subr.bf16.mxu0 %v4449
    %5563 = vmatpush1.bf16.msra.mxu0 %v4448
    %5564 = vmatprep.subr.bf16.mxu0 %v4453
    %5565 = vmatpush1.bf16.msra.mxu0 %v4452
    %5566 = vmatprep.subr.bf16.mxu0 %v4457
    %5567 = vmatpush1.bf16.msra.mxu0 %v4456
    %5568 = vmatprep.subr.bf16.mxu0 %v4461
    %5569 = vmatpush1.bf16.msra.mxu0 %v4460
    %5570 = vmatprep.subr.bf16.mxu0 %v4465
    %5571 = vmatpush1.bf16.msra.mxu0 %v4464
    %5572 = vmatprep.subr.bf16.mxu0 %v4469
    %5573 = vmatpush1.bf16.msra.mxu0 %v4468
    %5574 = vmatprep.subr.bf16.mxu0 %v4473
    %5575 = vmatpush1.bf16.msra.mxu0 %v4472
    %5576 = vmatprep.subr.bf16.mxu0 0
    %5577 = vmatpush1.bf16.msra.mxu0 0
    %5578 = vmatprep.subr.bf16.mxu0 0
    %5579 = vmatpush1.bf16.msra.mxu0 0
    %5580 = vmatprep.subr.bf16.mxu0 0
    %5581 = vmatpush1.bf16.msra.mxu0 0
    %5582 = vmatprep.subr.bf16.mxu0 0
    %5583 = vmatpush1.bf16.msra.mxu0 0
    %5584 = vmatprep.subr.bf16.mxu0 0
    %5585 = vmatpush1.bf16.msra.mxu0 0
    %5586 = vmatprep.subr.bf16.mxu0 0
    %5587 = vmatpush1.bf16.msra.mxu0 0
    %5588 = vmatprep.subr.bf16.mxu0 0
    %5589 = vmatpush1.bf16.msra.mxu0 0
    %5590 = vmatprep.subr.bf16.mxu0 0
    %5591 = vmatpush1.bf16.msra.mxu0 0
    %5592 = vmatprep.mubr.bf16.mxu0 0
    %5593 = vmatmul.mubr.bf16.gmra.mrb[0].mxu0 %v5559
    %v5594 = vpop.f32.mrb[0].mxu0
    %v5595 = vadd.f32 %v5406, %v5594
    %v5596 = vpop.f32.mrb[0].mxu0
    %v5597 = vadd.f32 %v5408, %v5596
    %v5598 = vpop.f32.mrb[0].mxu0
    %v5599 = vpop.f32.mrb[0].mxu0
    %5600 = vdwg.mxu0
    %5601 = vmatprep.subr.bf16.mxu0 %v4447
    %5602 = vmatpush1.bf16.msra.mxu0 %v4446
    %5603 = vmatprep.subr.bf16.mxu0 %v4451
    %5604 = vmatpush1.bf16.msra.mxu0 %v4450
    %5605 = vmatprep.subr.bf16.mxu0 %v4455
    %5606 = vmatpush1.bf16.msra.mxu0 %v4454
    %5607 = vmatprep.subr.bf16.mxu0 %v4459
    %5608 = vmatpush1.bf16.msra.mxu0 %v4458
    %5609 = vmatprep.subr.bf16.mxu0 %v4463
    %5610 = vmatpush1.bf16.msra.mxu0 %v4462
    %5611 = vmatprep.subr.bf16.mxu0 %v4467
    %5612 = vmatpush1.bf16.msra.mxu0 %v4466
    %5613 = vmatprep.subr.bf16.mxu0 %v4471
    %5614 = vmatpush1.bf16.msra.mxu0 %v4470
    %5615 = vmatprep.subr.bf16.mxu0 %v4475
    %5616 = vmatpush1.bf16.msra.mxu0 %v4474
    %5617 = vmatprep.subr.bf16.mxu0 0
    %5618 = vmatpush1.bf16.msra.mxu0 0
    %5619 = vmatprep.subr.bf16.mxu0 0
    %5620 = vmatpush1.bf16.msra.mxu0 0
    %5621 = vmatprep.subr.bf16.mxu0 0
    %5622 = vmatpush1.bf16.msra.mxu0 0
    %5623 = vmatprep.subr.bf16.mxu0 0
    %5624 = vmatpush1.bf16.msra.mxu0 0
    %5625 = vmatprep.subr.bf16.mxu0 0
    %5626 = vmatpush1.bf16.msra.mxu0 0
    %5627 = vmatprep.subr.bf16.mxu0 0
    %5628 = vmatpush1.bf16.msra.mxu0 0
    %5629 = vmatprep.subr.bf16.mxu0 0
    %5630 = vmatpush1.bf16.msra.mxu0 0
    %5631 = vmatprep.subr.bf16.mxu0 0
    %5632 = vmatpush1.bf16.msra.mxu0 0
    %5633 = vmatprep.mubr.bf16.mxu0 0
    %5634 = vmatmul.mubr.bf16.gmra.mrb[0].mxu0 %v5559
    %v5635 = vpop.f32.mrb[0].mxu0
    %v5636 = vadd.f32 %v5447, %v5635
    %v5637 = vpop.f32.mrb[0].mxu0
    %v5638 = vadd.f32 %v5449, %v5637
    %v5639 = vpop.f32.mrb[0].mxu0
    %v5640 = vpop.f32.mrb[0].mxu0
    %5641 = vdwg.mxu0
    %v5642 = vxor.u32 %v5595, 2147483648
    %v5643 = vmul.f32 %v5642, 1.442695
    %v5644 = vpow.pop %v5643
    %v5645 = vadd.f32 %v5644, 1.0
    %v5646 = vrcp.pop %v5645
    %v5647 = vmul.f32 1.0, %v5646
    %v5648 = vxor.u32 %v5597, 2147483648
    %v5649 = vmul.f32 %v5648, 1.442695
    %v5650 = vpow.pop %v5649
    %v5651 = vadd.f32 %v5650, 1.0
    %v5652 = vrcp.pop %v5651
    %v5653 = vmul.f32 1.0, %v5652
    %v5654 = vtanh.pop %v5636
    %v5655 = vxor.u32 %v5638, 2147483648
    %v5656 = vmul.f32 %v5655, 1.442695
    %v5657 = vpow.pop %v5656
    %v5658 = vadd.f32 %v5657, 1.0
    %v5659 = vrcp.pop %v5658
    %v5660 = vmul.f32 1.0, %v5659
    %v5661 = vmul.f32 %v5653, %v5367
    %v5662 = vmul.f32 %v5647, %v5654
    %v5663 = vadd.f32 %v5661, %v5662
    %v5664 = vtanh.pop %v5663
    %v5665 = vmul.f32 %v5660, %v5664
    %v5666 = vpack.c.bf16 %v5665, %v5665
    %5667 = vmatprep.subr.bf16.mxu0 %v4477
    %5668 = vmatpush1.bf16.msra.mxu0 %v4476
    %5669 = vmatprep.subr.bf16.mxu0 %v4481
    %5670 = vmatpush1.bf16.msra.mxu0 %v4480
    %5671 = vmatprep.subr.bf16.mxu0 %v4485
    %5672 = vmatpush1.bf16.msra.mxu0 %v4484
    %5673 = vmatprep.subr.bf16.mxu0 %v4489
    %5674 = vmatpush1.bf16.msra.mxu0 %v4488
    %5675 = vmatprep.subr.bf16.mxu0 %v4493
    %5676 = vmatpush1.bf16.msra.mxu0 %v4492
    %5677 = vmatprep.subr.bf16.mxu0 %v4497
    %5678 = vmatpush1.bf16.msra.mxu0 %v4496
    %5679 = vmatprep.subr.bf16.mxu0 %v4501
    %5680 = vmatpush1.bf16.msra.mxu0 %v4500
    %5681 = vmatprep.subr.bf16.mxu0 %v4505
    %5682 = vmatpush1.bf16.msra.mxu0 %v4504
    %5683 = vmatprep.subr.bf16.mxu0 0
    %5684 = vmatpush1.bf16.msra.mxu0 0
    %5685 = vmatprep.subr.bf16.mxu0 0
    %5686 = vmatpush1.bf16.msra.mxu0 0
    %5687 = vmatprep.subr.bf16.mxu0 0
    %5688 = vmatpush1.bf16.msra.mxu0 0
    %5689 = vmatprep.subr.bf16.mxu0 0
    %5690 = vmatpush1.bf16.msra.mxu0 0
    %5691 = vmatprep.subr.bf16.mxu0 0
    %5692 = vmatpush1.bf16.msra.mxu0 0
    %5693 = vmatprep.subr.bf16.mxu0 0
    %5694 = vmatpush1.bf16.msra.mxu0 0
    %5695 = vmatprep.subr.bf16.mxu0 0
    %5696 = vmatpush1.bf16.msra.mxu0 0
    %5697 = vmatprep.subr.bf16.mxu0 0
    %5698 = vmatpush1.bf16.msra.mxu0 0
    %5699 = vmatprep.mubr.bf16.mxu0 0
    %5700 = vmatmul.mubr.bf16.gmra.mrb[0].mxu0 %v5666
    %v5701 = vpop.f32.mrb[0].mxu0
    %v5702 = vadd.f32 %v4535, %v5701
    %v5703 = vpop.f32.mrb[0].mxu0
    %v5704 = vadd.f32 %v4539, %v5703
    %v5705 = vpop.f32.mrb[0].mxu0
    %v5706 = vpop.f32.mrb[0].mxu0
    %5707 = vdwg.mxu0
    %5708 = vmatprep.subr.bf16.mxu0 %v4479
    %5709 = vmatpush1.bf16.msra.mxu0 %v4478
    %5710 = vmatprep.subr.bf16.mxu0 %v4483
    %5711 = vmatpush1.bf16.msra.mxu0 %v4482
    %5712 = vmatprep.subr.bf16.mxu0 %v4487
    %5713 = vmatpush1.bf16.msra.mxu0 %v4486
    %5714 = vmatprep.subr.bf16.mxu0 %v4491
    %5715 = vmatpush1.bf16.msra.mxu0 %v4490
    %5716 = vmatprep.subr.bf16.mxu0 %v4495
    %5717 = vmatpush1.bf16.msra.mxu0 %v4494
    %5718 = vmatprep.subr.bf16.mxu0 %v4499
    %5719 = vmatpush1.bf16.msra.mxu0 %v4498
    %5720 = vmatprep.subr.bf16.mxu0 %v4503
    %5721 = vmatpush1.bf16.msra.mxu0 %v4502
    %5722 = vmatprep.subr.bf16.mxu0 %v4507
    %5723 = vmatpush1.bf16.msra.mxu0 %v4506
    %5724 = vmatprep.subr.bf16.mxu0 0
    %5725 = vmatpush1.bf16.msra.mxu0 0
    %5726 = vmatprep.subr.bf16.mxu0 0
    %5727 = vmatpush1.bf16.msra.mxu0 0
    %5728 = vmatprep.subr.bf16.mxu0 0
    %5729 = vmatpush1.bf16.msra.mxu0 0
    %5730 = vmatprep.subr.bf16.mxu0 0
    %5731 = vmatpush1.bf16.msra.mxu0 0
    %5732 = vmatprep.subr.bf16.mxu0 0
    %5733 = vmatpush1.bf16.msra.mxu0 0
    %5734 = vmatprep.subr.bf16.mxu0 0
    %5735 = vmatpush1.bf16.msra.mxu0 0
    %5736 = vmatprep.subr.bf16.mxu0 0
    %5737 = vmatpush1.bf16.msra.mxu0 0
    %5738 = vmatprep.subr.bf16.mxu0 0
    %5739 = vmatpush1.bf16.msra.mxu0 0
    %5740 = vmatprep.mubr.bf16.mxu0 0
    %5741 = vmatmul.mubr.bf16.gmra.mrb[0].mxu0 %v5666
    %v5742 = vpop.f32.mrb[0].mxu0
    %v5743 = vadd.f32 %v4543, %v5742
    %v5744 = vpop.f32.mrb[0].mxu0
    %v5745 = vadd.f32 %v4547, %v5744
    %v5746 = vpop.f32.mrb[0].mxu0
    %v5747 = vpop.f32.mrb[0].mxu0
    %5748 = vdwg.mxu0
    %5749 = vmatprep.subr.bf16.mxu0 %v4413
    %5750 = vmatpush1.bf16.msra.mxu0 %v4412
    %5751 = vmatprep.subr.bf16.mxu0 %v4417
    %5752 = vmatpush1.bf16.msra.mxu0 %v4416
    %5753 = vmatprep.subr.bf16.mxu0 %v4421
    %5754 = vmatpush1.bf16.msra.mxu0 %v4420
    %5755 = vmatprep.subr.bf16.mxu0 %v4425
    %5756 = vmatpush1.bf16.msra.mxu0 %v4424
    %5757 = vmatprep.subr.bf16.mxu0 %v4429
    %5758 = vmatpush1.bf16.msra.mxu0 %v4428
    %5759 = vmatprep.subr.bf16.mxu0 %v4433
    %5760 = vmatpush1.bf16.msra.mxu0 %v4432
    %5761 = vmatprep.subr.bf16.mxu0 %v4437
    %5762 = vmatpush1.bf16.msra.mxu0 %v4436
    %5763 = vmatprep.subr.bf16.mxu0 %v4441
    %5764 = vmatpush1.bf16.msra.mxu0 %v4440
    %5765 = vmatprep.subr.bf16.mxu0 0
    %5766 = vmatpush1.bf16.msra.mxu0 0
    %5767 = vmatprep.subr.bf16.mxu0 0
    %5768 = vmatpush1.bf16.msra.mxu0 0
    %5769 = vmatprep.subr.bf16.mxu0 0
    %5770 = vmatpush1.bf16.msra.mxu0 0
    %5771 = vmatprep.subr.bf16.mxu0 0
    %5772 = vmatpush1.bf16.msra.mxu0 0
    %5773 = vmatprep.subr.bf16.mxu0 0
    %5774 = vmatpush1.bf16.msra.mxu0 0
    %5775 = vmatprep.subr.bf16.mxu0 0
    %5776 = vmatpush1.bf16.msra.mxu0 0
    %5777 = vmatprep.subr.bf16.mxu0 0
    %5778 = vmatpush1.bf16.msra.mxu0 0
    %5779 = vmatprep.subr.bf16.mxu0 0
    %5780 = vmatpush1.bf16.msra.mxu0 0
    %5781 = vmatprep.mubr.bf16.mxu0 0
    %5782 = vmatmul.mubr.bf16.gmra.mrb[0].mxu0 %v5559
    %v5783 = vpop.f32.mrb[0].mxu0
    %v5784 = vadd.f32 %v4766, %v5783
    %v5785 = vpop.f32.mrb[0].mxu0
    %v5786 = vadd.f32 %v4768, %v5785
    %v5787 = vpop.f32.mrb[0].mxu0
    %v5788 = vpop.f32.mrb[0].mxu0
    %5789 = vdwg.mxu0
    %5790 = vmatprep.subr.bf16.mxu0 %v4415
    %5791 = vmatpush1.bf16.msra.mxu0 %v4414
    %5792 = vmatprep.subr.bf16.mxu0 %v4419
    %5793 = vmatpush1.bf16.msra.mxu0 %v4418
    %5794 = vmatprep.subr.bf16.mxu0 %v4423
    %5795 = vmatpush1.bf16.msra.mxu0 %v4422
    %5796 = vmatprep.subr.bf16.mxu0 %v4427
    %5797 = vmatpush1.bf16.msra.mxu0 %v4426
    %5798 = vmatprep.subr.bf16.mxu0 %v4431
    %5799 = vmatpush1.bf16.msra.mxu0 %v4430
    %5800 = vmatprep.subr.bf16.mxu0 %v4435
    %5801 = vmatpush1.bf16.msra.mxu0 %v4434
    %5802 = vmatprep.subr.bf16.mxu0 %v4439
    %5803 = vmatpush1.bf16.msra.mxu0 %v4438
    %5804 = vmatprep.subr.bf16.mxu0 %v4443
    %5805 = vmatpush1.bf16.msra.mxu0 %v4442
    %5806 = vmatprep.subr.bf16.mxu0 0
    %5807 = vmatpush1.bf16.msra.mxu0 0
    %5808 = vmatprep.subr.bf16.mxu0 0
    %5809 = vmatpush1.bf16.msra.mxu0 0
    %5810 = vmatprep.subr.bf16.mxu0 0
    %5811 = vmatpush1.bf16.msra.mxu0 0
    %5812 = vmatprep.subr.bf16.mxu0 0
    %5813 = vmatpush1.bf16.msra.mxu0 0
    %5814 = vmatprep.subr.bf16.mxu0 0
    %5815 = vmatpush1.bf16.msra.mxu0 0
    %5816 = vmatprep.subr.bf16.mxu0 0
    %5817 = vmatpush1.bf16.msra.mxu0 0
    %5818 = vmatprep.subr.bf16.mxu0 0
    %5819 = vmatpush1.bf16.msra.mxu0 0
    %5820 = vmatprep.subr.bf16.mxu0 0
    %5821 = vmatpush1.bf16.msra.mxu0 0
    %5822 = vmatprep.mubr.bf16.mxu0 0
    %5823 = vmatmul.mubr.bf16.gmra.mrb[0].mxu0 %v5559
    %v5824 = vpop.f32.mrb[0].mxu0
    %v5825 = vadd.f32 %v4807, %v5824
    %v5826 = vpop.f32.mrb[0].mxu0
    %v5827 = vadd.f32 %v4809, %v5826
    %v5828 = vpop.f32.mrb[0].mxu0
    %v5829 = vpop.f32.mrb[0].mxu0
    %5830 = vdwg.mxu0
    %v5831 = vxor.u32 %v5784, 2147483648
    %v5832 = vmul.f32 %v5831, 1.442695
    %v5833 = vpow.pop %v5832
    %v5834 = vadd.f32 %v5833, 1.0
    %v5835 = vrcp.pop %v5834
    %v5836 = vmul.f32 1.0, %v5835
    %v5837 = vxor.u32 %v5786, 2147483648
    %v5838 = vmul.f32 %v5837, 1.442695
    %v5839 = vpow.pop %v5838
    %v5840 = vadd.f32 %v5839, 1.0
    %v5841 = vrcp.pop %v5840
    %v5842 = vmul.f32 1.0, %v5841
    %v5843 = vtanh.pop %v5825
    %v5844 = vxor.u32 %v5827, 2147483648
    %v5845 = vmul.f32 %v5844, 1.442695
    %v5846 = vpow.pop %v5845
    %v5847 = vadd.f32 %v5846, 1.0
    %v5848 = vrcp.pop %v5847
    %v5849 = vmul.f32 1.0, %v5848
    %v5850 = vmul.f32 %v5842, %v5556
    %v5851 = vmul.f32 %v5836, %v5843
    %v5852 = vadd.f32 %v5850, %v5851
    %v5853 = vtanh.pop %v5852
    %v5854 = vmul.f32 %v5849, %v5853
    %v5855 = vpack.c.bf16 %v5854, %v5854
    %5856 = vmatprep.subr.bf16.mxu0 %v4445
    %5857 = vmatpush1.bf16.msra.mxu0 %v4444
    %5858 = vmatprep.subr.bf16.mxu0 %v4449
    %5859 = vmatpush1.bf16.msra.mxu0 %v4448
    %5860 = vmatprep.subr.bf16.mxu0 %v4453
    %5861 = vmatpush1.bf16.msra.mxu0 %v4452
    %5862 = vmatprep.subr.bf16.mxu0 %v4457
    %5863 = vmatpush1.bf16.msra.mxu0 %v4456
    %5864 = vmatprep.subr.bf16.mxu0 %v4461
    %5865 = vmatpush1.bf16.msra.mxu0 %v4460
    %5866 = vmatprep.subr.bf16.mxu0 %v4465
    %5867 = vmatpush1.bf16.msra.mxu0 %v4464
    %5868 = vmatprep.subr.bf16.mxu0 %v4469
    %5869 = vmatpush1.bf16.msra.mxu0 %v4468
    %5870 = vmatprep.subr.bf16.mxu0 %v4473
    %5871 = vmatpush1.bf16.msra.mxu0 %v4472
    %5872 = vmatprep.subr.bf16.mxu0 0
    %5873 = vmatpush1.bf16.msra.mxu0 0
    %5874 = vmatprep.subr.bf16.mxu0 0
    %5875 = vmatpush1.bf16.msra.mxu0 0
    %5876 = vmatprep.subr.bf16.mxu0 0
    %5877 = vmatpush1.bf16.msra.mxu0 0
    %5878 = vmatprep.subr.bf16.mxu0 0
    %5879 = vmatpush1.bf16.msra.mxu0 0
    %5880 = vmatprep.subr.bf16.mxu0 0
    %5881 = vmatpush1.bf16.msra.mxu0 0
    %5882 = vmatprep.subr.bf16.mxu0 0
    %5883 = vmatpush1.bf16.msra.mxu0 0
    %5884 = vmatprep.subr.bf16.mxu0 0
    %5885 = vmatpush1.bf16.msra.mxu0 0
    %5886 = vmatprep.subr.bf16.mxu0 0
    %5887 = vmatpush1.bf16.msra.mxu0 0
    %5888 = vmatprep.mubr.bf16.mxu0 0
    %5889 = vmatmul.mubr.bf16.gmra.mrb[0].mxu0 %v5855
    %v5890 = vpop.f32.mrb[0].mxu0
    %v5891 = vadd.f32 %v5702, %v5890
    %v5892 = vpop.f32.mrb[0].mxu0
    %v5893 = vadd.f32 %v5704, %v5892
    %v5894 = vpop.f32.mrb[0].mxu0
    %v5895 = vpop.f32.mrb[0].mxu0
    %5896 = vdwg.mxu0
    %5897 = vmatprep.subr.bf16.mxu0 %v4447
    %5898 = vmatpush1.bf16.msra.mxu0 %v4446
    %5899 = vmatprep.subr.bf16.mxu0 %v4451
    %5900 = vmatpush1.bf16.msra.mxu0 %v4450
    %5901 = vmatprep.subr.bf16.mxu0 %v4455
    %5902 = vmatpush1.bf16.msra.mxu0 %v4454
    %5903 = vmatprep.subr.bf16.mxu0 %v4459
    %5904 = vmatpush1.bf16.msra.mxu0 %v4458
    %5905 = vmatprep.subr.bf16.mxu0 %v4463
    %5906 = vmatpush1.bf16.msra.mxu0 %v4462
    %5907 = vmatprep.subr.bf16.mxu0 %v4467
    %5908 = vmatpush1.bf16.msra.mxu0 %v4466
    %5909 = vmatprep.subr.bf16.mxu0 %v4471
    %5910 = vmatpush1.bf16.msra.mxu0 %v4470
    %5911 = vmatprep.subr.bf16.mxu0 %v4475
    %5912 = vmatpush1.bf16.msra.mxu0 %v4474
    %5913 = vmatprep.subr.bf16.mxu0 0
    %5914 = vmatpush1.bf16.msra.mxu0 0
    %5915 = vmatprep.subr.bf16.mxu0 0
    %5916 = vmatpush1.bf16.msra.mxu0 0
    %5917 = vmatprep.subr.bf16.mxu0 0
    %5918 = vmatpush1.bf16.msra.mxu0 0
    %5919 = vmatprep.subr.bf16.mxu0 0
    %5920 = vmatpush1.bf16.msra.mxu0 0
    %5921 = vmatprep.subr.bf16.mxu0 0
    %5922 = vmatpush1.bf16.msra.mxu0 0
    %5923 = vmatprep.subr.bf16.mxu0 0
    %5924 = vmatpush1.bf16.msra.mxu0 0
    %5925 = vmatprep.subr.bf16.mxu0 0
    %5926 = vmatpush1.bf16.msra.mxu0 0
    %5927 = vmatprep.subr.bf16.mxu0 0
    %5928 = vmatpush1.bf16.msra.mxu0 0
    %5929 = vmatprep.mubr.bf16.mxu0 0
    %5930 = vmatmul.mubr.bf16.gmra.mrb[0].mxu0 %v5855
    %v5931 = vpop.f32.mrb[0].mxu0
    %v5932 = vadd.f32 %v5743, %v5931
    %v5933 = vpop.f32.mrb[0].mxu0
    %v5934 = vadd.f32 %v5745, %v5933
    %v5935 = vpop.f32.mrb[0].mxu0
    %v5936 = vpop.f32.mrb[0].mxu0
    %5937 = vdwg.mxu0
    %v5938 = vxor.u32 %v5891, 2147483648
    %v5939 = vmul.f32 %v5938, 1.442695
    %v5940 = vpow.pop %v5939
    %v5941 = vadd.f32 %v5940, 1.0
    %v5942 = vrcp.pop %v5941
    %v5943 = vmul.f32 1.0, %v5942
    %v5944 = vxor.u32 %v5893, 2147483648
    %v5945 = vmul.f32 %v5944, 1.442695
    %v5946 = vpow.pop %v5945
    %v5947 = vadd.f32 %v5946, 1.0
    %v5948 = vrcp.pop %v5947
    %v5949 = vmul.f32 1.0, %v5948
    %v5950 = vtanh.pop %v5932
    %v5951 = vxor.u32 %v5934, 2147483648
    %v5952 = vmul.f32 %v5951, 1.442695
    %v5953 = vpow.pop %v5952
    %v5954 = vadd.f32 %v5953, 1.0
    %v5955 = vrcp.pop %v5954
    %v5956 = vmul.f32 1.0, %v5955
    %v5957 = vmul.f32 %v5949, %v5663
    %v5958 = vmul.f32 %v5943, %v5950
    %v5959 = vadd.f32 %v5957, %v5958
    %v5960 = vtanh.pop %v5959
    %v5961 = vmul.f32 %v5956, %v5960
    %v5962 = vpack.c.bf16 %v5961, %v5961
    %5963 = vmatprep.subr.bf16.mxu0 %v4477
    %5964 = vmatpush1.bf16.msra.mxu0 %v4476
    %5965 = vmatprep.subr.bf16.mxu0 %v4481
    %5966 = vmatpush1.bf16.msra.mxu0 %v4480
    %5967 = vmatprep.subr.bf16.mxu0 %v4485
    %5968 = vmatpush1.bf16.msra.mxu0 %v4484
    %5969 = vmatprep.subr.bf16.mxu0 %v4489
    %5970 = vmatpush1.bf16.msra.mxu0 %v4488
    %5971 = vmatprep.subr.bf16.mxu0 %v4493
    %5972 = vmatpush1.bf16.msra.mxu0 %v4492
    %5973 = vmatprep.subr.bf16.mxu0 %v4497
    %5974 = vmatpush1.bf16.msra.mxu0 %v4496
    %5975 = vmatprep.subr.bf16.mxu0 %v4501
    %5976 = vmatpush1.bf16.msra.mxu0 %v4500
    %5977 = vmatprep.subr.bf16.mxu0 %v4505
    %5978 = vmatpush1.bf16.msra.mxu0 %v4504
    %5979 = vmatprep.subr.bf16.mxu0 0
    %5980 = vmatpush1.bf16.msra.mxu0 0
    %5981 = vmatprep.subr.bf16.mxu0 0
    %5982 = vmatpush1.bf16.msra.mxu0 0
    %5983 = vmatprep.subr.bf16.mxu0 0
    %5984 = vmatpush1.bf16.msra.mxu0 0
    %5985 = vmatprep.subr.bf16.mxu0 0
    %5986 = vmatpush1.bf16.msra.mxu0 0
    %5987 = vmatprep.subr.bf16.mxu0 0
    %5988 = vmatpush1.bf16.msra.mxu0 0
    %5989 = vmatprep.subr.bf16.mxu0 0
    %5990 = vmatpush1.bf16.msra.mxu0 0
    %5991 = vmatprep.subr.bf16.mxu0 0
    %5992 = vmatpush1.bf16.msra.mxu0 0
    %5993 = vmatprep.subr.bf16.mxu0 0
    %5994 = vmatpush1.bf16.msra.mxu0 0
    %5995 = vmatprep.mubr.bf16.mxu0 0
    %5996 = vmatmul.mubr.bf16.gmra.mrb[0].mxu0 %v5962
    %v5997 = vpop.f32.mrb[0].mxu0
    %v5998 = vadd.f32 %v4535, %v5997
    %v5999 = vpop.f32.mrb[0].mxu0
    %v6000 = vadd.f32 %v4539, %v5999
    %v6001 = vpop.f32.mrb[0].mxu0
    %v6002 = vpop.f32.mrb[0].mxu0
    %6003 = vdwg.mxu0
    %6004 = vmatprep.subr.bf16.mxu0 %v4479
    %6005 = vmatpush1.bf16.msra.mxu0 %v4478
    %6006 = vmatprep.subr.bf16.mxu0 %v4483
    %6007 = vmatpush1.bf16.msra.mxu0 %v4482
    %6008 = vmatprep.subr.bf16.mxu0 %v4487
    %6009 = vmatpush1.bf16.msra.mxu0 %v4486
    %6010 = vmatprep.subr.bf16.mxu0 %v4491
    %6011 = vmatpush1.bf16.msra.mxu0 %v4490
    %6012 = vmatprep.subr.bf16.mxu0 %v4495
    %6013 = vmatpush1.bf16.msra.mxu0 %v4494
    %6014 = vmatprep.subr.bf16.mxu0 %v4499
    %6015 = vmatpush1.bf16.msra.mxu0 %v4498
    %6016 = vmatprep.subr.bf16.mxu0 %v4503
    %6017 = vmatpush1.bf16.msra.mxu0 %v4502
    %6018 = vmatprep.subr.bf16.mxu0 %v4507
    %6019 = vmatpush1.bf16.msra.mxu0 %v4506
    %6020 = vmatprep.subr.bf16.mxu0 0
    %6021 = vmatpush1.bf16.msra.mxu0 0
    %6022 = vmatprep.subr.bf16.mxu0 0
    %6023 = vmatpush1.bf16.msra.mxu0 0
    %6024 = vmatprep.subr.bf16.mxu0 0
    %6025 = vmatpush1.bf16.msra.mxu0 0
    %6026 = vmatprep.subr.bf16.mxu0 0
    %6027 = vmatpush1.bf16.msra.mxu0 0
    %6028 = vmatprep.subr.bf16.mxu0 0
    %6029 = vmatpush1.bf16.msra.mxu0 0
    %6030 = vmatprep.subr.bf16.mxu0 0
    %6031 = vmatpush1.bf16.msra.mxu0 0
    %6032 = vmatprep.subr.bf16.mxu0 0
    %6033 = vmatpush1.bf16.msra.mxu0 0
    %6034 = vmatprep.subr.bf16.mxu0 0
    %6035 = vmatpush1.bf16.msra.mxu0 0
    %6036 = vmatprep.mubr.bf16.mxu0 0
    %6037 = vmatmul.mubr.bf16.gmra.mrb[0].mxu0 %v5962
    %v6038 = vpop.f32.mrb[0].mxu0
    %v6039 = vadd.f32 %v4543, %v6038
    %v6040 = vpop.f32.mrb[0].mxu0
    %v6041 = vadd.f32 %v4547, %v6040
    %v6042 = vpop.f32.mrb[0].mxu0
    %v6043 = vpop.f32.mrb[0].mxu0
    %6044 = vdwg.mxu0
    %6045 = vmatprep.subr.bf16.mxu0 %v4413
    %6046 = vmatpush1.bf16.msra.mxu0 %v4412
    %6047 = vmatprep.subr.bf16.mxu0 %v4417
    %6048 = vmatpush1.bf16.msra.mxu0 %v4416
    %6049 = vmatprep.subr.bf16.mxu0 %v4421
    %6050 = vmatpush1.bf16.msra.mxu0 %v4420
    %6051 = vmatprep.subr.bf16.mxu0 %v4425
    %6052 = vmatpush1.bf16.msra.mxu0 %v4424
    %6053 = vmatprep.subr.bf16.mxu0 %v4429
    %6054 = vmatpush1.bf16.msra.mxu0 %v4428
    %6055 = vmatprep.subr.bf16.mxu0 %v4433
    %6056 = vmatpush1.bf16.msra.mxu0 %v4432
    %6057 = vmatprep.subr.bf16.mxu0 %v4437
    %6058 = vmatpush1.bf16.msra.mxu0 %v4436
    %6059 = vmatprep.subr.bf16.mxu0 %v4441
    %6060 = vmatpush1.bf16.msra.mxu0 %v4440
    %6061 = vmatprep.subr.bf16.mxu0 0
    %6062 = vmatpush1.bf16.msra.mxu0 0
    %6063 = vmatprep.subr.bf16.mxu0 0
    %6064 = vmatpush1.bf16.msra.mxu0 0
    %6065 = vmatprep.subr.bf16.mxu0 0
    %6066 = vmatpush1.bf16.msra.mxu0 0
    %6067 = vmatprep.subr.bf16.mxu0 0
    %6068 = vmatpush1.bf16.msra.mxu0 0
    %6069 = vmatprep.subr.bf16.mxu0 0
    %6070 = vmatpush1.bf16.msra.mxu0 0
    %6071 = vmatprep.subr.bf16.mxu0 0
    %6072 = vmatpush1.bf16.msra.mxu0 0
    %6073 = vmatprep.subr.bf16.mxu0 0
    %6074 = vmatpush1.bf16.msra.mxu0 0
    %6075 = vmatprep.subr.bf16.mxu0 0
    %6076 = vmatpush1.bf16.msra.mxu0 0
    %6077 = vmatprep.mubr.bf16.mxu0 0
    %6078 = vmatmul.mubr.bf16.gmra.mrb[0].mxu0 %v5855
    %v6079 = vpop.f32.mrb[0].mxu0
    %v6080 = vadd.f32 %v4854, %v6079
    %v6081 = vpop.f32.mrb[0].mxu0
    %v6082 = vadd.f32 %v4856, %v6081
    %v6083 = vpop.f32.mrb[0].mxu0
    %v6084 = vpop.f32.mrb[0].mxu0
    %6085 = vdwg.mxu0
    %6086 = vmatprep.subr.bf16.mxu0 %v4415
    %6087 = vmatpush1.bf16.msra.mxu0 %v4414
    %6088 = vmatprep.subr.bf16.mxu0 %v4419
    %6089 = vmatpush1.bf16.msra.mxu0 %v4418
    %6090 = vmatprep.subr.bf16.mxu0 %v4423
    %6091 = vmatpush1.bf16.msra.mxu0 %v4422
    %6092 = vmatprep.subr.bf16.mxu0 %v4427
    %6093 = vmatpush1.bf16.msra.mxu0 %v4426
    %6094 = vmatprep.subr.bf16.mxu0 %v4431
    %6095 = vmatpush1.bf16.msra.mxu0 %v4430
    %6096 = vmatprep.subr.bf16.mxu0 %v4435
    %6097 = vmatpush1.bf16.msra.mxu0 %v4434
    %6098 = vmatprep.subr.bf16.mxu0 %v4439
    %6099 = vmatpush1.bf16.msra.mxu0 %v4438
    %6100 = vmatprep.subr.bf16.mxu0 %v4443
    %6101 = vmatpush1.bf16.msra.mxu0 %v4442
    %6102 = vmatprep.subr.bf16.mxu0 0
    %6103 = vmatpush1.bf16.msra.mxu0 0
    %6104 = vmatprep.subr.bf16.mxu0 0
    %6105 = vmatpush1.bf16.msra.mxu0 0
    %6106 = vmatprep.subr.bf16.mxu0 0
    %6107 = vmatpush1.bf16.msra.mxu0 0
    %6108 = vmatprep.subr.bf16.mxu0 0
    %6109 = vmatpush1.bf16.msra.mxu0 0
    %6110 = vmatprep.subr.bf16.mxu0 0
    %6111 = vmatpush1.bf16.msra.mxu0 0
    %6112 = vmatprep.subr.bf16.mxu0 0
    %6113 = vmatpush1.bf16.msra.mxu0 0
    %6114 = vmatprep.subr.bf16.mxu0 0
    %6115 = vmatpush1.bf16.msra.mxu0 0
    %6116 = vmatprep.subr.bf16.mxu0 0
    %6117 = vmatpush1.bf16.msra.mxu0 0
    %6118 = vmatprep.mubr.bf16.mxu0 0
    %6119 = vmatmul.mubr.bf16.gmra.mrb[0].mxu0 %v5855
    %v6120 = vpop.f32.mrb[0].mxu0
    %v6121 = vadd.f32 %v4895, %v6120
    %v6122 = vpop.f32.mrb[0].mxu0
    %v6123 = vadd.f32 %v4897, %v6122
    %v6124 = vpop.f32.mrb[0].mxu0
    %v6125 = vpop.f32.mrb[0].mxu0
    %6126 = vdwg.mxu0
    %v6127 = vxor.u32 %v6080, 2147483648
    %v6128 = vmul.f32 %v6127, 1.442695
    %v6129 = vpow.pop %v6128
    %v6130 = vadd.f32 %v6129, 1.0
    %v6131 = vrcp.pop %v6130
    %v6132 = vmul.f32 1.0, %v6131
    %v6133 = vxor.u32 %v6082, 2147483648
    %v6134 = vmul.f32 %v6133, 1.442695
    %v6135 = vpow.pop %v6134
    %v6136 = vadd.f32 %v6135, 1.0
    %v6137 = vrcp.pop %v6136
    %v6138 = vmul.f32 1.0, %v6137
    %v6139 = vtanh.pop %v6121
    %v6140 = vxor.u32 %v6123, 2147483648
    %v6141 = vmul.f32 %v6140, 1.442695
    %v6142 = vpow.pop %v6141
    %v6143 = vadd.f32 %v6142, 1.0
    %v6144 = vrcp.pop %v6143
    %v6145 = vmul.f32 1.0, %v6144
    %v6146 = vmul.f32 %v6138, %v5852
    %v6147 = vmul.f32 %v6132, %v6139
    %v6148 = vadd.f32 %v6146, %v6147
    %v6149 = vtanh.pop %v6148
    %v6150 = vmul.f32 %v6145, %v6149
    %v6151 = vpack.c.bf16 %v6150, %v6150
    %6152 = vmatprep.subr.bf16.mxu0 %v4445
    %6153 = vmatpush1.bf16.msra.mxu0 %v4444
    %6154 = vmatprep.subr.bf16.mxu0 %v4449
    %6155 = vmatpush1.bf16.msra.mxu0 %v4448
    %6156 = vmatprep.subr.bf16.mxu0 %v4453
    %6157 = vmatpush1.bf16.msra.mxu0 %v4452
    %6158 = vmatprep.subr.bf16.mxu0 %v4457
    %6159 = vmatpush1.bf16.msra.mxu0 %v4456
    %6160 = vmatprep.subr.bf16.mxu0 %v4461
    %6161 = vmatpush1.bf16.msra.mxu0 %v4460
    %6162 = vmatprep.subr.bf16.mxu0 %v4465
    %6163 = vmatpush1.bf16.msra.mxu0 %v4464
    %6164 = vmatprep.subr.bf16.mxu0 %v4469
    %6165 = vmatpush1.bf16.msra.mxu0 %v4468
    %6166 = vmatprep.subr.bf16.mxu0 %v4473
    %6167 = vmatpush1.bf16.msra.mxu0 %v4472
    %6168 = vmatprep.subr.bf16.mxu0 0
    %6169 = vmatpush1.bf16.msra.mxu0 0
    %6170 = vmatprep.subr.bf16.mxu0 0
    %6171 = vmatpush1.bf16.msra.mxu0 0
    %6172 = vmatprep.subr.bf16.mxu0 0
    %6173 = vmatpush1.bf16.msra.mxu0 0
    %6174 = vmatprep.subr.bf16.mxu0 0
    %6175 = vmatpush1.bf16.msra.mxu0 0
    %6176 = vmatprep.subr.bf16.mxu0 0
    %6177 = vmatpush1.bf16.msra.mxu0 0
    %6178 = vmatprep.subr.bf16.mxu0 0
    %6179 = vmatpush1.bf16.msra.mxu0 0
    %6180 = vmatprep.subr.bf16.mxu0 0
    %6181 = vmatpush1.bf16.msra.mxu0 0
    %6182 = vmatprep.subr.bf16.mxu0 0
    %6183 = vmatpush1.bf16.msra.mxu0 0
    %6184 = vmatprep.mubr.bf16.mxu0 0
    %6185 = vmatmul.mubr.bf16.gmra.mrb[0].mxu0 %v6151
    %v6186 = vpop.f32.mrb[0].mxu0
    %v6187 = vadd.f32 %v5998, %v6186
    %v6188 = vpop.f32.mrb[0].mxu0
    %v6189 = vadd.f32 %v6000, %v6188
    %v6190 = vpop.f32.mrb[0].mxu0
    %v6191 = vpop.f32.mrb[0].mxu0
    %6192 = vdwg.mxu0
    %6193 = vmatprep.subr.bf16.mxu0 %v4447
    %6194 = vmatpush1.bf16.msra.mxu0 %v4446
    %6195 = vmatprep.subr.bf16.mxu0 %v4451
    %6196 = vmatpush1.bf16.msra.mxu0 %v4450
    %6197 = vmatprep.subr.bf16.mxu0 %v4455
    %6198 = vmatpush1.bf16.msra.mxu0 %v4454
    %6199 = vmatprep.subr.bf16.mxu0 %v4459
    %6200 = vmatpush1.bf16.msra.mxu0 %v4458
    %6201 = vmatprep.subr.bf16.mxu0 %v4463
    %6202 = vmatpush1.bf16.msra.mxu0 %v4462
    %6203 = vmatprep.subr.bf16.mxu0 %v4467
    %6204 = vmatpush1.bf16.msra.mxu0 %v4466
    %6205 = vmatprep.subr.bf16.mxu0 %v4471
    %6206 = vmatpush1.bf16.msra.mxu0 %v4470
    %6207 = vmatprep.subr.bf16.mxu0 %v4475
    %6208 = vmatpush1.bf16.msra.mxu0 %v4474
    %6209 = vmatprep.subr.bf16.mxu0 0
    %6210 = vmatpush1.bf16.msra.mxu0 0
    %6211 = vmatprep.subr.bf16.mxu0 0
    %6212 = vmatpush1.bf16.msra.mxu0 0
    %6213 = vmatprep.subr.bf16.mxu0 0
    %6214 = vmatpush1.bf16.msra.mxu0 0
    %6215 = vmatprep.subr.bf16.mxu0 0
    %6216 = vmatpush1.bf16.msra.mxu0 0
    %6217 = vmatprep.subr.bf16.mxu0 0
    %6218 = vmatpush1.bf16.msra.mxu0 0
    %6219 = vmatprep.subr.bf16.mxu0 0
    %6220 = vmatpush1.bf16.msra.mxu0 0
    %6221 = vmatprep.subr.bf16.mxu0 0
    %6222 = vmatpush1.bf16.msra.mxu0 0
    %6223 = vmatprep.subr.bf16.mxu0 0
    %6224 = vmatpush1.bf16.msra.mxu0 0
    %6225 = vmatprep.mubr.bf16.mxu0 0
    %6226 = vmatmul.mubr.bf16.gmra.mrb[0].mxu0 %v6151
    %v6227 = vpop.f32.mrb[0].mxu0
    %v6228 = vadd.f32 %v6039, %v6227
    %v6229 = vpop.f32.mrb[0].mxu0
    %v6230 = vadd.f32 %v6041, %v6229
    %v6231 = vpop.f32.mrb[0].mxu0
    %v6232 = vpop.f32.mrb[0].mxu0
    %6233 = vdwg.mxu0
    %v6234 = vxor.u32 %v6187, 2147483648
    %v6235 = vmul.f32 %v6234, 1.442695
    %v6236 = vpow.pop %v6235
    %v6237 = vadd.f32 %v6236, 1.0
    %v6238 = vrcp.pop %v6237
    %v6239 = vmul.f32 1.0, %v6238
    %v6240 = vxor.u32 %v6189, 2147483648
    %v6241 = vmul.f32 %v6240, 1.442695
    %v6242 = vpow.pop %v6241
    %v6243 = vadd.f32 %v6242, 1.0
    %v6244 = vrcp.pop %v6243
    %v6245 = vmul.f32 1.0, %v6244
    %v6246 = vtanh.pop %v6228
    %v6247 = vxor.u32 %v6230, 2147483648
    %v6248 = vmul.f32 %v6247, 1.442695
    %v6249 = vpow.pop %v6248
    %v6250 = vadd.f32 %v6249, 1.0
    %v6251 = vrcp.pop %v6250
    %v6252 = vmul.f32 1.0, %v6251
    %v6253 = vmul.f32 %v6245, %v5959
    %v6254 = vmul.f32 %v6239, %v6246
    %v6255 = vadd.f32 %v6253, %v6254
    %v6256 = vtanh.pop %v6255
    %v6257 = vmul.f32 %v6252, %v6256
    %v6258 = vpack.c.bf16 %v6257, %v6257
    %6259 = vmatprep.subr.bf16.mxu0 %v4477
    %6260 = vmatpush1.bf16.msra.mxu0 %v4476
    %6261 = vmatprep.subr.bf16.mxu0 %v4481
    %6262 = vmatpush1.bf16.msra.mxu0 %v4480
    %6263 = vmatprep.subr.bf16.mxu0 %v4485
    %6264 = vmatpush1.bf16.msra.mxu0 %v4484
    %6265 = vmatprep.subr.bf16.mxu0 %v4489
    %6266 = vmatpush1.bf16.msra.mxu0 %v4488
    %6267 = vmatprep.subr.bf16.mxu0 %v4493
    %6268 = vmatpush1.bf16.msra.mxu0 %v4492
    %6269 = vmatprep.subr.bf16.mxu0 %v4497
    %6270 = vmatpush1.bf16.msra.mxu0 %v4496
    %6271 = vmatprep.subr.bf16.mxu0 %v4501
    %6272 = vmatpush1.bf16.msra.mxu0 %v4500
    %6273 = vmatprep.subr.bf16.mxu0 %v4505
    %6274 = vmatpush1.bf16.msra.mxu0 %v4504
    %6275 = vmatprep.subr.bf16.mxu0 0
    %6276 = vmatpush1.bf16.msra.mxu0 0
    %6277 = vmatprep.subr.bf16.mxu0 0
    %6278 = vmatpush1.bf16.msra.mxu0 0
    %6279 = vmatprep.subr.bf16.mxu0 0
    %6280 = vmatpush1.bf16.msra.mxu0 0
    %6281 = vmatprep.subr.bf16.mxu0 0
    %6282 = vmatpush1.bf16.msra.mxu0 0
    %6283 = vmatprep.subr.bf16.mxu0 0
    %6284 = vmatpush1.bf16.msra.mxu0 0
    %6285 = vmatprep.subr.bf16.mxu0 0
    %6286 = vmatpush1.bf16.msra.mxu0 0
    %6287 = vmatprep.subr.bf16.mxu0 0
    %6288 = vmatpush1.bf16.msra.mxu0 0
    %6289 = vmatprep.subr.bf16.mxu0 0
    %6290 = vmatpush1.bf16.msra.mxu0 0
    %6291 = vmatprep.mubr.bf16.mxu0 0
    %6292 = vmatmul.mubr.bf16.gmra.mrb[0].mxu0 %v6258
    %v6293 = vpop.f32.mrb[0].mxu0
    %v6294 = vadd.f32 %v4535, %v6293
    %v6295 = vpop.f32.mrb[0].mxu0
    %v6296 = vadd.f32 %v4539, %v6295
    %v6297 = vpop.f32.mrb[0].mxu0
    %v6298 = vpop.f32.mrb[0].mxu0
    %6299 = vdwg.mxu0
    %6300 = vmatprep.subr.bf16.mxu0 %v4479
    %6301 = vmatpush1.bf16.msra.mxu0 %v4478
    %6302 = vmatprep.subr.bf16.mxu0 %v4483
    %6303 = vmatpush1.bf16.msra.mxu0 %v4482
    %6304 = vmatprep.subr.bf16.mxu0 %v4487
    %6305 = vmatpush1.bf16.msra.mxu0 %v4486
    %6306 = vmatprep.subr.bf16.mxu0 %v4491
    %6307 = vmatpush1.bf16.msra.mxu0 %v4490
    %6308 = vmatprep.subr.bf16.mxu0 %v4495
    %6309 = vmatpush1.bf16.msra.mxu0 %v4494
    %6310 = vmatprep.subr.bf16.mxu0 %v4499
    %6311 = vmatpush1.bf16.msra.mxu0 %v4498
    %6312 = vmatprep.subr.bf16.mxu0 %v4503
    %6313 = vmatpush1.bf16.msra.mxu0 %v4502
    %6314 = vmatprep.subr.bf16.mxu0 %v4507
    %6315 = vmatpush1.bf16.msra.mxu0 %v4506
    %6316 = vmatprep.subr.bf16.mxu0 0
    %6317 = vmatpush1.bf16.msra.mxu0 0
    %6318 = vmatprep.subr.bf16.mxu0 0
    %6319 = vmatpush1.bf16.msra.mxu0 0
    %6320 = vmatprep.subr.bf16.mxu0 0
    %6321 = vmatpush1.bf16.msra.mxu0 0
    %6322 = vmatprep.subr.bf16.mxu0 0
    %6323 = vmatpush1.bf16.msra.mxu0 0
    %6324 = vmatprep.subr.bf16.mxu0 0
    %6325 = vmatpush1.bf16.msra.mxu0 0
    %6326 = vmatprep.subr.bf16.mxu0 0
    %6327 = vmatpush1.bf16.msra.mxu0 0
    %6328 = vmatprep.subr.bf16.mxu0 0
    %6329 = vmatpush1.bf16.msra.mxu0 0
    %6330 = vmatprep.subr.bf16.mxu0 0
    %6331 = vmatpush1.bf16.msra.mxu0 0
    %6332 = vmatprep.mubr.bf16.mxu0 0
    %6333 = vmatmul.mubr.bf16.gmra.mrb[0].mxu0 %v6258
    %v6334 = vpop.f32.mrb[0].mxu0
    %v6335 = vadd.f32 %v4543, %v6334
    %v6336 = vpop.f32.mrb[0].mxu0
    %v6337 = vadd.f32 %v4547, %v6336
    %v6338 = vpop.f32.mrb[0].mxu0
    %v6339 = vpop.f32.mrb[0].mxu0
    %6340 = vdwg.mxu0
    %6341 = vmatprep.subr.bf16.mxu0 %v4413
    %6342 = vmatpush1.bf16.msra.mxu0 %v4412
    %6343 = vmatprep.subr.bf16.mxu0 %v4417
    %6344 = vmatpush1.bf16.msra.mxu0 %v4416
    %6345 = vmatprep.subr.bf16.mxu0 %v4421
    %6346 = vmatpush1.bf16.msra.mxu0 %v4420
    %6347 = vmatprep.subr.bf16.mxu0 %v4425
    %6348 = vmatpush1.bf16.msra.mxu0 %v4424
    %6349 = vmatprep.subr.bf16.mxu0 %v4429
    %6350 = vmatpush1.bf16.msra.mxu0 %v4428
    %6351 = vmatprep.subr.bf16.mxu0 %v4433
    %6352 = vmatpush1.bf16.msra.mxu0 %v4432
    %6353 = vmatprep.subr.bf16.mxu0 %v4437
    %6354 = vmatpush1.bf16.msra.mxu0 %v4436
    %6355 = vmatprep.subr.bf16.mxu0 %v4441
    %6356 = vmatpush1.bf16.msra.mxu0 %v4440
    %6357 = vmatprep.subr.bf16.mxu0 0
    %6358 = vmatpush1.bf16.msra.mxu0 0
    %6359 = vmatprep.subr.bf16.mxu0 0
    %6360 = vmatpush1.bf16.msra.mxu0 0
    %6361 = vmatprep.subr.bf16.mxu0 0
    %6362 = vmatpush1.bf16.msra.mxu0 0
    %6363 = vmatprep.subr.bf16.mxu0 0
    %6364 = vmatpush1.bf16.msra.mxu0 0
    %6365 = vmatprep.subr.bf16.mxu0 0
    %6366 = vmatpush1.bf16.msra.mxu0 0
    %6367 = vmatprep.subr.bf16.mxu0 0
    %6368 = vmatpush1.bf16.msra.mxu0 0
    %6369 = vmatprep.subr.bf16.mxu0 0
    %6370 = vmatpush1.bf16.msra.mxu0 0
    %6371 = vmatprep.subr.bf16.mxu0 0
    %6372 = vmatpush1.bf16.msra.mxu0 0
    %6373 = vmatprep.mubr.bf16.mxu0 0
    %6374 = vmatmul.mubr.bf16.gmra.mrb[0].mxu0 %v6151
    %v6375 = vpop.f32.mrb[0].mxu0
    %v6376 = vadd.f32 %v4940, %v6375
    %v6377 = vpop.f32.mrb[0].mxu0
    %v6378 = vadd.f32 %v4942, %v6377
    %v6379 = vpop.f32.mrb[0].mxu0
    %v6380 = vpop.f32.mrb[0].mxu0
    %6381 = vdwg.mxu0
    %6382 = vmatprep.subr.bf16.mxu0 %v4415
    %6383 = vmatpush1.bf16.msra.mxu0 %v4414
    %6384 = vmatprep.subr.bf16.mxu0 %v4419
    %6385 = vmatpush1.bf16.msra.mxu0 %v4418
    %6386 = vmatprep.subr.bf16.mxu0 %v4423
    %6387 = vmatpush1.bf16.msra.mxu0 %v4422
    %6388 = vmatprep.subr.bf16.mxu0 %v4427
    %6389 = vmatpush1.bf16.msra.mxu0 %v4426
    %6390 = vmatprep.subr.bf16.mxu0 %v4431
    %6391 = vmatpush1.bf16.msra.mxu0 %v4430
    %6392 = vmatprep.subr.bf16.mxu0 %v4435
    %6393 = vmatpush1.bf16.msra.mxu0 %v4434
    %6394 = vmatprep.subr.bf16.mxu0 %v4439
    %6395 = vmatpush1.bf16.msra.mxu0 %v4438
    %6396 = vmatprep.subr.bf16.mxu0 %v4443
    %6397 = vmatpush1.bf16.msra.mxu0 %v4442
    %6398 = vmatprep.subr.bf16.mxu0 0
    %6399 = vmatpush1.bf16.msra.mxu0 0
    %6400 = vmatprep.subr.bf16.mxu0 0
    %6401 = vmatpush1.bf16.msra.mxu0 0
    %6402 = vmatprep.subr.bf16.mxu0 0
    %6403 = vmatpush1.bf16.msra.mxu0 0
    %6404 = vmatprep.subr.bf16.mxu0 0
    %6405 = vmatpush1.bf16.msra.mxu0 0
    %6406 = vmatprep.subr.bf16.mxu0 0
    %6407 = vmatpush1.bf16.msra.mxu0 0
    %6408 = vmatprep.subr.bf16.mxu0 0
    %6409 = vmatpush1.bf16.msra.mxu0 0
    %6410 = vmatprep.subr.bf16.mxu0 0
    %6411 = vmatpush1.bf16.msra.mxu0 0
    %6412 = vmatprep.subr.bf16.mxu0 0
    %6413 = vmatpush1.bf16.msra.mxu0 0
    %6414 = vmatprep.mubr.bf16.mxu0 0
    %6415 = vmatmul.mubr.bf16.gmra.mrb[0].mxu0 %v6151
    %v6416 = vpop.f32.mrb[0].mxu0
    %v6417 = vadd.f32 %v4981, %v6416
    %v6418 = vpop.f32.mrb[0].mxu0
    %v6419 = vadd.f32 %v4983, %v6418
    %v6420 = vpop.f32.mrb[0].mxu0
    %v6421 = vpop.f32.mrb[0].mxu0
    %6422 = vdwg.mxu0
    %v6423 = vxor.u32 %v6376, 2147483648
    %v6424 = vmul.f32 %v6423, 1.442695
    %v6425 = vpow.pop %v6424
    %v6426 = vadd.f32 %v6425, 1.0
    %v6427 = vrcp.pop %v6426
    %v6428 = vmul.f32 1.0, %v6427
    %v6429 = vxor.u32 %v6378, 2147483648
    %v6430 = vmul.f32 %v6429, 1.442695
    %v6431 = vpow.pop %v6430
    %v6432 = vadd.f32 %v6431, 1.0
    %v6433 = vrcp.pop %v6432
    %v6434 = vmul.f32 1.0, %v6433
    %v6435 = vtanh.pop %v6417
    %v6436 = vxor.u32 %v6419, 2147483648
    %v6437 = vmul.f32 %v6436, 1.442695
    %v6438 = vpow.pop %v6437
    %v6439 = vadd.f32 %v6438, 1.0
    %v6440 = vrcp.pop %v6439
    %v6441 = vmul.f32 1.0, %v6440
    %v6442 = vmul.f32 %v6434, %v6148
    %v6443 = vmul.f32 %v6428, %v6435
    %v6444 = vadd.f32 %v6442, %v6443
    %v6445 = vtanh.pop %v6444
    %v6446 = vmul.f32 %v6441, %v6445
    %v6447 = vpack.c.bf16 %v6446, %v6446
    %6448 = vmatprep.subr.bf16.mxu0 %v4445
    %6449 = vmatpush1.bf16.msra.mxu0 %v4444
    %6450 = vmatprep.subr.bf16.mxu0 %v4449
    %6451 = vmatpush1.bf16.msra.mxu0 %v4448
    %6452 = vmatprep.subr.bf16.mxu0 %v4453
    %6453 = vmatpush1.bf16.msra.mxu0 %v4452
    %6454 = vmatprep.subr.bf16.mxu0 %v4457
    %6455 = vmatpush1.bf16.msra.mxu0 %v4456
    %6456 = vmatprep.subr.bf16.mxu0 %v4461
    %6457 = vmatpush1.bf16.msra.mxu0 %v4460
    %6458 = vmatprep.subr.bf16.mxu0 %v4465
    %6459 = vmatpush1.bf16.msra.mxu0 %v4464
    %6460 = vmatprep.subr.bf16.mxu0 %v4469
    %6461 = vmatpush1.bf16.msra.mxu0 %v4468
    %6462 = vmatprep.subr.bf16.mxu0 %v4473
    %6463 = vmatpush1.bf16.msra.mxu0 %v4472
    %6464 = vmatprep.subr.bf16.mxu0 0
    %6465 = vmatpush1.bf16.msra.mxu0 0
    %6466 = vmatprep.subr.bf16.mxu0 0
    %6467 = vmatpush1.bf16.msra.mxu0 0
    %6468 = vmatprep.subr.bf16.mxu0 0
    %6469 = vmatpush1.bf16.msra.mxu0 0
    %6470 = vmatprep.subr.bf16.mxu0 0
    %6471 = vmatpush1.bf16.msra.mxu0 0
    %6472 = vmatprep.subr.bf16.mxu0 0
    %6473 = vmatpush1.bf16.msra.mxu0 0
    %6474 = vmatprep.subr.bf16.mxu0 0
    %6475 = vmatpush1.bf16.msra.mxu0 0
    %6476 = vmatprep.subr.bf16.mxu0 0
    %6477 = vmatpush1.bf16.msra.mxu0 0
    %6478 = vmatprep.subr.bf16.mxu0 0
    %6479 = vmatpush1.bf16.msra.mxu0 0
    %6480 = vmatprep.mubr.bf16.mxu0 0
    %6481 = vmatmul.mubr.bf16.gmra.mrb[0].mxu0 %v6447
    %v6482 = vpop.f32.mrb[0].mxu0
    %v6483 = vadd.f32 %v6294, %v6482
    %v6484 = vpop.f32.mrb[0].mxu0
    %v6485 = vadd.f32 %v6296, %v6484
    %v6486 = vpop.f32.mrb[0].mxu0
    %v6487 = vpop.f32.mrb[0].mxu0
    %6488 = vdwg.mxu0
    %6489 = vmatprep.subr.bf16.mxu0 %v4447
    %6490 = vmatpush1.bf16.msra.mxu0 %v4446
    %6491 = vmatprep.subr.bf16.mxu0 %v4451
    %6492 = vmatpush1.bf16.msra.mxu0 %v4450
    %6493 = vmatprep.subr.bf16.mxu0 %v4455
    %6494 = vmatpush1.bf16.msra.mxu0 %v4454
    %6495 = vmatprep.subr.bf16.mxu0 %v4459
    %6496 = vmatpush1.bf16.msra.mxu0 %v4458
    %6497 = vmatprep.subr.bf16.mxu0 %v4463
    %6498 = vmatpush1.bf16.msra.mxu0 %v4462
    %6499 = vmatprep.subr.bf16.mxu0 %v4467
    %6500 = vmatpush1.bf16.msra.mxu0 %v4466
    %6501 = vmatprep.subr.bf16.mxu0 %v4471
    %6502 = vmatpush1.bf16.msra.mxu0 %v4470
    %6503 = vmatprep.subr.bf16.mxu0 %v4475
    %6504 = vmatpush1.bf16.msra.mxu0 %v4474
    %6505 = vmatprep.subr.bf16.mxu0 0
    %6506 = vmatpush1.bf16.msra.mxu0 0
    %6507 = vmatprep.subr.bf16.mxu0 0
    %6508 = vmatpush1.bf16.msra.mxu0 0
    %6509 = vmatprep.subr.bf16.mxu0 0
    %6510 = vmatpush1.bf16.msra.mxu0 0
    %6511 = vmatprep.subr.bf16.mxu0 0
    %6512 = vmatpush1.bf16.msra.mxu0 0
    %6513 = vmatprep.subr.bf16.mxu0 0
    %6514 = vmatpush1.bf16.msra.mxu0 0
    %6515 = vmatprep.subr.bf16.mxu0 0
    %6516 = vmatpush1.bf16.msra.mxu0 0
    %6517 = vmatprep.subr.bf16.mxu0 0
    %6518 = vmatpush1.bf16.msra.mxu0 0
    %6519 = vmatprep.subr.bf16.mxu0 0
    %6520 = vmatpush1.bf16.msra.mxu0 0
    %6521 = vmatprep.mubr.bf16.mxu0 0
    %6522 = vmatmul.mubr.bf16.gmra.mrb[0].mxu0 %v6447
    %v6523 = vpop.f32.mrb[0].mxu0
    %v6524 = vadd.f32 %v6335, %v6523
    %v6525 = vpop.f32.mrb[0].mxu0
    %v6526 = vadd.f32 %v6337, %v6525
    %v6527 = vpop.f32.mrb[0].mxu0
    %v6528 = vpop.f32.mrb[0].mxu0
    %6529 = vdwg.mxu0
    %v6530 = vxor.u32 %v6483, 2147483648
    %v6531 = vmul.f32 %v6530, 1.442695
    %v6532 = vpow.pop %v6531
    %v6533 = vadd.f32 %v6532, 1.0
    %v6534 = vrcp.pop %v6533
    %v6535 = vmul.f32 1.0, %v6534
    %v6536 = vxor.u32 %v6485, 2147483648
    %v6537 = vmul.f32 %v6536, 1.442695
    %v6538 = vpow.pop %v6537
    %v6539 = vadd.f32 %v6538, 1.0
    %v6540 = vrcp.pop %v6539
    %v6541 = vmul.f32 1.0, %v6540
    %v6542 = vtanh.pop %v6524
    %v6543 = vxor.u32 %v6526, 2147483648
    %v6544 = vmul.f32 %v6543, 1.442695
    %v6545 = vpow.pop %v6544
    %v6546 = vadd.f32 %v6545, 1.0
    %v6547 = vrcp.pop %v6546
    %v6548 = vmul.f32 1.0, %v6547
    %v6549 = vmul.f32 %v6541, %v6255
    %v6550 = vmul.f32 %v6535, %v6542
    %v6551 = vadd.f32 %v6549, %v6550
    %v6552 = vtanh.pop %v6551
    %v6553 = vmul.f32 %v6548, %v6552
    %v6554 = vpack.c.bf16 %v6553, %v6553
    %6555 = vmatprep.subr.bf16.mxu0 %v4477
    %6556 = vmatpush1.bf16.msra.mxu0 %v4476
    %6557 = vmatprep.subr.bf16.mxu0 %v4481
    %6558 = vmatpush1.bf16.msra.mxu0 %v4480
    %6559 = vmatprep.subr.bf16.mxu0 %v4485
    %6560 = vmatpush1.bf16.msra.mxu0 %v4484
    %6561 = vmatprep.subr.bf16.mxu0 %v4489
    %6562 = vmatpush1.bf16.msra.mxu0 %v4488
    %6563 = vmatprep.subr.bf16.mxu0 %v4493
    %6564 = vmatpush1.bf16.msra.mxu0 %v4492
    %6565 = vmatprep.subr.bf16.mxu0 %v4497
    %6566 = vmatpush1.bf16.msra.mxu0 %v4496
    %6567 = vmatprep.subr.bf16.mxu0 %v4501
    %6568 = vmatpush1.bf16.msra.mxu0 %v4500
    %6569 = vmatprep.subr.bf16.mxu0 %v4505
    %6570 = vmatpush1.bf16.msra.mxu0 %v4504
    %6571 = vmatprep.subr.bf16.mxu0 0
    %6572 = vmatpush1.bf16.msra.mxu0 0
    %6573 = vmatprep.subr.bf16.mxu0 0
    %6574 = vmatpush1.bf16.msra.mxu0 0
    %6575 = vmatprep.subr.bf16.mxu0 0
    %6576 = vmatpush1.bf16.msra.mxu0 0
    %6577 = vmatprep.subr.bf16.mxu0 0
    %6578 = vmatpush1.bf16.msra.mxu0 0
    %6579 = vmatprep.subr.bf16.mxu0 0
    %6580 = vmatpush1.bf16.msra.mxu0 0
    %6581 = vmatprep.subr.bf16.mxu0 0
    %6582 = vmatpush1.bf16.msra.mxu0 0
    %6583 = vmatprep.subr.bf16.mxu0 0
    %6584 = vmatpush1.bf16.msra.mxu0 0
    %6585 = vmatprep.subr.bf16.mxu0 0
    %6586 = vmatpush1.bf16.msra.mxu0 0
    %6587 = vmatprep.mubr.bf16.mxu0 0
    %6588 = vmatmul.mubr.bf16.gmra.mrb[0].mxu0 %v6554
    %v6589 = vpop.f32.mrb[0].mxu0
    %v6590 = vadd.f32 %v4535, %v6589
    %v6591 = vpop.f32.mrb[0].mxu0
    %v6592 = vadd.f32 %v4539, %v6591
    %v6593 = vpop.f32.mrb[0].mxu0
    %v6594 = vpop.f32.mrb[0].mxu0
    %6595 = vdwg.mxu0
    %6596 = vmatprep.subr.bf16.mxu0 %v4479
    %6597 = vmatpush1.bf16.msra.mxu0 %v4478
    %6598 = vmatprep.subr.bf16.mxu0 %v4483
    %6599 = vmatpush1.bf16.msra.mxu0 %v4482
    %6600 = vmatprep.subr.bf16.mxu0 %v4487
    %6601 = vmatpush1.bf16.msra.mxu0 %v4486
    %6602 = vmatprep.subr.bf16.mxu0 %v4491
    %6603 = vmatpush1.bf16.msra.mxu0 %v4490
    %6604 = vmatprep.subr.bf16.mxu0 %v4495
    %6605 = vmatpush1.bf16.msra.mxu0 %v4494
    %6606 = vmatprep.subr.bf16.mxu0 %v4499
    %6607 = vmatpush1.bf16.msra.mxu0 %v4498
    %6608 = vmatprep.subr.bf16.mxu0 %v4503
    %6609 = vmatpush1.bf16.msra.mxu0 %v4502
    %6610 = vmatprep.subr.bf16.mxu0 %v4507
    %6611 = vmatpush1.bf16.msra.mxu0 %v4506
    %6612 = vmatprep.subr.bf16.mxu0 0
    %6613 = vmatpush1.bf16.msra.mxu0 0
    %6614 = vmatprep.subr.bf16.mxu0 0
    %6615 = vmatpush1.bf16.msra.mxu0 0
    %6616 = vmatprep.subr.bf16.mxu0 0
    %6617 = vmatpush1.bf16.msra.mxu0 0
    %6618 = vmatprep.subr.bf16.mxu0 0
    %6619 = vmatpush1.bf16.msra.mxu0 0
    %6620 = vmatprep.subr.bf16.mxu0 0
    %6621 = vmatpush1.bf16.msra.mxu0 0
    %6622 = vmatprep.subr.bf16.mxu0 0
    %6623 = vmatpush1.bf16.msra.mxu0 0
    %6624 = vmatprep.subr.bf16.mxu0 0
    %6625 = vmatpush1.bf16.msra.mxu0 0
    %6626 = vmatprep.subr.bf16.mxu0 0
    %6627 = vmatpush1.bf16.msra.mxu0 0
    %6628 = vmatprep.mubr.bf16.mxu0 0
    %6629 = vmatmul.mubr.bf16.gmra.mrb[0].mxu0 %v6554
    %v6630 = vpop.f32.mrb[0].mxu0
    %v6631 = vadd.f32 %v4543, %v6630
    %v6632 = vpop.f32.mrb[0].mxu0
    %v6633 = vadd.f32 %v4547, %v6632
    %v6634 = vpop.f32.mrb[0].mxu0
    %v6635 = vpop.f32.mrb[0].mxu0
    %6636 = vdwg.mxu0
    %6637 = vmatprep.subr.bf16.mxu0 %v4413
    %6638 = vmatpush1.bf16.msra.mxu0 %v4412
    %6639 = vmatprep.subr.bf16.mxu0 %v4417
    %6640 = vmatpush1.bf16.msra.mxu0 %v4416
    %6641 = vmatprep.subr.bf16.mxu0 %v4421
    %6642 = vmatpush1.bf16.msra.mxu0 %v4420
    %6643 = vmatprep.subr.bf16.mxu0 %v4425
    %6644 = vmatpush1.bf16.msra.mxu0 %v4424
    %6645 = vmatprep.subr.bf16.mxu0 %v4429
    %6646 = vmatpush1.bf16.msra.mxu0 %v4428
    %6647 = vmatprep.subr.bf16.mxu0 %v4433
    %6648 = vmatpush1.bf16.msra.mxu0 %v4432
    %6649 = vmatprep.subr.bf16.mxu0 %v4437
    %6650 = vmatpush1.bf16.msra.mxu0 %v4436
    %6651 = vmatprep.subr.bf16.mxu0 %v4441
    %6652 = vmatpush1.bf16.msra.mxu0 %v4440
    %6653 = vmatprep.subr.bf16.mxu0 0
    %6654 = vmatpush1.bf16.msra.mxu0 0
    %6655 = vmatprep.subr.bf16.mxu0 0
    %6656 = vmatpush1.bf16.msra.mxu0 0
    %6657 = vmatprep.subr.bf16.mxu0 0
    %6658 = vmatpush1.bf16.msra.mxu0 0
    %6659 = vmatprep.subr.bf16.mxu0 0
    %6660 = vmatpush1.bf16.msra.mxu0 0
    %6661 = vmatprep.subr.bf16.mxu0 0
    %6662 = vmatpush1.bf16.msra.mxu0 0
    %6663 = vmatprep.subr.bf16.mxu0 0
    %6664 = vmatpush1.bf16.msra.mxu0 0
    %6665 = vmatprep.subr.bf16.mxu0 0
    %6666 = vmatpush1.bf16.msra.mxu0 0
    %6667 = vmatprep.subr.bf16.mxu0 0
    %6668 = vmatpush1.bf16.msra.mxu0 0
    %6669 = vmatprep.mubr.bf16.mxu0 0
    %6670 = vmatmul.mubr.bf16.gmra.mrb[0].mxu0 %v6447
    %v6671 = vpop.f32.mrb[0].mxu0
    %v6672 = vadd.f32 %v5028, %v6671
    %v6673 = vpop.f32.mrb[0].mxu0
    %v6674 = vadd.f32 %v5030, %v6673
    %v6675 = vpop.f32.mrb[0].mxu0
    %v6676 = vpop.f32.mrb[0].mxu0
    %6677 = vdwg.mxu0
    %6678 = vmatprep.subr.bf16.mxu0 %v4415
    %6679 = vmatpush1.bf16.msra.mxu0 %v4414
    %6680 = vmatprep.subr.bf16.mxu0 %v4419
    %6681 = vmatpush1.bf16.msra.mxu0 %v4418
    %6682 = vmatprep.subr.bf16.mxu0 %v4423
    %6683 = vmatpush1.bf16.msra.mxu0 %v4422
    %6684 = vmatprep.subr.bf16.mxu0 %v4427
    %6685 = vmatpush1.bf16.msra.mxu0 %v4426
    %6686 = vmatprep.subr.bf16.mxu0 %v4431
    %6687 = vmatpush1.bf16.msra.mxu0 %v4430
    %6688 = vmatprep.subr.bf16.mxu0 %v4435
    %6689 = vmatpush1.bf16.msra.mxu0 %v4434
    %6690 = vmatprep.subr.bf16.mxu0 %v4439
    %6691 = vmatpush1.bf16.msra.mxu0 %v4438
    %6692 = vmatprep.subr.bf16.mxu0 %v4443
    %6693 = vmatpush1.bf16.msra.mxu0 %v4442
    %6694 = vmatprep.subr.bf16.mxu0 0
    %6695 = vmatpush1.bf16.msra.mxu0 0
    %6696 = vmatprep.subr.bf16.mxu0 0
    %6697 = vmatpush1.bf16.msra.mxu0 0
    %6698 = vmatprep.subr.bf16.mxu0 0
    %6699 = vmatpush1.bf16.msra.mxu0 0
    %6700 = vmatprep.subr.bf16.mxu0 0
    %6701 = vmatpush1.bf16.msra.mxu0 0
    %6702 = vmatprep.subr.bf16.mxu0 0
    %6703 = vmatpush1.bf16.msra.mxu0 0
    %6704 = vmatprep.subr.bf16.mxu0 0
    %6705 = vmatpush1.bf16.msra.mxu0 0
    %6706 = vmatprep.subr.bf16.mxu0 0
    %6707 = vmatpush1.bf16.msra.mxu0 0
    %6708 = vmatprep.subr.bf16.mxu0 0
    %6709 = vmatpush1.bf16.msra.mxu0 0
    %6710 = vmatprep.mubr.bf16.mxu0 0
    %6711 = vmatmul.mubr.bf16.gmra.mrb[0].mxu0 %v6447
    %v6712 = vpop.f32.mrb[0].mxu0
    %v6713 = vadd.f32 %v5069, %v6712
    %v6714 = vpop.f32.mrb[0].mxu0
    %v6715 = vadd.f32 %v5071, %v6714
    %v6716 = vpop.f32.mrb[0].mxu0
    %v6717 = vpop.f32.mrb[0].mxu0
    %6718 = vdwg.mxu0
    %v6719 = vxor.u32 %v6672, 2147483648
    %v6720 = vmul.f32 %v6719, 1.442695
    %v6721 = vpow.pop %v6720
    %v6722 = vadd.f32 %v6721, 1.0
    %v6723 = vrcp.pop %v6722
    %v6724 = vmul.f32 1.0, %v6723
    %v6725 = vxor.u32 %v6674, 2147483648
    %v6726 = vmul.f32 %v6725, 1.442695
    %v6727 = vpow.pop %v6726
    %v6728 = vadd.f32 %v6727, 1.0
    %v6729 = vrcp.pop %v6728
    %v6730 = vmul.f32 1.0, %v6729
    %v6731 = vtanh.pop %v6713
    %v6732 = vxor.u32 %v6715, 2147483648
    %v6733 = vmul.f32 %v6732, 1.442695
    %v6734 = vpow.pop %v6733
    %v6735 = vadd.f32 %v6734, 1.0
    %v6736 = vrcp.pop %v6735
    %v6737 = vmul.f32 1.0, %v6736
    %v6738 = vmul.f32 %v6730, %v6444
    %v6739 = vmul.f32 %v6724, %v6731
    %v6740 = vadd.f32 %v6738, %v6739
    %v6741 = vtanh.pop %v6740
    %v6742 = vmul.f32 %v6737, %v6741
    %v6743 = vpack.c.bf16 %v6742, %v6742
    %6744 = vmatprep.subr.bf16.mxu0 %v4445
    %6745 = vmatpush1.bf16.msra.mxu0 %v4444
    %6746 = vmatprep.subr.bf16.mxu0 %v4449
    %6747 = vmatpush1.bf16.msra.mxu0 %v4448
    %6748 = vmatprep.subr.bf16.mxu0 %v4453
    %6749 = vmatpush1.bf16.msra.mxu0 %v4452
    %6750 = vmatprep.subr.bf16.mxu0 %v4457
    %6751 = vmatpush1.bf16.msra.mxu0 %v4456
    %6752 = vmatprep.subr.bf16.mxu0 %v4461
    %6753 = vmatpush1.bf16.msra.mxu0 %v4460
    %6754 = vmatprep.subr.bf16.mxu0 %v4465
    %6755 = vmatpush1.bf16.msra.mxu0 %v4464
    %6756 = vmatprep.subr.bf16.mxu0 %v4469
    %6757 = vmatpush1.bf16.msra.mxu0 %v4468
    %6758 = vmatprep.subr.bf16.mxu0 %v4473
    %6759 = vmatpush1.bf16.msra.mxu0 %v4472
    %6760 = vmatprep.subr.bf16.mxu0 0
    %6761 = vmatpush1.bf16.msra.mxu0 0
    %6762 = vmatprep.subr.bf16.mxu0 0
    %6763 = vmatpush1.bf16.msra.mxu0 0
    %6764 = vmatprep.subr.bf16.mxu0 0
    %6765 = vmatpush1.bf16.msra.mxu0 0
    %6766 = vmatprep.subr.bf16.mxu0 0
    %6767 = vmatpush1.bf16.msra.mxu0 0
    %6768 = vmatprep.subr.bf16.mxu0 0
    %6769 = vmatpush1.bf16.msra.mxu0 0
    %6770 = vmatprep.subr.bf16.mxu0 0
    %6771 = vmatpush1.bf16.msra.mxu0 0
    %6772 = vmatprep.subr.bf16.mxu0 0
    %6773 = vmatpush1.bf16.msra.mxu0 0
    %6774 = vmatprep.subr.bf16.mxu0 0
    %6775 = vmatpush1.bf16.msra.mxu0 0
    %6776 = vmatprep.mubr.bf16.mxu0 0
    %6777 = vmatmul.mubr.bf16.gmra.mrb[0].mxu0 %v6743
    %v6778 = vpop.f32.mrb[0].mxu0
    %v6779 = vadd.f32 %v6590, %v6778
    %v6780 = vpop.f32.mrb[0].mxu0
    %v6781 = vadd.f32 %v6592, %v6780
    %v6782 = vpop.f32.mrb[0].mxu0
    %v6783 = vpop.f32.mrb[0].mxu0
    %6784 = vdwg.mxu0
    %6785 = vmatprep.subr.bf16.mxu0 %v4447
    %6786 = vmatpush1.bf16.msra.mxu0 %v4446
    %6787 = vmatprep.subr.bf16.mxu0 %v4451
    %6788 = vmatpush1.bf16.msra.mxu0 %v4450
    %6789 = vmatprep.subr.bf16.mxu0 %v4455
    %6790 = vmatpush1.bf16.msra.mxu0 %v4454
    %6791 = vmatprep.subr.bf16.mxu0 %v4459
    %6792 = vmatpush1.bf16.msra.mxu0 %v4458
    %6793 = vmatprep.subr.bf16.mxu0 %v4463
    %6794 = vmatpush1.bf16.msra.mxu0 %v4462
    %6795 = vmatprep.subr.bf16.mxu0 %v4467
    %6796 = vmatpush1.bf16.msra.mxu0 %v4466
    %6797 = vmatprep.subr.bf16.mxu0 %v4471
    %6798 = vmatpush1.bf16.msra.mxu0 %v4470
    %6799 = vmatprep.subr.bf16.mxu0 %v4475
    %6800 = vmatpush1.bf16.msra.mxu0 %v4474
    %6801 = vmatprep.subr.bf16.mxu0 0
    %6802 = vmatpush1.bf16.msra.mxu0 0
    %6803 = vmatprep.subr.bf16.mxu0 0
    %6804 = vmatpush1.bf16.msra.mxu0 0
    %6805 = vmatprep.subr.bf16.mxu0 0
    %6806 = vmatpush1.bf16.msra.mxu0 0
    %6807 = vmatprep.subr.bf16.mxu0 0
    %6808 = vmatpush1.bf16.msra.mxu0 0
    %6809 = vmatprep.subr.bf16.mxu0 0
    %6810 = vmatpush1.bf16.msra.mxu0 0
    %6811 = vmatprep.subr.bf16.mxu0 0
    %6812 = vmatpush1.bf16.msra.mxu0 0
    %6813 = vmatprep.subr.bf16.mxu0 0
    %6814 = vmatpush1.bf16.msra.mxu0 0
    %6815 = vmatprep.subr.bf16.mxu0 0
    %6816 = vmatpush1.bf16.msra.mxu0 0
    %6817 = vmatprep.mubr.bf16.mxu0 0
    %6818 = vmatmul.mubr.bf16.gmra.mrb[0].mxu0 %v6743
    %v6819 = vpop.f32.mrb[0].mxu0
    %v6820 = vadd.f32 %v6631, %v6819
    %v6821 = vpop.f32.mrb[0].mxu0
    %v6822 = vadd.f32 %v6633, %v6821
    %v6823 = vpop.f32.mrb[0].mxu0
    %v6824 = vpop.f32.mrb[0].mxu0
    %6825 = vdwg.mxu0
    %v6826 = vxor.u32 %v6779, 2147483648
    %v6827 = vmul.f32 %v6826, 1.442695
    %v6828 = vpow.pop %v6827
    %v6829 = vadd.f32 %v6828, 1.0
    %v6830 = vrcp.pop %v6829
    %v6831 = vmul.f32 1.0, %v6830
    %v6832 = vxor.u32 %v6781, 2147483648
    %v6833 = vmul.f32 %v6832, 1.442695
    %v6834 = vpow.pop %v6833
    %v6835 = vadd.f32 %v6834, 1.0
    %v6836 = vrcp.pop %v6835
    %v6837 = vmul.f32 1.0, %v6836
    %v6838 = vtanh.pop %v6820
    %v6839 = vxor.u32 %v6822, 2147483648
    %v6840 = vmul.f32 %v6839, 1.442695
    %v6841 = vpow.pop %v6840
    %v6842 = vadd.f32 %v6841, 1.0
    %v6843 = vrcp.pop %v6842
    %v6844 = vmul.f32 1.0, %v6843
    %v6845 = vmul.f32 %v6837, %v6551
    %v6846 = vmul.f32 %v6831, %v6838
    %v6847 = vadd.f32 %v6845, %v6846
    %v6848 = vtanh.pop %v6847
    %v6849 = vmul.f32 %v6844, %v6848
    %s6850 = smul.u32 4, 16
    %s6851 = smul.u32 %s6850, 2
    %s6852 = sshll.u32 %s6851, 4
    %6853 = dma.done %s123, %s6852
    %v6854 = vld [vmem:[#allocation4] sm:$0xff]
    %v6855 = vld [vmem:[#allocation4 + $0x10] sm:$0xff]
    %v6856 = vld [vmem:[#allocation4 + $0x20] sm:$0xff]
    %v6857 = vld [vmem:[#allocation4 + $0x30] sm:$0xff]
    %v6858 = vld [vmem:[#allocation4 + $0x40] sm:$0xff]
    %v6859 = vld [vmem:[#allocation4 + $0x50] sm:$0xff]
    %v6860 = vld [vmem:[#allocation4 + $0x60] sm:$0xff]
    %v6861 = vld [vmem:[#allocation4 + $0x70] sm:$0xff]
    %v6862 = vld [vmem:[#allocation4 + $0x8] sm:$0xff]
    %v6863 = vld [vmem:[#allocation4 + $0x18] sm:$0xff]
    %v6864 = vld [vmem:[#allocation4 + $0x28] sm:$0xff]
    %v6865 = vld [vmem:[#allocation4 + $0x38] sm:$0xff]
    %v6866 = vld [vmem:[#allocation4 + $0x48] sm:$0xff]
    %v6867 = vld [vmem:[#allocation4 + $0x58] sm:$0xff]
    %v6868 = vld [vmem:[#allocation4 + $0x68] sm:$0xff]
    %v6869 = vld [vmem:[#allocation4 + $0x78] sm:$0xff]
    %6870 = vadd.xlane.f32.xlu0 %v6849
    %v6871 = vpop.xlane.xlu0 %6870
    %v6872 = vrcp.pop 128.0
    %v6873 = vmul.f32 %v6871, %v6872
    %v6874 = vsub.f32 %v6849, %v6873
    %v6875 = vmul.f32 %v6874, %v6874
    %6876 = vadd.xlane.f32.xlu0 %v6875
    %v6877 = vpop.xlane.xlu0 %6876
    %v6878 = vmul.f32 %v6877, %v6872
    %v6879 = vadd.f32 %v6878, 1e-05
    %v6880 = vrsqrt.pop %v6879
    %v6881 = vmul.f32 %v6874, %v6880
    %v6882 = vld [vmem:[%s6] sm:$0x1]
    %v6884 = vlaneseq
    %v6885 = vshrl.u32 %v6884, 7
    %v6886 = vsub.s32 0, %v6885
    %v6887 = vrot.slane %v6882, %v6886
    %v6889 = vmul.f32 %v6881, %v6887
    %v6890 = vld [vmem:[%s7] sm:$0x1]
    %v6892 = vlaneseq
    %v6893 = vshrl.u32 %v6892, 7
    %v6894 = vsub.s32 0, %v6893
    %v6895 = vrot.slane %v6890, %v6894
    %v6897 = vadd.f32 %v6889, %v6895
    %v6898 = vpack.c.bf16 %v6897, %v6897
    %v6899 = vld [vmem:[%s8] sm:$0x1]
    %v6901 = vlaneseq
    %v6902 = vshrl.u32 %v6901, 7
    %v6903 = vsub.s32 0, %v6902
    %v6904 = vrot.slane %v6899, %v6903
    %6906 = vmatprep.subr.bf16.mxu0 0
    %6907 = vmatpush1.bf16.msra.mxu0 %v6854
    %6908 = vmatprep.subr.bf16.mxu0 0
    %6909 = vmatpush1.bf16.msra.mxu0 %v6855
    %6910 = vmatprep.subr.bf16.mxu0 0
    %6911 = vmatpush1.bf16.msra.mxu0 %v6856
    %6912 = vmatprep.subr.bf16.mxu0 0
    %6913 = vmatpush1.bf16.msra.mxu0 %v6857
    %6914 = vmatprep.subr.bf16.mxu0 0
    %6915 = vmatpush1.bf16.msra.mxu0 %v6858
    %6916 = vmatprep.subr.bf16.mxu0 0
    %6917 = vmatpush1.bf16.msra.mxu0 %v6859
    %6918 = vmatprep.subr.bf16.mxu0 0
    %6919 = vmatpush1.bf16.msra.mxu0 %v6860
    %6920 = vmatprep.subr.bf16.mxu0 0
    %6921 = vmatpush1.bf16.msra.mxu0 %v6861
    %6922 = vmatprep.subr.bf16.mxu0 0
    %6923 = vmatpush1.bf16.msra.mxu0 0
    %6924 = vmatprep.subr.bf16.mxu0 0
    %6925 = vmatpush1.bf16.msra.mxu0 0
    %6926 = vmatprep.subr.bf16.mxu0 0
    %6927 = vmatpush1.bf16.msra.mxu0 0
    %6928 = vmatprep.subr.bf16.mxu0 0
    %6929 = vmatpush1.bf16.msra.mxu0 0
    %6930 = vmatprep.subr.bf16.mxu0 0
    %6931 = vmatpush1.bf16.msra.mxu0 0
    %6932 = vmatprep.subr.bf16.mxu0 0
    %6933 = vmatpush1.bf16.msra.mxu0 0
    %6934 = vmatprep.subr.bf16.mxu0 0
    %6935 = vmatpush1.bf16.msra.mxu0 0
    %6936 = vmatprep.subr.bf16.mxu0 0
    %6937 = vmatpush1.bf16.msra.mxu0 0
    %6938 = vmatprep.mubr.bf16.mxu0 0
    %6939 = vmatmul.mubr.bf16.gmra.mrb[0].mxu0 %v6898
    %v6940 = vpop.f32.mrb[0].mxu0
    %v6941 = vadd.f32 %v6904, %v6940
    %v6942 = vpop.f32.mrb[0].mxu0
    %v6943 = vpop.f32.mrb[0].mxu0
    %v6944 = vpop.f32.mrb[0].mxu0
    %6945 = vdwg.mxu0
    %v6946 = vmul.f32 %v6941, %v6941
    %v6947 = vmul.f32 %v6941, %v6946
    %v6948 = vmul.f32 %v6947, 0.044715
    %v6949 = vadd.f32 %v6941, %v6948
    %v6950 = vmul.f32 %v6949, 0.7978846
    %v6951 = vtanh.pop %v6950
    %v6952 = vadd.f32 %v6951, 1.0
    %v6953 = vmul.f32 %v6952, 0.5
    %v6954 = vmul.f32 %v6941, %v6953
    %v6955 = vpack.c.bf16 %v6954, %v6954
    %v6956 = vld [vmem:[%s9] sm:$0x1]
    %v6958 = vlaneseq
    %v6959 = vshrl.u32 %v6958, 7
    %v6960 = vsub.s32 0, %v6959
    %v6961 = vrot.slane %v6956, %v6960
    %6963 = vmatprep.subr.bf16.mxu0 0
    %6964 = vmatpush1.bf16.msra.mxu0 %v6862
    %6965 = vmatprep.subr.bf16.mxu0 0
    %6966 = vmatpush1.bf16.msra.mxu0 %v6863
    %6967 = vmatprep.subr.bf16.mxu0 0
    %6968 = vmatpush1.bf16.msra.mxu0 %v6864
    %6969 = vmatprep.subr.bf16.mxu0 0
    %6970 = vmatpush1.bf16.msra.mxu0 %v6865
    %6971 = vmatprep.subr.bf16.mxu0 0
    %6972 = vmatpush1.bf16.msra.mxu0 %v6866
    %6973 = vmatprep.subr.bf16.mxu0 0
    %6974 = vmatpush1.bf16.msra.mxu0 %v6867
    %6975 = vmatprep.subr.bf16.mxu0 0
    %6976 = vmatpush1.bf16.msra.mxu0 %v6868
    %6977 = vmatprep.subr.bf16.mxu0 0
    %6978 = vmatpush1.bf16.msra.mxu0 %v6869
    %6979 = vmatprep.subr.bf16.mxu0 0
    %6980 = vmatpush1.bf16.msra.mxu0 0
    %6981 = vmatprep.subr.bf16.mxu0 0
    %6982 = vmatpush1.bf16.msra.mxu0 0
    %6983 = vmatprep.subr.bf16.mxu0 0
    %6984 = vmatpush1.bf16.msra.mxu0 0
    %6985 = vmatprep.subr.bf16.mxu0 0
    %6986 = vmatpush1.bf16.msra.mxu0 0
    %6987 = vmatprep.subr.bf16.mxu0 0
    %6988 = vmatpush1.bf16.msra.mxu0 0
    %6989 = vmatprep.subr.bf16.mxu0 0
    %6990 = vmatpush1.bf16.msra.mxu0 0
    %6991 = vmatprep.subr.bf16.mxu0 0
    %6992 = vmatpush1.bf16.msra.mxu0 0
    %6993 = vmatprep.subr.bf16.mxu0 0
    %6994 = vmatpush1.bf16.msra.mxu0 0
    %6995 = vmatprep.mubr.bf16.mxu0 0
    %6996 = vmatmul.mubr.bf16.gmra.mrb[0].mxu0 %v6955
    %v6997 = vpop.f32.mrb[0].mxu0
    %v6998 = vadd.f32 %v6961, %v6997
    %v6999 = vpop.f32.mrb[0].mxu0
    %v7000 = vpop.f32.mrb[0].mxu0
    %v7001 = vpop.f32.mrb[0].mxu0
    %7002 = vdwg.mxu0
    %7003 = vst [vmem:[%s13] sm:$0xff] %v6998
    // Predicated region
    $region83: #{forward.1} parent=1 // pred_check
      _
    $region84: #{forward.1} parent=1 // pred_check_branch
      %7005 = sbr.rel (0) target = $region86
    $region85: #{forward.1} parent=1 // pred_region
      _
    $region86: #{forward.1} parent=1 // pred_fallthru
      _
    // Predicated region
    $region87: #{forward.1} parent=1 // pred_check
      _
    $region88: #{forward.1} parent=1 // pred_check_branch
      %7007 = sbr.rel (0) target = $region90
    $region89: #{forward.1} parent=1 // pred_region
      _
    $region90: #{forward.1} parent=1 // pred_fallthru
      _
    %7008 = vsyncpa [#allocation7], 1
  %7009 = vsyncmov [#allocation5]
  %s7010 = vpop.sfrf %7009
  %p7011 = scmp.eq.s32.totalorder %s7010, 0
  %p7012 = pneg %p7011
  %7014 = shalt.err (%p7012)
  %s7015 = scalar_lea.sflag [#allocation5], 1
  %7016 = vsyncmov %s7015
  %s7017 = vpop.sfrf %7016
  %p7018 = scmp.eq.s32.totalorder %s7017, 0
  %p7019 = pneg %p7018
  %7021 = shalt.err (%p7019)
  %s7022 = scalar_lea.sflag [#allocation5], 2
  %7023 = vsyncmov %s7022
  %s7024 = vpop.sfrf %7023
  %p7025 = scmp.eq.s32.totalorder %s7024, 0
  %p7026 = pneg %p7025
  %7028 = shalt.err (%p7026)

</llo_original>
